<compile_context>
chip_gen: v5e
topology: v5e:2x2
jax: 0.10.0
libtpu: 0.0.40
codegen_flags: <defaults>
</compile_context>

<pallas_src>
import functools

import jax
import jax.numpy as jnp
from jax.experimental import pallas as pl
from jax.experimental.pallas import tpu as pltpu

EPS = 1e-5      # nn.InstanceNorm2d default
SLOPE = 0.2     # nn.LeakyReLU(0.2)


# ----------------------------------------------------------------------------
# In-kernel helpers (plain jnp, traced inside the Pallas bodies, all f32).
# ----------------------------------------------------------------------------
def _leaky_relu(y):
    return jnp.where(y >= 0.0, y, SLOPE * y)


def _instance_norm_2pass(seg):
    # seg: [C, P] f32.  Per-channel mean/var over the lane (spatial) axis,
    # two-pass (subtract mean first) per the correctness review; biased var,
    # eps added to var exactly like torch.nn.InstanceNorm2d.
    mean = jnp.mean(seg, axis=-1, keepdims=True)
    cent = seg - mean
    var = jnp.mean(cent * cent, axis=-1, keepdims=True)
    return cent * jax.lax.rsqrt(var + EPS)


# ----------------------------------------------------------------------------
# Pallas kernel bodies.  One grid step == Nb samples; columns of every 2-D
# tile are sample-major (col = n_local * P + spatial).
# ----------------------------------------------------------------------------
def _conv_bias_act_kernel(p_ref, w_ref, b_ref, o_ref):
    # conv0: bias + LeakyReLU, no InstanceNorm.  Fully batched single matmul.
    # p_ref: [K, Nb*P] bf16   w_ref: [Cout, K] bf16   b_ref: [Cout, 1] f32
    y = jnp.dot(w_ref[...], p_ref[...], preferred_element_type=jnp.float32)
    o_ref[...] = _leaky_relu(y + b_ref[...]).astype(o_ref.dtype)


def _conv_norm_act_kernel(p_ref, w_ref, o_ref, *, nb, p):
    # conv1..conv3: InstanceNorm + LeakyReLU.  Conv bias is cancelled by IN and
    # is not even loaded.  Per-sample stats on static contiguous lane segments.
    y = jnp.dot(w_ref[...], p_ref[...], preferred_element_type=jnp.float32)
    if p % 128 == 0:
        # Per-segment stores are already lane-aligned -> write directly.
        for s in range(nb):
            seg = y[:, s * p:(s + 1) * p]
            o_ref[:, s * p:(s + 1) * p] = (
                _leaky_relu(_instance_norm_2pass(seg)).astype(o_ref.dtype))
    else:
        # (e.g. conv3, P=64): concatenate the normalized segments and do one
        # lane-dense store of the whole [Cout, Nb*P] block.
        segs = [_leaky_relu(_instance_norm_2pass(y[:, s * p:(s + 1) * p]))
                for s in range(nb)]
        out = segs[0] if nb == 1 else jnp.concatenate(segs, axis=-1)
        o_ref[...] = out.astype(o_ref.dtype)


def _conv4_fc_kernel(p_ref, w4_ref, wfc_ref, bfc_ref, o_ref, *, n, p):
    # conv4 (IN + LeakyReLU) fused with fc_mu / fc_logvar, whole batch at once.
    # p_ref:  [K4, N*16] bf16    w4_ref: [C4, K4] bf16
    # wfc_ref:[2z, C4, 16] bf16  bfc_ref:[2z, 1] f32      o_ref: [2z, N] f32
    y4 = jnp.dot(w4_ref[...], p_ref[...], preferred_element_type=jnp.float32)
    wfc = wfc_ref[...].astype(jnp.float32)                     # hoisted upcast
    cols = []
    for s in range(n):
        act = _leaky_relu(_instance_norm_2pass(y4[:, s * p:(s + 1) * p]))
        prod = wfc * act[None, :, :]                           # [2z, C4, 16]
        red = jnp.sum(jnp.sum(prod, axis=2), axis=1, keepdims=True)   # [2z, 1]
        cols.append(red)
    out = cols[0] if n == 1 else jnp.concatenate(cols, axis=-1)       # [2z, N]
    o_ref[...] = out + bfc_ref[...]


# ----------------------------------------------------------------------------
# Nb selection: amortize grid-step overhead, keep lane extent Nb*P a multiple
# of 128 (unmasked stores / legal BlockSpec), stay inside a conservative VMEM
# budget that is safe at every generation's default scoped limit, and keep at
# least 2 grid steps so the "parallel" batch axis feeds both v7x TensorCores.
# ----------------------------------------------------------------------------
def _pick_nb(n, p, per_sample_bytes, vmem_budget=8 << 20):
    nb = int(max(1, min(n, vmem_budget // max(int(per_sample_bytes), 1))))
    if n >= 2:
        nb = min(nb, n // 2)
    while nb > 1 and (n % nb != 0 or (nb * p) % 128 != 0):
        nb -= 1
    if (nb * p) % 128 != 0 and nb != n:
        nb = n          # full-extent block is always legal
    return nb


# ----------------------------------------------------------------------------
# pallas_call wrappers.
# ----------------------------------------------------------------------------
def conv_block(patches, w_t, bias, *, do_norm, n, p, out_dtype=jnp.bfloat16):
    """patches: [K, N*P] bf16, w_t: [Cout, K] bf16 -> [Cout, N*P] out_dtype."""
    K, NP = patches.shape
    assert NP == n * p
    cout = w_t.shape[0]

    per_sample = (2 * K + 2 * cout) * p * 2 + 2 * cout * p * 4   # rough, bytes
    nb = _pick_nb(n, p, per_sample)
    L = nb * p
    grid = (n // nb,)

    if do_norm:
        kernel = functools.partial(_conv_norm_act_kernel, nb=nb, p=p)
        operands = (patches, w_t)
        in_specs = [
            pl.BlockSpec((K, L), lambda g: (0, g)),
            pl.BlockSpec((cout, K), lambda g: (0, 0)),
        ]
    else:
        kernel = _conv_bias_act_kernel
        operands = (patches, w_t, bias.reshape(cout, 1).astype(jnp.float32))
        in_specs = [
            pl.BlockSpec((K, L), lambda g: (0, g)),
            pl.BlockSpec((cout, K), lambda g: (0, 0)),
            pl.BlockSpec((cout, 1), lambda g: (0, 0)),
        ]

    return pl.pallas_call(
        kernel,
        out_shape=jax.ShapeDtypeStruct((cout, n * p), out_dtype),
        grid_spec=pltpu.PrefetchScalarGridSpec(
            num_scalar_prefetch=0,
            grid=grid,
            in_specs=in_specs,
            out_specs=pl.BlockSpec((cout, L), lambda g: (0, g)),
        ),
        compiler_params=pltpu.CompilerParams(dimension_semantics=("parallel",)),
    )(*operands)


def conv4_fc_block(patches4, w4_t, wfc, bfc, *, n):
    """patches4: [K4, N*16] bf16 -> [2z, N] f32 (rows = mu ++ logvar)."""
    K4, NP = patches4.shape
    assert NP % n == 0
    p = NP // n
    c4 = w4_t.shape[0]
    zz = wfc.shape[0]
    kernel = functools.partial(_conv4_fc_kernel, n=n, p=p)
    return pl.pallas_call(
        kernel,
        out_shape=jax.ShapeDtypeStruct((zz, n), jnp.float32),
        grid_spec=pltpu.PrefetchScalarGridSpec(
            num_scalar_prefetch=0,
            grid=(1,),                       # whole (tiny) head in one step
            in_specs=[
                pl.BlockSpec((K4, NP), lambda g: (0, 0)),
                pl.BlockSpec((c4, K4), lambda g: (0, 0)),
                pl.BlockSpec((zz, c4, p), lambda g: (0, 0, 0)),
                pl.BlockSpec((zz, 1), lambda g: (0, 0)),
            ],
            out_specs=pl.BlockSpec((zz, n), lambda g: (0, 0)),
        ),
        compiler_params=pltpu.CompilerParams(dimension_semantics=("arbitrary",)),
    )(patches4, w4_t, wfc, bfc)


# ----------------------------------------------------------------------------
# Plain-JAX glue: channel-major im2col producing [K, N*P] directly, with
# K = (cin, kh, kw) in PyTorch's weight.view(Cout, -1) order and columns
# ordered sample-major (col = n*P + oh*OW + ow).  Emitted in bf16 so the
# patches tensor (the only HBM-amplified intermediate) is half-size.
# (Could be lax.conv_general_dilated_patches; kept explicit so the ordering
#  matches the PyTorch weight flattening by construction.)
# ----------------------------------------------------------------------------
def im2col_cmajor(x_cnhw, ksize, stride, pad):
    C, N, H, W = x_cnhw.shape
    xp = jnp.pad(x_cnhw, ((0, 0), (0, 0), (pad, pad), (pad, pad)))
    OH = (H + 2 * pad - ksize) // stride + 1
    OW = (W + 2 * pad - ksize) // stride + 1
    cols = [xp[:, :, i:i + stride * OH:stride, j:j + stride * OW:stride]
            for i in range(ksize) for j in range(ksize)]
    p = jnp.stack(cols, axis=1)                          # [C, kk, N, OH, OW]
    p = p.reshape(C * ksize * ksize, N * OH * OW)
    return p.astype(jnp.bfloat16), OH, OW


# ----------------------------------------------------------------------------
# Deterministic parameter init (PyTorch layout: w [Cout, Cin, 4, 4], b [Cout]).
# ----------------------------------------------------------------------------
def init_params(key, f_dim, z_dim):
    shapes = [
        (f_dim,     1,         4, 4),   # conv0
        (f_dim * 2, f_dim,     4, 4),   # conv1
        (f_dim * 4, f_dim * 2, 4, 4),   # conv2
        (f_dim * 8, f_dim * 4, 4, 4),   # conv3
        (f_dim * 8, f_dim * 8, 4, 4),   # conv4
        (z_dim,     f_dim * 8, 4, 4),   # fc_mu
        (z_dim,     f_dim * 8, 4, 4),   # fc_logvar
    ]
    params = []
    for i, s in enumerate(shapes):
        kw_, kb_ = jax.random.split(jax.random.fold_in(key, i))
        fan_in = s[1] * s[2] * s[3]
        w = jax.random.normal(kw_, s, jnp.float32) / jnp.sqrt(float(fan_in))
        b = 0.01 * jax.random.normal(kb_, (s[0],), jnp.float32)
        params.append((w, b))
    return params


# ----------------------------------------------------------------------------
# Forward pass (matches What_Encoder_Sup.forward).  x: [N, 1, 128, 128] NCHW.
# ----------------------------------------------------------------------------
def what_encoder_sup(x_nchw, params, z_dim):
    x = x_nchw.astype(jnp.float32)
    N, cin, H, W = x.shape
    assert cin == 1

    # Channel-major activation layout [C, N, H, W]; for C==1 this reshape is a
    # pure metadata op.
    acts = x.reshape(1, N, H, W)

    # conv0 (bias + LeakyReLU), conv1..conv3 (InstanceNorm + LeakyReLU).
    do_norm_cfg = [False, True, True, True]
    for li in range(4):
        w, b = params[li]
        cout = w.shape[0]
        patches, OH, OW = im2col_cmajor(acts, 4, stride=2, pad=1)   # [K, N*P]
        w_t = w.reshape(cout, -1).astype(jnp.bfloat16)
        y = conv_block(patches, w_t, b, do_norm=do_norm_cfg[li],
                       n=N, p=OH * OW)                              # [Cout, N*P]
        acts = y.reshape(cout, N, OH, OW)

    # conv4 (InstanceNorm + LeakyReLU) fused with fc_mu / fc_logvar.
    w4, _b4 = params[4]                        # conv4 bias cancelled by IN
    w_mu, b_mu = params[5]
    w_lv, b_lv = params[6]
    c4 = w4.shape[0]
    patches4, OH, OW = im2col_cmajor(acts, 4, stride=2, pad=1)      # [16*c4, N*16]
    assert OH * OW == 16, "input spatial size must be 128 (fc is a 4x4 valid conv)"
    w4_t = w4.reshape(c4, -1).astype(jnp.bfloat16)
    wfc = jnp.concatenate([w_mu, w_lv], axis=0).reshape(
        2 * z_dim, c4, OH * OW).astype(jnp.bfloat16)
    bfc = jnp.concatenate([b_mu, b_lv], axis=0).reshape(
        2 * z_dim, 1).astype(jnp.float32)

    out = conv4_fc_block(patches4, w4_t, wfc, bfc, n=N)             # [2z, N]
    mu = out[:z_dim].T.reshape(N, z_dim, 1, 1)
    logvar = out[z_dim:].T.reshape(N, z_dim, 1, 1)
    return mu, logvar


# ----------------------------------------------------------------------------
# Pure-JAX f32 reference (lax convs) for a loose numerical check; the Pallas
# path uses bf16 patches/weights so only ~1e-2-level agreement is expected.
# ----------------------------------------------------------------------------
def _ref_forward(x, params, z_dim):
    def conv(h, w, b, stride, pad):
        y = jax.lax.conv_general_dilated(
            h, w, (stride, stride), [(pad, pad), (pad, pad)],
            dimension_numbers=("NCHW", "OIHW", "NCHW"))
        return y + b.reshape(1, -1, 1, 1)

    def inorm(y):
        m = jnp.mean(y, axis=(2, 3), keepdims=True)
        v = jnp.mean((y - m) ** 2, axis=(2, 3), keepdims=True)
        return (y - m) / jnp.sqrt(v + EPS)

    h = x.astype(jnp.float32)
    for li in range(5):
        w, b = params[li]
        h = conv(h, w, b, 2, 1)
        if li > 0:
            h = inorm(h)
        h = jnp.where(h >= 0, h, SLOPE * h)
    w_mu, b_mu = params[5]
    w_lv, b_lv = params[6]
    return conv(h, w_mu, b_mu, 1, 0), conv(h, w_lv, b_lv, 1, 0)


if __name__ == "__main__":
    key = jax.random.PRNGKey(0)
    f_dim = 4          # opt.gf_dim (small)
    z_dim = 8          # opt.z_dim_appr (small)
    N = 4
    # Input spatial size must be 128 so the final 4x4 valid conv sees a 4x4 map
    # (128 -> 64 -> 32 -> 16 -> 8 -> 4 -> 1), as the PyTorch module assumes.
    x = jax.random.normal(jax.random.fold_in(key, 7), (N, 1, 128, 128), jnp.float32)
    params = init_params(jax.random.fold_in(key, 123), f_dim, z_dim)

    fwd = jax.jit(lambda inp: what_encoder_sup(inp, params, z_dim))
    mu, logvar = fwd(x)
    jax.block_until_ready((mu, logvar))

    assert mu.shape == (N, z_dim, 1, 1) and logvar.shape == (N, z_dim, 1, 1)
    assert mu.dtype == jnp.float32 and logvar.dtype == jnp.float32

    # Loose check against the f32 reference (bf16 MXU path => ~1e-2 agreement).
    mu_r, lv_r = jax.jit(lambda inp: _ref_forward(inp, params, z_dim))(x)
    scale = float(jnp.maximum(jnp.max(jnp.abs(mu_r)), jnp.max(jnp.abs(lv_r))))
    err = float(jnp.maximum(jnp.max(jnp.abs(mu - mu_r)),
                            jnp.max(jnp.abs(logvar - lv_r)))) / max(scale, 1e-6)
    assert err < 0.12, f"kernel/reference mismatch: rel-to-max error {err:.4f}"

    print("KERNEL_OK")
</pallas_src>

<mosaic_0001>
module attributes {stable_mosaic.version = 11 : i64} {
  func.func @_conv_bias_act_kernel(%arg0: i32, %arg1: memref<16x8192xbf16, #tpu.memory_space<vmem>>, %arg2: memref<4x16xbf16, #tpu.memory_space<vmem>>, %arg3: memref<4x1xf32, #tpu.memory_space<vmem>>, %arg4: memref<4x8192xbf16, #tpu.memory_space<vmem>>) attributes {dimension_semantics = [#tpu.dimension_semantics<parallel>], iteration_bounds = array<i64: 2>, scalar_prefetch = 0 : i64, scratch_operands = 0 : i64, tpu.core_type = #tpu.core_type<tc>, window_params = [{transform_indices = @transform_0, window_bounds = array<i64: 16, 8192>}, {pipeline_mode = #tpu.pipeline_mode<synchronous>, transform_indices = @transform_1, window_bounds = array<i64: 4, 16>}, {pipeline_mode = #tpu.pipeline_mode<synchronous>, transform_indices = @transform_2, window_bounds = array<i64: 4, 1>}, {transform_indices = @transform_3, window_bounds = array<i64: 4, 8192>}]} {
    %c0 = arith.constant 0 : index
    %c0_0 = arith.constant 0 : index
    %0 = vector.load %arg2[%c0, %c0_0] : memref<4x16xbf16, #tpu.memory_space<vmem>>, vector<4x16xbf16>
    %c0_1 = arith.constant 0 : index
    %c0_2 = arith.constant 0 : index
    %1 = vector.load %arg1[%c0_1, %c0_2] : memref<16x8192xbf16, #tpu.memory_space<vmem>>, vector<16x8192xbf16>
    %cst = arith.constant dense<0.000000e+00> : vector<4x8192xf32>
    %2 = tpu.matmul %0, %1, %cst {dimension_numbers = #tpu.dot_dimension_numbers<[1], [0], [0], [1], [0, 0, 1, 1], [], []>} : vector<4x16xbf16>, vector<16x8192xbf16>, vector<4x8192xf32> -> vector<4x8192xf32>
    %c0_3 = arith.constant 0 : index
    %c0_4 = arith.constant 0 : index
    %3 = vector.load %arg3[%c0_3, %c0_4] : memref<4x1xf32, #tpu.memory_space<vmem>>, vector<4x1xf32>
    %4 = vector.broadcast %3 : vector<4x1xf32> to vector<4x8192xf32>
    %5 = arith.addf %2, %4 : vector<4x8192xf32>
    %cst_5 = arith.constant 0.000000e+00 : f32
    %6 = vector.broadcast %cst_5 : f32 to vector<4x8192xf32>
    %7 = arith.cmpf oge, %5, %6 : vector<4x8192xf32>
    %cst_6 = arith.constant 2.000000e-01 : f32
    %8 = vector.broadcast %cst_6 : f32 to vector<4x8192xf32>
    %9 = arith.mulf %8, %5 : vector<4x8192xf32>
    %10 = arith.select %7, %5, %9 : vector<4x8192xi1>, vector<4x8192xf32>
    %11 = arith.truncf %10 : vector<4x8192xf32> to vector<4x8192xbf16>
    %c0_7 = arith.constant 0 : index
    %c0_8 = arith.constant 0 : index
    %12 = vector.load %arg4[%c0_7, %c0_8] : memref<4x8192xbf16, #tpu.memory_space<vmem>>, vector<4x8192xbf16>
    tpu.vector_store %arg4[%c0_7, %c0_8], %11 {strides = array<i32>} : memref<4x8192xbf16, #tpu.memory_space<vmem>>, vector<4x8192xbf16>,
    return
  }
  func.func @transform_0(%arg0: i32) -> (i32, i32) {
    %c0_i32 = arith.constant 0 : i32
    %c0_i32_0 = arith.constant 0 : i32
    return %c0_i32, %arg0 : i32, i32
  }
  func.func @transform_1(%arg0: i32) -> (i32, i32) {
    %c0_i32 = arith.constant 0 : i32
    %c0_i32_0 = arith.constant 0 : i32
    %c0_i32_1 = arith.constant 0 : i32
    return %c0_i32, %c0_i32_0 : i32, i32
  }
  func.func @transform_2(%arg0: i32) -> (i32, i32) {
    %c0_i32 = arith.constant 0 : i32
    %c0_i32_0 = arith.constant 0 : i32
    %c0_i32_1 = arith.constant 0 : i32
    return %c0_i32, %c0_i32_0 : i32, i32
  }
  func.func @transform_3(%arg0: i32) -> (i32, i32) {
    %c0_i32 = arith.constant 0 : i32
    %c0_i32_0 = arith.constant 0 : i32
    return %c0_i32, %arg0 : i32, i32
  }
}

module attributes {stable_mosaic.version = 11 : i64} {
  func.func @_conv_norm_act_kernel(%arg0: i32, %arg1: memref<64x2048xbf16, #tpu.memory_space<vmem>>, %arg2: memref<8x64xbf16, #tpu.memory_space<vmem>>, %arg3: memref<8x2048xbf16, #tpu.memory_space<vmem>>) attributes {dimension_semantics = [#tpu.dimension_semantics<parallel>], iteration_bounds = array<i64: 2>, scalar_prefetch = 0 : i64, scratch_operands = 0 : i64, tpu.core_type = #tpu.core_type<tc>, window_params = [{transform_indices = @transform_0, window_bounds = array<i64: 64, 2048>}, {pipeline_mode = #tpu.pipeline_mode<synchronous>, transform_indices = @transform_1, window_bounds = array<i64: 8, 64>}, {transform_indices = @transform_2, window_bounds = array<i64: 8, 2048>}]} {
    %c0 = arith.constant 0 : index
    %c0_0 = arith.constant 0 : index
    %0 = vector.load %arg2[%c0, %c0_0] : memref<8x64xbf16, #tpu.memory_space<vmem>>, vector<8x64xbf16>
    %c0_1 = arith.constant 0 : index
    %c0_2 = arith.constant 0 : index
    %1 = vector.load %arg1[%c0_1, %c0_2] : memref<64x2048xbf16, #tpu.memory_space<vmem>>, vector<64x2048xbf16>
    %cst = arith.constant dense<0.000000e+00> : vector<8x2048xf32>
    %2 = tpu.matmul %0, %1, %cst {dimension_numbers = #tpu.dot_dimension_numbers<[1], [0], [0], [1], [0, 0, 1, 1], [], []>} : vector<8x64xbf16>, vector<64x2048xbf16>, vector<8x2048xf32> -> vector<8x2048xf32>
    %3 = vector.extract_strided_slice %2 {offsets = [0, 0], sizes = [8, 1024], strides = [1, 1]} : vector<8x2048xf32> to vector<8x1024xf32>
    %cst_3 = arith.constant dense<0.000000e+00> : vector<8xf32>
    %4 = vector.multi_reduction <add>, %3, %cst_3 [1] : vector<8x1024xf32> to vector<8xf32>
    %5 = vector.shape_cast %4 : vector<8xf32> to vector<8x1xf32>
    %cst_4 = arith.constant 1.024000e+03 : f32
    %6 = vector.broadcast %cst_4 : f32 to vector<8x1xf32>
    %7 = arith.divf %5, %6 : vector<8x1xf32>
    %8 = vector.broadcast %7 : vector<8x1xf32> to vector<8x1024xf32>
    %9 = arith.subf %3, %8 : vector<8x1024xf32>
    %10 = arith.mulf %9, %9 : vector<8x1024xf32>
    %cst_5 = arith.constant dense<0.000000e+00> : vector<8xf32>
    %11 = vector.multi_reduction <add>, %10, %cst_5 [1] : vector<8x1024xf32> to vector<8xf32>
    %12 = vector.shape_cast %11 : vector<8xf32> to vector<8x1xf32>
    %cst_6 = arith.constant 1.024000e+03 : f32
    %13 = vector.broadcast %cst_6 : f32 to vector<8x1xf32>
    %14 = arith.divf %12, %13 : vector<8x1xf32>
    %cst_7 = arith.constant 9.99999974E-6 : f32
    %15 = vector.broadcast %cst_7 : f32 to vector<8x1xf32>
    %16 = arith.addf %14, %15 : vector<8x1xf32>
    %17 = math.rsqrt %16 : vector<8x1xf32>
    %18 = vector.broadcast %17 : vector<8x1xf32> to vector<8x1024xf32>
    %19 = arith.mulf %9, %18 : vector<8x1024xf32>
    %cst_8 = arith.constant 0.000000e+00 : f32
    %20 = vector.broadcast %cst_8 : f32 to vector<8x1024xf32>
    %21 = arith.cmpf oge, %19, %20 : vector<8x1024xf32>
    %cst_9 = arith.constant 2.000000e-01 : f32
    %22 = vector.broadcast %cst_9 : f32 to vector<8x1024xf32>
    %23 = arith.mulf %22, %19 : vector<8x1024xf32>
    %24 = arith.select %21, %19, %23 : vector<8x1024xi1>, vector<8x1024xf32>
    %25 = arith.truncf %24 : vector<8x1024xf32> to vector<8x1024xbf16>
    %c0_10 = arith.constant 0 : index
    %c0_11 = arith.constant 0 : index
    %26 = vector.load %arg3[%c0_10, %c0_11] : memref<8x2048xbf16, #tpu.memory_space<vmem>>, vector<8x1024xbf16>
    tpu.vector_store %arg3[%c0_10, %c0_11], %25 {strides = array<i32>} : memref<8x2048xbf16, #tpu.memory_space<vmem>>, vector<8x1024xbf16>,
    %27 = vector.extract_strided_slice %2 {offsets = [0, 1024], sizes = [8, 1024], strides = [1, 1]} : vector<8x2048xf32> to vector<8x1024xf32>
    %cst_12 = arith.constant dense<0.000000e+00> : vector<8xf32>
    %28 = vector.multi_reduction <add>, %27, %cst_12 [1] : vector<8x1024xf32> to vector<8xf32>
    %29 = vector.shape_cast %28 : vector<8xf32> to vector<8x1xf32>
    %cst_13 = arith.constant 1.024000e+03 : f32
    %30 = vector.broadcast %cst_13 : f32 to vector<8x1xf32>
    %31 = arith.divf %29, %30 : vector<8x1xf32>
    %32 = vector.broadcast %31 : vector<8x1xf32> to vector<8x1024xf32>
    %33 = arith.subf %27, %32 : vector<8x1024xf32>
    %34 = arith.mulf %33, %33 : vector<8x1024xf32>
    %cst_14 = arith.constant dense<0.000000e+00> : vector<8xf32>
    %35 = vector.multi_reduction <add>, %34, %cst_14 [1] : vector<8x1024xf32> to vector<8xf32>
    %36 = vector.shape_cast %35 : vector<8xf32> to vector<8x1xf32>
    %cst_15 = arith.constant 1.024000e+03 : f32
    %37 = vector.broadcast %cst_15 : f32 to vector<8x1xf32>
    %38 = arith.divf %36, %37 : vector<8x1xf32>
    %cst_16 = arith.constant 9.99999974E-6 : f32
    %39 = vector.broadcast %cst_16 : f32 to vector<8x1xf32>
    %40 = arith.addf %38, %39 : vector<8x1xf32>
    %41 = math.rsqrt %40 : vector<8x1xf32>
    %42 = vector.broadcast %41 : vector<8x1xf32> to vector<8x1024xf32>
    %43 = arith.mulf %33, %42 : vector<8x1024xf32>
    %cst_17 = arith.constant 0.000000e+00 : f32
    %44 = vector.broadcast %cst_17 : f32 to vector<8x1024xf32>
    %45 = arith.cmpf oge, %43, %44 : vector<8x1024xf32>
    %cst_18 = arith.constant 2.000000e-01 : f32
    %46 = vector.broadcast %cst_18 : f32 to vector<8x1024xf32>
    %47 = arith.mulf %46, %43 : vector<8x1024xf32>
    %48 = arith.select %45, %43, %47 : vector<8x1024xi1>, vector<8x1024xf32>
    %49 = arith.truncf %48 : vector<8x1024xf32> to vector<8x1024xbf16>
    %c0_19 = arith.constant 0 : index
    %c1024 = arith.constant 1024 : index
    %50 = vector.load %arg3[%c0_19, %c1024] : memref<8x2048xbf16, #tpu.memory_space<vmem>>, vector<8x1024xbf16>
    tpu.vector_store %arg3[%c0_19, %c1024], %49 {strides = array<i32>} : memref<8x2048xbf16, #tpu.memory_space<vmem>>, vector<8x1024xbf16>,
    return
  }
  func.func @transform_0(%arg0: i32) -> (i32, i32) {
    %c0_i32 = arith.constant 0 : i32
    %c0_i32_0 = arith.constant 0 : i32
    return %c0_i32, %arg0 : i32, i32
  }
  func.func @transform_1(%arg0: i32) -> (i32, i32) {
    %c0_i32 = arith.constant 0 : i32
    %c0_i32_0 = arith.constant 0 : i32
    %c0_i32_1 = arith.constant 0 : i32
    return %c0_i32, %c0_i32_0 : i32, i32
  }
  func.func @transform_2(%arg0: i32) -> (i32, i32) {
    %c0_i32 = arith.constant 0 : i32
    %c0_i32_0 = arith.constant 0 : i32
    return %c0_i32, %arg0 : i32, i32
  }
}

module attributes {stable_mosaic.version = 11 : i64} {
  func.func @_conv_norm_act_kernel(%arg0: i32, %arg1: memref<128x512xbf16, #tpu.memory_space<vmem>>, %arg2: memref<16x128xbf16, #tpu.memory_space<vmem>>, %arg3: memref<16x512xbf16, #tpu.memory_space<vmem>>) attributes {dimension_semantics = [#tpu.dimension_semantics<parallel>], iteration_bounds = array<i64: 2>, scalar_prefetch = 0 : i64, scratch_operands = 0 : i64, tpu.core_type = #tpu.core_type<tc>, window_params = [{transform_indices = @transform_0, window_bounds = array<i64: 128, 512>}, {pipeline_mode = #tpu.pipeline_mode<synchronous>, transform_indices = @transform_1, window_bounds = array<i64: 16, 128>}, {transform_indices = @transform_2, window_bounds = array<i64: 16, 512>}]} {
    %c0 = arith.constant 0 : index
    %c0_0 = arith.constant 0 : index
    %0 = vector.load %arg2[%c0, %c0_0] : memref<16x128xbf16, #tpu.memory_space<vmem>>, vector<16x128xbf16>
    %c0_1 = arith.constant 0 : index
    %c0_2 = arith.constant 0 : index
    %1 = vector.load %arg1[%c0_1, %c0_2] : memref<128x512xbf16, #tpu.memory_space<vmem>>, vector<128x512xbf16>
    %cst = arith.constant dense<0.000000e+00> : vector<16x512xf32>
    %2 = tpu.matmul %0, %1, %cst {dimension_numbers = #tpu.dot_dimension_numbers<[1], [0], [0], [1], [0, 0, 1, 1], [], []>} : vector<16x128xbf16>, vector<128x512xbf16>, vector<16x512xf32> -> vector<16x512xf32>
    %3 = vector.extract_strided_slice %2 {offsets = [0, 0], sizes = [16, 256], strides = [1, 1]} : vector<16x512xf32> to vector<16x256xf32>
    %cst_3 = arith.constant dense<0.000000e+00> : vector<16xf32>
    %4 = vector.multi_reduction <add>, %3, %cst_3 [1] : vector<16x256xf32> to vector<16xf32>
    %5 = vector.shape_cast %4 : vector<16xf32> to vector<16x1xf32>
    %cst_4 = arith.constant 2.560000e+02 : f32
    %6 = vector.broadcast %cst_4 : f32 to vector<16x1xf32>
    %7 = arith.divf %5, %6 : vector<16x1xf32>
    %8 = vector.broadcast %7 : vector<16x1xf32> to vector<16x256xf32>
    %9 = arith.subf %3, %8 : vector<16x256xf32>
    %10 = arith.mulf %9, %9 : vector<16x256xf32>
    %cst_5 = arith.constant dense<0.000000e+00> : vector<16xf32>
    %11 = vector.multi_reduction <add>, %10, %cst_5 [1] : vector<16x256xf32> to vector<16xf32>
    %12 = vector.shape_cast %11 : vector<16xf32> to vector<16x1xf32>
    %cst_6 = arith.constant 2.560000e+02 : f32
    %13 = vector.broadcast %cst_6 : f32 to vector<16x1xf32>
    %14 = arith.divf %12, %13 : vector<16x1xf32>
    %cst_7 = arith.constant 9.99999974E-6 : f32
    %15 = vector.broadcast %cst_7 : f32 to vector<16x1xf32>
    %16 = arith.addf %14, %15 : vector<16x1xf32>
    %17 = math.rsqrt %16 : vector<16x1xf32>
    %18 = vector.broadcast %17 : vector<16x1xf32> to vector<16x256xf32>
    %19 = arith.mulf %9, %18 : vector<16x256xf32>
    %cst_8 = arith.constant 0.000000e+00 : f32
    %20 = vector.broadcast %cst_8 : f32 to vector<16x256xf32>
    %21 = arith.cmpf oge, %19, %20 : vector<16x256xf32>
    %cst_9 = arith.constant 2.000000e-01 : f32
    %22 = vector.broadcast %cst_9 : f32 to vector<16x256xf32>
    %23 = arith.mulf %22, %19 : vector<16x256xf32>
    %24 = arith.select %21, %19, %23 : vector<16x256xi1>, vector<16x256xf32>
    %25 = arith.truncf %24 : vector<16x256xf32> to vector<16x256xbf16>
    %c0_10 = arith.constant 0 : index
    %c0_11 = arith.constant 0 : index
    %26 = vector.load %arg3[%c0_10, %c0_11] : memref<16x512xbf16, #tpu.memory_space<vmem>>, vector<16x256xbf16>
    tpu.vector_store %arg3[%c0_10, %c0_11], %25 {strides = array<i32>} : memref<16x512xbf16, #tpu.memory_space<vmem>>, vector<16x256xbf16>,
    %27 = vector.extract_strided_slice %2 {offsets = [0, 256], sizes = [16, 256], strides = [1, 1]} : vector<16x512xf32> to vector<16x256xf32>
    %cst_12 = arith.constant dense<0.000000e+00> : vector<16xf32>
    %28 = vector.multi_reduction <add>, %27, %cst_12 [1] : vector<16x256xf32> to vector<16xf32>
    %29 = vector.shape_cast %28 : vector<16xf32> to vector<16x1xf32>
    %cst_13 = arith.constant 2.560000e+02 : f32
    %30 = vector.broadcast %cst_13 : f32 to vector<16x1xf32>
    %31 = arith.divf %29, %30 : vector<16x1xf32>
    %32 = vector.broadcast %31 : vector<16x1xf32> to vector<16x256xf32>
    %33 = arith.subf %27, %32 : vector<16x256xf32>
    %34 = arith.mulf %33, %33 : vector<16x256xf32>
    %cst_14 = arith.constant dense<0.000000e+00> : vector<16xf32>
    %35 = vector.multi_reduction <add>, %34, %cst_14 [1] : vector<16x256xf32> to vector<16xf32>
    %36 = vector.shape_cast %35 : vector<16xf32> to vector<16x1xf32>
    %cst_15 = arith.constant 2.560000e+02 : f32
    %37 = vector.broadcast %cst_15 : f32 to vector<16x1xf32>
    %38 = arith.divf %36, %37 : vector<16x1xf32>
    %cst_16 = arith.constant 9.99999974E-6 : f32
    %39 = vector.broadcast %cst_16 : f32 to vector<16x1xf32>
    %40 = arith.addf %38, %39 : vector<16x1xf32>
    %41 = math.rsqrt %40 : vector<16x1xf32>
    %42 = vector.broadcast %41 : vector<16x1xf32> to vector<16x256xf32>
    %43 = arith.mulf %33, %42 : vector<16x256xf32>
    %cst_17 = arith.constant 0.000000e+00 : f32
    %44 = vector.broadcast %cst_17 : f32 to vector<16x256xf32>
    %45 = arith.cmpf oge, %43, %44 : vector<16x256xf32>
    %cst_18 = arith.constant 2.000000e-01 : f32
    %46 = vector.broadcast %cst_18 : f32 to vector<16x256xf32>
    %47 = arith.mulf %46, %43 : vector<16x256xf32>
    %48 = arith.select %45, %43, %47 : vector<16x256xi1>, vector<16x256xf32>
    %49 = arith.truncf %48 : vector<16x256xf32> to vector<16x256xbf16>
    %c0_19 = arith.constant 0 : index
    %c256 = arith.constant 256 : index
    %50 = vector.load %arg3[%c0_19, %c256] : memref<16x512xbf16, #tpu.memory_space<vmem>>, vector<16x256xbf16>
    tpu.vector_store %arg3[%c0_19, %c256], %49 {strides = array<i32>} : memref<16x512xbf16, #tpu.memory_space<vmem>>, vector<16x256xbf16>,
    return
  }
  func.func @transform_0(%arg0: i32) -> (i32, i32) {
    %c0_i32 = arith.constant 0 : i32
    %c0_i32_0 = arith.constant 0 : i32
    return %c0_i32, %arg0 : i32, i32
  }
  func.func @transform_1(%arg0: i32) -> (i32, i32) {
    %c0_i32 = arith.constant 0 : i32
    %c0_i32_0 = arith.constant 0 : i32
    %c0_i32_1 = arith.constant 0 : i32
    return %c0_i32, %c0_i32_0 : i32, i32
  }
  func.func @transform_2(%arg0: i32) -> (i32, i32) {
    %c0_i32 = arith.constant 0 : i32
    %c0_i32_0 = arith.constant 0 : i32
    return %c0_i32, %arg0 : i32, i32
  }
}

module attributes {stable_mosaic.version = 11 : i64} {
  func.func @_conv_norm_act_kernel(%arg0: i32, %arg1: memref<256x128xbf16, #tpu.memory_space<vmem>>, %arg2: memref<32x256xbf16, #tpu.memory_space<vmem>>, %arg3: memref<32x128xbf16, #tpu.memory_space<vmem>>) attributes {dimension_semantics = [#tpu.dimension_semantics<parallel>], iteration_bounds = array<i64: 2>, scalar_prefetch = 0 : i64, scratch_operands = 0 : i64, tpu.core_type = #tpu.core_type<tc>, window_params = [{transform_indices = @transform_0, window_bounds = array<i64: 256, 128>}, {pipeline_mode = #tpu.pipeline_mode<synchronous>, transform_indices = @transform_1, window_bounds = array<i64: 32, 256>}, {transform_indices = @transform_2, window_bounds = array<i64: 32, 128>}]} {
    %c0 = arith.constant 0 : index
    %c0_0 = arith.constant 0 : index
    %0 = vector.load %arg2[%c0, %c0_0] : memref<32x256xbf16, #tpu.memory_space<vmem>>, vector<32x256xbf16>
    %c0_1 = arith.constant 0 : index
    %c0_2 = arith.constant 0 : index
    %1 = vector.load %arg1[%c0_1, %c0_2] : memref<256x128xbf16, #tpu.memory_space<vmem>>, vector<256x128xbf16>
    %cst = arith.constant dense<0.000000e+00> : vector<32x128xf32>
    %2 = tpu.matmul %0, %1, %cst {dimension_numbers = #tpu.dot_dimension_numbers<[1], [0], [0], [1], [0, 0, 1, 1], [], []>} : vector<32x256xbf16>, vector<256x128xbf16>, vector<32x128xf32> -> vector<32x128xf32>
    %3 = vector.extract_strided_slice %2 {offsets = [0, 0], sizes = [32, 64], strides = [1, 1]} : vector<32x128xf32> to vector<32x64xf32>
    %cst_3 = arith.constant dense<0.000000e+00> : vector<32xf32>
    %4 = vector.multi_reduction <add>, %3, %cst_3 [1] : vector<32x64xf32> to vector<32xf32>
    %5 = vector.shape_cast %4 : vector<32xf32> to vector<32x1xf32>
    %cst_4 = arith.constant 6.400000e+01 : f32
    %6 = vector.broadcast %cst_4 : f32 to vector<32x1xf32>
    %7 = arith.divf %5, %6 : vector<32x1xf32>
    %8 = vector.broadcast %7 : vector<32x1xf32> to vector<32x64xf32>
    %9 = arith.subf %3, %8 : vector<32x64xf32>
    %10 = arith.mulf %9, %9 : vector<32x64xf32>
    %cst_5 = arith.constant dense<0.000000e+00> : vector<32xf32>
    %11 = vector.multi_reduction <add>, %10, %cst_5 [1] : vector<32x64xf32> to vector<32xf32>
    %12 = vector.shape_cast %11 : vector<32xf32> to vector<32x1xf32>
    %cst_6 = arith.constant 6.400000e+01 : f32
    %13 = vector.broadcast %cst_6 : f32 to vector<32x1xf32>
    %14 = arith.divf %12, %13 : vector<32x1xf32>
    %cst_7 = arith.constant 9.99999974E-6 : f32
    %15 = vector.broadcast %cst_7 : f32 to vector<32x1xf32>
    %16 = arith.addf %14, %15 : vector<32x1xf32>
    %17 = math.rsqrt %16 : vector<32x1xf32>
    %18 = vector.broadcast %17 : vector<32x1xf32> to vector<32x64xf32>
    %19 = arith.mulf %9, %18 : vector<32x64xf32>
    %cst_8 = arith.constant 0.000000e+00 : f32
    %20 = vector.broadcast %cst_8 : f32 to vector<32x64xf32>
    %21 = arith.cmpf oge, %19, %20 : vector<32x64xf32>
    %cst_9 = arith.constant 2.000000e-01 : f32
    %22 = vector.broadcast %cst_9 : f32 to vector<32x64xf32>
    %23 = arith.mulf %22, %19 : vector<32x64xf32>
    %24 = arith.select %21, %19, %23 : vector<32x64xi1>, vector<32x64xf32>
    %25 = vector.extract_strided_slice %2 {offsets = [0, 64], sizes = [32, 64], strides = [1, 1]} : vector<32x128xf32> to vector<32x64xf32>
    %cst_10 = arith.constant dense<0.000000e+00> : vector<32xf32>
    %26 = vector.multi_reduction <add>, %25, %cst_10 [1] : vector<32x64xf32> to vector<32xf32>
    %27 = vector.shape_cast %26 : vector<32xf32> to vector<32x1xf32>
    %cst_11 = arith.constant 6.400000e+01 : f32
    %28 = vector.broadcast %cst_11 : f32 to vector<32x1xf32>
    %29 = arith.divf %27, %28 : vector<32x1xf32>
    %30 = vector.broadcast %29 : vector<32x1xf32> to vector<32x64xf32>
    %31 = arith.subf %25, %30 : vector<32x64xf32>
    %32 = arith.mulf %31, %31 : vector<32x64xf32>
    %cst_12 = arith.constant dense<0.000000e+00> : vector<32xf32>
    %33 = vector.multi_reduction <add>, %32, %cst_12 [1] : vector<32x64xf32> to vector<32xf32>
    %34 = vector.shape_cast %33 : vector<32xf32> to vector<32x1xf32>
    %cst_13 = arith.constant 6.400000e+01 : f32
    %35 = vector.broadcast %cst_13 : f32 to vector<32x1xf32>
    %36 = arith.divf %34, %35 : vector<32x1xf32>
    %cst_14 = arith.constant 9.99999974E-6 : f32
    %37 = vector.broadcast %cst_14 : f32 to vector<32x1xf32>
    %38 = arith.addf %36, %37 : vector<32x1xf32>
    %39 = math.rsqrt %38 : vector<32x1xf32>
    %40 = vector.broadcast %39 : vector<32x1xf32> to vector<32x64xf32>
    %41 = arith.mulf %31, %40 : vector<32x64xf32>
    %cst_15 = arith.constant 0.000000e+00 : f32
    %42 = vector.broadcast %cst_15 : f32 to vector<32x64xf32>
    %43 = arith.cmpf oge, %41, %42 : vector<32x64xf32>
    %cst_16 = arith.constant 2.000000e-01 : f32
    %44 = vector.broadcast %cst_16 : f32 to vector<32x64xf32>
    %45 = arith.mulf %44, %41 : vector<32x64xf32>
    %46 = arith.select %43, %41, %45 : vector<32x64xi1>, vector<32x64xf32>
    %47 = tpu.concatenate %24, %46 in 1 : vector<32x64xf32>, vector<32x64xf32> -> vector<32x128xf32>
    %48 = arith.truncf %47 : vector<32x128xf32> to vector<32x128xbf16>
    %c0_17 = arith.constant 0 : index
    %c0_18 = arith.constant 0 : index
    %49 = vector.load %arg3[%c0_17, %c0_18] : memref<32x128xbf16, #tpu.memory_space<vmem>>, vector<32x128xbf16>
    tpu.vector_store %arg3[%c0_17, %c0_18], %48 {strides = array<i32>} : memref<32x128xbf16, #tpu.memory_space<vmem>>, vector<32x128xbf16>,
    return
  }
  func.func @transform_0(%arg0: i32) -> (i32, i32) {
    %c0_i32 = arith.constant 0 : i32
    %c0_i32_0 = arith.constant 0 : i32
    return %c0_i32, %arg0 : i32, i32
  }
  func.func @transform_1(%arg0: i32) -> (i32, i32) {
    %c0_i32 = arith.constant 0 : i32
    %c0_i32_0 = arith.constant 0 : i32
    %c0_i32_1 = arith.constant 0 : i32
    return %c0_i32, %c0_i32_0 : i32, i32
  }
  func.func @transform_2(%arg0: i32) -> (i32, i32) {
    %c0_i32 = arith.constant 0 : i32
    %c0_i32_0 = arith.constant 0 : i32
    return %c0_i32, %arg0 : i32, i32
  }
}

module attributes {stable_mosaic.version = 11 : i64} {
  func.func @_conv4_fc_kernel(%arg0: i32, %arg1: memref<512x64xbf16, #tpu.memory_space<vmem>>, %arg2: memref<32x512xbf16, #tpu.memory_space<vmem>>, %arg3: memref<16x32x16xbf16, #tpu.memory_space<vmem>>, %arg4: memref<16x1xf32, #tpu.memory_space<vmem>>, %arg5: memref<16x4xf32, #tpu.memory_space<vmem>>) attributes {dimension_semantics = [#tpu.dimension_semantics<arbitrary>], iteration_bounds = array<i64: 1>, scalar_prefetch = 0 : i64, scratch_operands = 0 : i64, tpu.core_type = #tpu.core_type<tc>, window_params = [{pipeline_mode = #tpu.pipeline_mode<synchronous>, transform_indices = @transform_0, window_bounds = array<i64: 512, 64>}, {pipeline_mode = #tpu.pipeline_mode<synchronous>, transform_indices = @transform_1, window_bounds = array<i64: 32, 512>}, {pipeline_mode = #tpu.pipeline_mode<synchronous>, transform_indices = @transform_2, window_bounds = array<i64: 16, 32, 16>}, {pipeline_mode = #tpu.pipeline_mode<synchronous>, transform_indices = @transform_3, window_bounds = array<i64: 16, 1>}, {pipeline_mode = #tpu.pipeline_mode<synchronous>, transform_indices = @transform_4, window_bounds = array<i64: 16, 4>}]} {
    %c0 = arith.constant 0 : index
    %c0_0 = arith.constant 0 : index
    %0 = vector.load %arg2[%c0, %c0_0] : memref<32x512xbf16, #tpu.memory_space<vmem>>, vector<32x512xbf16>
    %c0_1 = arith.constant 0 : index
    %c0_2 = arith.constant 0 : index
    %1 = vector.load %arg1[%c0_1, %c0_2] : memref<512x64xbf16, #tpu.memory_space<vmem>>, vector<512x64xbf16>
    %cst = arith.constant dense<0.000000e+00> : vector<32x64xf32>
    %2 = tpu.matmul %0, %1, %cst {dimension_numbers = #tpu.dot_dimension_numbers<[1], [0], [0], [1], [0, 0, 1, 1], [], []>} : vector<32x512xbf16>, vector<512x64xbf16>, vector<32x64xf32> -> vector<32x64xf32>
    %c0_3 = arith.constant 0 : index
    %c0_4 = arith.constant 0 : index
    %c0_5 = arith.constant 0 : index
    %3 = vector.load %arg3[%c0_3, %c0_4, %c0_5] : memref<16x32x16xbf16, #tpu.memory_space<vmem>>, vector<16x32x16xbf16>
    %4 = arith.extf %3 : vector<16x32x16xbf16> to vector<16x32x16xf32>
    %5 = vector.extract_strided_slice %2 {offsets = [0, 0], sizes = [32, 16], strides = [1, 1]} : vector<32x64xf32> to vector<32x16xf32>
    %cst_6 = arith.constant dense<0.000000e+00> : vector<32xf32>
    %6 = vector.multi_reduction <add>, %5, %cst_6 [1] : vector<32x16xf32> to vector<32xf32>
    %7 = vector.shape_cast %6 : vector<32xf32> to vector<32x1xf32>
    %cst_7 = arith.constant 1.600000e+01 : f32
    %8 = vector.broadcast %cst_7 : f32 to vector<32x1xf32>
    %9 = arith.divf %7, %8 : vector<32x1xf32>
    %10 = vector.broadcast %9 : vector<32x1xf32> to vector<32x16xf32>
    %11 = arith.subf %5, %10 : vector<32x16xf32>
    %12 = arith.mulf %11, %11 : vector<32x16xf32>
    %cst_8 = arith.constant dense<0.000000e+00> : vector<32xf32>
    %13 = vector.multi_reduction <add>, %12, %cst_8 [1] : vector<32x16xf32> to vector<32xf32>
    %14 = vector.shape_cast %13 : vector<32xf32> to vector<32x1xf32>
    %cst_9 = arith.constant 1.600000e+01 : f32
    %15 = vector.broadcast %cst_9 : f32 to vector<32x1xf32>
    %16 = arith.divf %14, %15 : vector<32x1xf32>
    %cst_10 = arith.constant 9.99999974E-6 : f32
    %17 = vector.broadcast %cst_10 : f32 to vector<32x1xf32>
    %18 = arith.addf %16, %17 : vector<32x1xf32>
    %19 = math.rsqrt %18 : vector<32x1xf32>
    %20 = vector.broadcast %19 : vector<32x1xf32> to vector<32x16xf32>
    %21 = arith.mulf %11, %20 : vector<32x16xf32>
    %cst_11 = arith.constant 0.000000e+00 : f32
    %22 = vector.broadcast %cst_11 : f32 to vector<32x16xf32>
    %23 = arith.cmpf oge, %21, %22 : vector<32x16xf32>
    %cst_12 = arith.constant 2.000000e-01 : f32
    %24 = vector.broadcast %cst_12 : f32 to vector<32x16xf32>
    %25 = arith.mulf %24, %21 : vector<32x16xf32>
    %26 = arith.select %23, %21, %25 : vector<32x16xi1>, vector<32x16xf32>
    %27 = vector.shape_cast %26 : vector<32x16xf32> to vector<1x32x16xf32>
    %28 = vector.broadcast %27 : vector<1x32x16xf32> to vector<16x32x16xf32>
    %29 = arith.mulf %4, %28 : vector<16x32x16xf32>
    %cst_13 = arith.constant dense<0.000000e+00> : vector<16x32xf32>
    %30 = vector.multi_reduction <add>, %29, %cst_13 [2] : vector<16x32x16xf32> to vector<16x32xf32>
    %cst_14 = arith.constant dense<0.000000e+00> : vector<16xf32>
    %31 = vector.multi_reduction <add>, %30, %cst_14 [1] : vector<16x32xf32> to vector<16xf32>
    %32 = vector.shape_cast %31 : vector<16xf32> to vector<16x1xf32>
    %33 = vector.extract_strided_slice %2 {offsets = [0, 16], sizes = [32, 16], strides = [1, 1]} : vector<32x64xf32> to vector<32x16xf32>
    %cst_15 = arith.constant dense<0.000000e+00> : vector<32xf32>
    %34 = vector.multi_reduction <add>, %33, %cst_15 [1] : vector<32x16xf32> to vector<32xf32>
    %35 = vector.shape_cast %34 : vector<32xf32> to vector<32x1xf32>
    %cst_16 = arith.constant 1.600000e+01 : f32
    %36 = vector.broadcast %cst_16 : f32 to vector<32x1xf32>
    %37 = arith.divf %35, %36 : vector<32x1xf32>
    %38 = vector.broadcast %37 : vector<32x1xf32> to vector<32x16xf32>
    %39 = arith.subf %33, %38 : vector<32x16xf32>
    %40 = arith.mulf %39, %39 : vector<32x16xf32>
    %cst_17 = arith.constant dense<0.000000e+00> : vector<32xf32>
    %41 = vector.multi_reduction <add>, %40, %cst_17 [1] : vector<32x16xf32> to vector<32xf32>
    %42 = vector.shape_cast %41 : vector<32xf32> to vector<32x1xf32>
    %cst_18 = arith.constant 1.600000e+01 : f32
    %43 = vector.broadcast %cst_18 : f32 to vector<32x1xf32>
    %44 = arith.divf %42, %43 : vector<32x1xf32>
    %cst_19 = arith.constant 9.99999974E-6 : f32
    %45 = vector.broadcast %cst_19 : f32 to vector<32x1xf32>
    %46 = arith.addf %44, %45 : vector<32x1xf32>
    %47 = math.rsqrt %46 : vector<32x1xf32>
    %48 = vector.broadcast %47 : vector<32x1xf32> to vector<32x16xf32>
    %49 = arith.mulf %39, %48 : vector<32x16xf32>
    %cst_20 = arith.constant 0.000000e+00 : f32
    %50 = vector.broadcast %cst_20 : f32 to vector<32x16xf32>
    %51 = arith.cmpf oge, %49, %50 : vector<32x16xf32>
    %cst_21 = arith.constant 2.000000e-01 : f32
    %52 = vector.broadcast %cst_21 : f32 to vector<32x16xf32>
    %53 = arith.mulf %52, %49 : vector<32x16xf32>
    %54 = arith.select %51, %49, %53 : vector<32x16xi1>, vector<32x16xf32>
    %55 = vector.shape_cast %54 : vector<32x16xf32> to vector<1x32x16xf32>
    %56 = vector.broadcast %55 : vector<1x32x16xf32> to vector<16x32x16xf32>
    %57 = arith.mulf %4, %56 : vector<16x32x16xf32>
    %cst_22 = arith.constant dense<0.000000e+00> : vector<16x32xf32>
    %58 = vector.multi_reduction <add>, %57, %cst_22 [2] : vector<16x32x16xf32> to vector<16x32xf32>
    %cst_23 = arith.constant dense<0.000000e+00> : vector<16xf32>
    %59 = vector.multi_reduction <add>, %58, %cst_23 [1] : vector<16x32xf32> to vector<16xf32>
    %60 = vector.shape_cast %59 : vector<16xf32> to vector<16x1xf32>
    %61 = vector.extract_strided_slice %2 {offsets = [0, 32], sizes = [32, 16], strides = [1, 1]} : vector<32x64xf32> to vector<32x16xf32>
    %cst_24 = arith.constant dense<0.000000e+00> : vector<32xf32>
    %62 = vector.multi_reduction <add>, %61, %cst_24 [1] : vector<32x16xf32> to vector<32xf32>
    %63 = vector.shape_cast %62 : vector<32xf32> to vector<32x1xf32>
    %cst_25 = arith.constant 1.600000e+01 : f32
    %64 = vector.broadcast %cst_25 : f32 to vector<32x1xf32>
    %65 = arith.divf %63, %64 : vector<32x1xf32>
    %66 = vector.broadcast %65 : vector<32x1xf32> to vector<32x16xf32>
    %67 = arith.subf %61, %66 : vector<32x16xf32>
    %68 = arith.mulf %67, %67 : vector<32x16xf32>
    %cst_26 = arith.constant dense<0.000000e+00> : vector<32xf32>
    %69 = vector.multi_reduction <add>, %68, %cst_26 [1] : vector<32x16xf32> to vector<32xf32>
    %70 = vector.shape_cast %69 : vector<32xf32> to vector<32x1xf32>
    %cst_27 = arith.constant 1.600000e+01 : f32
    %71 = vector.broadcast %cst_27 : f32 to vector<32x1xf32>
    %72 = arith.divf %70, %71 : vector<32x1xf32>
    %cst_28 = arith.constant 9.99999974E-6 : f32
    %73 = vector.broadcast %cst_28 : f32 to vector<32x1xf32>
    %74 = arith.addf %72, %73 : vector<32x1xf32>
    %75 = math.rsqrt %74 : vector<32x1xf32>
    %76 = vector.broadcast %75 : vector<32x1xf32> to vector<32x16xf32>
    %77 = arith.mulf %67, %76 : vector<32x16xf32>
    %cst_29 = arith.constant 0.000000e+00 : f32
    %78 = vector.broadcast %cst_29 : f32 to vector<32x16xf32>
    %79 = arith.cmpf oge, %77, %78 : vector<32x16xf32>
    %cst_30 = arith.constant 2.000000e-01 : f32
    %80 = vector.broadcast %cst_30 : f32 to vector<32x16xf32>
    %81 = arith.mulf %80, %77 : vector<32x16xf32>
    %82 = arith.select %79, %77, %81 : vector<32x16xi1>, vector<32x16xf32>
    %83 = vector.shape_cast %82 : vector<32x16xf32> to vector<1x32x16xf32>
    %84 = vector.broadcast %83 : vector<1x32x16xf32> to vector<16x32x16xf32>
    %85 = arith.mulf %4, %84 : vector<16x32x16xf32>
    %cst_31 = arith.constant dense<0.000000e+00> : vector<16x32xf32>
    %86 = vector.multi_reduction <add>, %85, %cst_31 [2] : vector<16x32x16xf32> to vector<16x32xf32>
    %cst_32 = arith.constant dense<0.000000e+00> : vector<16xf32>
    %87 = vector.multi_reduction <add>, %86, %cst_32 [1] : vector<16x32xf32> to vector<16xf32>
    %88 = vector.shape_cast %87 : vector<16xf32> to vector<16x1xf32>
    %89 = vector.extract_strided_slice %2 {offsets = [0, 48], sizes = [32, 16], strides = [1, 1]} : vector<32x64xf32> to vector<32x16xf32>
    %cst_33 = arith.constant dense<0.000000e+00> : vector<32xf32>
    %90 = vector.multi_reduction <add>, %89, %cst_33 [1] : vector<32x16xf32> to vector<32xf32>
    %91 = vector.shape_cast %90 : vector<32xf32> to vector<32x1xf32>
    %cst_34 = arith.constant 1.600000e+01 : f32
    %92 = vector.broadcast %cst_34 : f32 to vector<32x1xf32>
    %93 = arith.divf %91, %92 : vector<32x1xf32>
    %94 = vector.broadcast %93 : vector<32x1xf32> to vector<32x16xf32>
    %95 = arith.subf %89, %94 : vector<32x16xf32>
    %96 = arith.mulf %95, %95 : vector<32x16xf32>
    %cst_35 = arith.constant dense<0.000000e+00> : vector<32xf32>
    %97 = vector.multi_reduction <add>, %96, %cst_35 [1] : vector<32x16xf32> to vector<32xf32>
    %98 = vector.shape_cast %97 : vector<32xf32> to vector<32x1xf32>
    %cst_36 = arith.constant 1.600000e+01 : f32
    %99 = vector.broadcast %cst_36 : f32 to vector<32x1xf32>
    %100 = arith.divf %98, %99 : vector<32x1xf32>
    %cst_37 = arith.constant 9.99999974E-6 : f32
    %101 = vector.broadcast %cst_37 : f32 to vector<32x1xf32>
    %102 = arith.addf %100, %101 : vector<32x1xf32>
    %103 = math.rsqrt %102 : vector<32x1xf32>
    %104 = vector.broadcast %103 : vector<32x1xf32> to vector<32x16xf32>
    %105 = arith.mulf %95, %104 : vector<32x16xf32>
    %cst_38 = arith.constant 0.000000e+00 : f32
    %106 = vector.broadcast %cst_38 : f32 to vector<32x16xf32>
    %107 = arith.cmpf oge, %105, %106 : vector<32x16xf32>
    %cst_39 = arith.constant 2.000000e-01 : f32
    %108 = vector.broadcast %cst_39 : f32 to vector<32x16xf32>
    %109 = arith.mulf %108, %105 : vector<32x16xf32>
    %110 = arith.select %107, %105, %109 : vector<32x16xi1>, vector<32x16xf32>
    %111 = vector.shape_cast %110 : vector<32x16xf32> to vector<1x32x16xf32>
    %112 = vector.broadcast %111 : vector<1x32x16xf32> to vector<16x32x16xf32>
    %113 = arith.mulf %4, %112 : vector<16x32x16xf32>
    %cst_40 = arith.constant dense<0.000000e+00> : vector<16x32xf32>
    %114 = vector.multi_reduction <add>, %113, %cst_40 [2] : vector<16x32x16xf32> to vector<16x32xf32>
    %cst_41 = arith.constant dense<0.000000e+00> : vector<16xf32>
    %115 = vector.multi_reduction <add>, %114, %cst_41 [1] : vector<16x32xf32> to vector<16xf32>
    %116 = vector.shape_cast %115 : vector<16xf32> to vector<16x1xf32>
    %117 = tpu.concatenate %32, %60, %88, %116 in 1 : vector<16x1xf32>, vector<16x1xf32>, vector<16x1xf32>, vector<16x1xf32> -> vector<16x4xf32>
    %c0_42 = arith.constant 0 : index
    %c0_43 = arith.constant 0 : index
    %118 = vector.load %arg4[%c0_42, %c0_43] : memref<16x1xf32, #tpu.memory_space<vmem>>, vector<16x1xf32>
    %119 = vector.broadcast %118 : vector<16x1xf32> to vector<16x4xf32>
    %120 = arith.addf %117, %119 : vector<16x4xf32>
    %c0_44 = arith.constant 0 : index
    %c0_45 = arith.constant 0 : index
    %121 = vector.load %arg5[%c0_44, %c0_45] : memref<16x4xf32, #tpu.memory_space<vmem>>, vector<16x4xf32>
    tpu.vector_store %arg5[%c0_44, %c0_45], %120 {strides = array<i32>} : memref<16x4xf32, #tpu.memory_space<vmem>>, vector<16x4xf32>,
    return
  }
  func.func @transform_0(%arg0: i32) -> (i32, i32) {
    %c0_i32 = arith.constant 0 : i32
    %c0_i32_0 = arith.constant 0 : i32
    %c0_i32_1 = arith.constant 0 : i32
    return %c0_i32, %c0_i32_0 : i32, i32
  }
  func.func @transform_1(%arg0: i32) -> (i32, i32) {
    %c0_i32 = arith.constant 0 : i32
    %c0_i32_0 = arith.constant 0 : i32
    %c0_i32_1 = arith.constant 0 : i32
    return %c0_i32, %c0_i32_0 : i32, i32
  }
  func.func @transform_2(%arg0: i32) -> (i32, i32, i32) {
    %c0_i32 = arith.constant 0 : i32
    %c0_i32_0 = arith.constant 0 : i32
    %c0_i32_1 = arith.constant 0 : i32
    %c0_i32_2 = arith.constant 0 : i32
    return %c0_i32, %c0_i32_0, %c0_i32_1 : i32, i32, i32
  }
  func.func @transform_3(%arg0: i32) -> (i32, i32) {
    %c0_i32 = arith.constant 0 : i32
    %c0_i32_0 = arith.constant 0 : i32
    %c0_i32_1 = arith.constant 0 : i32
    return %c0_i32, %c0_i32_0 : i32, i32
  }
  func.func @transform_4(%arg0: i32) -> (i32, i32) {
    %c0_i32 = arith.constant 0 : i32
    %c0_i32_0 = arith.constant 0 : i32
    %c0_i32_1 = arith.constant 0 : i32
    return %c0_i32, %c0_i32_0 : i32, i32
  }
}

</mosaic_0001>

<llo_original>
// kernel: _lambda_.5
$region0: #{_lambda_.5}
  #allocation0 [shape = 'u32[]', space=smem, size = 0x4, offset = 0x4, fixed_abs, tag = 'smem constant byte address 0x4 - core index']
  #allocation1 [shape = 'u32[72,128]{1,0:T(1,128)}', space=vmem, size = 0x9000, scoped, tag = 'internal scratch']
  %s0 = inlined_call_operand.vmem [shape: bf16[16,16384], index: 0, kind: input, shape index: {}]
  %s1 = inlined_call_operand.vmem [shape: bf16[4,16], index: 1, kind: input, shape index: {}]
  %s2 = inlined_call_operand.vmem [shape: f32[4,1], index: 2, kind: input, shape index: {}]
  %s3 = inlined_call_operand.vmem [shape: bf16[4,16384], index: 3, kind: output, shape index: {}]
  %s4 = sld [smem:[#allocation0]]
  $region68: #{_lambda_.5} parent=0
    _
  %s6 = ssub.s32 1, %s4
  %s7 = scalar_select 0, %s6, %s4
  $region1: #{_lambda_.5} parent=0
    #allocation2 [shape = 'u8[524288]{0}', space=vmem, size = 0x80000, scoped, tag = 'input window, operand 0']
    loop: start=0, step=1, limit=4
    $region2: #{_lambda_.5} parent=1 // loop_pre_header
      _
    $region3: #{_lambda_.5} parent=1 // loop_header
      %s9 = sphi 0, %s13
      %p10 = scmp.ge.s32.totalorder %s9, 4
      %s19 = sphi 0, %s21
      %s22 = sphi 0, %s19
      %s23 = sphi 0, %s22
      %s39 = sphi 0, %s23
      %s43 = sphi 0, %s43
      %s45 = sphi 0, %s43
      %s46 = sphi 0, %s45
      %s60 = sphi 0, %s46
      %s64 = sphi 0, %s64
      %s66 = sphi 0, %s64
      %s67 = sphi 0, %s66
      %s81 = sphi 0, %s67
      %s87 = sphi 0, %s89
      %s90 = sphi 0, %s87
      %s91 = sphi 0, %s90
      %s107 = sphi 0, %s91
    $region4: #{_lambda_.5} parent=1 // loop_header_branch
      %12 = sbr.rel (%p10) target = $region8
    $region5: #{_lambda_.5} parent=1 // loop_body
      %s14 = ssub.s32 %s9, 1
      %s15 = ssub.s32 %s9, 2
      %s16 = sadd.s32 %s9, 1
      %s17 = ssub.s32 %s9, %s16
      %p18 = scmp.eq.s32.totalorder %s17, 0
      %s20 = sadd.s32 %s19, 1
      %s21 = scalar_select %p18, %s19, %s20
      %p24 = pneg %p18
      %p25 = scmp.eq.s32.totalorder %s9, 1
      %p26 = por %p24, %p25
      %p27 = scmp.ne.s32.totalorder %s19, %s22
      %p28 = scmp.eq.s32.totalorder %s9, 0
      %p29 = por %p27, %p28
      %p30 = scmp.ne.s32.totalorder %s19, %s22
      %p31 = scmp.eq.s32.totalorder %s14, 1
      %p32 = por %p30, %p31
      %p33 = scmp.ne.s32.totalorder %s22, %s23
      %p34 = scmp.eq.s32.totalorder %s14, 0
      %p35 = por %p33, %p34
      %p36 = scmp.ne.s32.totalorder %s22, %s23
      %p37 = scmp.eq.s32.totalorder %s15, 1
      %p38 = por %p36, %p37
      %p40 = scmp.ne.s32.totalorder %s23, %s39
      %p41 = scmp.eq.s32.totalorder %s15, 0
      %p42 = por %p40, %p41
      %s44 = sadd.s32 %s43, 1
      %p47 = scmp.eq.s32.totalorder %s9, 1
      %p48 = scmp.ne.s32.totalorder %s43, %s45
      %p49 = scmp.eq.s32.totalorder %s9, 0
      %p50 = por %p48, %p49
      %p51 = scmp.ne.s32.totalorder %s43, %s45
      %p52 = scmp.eq.s32.totalorder %s14, 1
      %p53 = por %p51, %p52
      %p54 = scmp.ne.s32.totalorder %s45, %s46
      %p55 = scmp.eq.s32.totalorder %s14, 0
      %p56 = por %p54, %p55
      %p57 = scmp.ne.s32.totalorder %s45, %s46
      %p58 = scmp.eq.s32.totalorder %s15, 1
      %p59 = por %p57, %p58
      %p61 = scmp.ne.s32.totalorder %s46, %s60
      %p62 = scmp.eq.s32.totalorder %s15, 0
      %p63 = por %p61, %p62
      %s65 = sadd.s32 %s64, 1
      %p68 = scmp.eq.s32.totalorder %s9, 1
      %p69 = scmp.ne.s32.totalorder %s64, %s66
      %p70 = scmp.eq.s32.totalorder %s9, 0
      %p71 = por %p69, %p70
      %p72 = scmp.ne.s32.totalorder %s64, %s66
      %p73 = scmp.eq.s32.totalorder %s14, 1
      %p74 = por %p72, %p73
      %p75 = scmp.ne.s32.totalorder %s66, %s67
      %p76 = scmp.eq.s32.totalorder %s14, 0
      %p77 = por %p75, %p76
      %p78 = scmp.ne.s32.totalorder %s66, %s67
      %p79 = scmp.eq.s32.totalorder %s15, 1
      %p80 = por %p78, %p79
      %p82 = scmp.ne.s32.totalorder %s67, %s81
      %p83 = scmp.eq.s32.totalorder %s15, 0
      %p84 = por %p82, %p83
      %s85 = ssub.s32 %s9, %s16
      %p86 = scmp.eq.s32.totalorder %s85, 0
      %s88 = sadd.s32 %s87, 1
      %s89 = scalar_select %p86, %s87, %s88
      %p92 = pneg %p86
      %p93 = scmp.eq.s32.totalorder %s9, 1
      %p94 = por %p92, %p93
      %p95 = scmp.ne.s32.totalorder %s87, %s90
      %p96 = scmp.eq.s32.totalorder %s9, 0
      %p97 = por %p95, %p96
      %p98 = scmp.ne.s32.totalorder %s87, %s90
      %p99 = scmp.eq.s32.totalorder %s14, 1
      %p100 = por %p98, %p99
      %p101 = scmp.ne.s32.totalorder %s90, %s91
      %p102 = scmp.eq.s32.totalorder %s14, 0
      %p103 = por %p101, %p102
      %p104 = scmp.ne.s32.totalorder %s90, %s91
      %p105 = scmp.eq.s32.totalorder %s15, 1
      %p106 = por %p104, %p105
      %p108 = scmp.ne.s32.totalorder %s91, %s107
      %p109 = scmp.eq.s32.totalorder %s15, 0
      %p110 = por %p108, %p109
      %p111 = scmp.le.s32.totalorder 1, %s9
      %p112 = scmp.lt.s32.totalorder %s9, 3
      %p113 = pnand %p111, %p112
      %p114 = pneg %p113
      // Predicated region
      $region9: #{_lambda_.5} parent=5 // pred_check
        _
      $region10: #{_lambda_.5} parent=5 // pred_check_branch
        %116 = sbr.rel (%p113) target = $region12
      $region11: #{_lambda_.5} parent=5 // pred_region
        %s117 = ssub.s32 %s9, 1
        // Predicated region
        $region13: #{_lambda_.5} parent=11 // pred_check
          %p118 = pneg %p56
        $region14: #{_lambda_.5} parent=11 // pred_check_branch
          %120 = sbr.rel (%p118) target = $region16
        $region15: #{_lambda_.5} parent=11 // pred_region
          _
        $region16: #{_lambda_.5} parent=11 // pred_fallthru
          _
        // Predicated region
        $region17: #{_lambda_.5} parent=11 // pred_check
          %p121 = pneg %p77
        $region18: #{_lambda_.5} parent=11 // pred_check_branch
          %123 = sbr.rel (%p121) target = $region20
        $region19: #{_lambda_.5} parent=11 // pred_region
          _
        $region20: #{_lambda_.5} parent=11 // pred_fallthru
          _
      $region12: #{_lambda_.5} parent=5 // pred_fallthru
        _
      %p124 = scmp.lt.s32.totalorder %s9, 2
      // Predicated region
      $region21: #{_lambda_.5} parent=5 // pred_check
        %p125 = pneg %p124
      $region22: #{_lambda_.5} parent=5 // pred_check_branch
        %127 = sbr.rel (%p125) target = $region24
      $region23: #{_lambda_.5} parent=5 // pred_region
        // Predicated region
        $region25: #{_lambda_.5} parent=23 // pred_check
          %p128 = pneg %p29
        $region26: #{_lambda_.5} parent=23 // pred_check_branch
          %130 = sbr.rel (%p128) target = $region28
        $region27: #{_lambda_.5} parent=23 // pred_region
          %s131 = sand.u32 %s19, 1
          %s132 = sand.u32 %s19, 1
          %s133 = smul.addr %s132, 512
          %s134 = scalar_lea.vmem [#allocation2], %s133
          %s135 = smul.u32 64, %s9
          %s136 = smul.addr %s135, 4
          %s137 = scalar_lea.vmem %s0, %s136
          // Predicated region
          $region29: #{_lambda_.5} parent=27 // pred_check
            _
          $region30: #{_lambda_.5} parent=27 // pred_check_branch
            %139 = sbr.rel (0) target = $region32
          $region31: #{_lambda_.5} parent=27 // pred_region
            // Predicated region
            $region33: #{_lambda_.5} parent=31 // pred_check
              _
            $region34: #{_lambda_.5} parent=31 // pred_check_branch
              %141 = sbr.rel (0) target = $region36
            $region35: #{_lambda_.5} parent=31 // pred_region
              loop: start=0, step=1, limit=1
              $region37: #{_lambda_.5} parent=35 // loop_pre_header
                _
              $region38: #{_lambda_.5} parent=35 // loop_header
                %s143 = sphi 0, %s147
                %p144 = scmp.ge.s32.totalorder %s143, 1
                %s148 = sphi %s137, %s137
                %s149 = sphi %s134, %s134
              $region39: #{_lambda_.5} parent=35 // loop_header_branch
                %146 = sbr.rel (%p144) target = $region43
              $region40: #{_lambda_.5} parent=35 // loop_body
                %v150 = vld [vmem:[%s148] sm:$0xff]
                %151 = vst [vmem:[%s149] sm:$0xff] %v150
                %v152 = vld [vmem:[%s148 + $0x8] sm:$0xff]
                %153 = vst [vmem:[%s149 + $0x8] sm:$0xff] %v152
                %v154 = vld [vmem:[%s148 + $0x10] sm:$0xff]
                %155 = vst [vmem:[%s149 + $0x10] sm:$0xff] %v154
                %v156 = vld [vmem:[%s148 + $0x18] sm:$0xff]
                %157 = vst [vmem:[%s149 + $0x18] sm:$0xff] %v156
                %v158 = vld [vmem:[%s148 + $0x20] sm:$0xff]
                %159 = vst [vmem:[%s149 + $0x20] sm:$0xff] %v158
                %v160 = vld [vmem:[%s148 + $0x28] sm:$0xff]
                %161 = vst [vmem:[%s149 + $0x28] sm:$0xff] %v160
                %v162 = vld [vmem:[%s148 + $0x30] sm:$0xff]
                %163 = vst [vmem:[%s149 + $0x30] sm:$0xff] %v162
                %v164 = vld [vmem:[%s148 + $0x38] sm:$0xff]
                %165 = vst [vmem:[%s149 + $0x38] sm:$0xff] %v164
                %v166 = vld [vmem:[%s148 + $0x40] sm:$0xff]
                %167 = vst [vmem:[%s149 + $0x40] sm:$0xff] %v166
                %v168 = vld [vmem:[%s148 + $0x48] sm:$0xff]
                %169 = vst [vmem:[%s149 + $0x48] sm:$0xff] %v168
                %v170 = vld [vmem:[%s148 + $0x50] sm:$0xff]
                %171 = vst [vmem:[%s149 + $0x50] sm:$0xff] %v170
                %v172 = vld [vmem:[%s148 + $0x58] sm:$0xff]
                %173 = vst [vmem:[%s149 + $0x58] sm:$0xff] %v172
                %v174 = vld [vmem:[%s148 + $0x60] sm:$0xff]
                %175 = vst [vmem:[%s149 + $0x60] sm:$0xff] %v174
                %v176 = vld [vmem:[%s148 + $0x68] sm:$0xff]
                %177 = vst [vmem:[%s149 + $0x68] sm:$0xff] %v176
                %v178 = vld [vmem:[%s148 + $0x70] sm:$0xff]
                %179 = vst [vmem:[%s149 + $0x70] sm:$0xff] %v178
                %v180 = vld [vmem:[%s148 + $0x78] sm:$0xff]
                %181 = vst [vmem:[%s149 + $0x78] sm:$0xff] %v180
                %v182 = vld [vmem:[%s148 + $0x80] sm:$0xff]
                %183 = vst [vmem:[%s149 + $0x80] sm:$0xff] %v182
                %v184 = vld [vmem:[%s148 + $0x88] sm:$0xff]
                %185 = vst [vmem:[%s149 + $0x88] sm:$0xff] %v184
                %v186 = vld [vmem:[%s148 + $0x90] sm:$0xff]
                %187 = vst [vmem:[%s149 + $0x90] sm:$0xff] %v186
                %v188 = vld [vmem:[%s148 + $0x98] sm:$0xff]
                %189 = vst [vmem:[%s149 + $0x98] sm:$0xff] %v188
                %v190 = vld [vmem:[%s148 + $0xa0] sm:$0xff]
                %191 = vst [vmem:[%s149 + $0xa0] sm:$0xff] %v190
                %v192 = vld [vmem:[%s148 + $0xa8] sm:$0xff]
                %193 = vst [vmem:[%s149 + $0xa8] sm:$0xff] %v192
                %v194 = vld [vmem:[%s148 + $0xb0] sm:$0xff]
                %195 = vst [vmem:[%s149 + $0xb0] sm:$0xff] %v194
                %v196 = vld [vmem:[%s148 + $0xb8] sm:$0xff]
                %197 = vst [vmem:[%s149 + $0xb8] sm:$0xff] %v196
                %v198 = vld [vmem:[%s148 + $0xc0] sm:$0xff]
                %199 = vst [vmem:[%s149 + $0xc0] sm:$0xff] %v198
                %v200 = vld [vmem:[%s148 + $0xc8] sm:$0xff]
                %201 = vst [vmem:[%s149 + $0xc8] sm:$0xff] %v200
                %v202 = vld [vmem:[%s148 + $0xd0] sm:$0xff]
                %203 = vst [vmem:[%s149 + $0xd0] sm:$0xff] %v202
                %v204 = vld [vmem:[%s148 + $0xd8] sm:$0xff]
                %205 = vst [vmem:[%s149 + $0xd8] sm:$0xff] %v204
                %v206 = vld [vmem:[%s148 + $0xe0] sm:$0xff]
                %207 = vst [vmem:[%s149 + $0xe0] sm:$0xff] %v206
                %v208 = vld [vmem:[%s148 + $0xe8] sm:$0xff]
                %209 = vst [vmem:[%s149 + $0xe8] sm:$0xff] %v208
                %v210 = vld [vmem:[%s148 + $0xf0] sm:$0xff]
                %211 = vst [vmem:[%s149 + $0xf0] sm:$0xff] %v210
                %v212 = vld [vmem:[%s148 + $0xf8] sm:$0xff]
                %213 = vst [vmem:[%s149 + $0xf8] sm:$0xff] %v212
                %v214 = vld [vmem:[%s148 + $0x200] sm:$0xff]
                %215 = vst [vmem:[%s149 + $0x100] sm:$0xff] %v214
                %v216 = vld [vmem:[%s148 + $0x208] sm:$0xff]
                %217 = vst [vmem:[%s149 + $0x108] sm:$0xff] %v216
                %v218 = vld [vmem:[%s148 + $0x210] sm:$0xff]
                %219 = vst [vmem:[%s149 + $0x110] sm:$0xff] %v218
                %v220 = vld [vmem:[%s148 + $0x218] sm:$0xff]
                %221 = vst [vmem:[%s149 + $0x118] sm:$0xff] %v220
                %v222 = vld [vmem:[%s148 + $0x220] sm:$0xff]
                %223 = vst [vmem:[%s149 + $0x120] sm:$0xff] %v222
                %v224 = vld [vmem:[%s148 + $0x228] sm:$0xff]
                %225 = vst [vmem:[%s149 + $0x128] sm:$0xff] %v224
                %v226 = vld [vmem:[%s148 + $0x230] sm:$0xff]
                %227 = vst [vmem:[%s149 + $0x130] sm:$0xff] %v226
                %v228 = vld [vmem:[%s148 + $0x238] sm:$0xff]
                %229 = vst [vmem:[%s149 + $0x138] sm:$0xff] %v228
                %v230 = vld [vmem:[%s148 + $0x240] sm:$0xff]
                %231 = vst [vmem:[%s149 + $0x140] sm:$0xff] %v230
                %v232 = vld [vmem:[%s148 + $0x248] sm:$0xff]
                %233 = vst [vmem:[%s149 + $0x148] sm:$0xff] %v232
                %v234 = vld [vmem:[%s148 + $0x250] sm:$0xff]
                %235 = vst [vmem:[%s149 + $0x150] sm:$0xff] %v234
                %v236 = vld [vmem:[%s148 + $0x258] sm:$0xff]
                %237 = vst [vmem:[%s149 + $0x158] sm:$0xff] %v236
                %v238 = vld [vmem:[%s148 + $0x260] sm:$0xff]
                %239 = vst [vmem:[%s149 + $0x160] sm:$0xff] %v238
                %v240 = vld [vmem:[%s148 + $0x268] sm:$0xff]
                %241 = vst [vmem:[%s149 + $0x168] sm:$0xff] %v240
                %v242 = vld [vmem:[%s148 + $0x270] sm:$0xff]
                %243 = vst [vmem:[%s149 + $0x170] sm:$0xff] %v242
                %v244 = vld [vmem:[%s148 + $0x278] sm:$0xff]
                %245 = vst [vmem:[%s149 + $0x178] sm:$0xff] %v244
                %v246 = vld [vmem:[%s148 + $0x280] sm:$0xff]
                %247 = vst [vmem:[%s149 + $0x180] sm:$0xff] %v246
                %v248 = vld [vmem:[%s148 + $0x288] sm:$0xff]
                %249 = vst [vmem:[%s149 + $0x188] sm:$0xff] %v248
                %v250 = vld [vmem:[%s148 + $0x290] sm:$0xff]
                %251 = vst [vmem:[%s149 + $0x190] sm:$0xff] %v250
                %v252 = vld [vmem:[%s148 + $0x298] sm:$0xff]
                %253 = vst [vmem:[%s149 + $0x198] sm:$0xff] %v252
                %v254 = vld [vmem:[%s148 + $0x2a0] sm:$0xff]
                %255 = vst [vmem:[%s149 + $0x1a0] sm:$0xff] %v254
                %v256 = vld [vmem:[%s148 + $0x2a8] sm:$0xff]
                %257 = vst [vmem:[%s149 + $0x1a8] sm:$0xff] %v256
                %v258 = vld [vmem:[%s148 + $0x2b0] sm:$0xff]
                %259 = vst [vmem:[%s149 + $0x1b0] sm:$0xff] %v258
                %v260 = vld [vmem:[%s148 + $0x2b8] sm:$0xff]
                %261 = vst [vmem:[%s149 + $0x1b8] sm:$0xff] %v260
                %v262 = vld [vmem:[%s148 + $0x2c0] sm:$0xff]
                %263 = vst [vmem:[%s149 + $0x1c0] sm:$0xff] %v262
                %v264 = vld [vmem:[%s148 + $0x2c8] sm:$0xff]
                %265 = vst [vmem:[%s149 + $0x1c8] sm:$0xff] %v264
                %v266 = vld [vmem:[%s148 + $0x2d0] sm:$0xff]
                %267 = vst [vmem:[%s149 + $0x1d0] sm:$0xff] %v266
                %v268 = vld [vmem:[%s148 + $0x2d8] sm:$0xff]
                %269 = vst [vmem:[%s149 + $0x1d8] sm:$0xff] %v268
                %v270 = vld [vmem:[%s148 + $0x2e0] sm:$0xff]
                %271 = vst [vmem:[%s149 + $0x1e0] sm:$0xff] %v270
                %v272 = vld [vmem:[%s148 + $0x2e8] sm:$0xff]
                %273 = vst [vmem:[%s149 + $0x1e8] sm:$0xff] %v272
                %v274 = vld [vmem:[%s148 + $0x2f0] sm:$0xff]
                %275 = vst [vmem:[%s149 + $0x1f0] sm:$0xff] %v274
                %v276 = vld [vmem:[%s148 + $0x2f8] sm:$0xff]
                %277 = vst [vmem:[%s149 + $0x1f8] sm:$0xff] %v276
              $region41: #{_lambda_.5} parent=35 // loop_footer
                %s147 = sadd.s32 1, %s143
              $region42: #{_lambda_.5} parent=35 // loop_footer_branch
                %142 = sbr.rel target = $region38
              $region43: #{_lambda_.5} parent=35 // loop_exit
                _
            $region36: #{_lambda_.5} parent=31 // pred_fallthru
              _
            // Predicated region
            $region44: #{_lambda_.5} parent=31 // pred_check
              _
            $region45: #{_lambda_.5} parent=31 // pred_check_branch
              %279 = sbr.rel target = $region47
            $region46: #{_lambda_.5} parent=31 // pred_region
              _
            $region47: #{_lambda_.5} parent=31 // pred_fallthru
              _
          $region32: #{_lambda_.5} parent=27 // pred_fallthru
            _
          %280 = vnop
        $region28: #{_lambda_.5} parent=23 // pred_fallthru
          _
      $region24: #{_lambda_.5} parent=5 // pred_fallthru
        _
      %p281 = scmp.le.s32.totalorder 1, %s9
      %p282 = scmp.lt.s32.totalorder %s9, 3
      %p283 = pnand %p281, %p282
      %p284 = pneg %p283
      // Predicated region
      $region48: #{_lambda_.5} parent=5 // pred_check
        _
      $region49: #{_lambda_.5} parent=5 // pred_check_branch
        %286 = sbr.rel (%p283) target = $region51
      $region50: #{_lambda_.5} parent=5 // pred_region
        %s287 = ssub.s32 %s9, 1
        %s288 = sand.u32 %s22, 1
        %s289 = sand.u32 %s22, 1
        %s290 = smul.addr %s289, 512
        %s291 = scalar_lea.vmem [#allocation2], %s290
        // Predicated region
        $region52: #{_lambda_.5} parent=50 // pred_check
          %p292 = pneg %p35
        $region53: #{_lambda_.5} parent=50 // pred_check_branch
          %294 = sbr.rel (%p292) target = $region55
        $region54: #{_lambda_.5} parent=50 // pred_region
          _
        $region55: #{_lambda_.5} parent=50 // pred_fallthru
          _
        %s295 = sand.u32 %s22, 1
        %s296 = sand.u32 %s22, 1
        %s297 = smul.addr %s296, 512
        %s298 = scalar_lea.vmem [#allocation2], %s297
        %p299 = pneg %p35
        %p300 = pneg %p32
        %p301 = pneg %p56
        %p302 = pneg %p53
        %p303 = pneg %p77
        %p304 = pneg %p74
        %p305 = pneg %p103
        %p306 = pneg %p100
        %s307 = smul.u32 64, %s14
        %p308 = scmp.lt.s32.totalorder %s307, 127
        %s309 = scalar_select %p308, %s307, 127
        %s310 = smul.addr %s309, 2
        %s311 = scalar_lea.vmem %s3, %s310
        %s312 = smul.u32 64, %s14
        %s313 = smul.u32 64, %s14
        %p314 = scmp.lt.s32.totalorder %s313, 127
        %s315 = scalar_select %p314, %s313, 127
        %s316 = smul.addr %s315, 2
        %s317 = scalar_lea.vmem %s3, %s316
        %s318 = smul.u32 64, %s14
        %v320 = vld [vmem:[%s1] sm:$0x3]
        %v321 = vld [vmem:[%s291] sm:$0xff]
        %v322 = vld [vmem:[%s291 + $0x8] sm:$0xff]
        %v323 = vld [vmem:[%s291 + $0x10] sm:$0xff]
        %v324 = vld [vmem:[%s291 + $0x18] sm:$0xff]
        %v325 = vld [vmem:[%s291 + $0x20] sm:$0xff]
        %v326 = vld [vmem:[%s291 + $0x28] sm:$0xff]
        %v327 = vld [vmem:[%s291 + $0x30] sm:$0xff]
        %v328 = vld [vmem:[%s291 + $0x38] sm:$0xff]
        %v329 = vld [vmem:[%s291 + $0x40] sm:$0xff]
        %v330 = vld [vmem:[%s291 + $0x48] sm:$0xff]
        %v331 = vld [vmem:[%s291 + $0x50] sm:$0xff]
        %v332 = vld [vmem:[%s291 + $0x58] sm:$0xff]
        %v333 = vld [vmem:[%s291 + $0x60] sm:$0xff]
        %v334 = vld [vmem:[%s291 + $0x68] sm:$0xff]
        %v335 = vld [vmem:[%s291 + $0x70] sm:$0xff]
        %v336 = vld [vmem:[%s291 + $0x78] sm:$0xff]
        %v337 = vld [vmem:[%s291 + $0x80] sm:$0xff]
        %v338 = vld [vmem:[%s291 + $0x88] sm:$0xff]
        %v339 = vld [vmem:[%s291 + $0x90] sm:$0xff]
        %v340 = vld [vmem:[%s291 + $0x98] sm:$0xff]
        %v341 = vld [vmem:[%s291 + $0xa0] sm:$0xff]
        %v342 = vld [vmem:[%s291 + $0xa8] sm:$0xff]
        %v343 = vld [vmem:[%s291 + $0xb0] sm:$0xff]
        %v344 = vld [vmem:[%s291 + $0xb8] sm:$0xff]
        %v345 = vld [vmem:[%s291 + $0xc0] sm:$0xff]
        %v346 = vld [vmem:[%s291 + $0xc8] sm:$0xff]
        %v347 = vld [vmem:[%s291 + $0xd0] sm:$0xff]
        %v348 = vld [vmem:[%s291 + $0xd8] sm:$0xff]
        %v349 = vld [vmem:[%s291 + $0xe0] sm:$0xff]
        %v350 = vld [vmem:[%s291 + $0xe8] sm:$0xff]
        %v351 = vld [vmem:[%s291 + $0xf0] sm:$0xff]
        %v352 = vld [vmem:[%s291 + $0xf8] sm:$0xff]
        %v353 = vld [vmem:[%s291 + $0x100] sm:$0xff]
        %v354 = vld [vmem:[%s291 + $0x108] sm:$0xff]
        %v355 = vld [vmem:[%s291 + $0x110] sm:$0xff]
        %v356 = vld [vmem:[%s291 + $0x118] sm:$0xff]
        %v357 = vld [vmem:[%s291 + $0x120] sm:$0xff]
        %v358 = vld [vmem:[%s291 + $0x128] sm:$0xff]
        %v359 = vld [vmem:[%s291 + $0x130] sm:$0xff]
        %v360 = vld [vmem:[%s291 + $0x138] sm:$0xff]
        %v361 = vld [vmem:[%s291 + $0x140] sm:$0xff]
        %v362 = vld [vmem:[%s291 + $0x148] sm:$0xff]
        %v363 = vld [vmem:[%s291 + $0x150] sm:$0xff]
        %v364 = vld [vmem:[%s291 + $0x158] sm:$0xff]
        %v365 = vld [vmem:[%s291 + $0x160] sm:$0xff]
        %v366 = vld [vmem:[%s291 + $0x168] sm:$0xff]
        %v367 = vld [vmem:[%s291 + $0x170] sm:$0xff]
        %v368 = vld [vmem:[%s291 + $0x178] sm:$0xff]
        %v369 = vld [vmem:[%s291 + $0x180] sm:$0xff]
        %v370 = vld [vmem:[%s291 + $0x188] sm:$0xff]
        %v371 = vld [vmem:[%s291 + $0x190] sm:$0xff]
        %v372 = vld [vmem:[%s291 + $0x198] sm:$0xff]
        %v373 = vld [vmem:[%s291 + $0x1a0] sm:$0xff]
        %v374 = vld [vmem:[%s291 + $0x1a8] sm:$0xff]
        %v375 = vld [vmem:[%s291 + $0x1b0] sm:$0xff]
        %v376 = vld [vmem:[%s291 + $0x1b8] sm:$0xff]
        %v377 = vld [vmem:[%s291 + $0x1c0] sm:$0xff]
        %v378 = vld [vmem:[%s291 + $0x1c8] sm:$0xff]
        %v379 = vld [vmem:[%s291 + $0x1d0] sm:$0xff]
        %v380 = vld [vmem:[%s291 + $0x1d8] sm:$0xff]
        %v381 = vld [vmem:[%s291 + $0x1e0] sm:$0xff]
        %v382 = vld [vmem:[%s291 + $0x1e8] sm:$0xff]
        %v383 = vld [vmem:[%s291 + $0x1f0] sm:$0xff]
        %v384 = vld [vmem:[%s291 + $0x1f8] sm:$0xff]
        %v385 = vld [vmem:[%s2] sm:$0xf]
        %387 = vset.pattern.permute.xlu0 0
        %388 = vperm.xlu0 %387, %v385
        %v389 = vpop.permute.xlu0 %388
        %v455 = vunpack.c.l.b16 %v321
        %v456 = vunpack.c.h.b16 %v321
        %v457 = vunpack.c.l.b16 %v322
        %v458 = vunpack.c.h.b16 %v322
        %v459 = vunpack.c.l.b16 %v323
        %v460 = vunpack.c.h.b16 %v323
        %v461 = vunpack.c.l.b16 %v324
        %v462 = vunpack.c.h.b16 %v324
        %v463 = vunpack.c.l.b16 %v325
        %v464 = vunpack.c.h.b16 %v325
        %v465 = vunpack.c.l.b16 %v326
        %v466 = vunpack.c.h.b16 %v326
        %v467 = vunpack.c.l.b16 %v327
        %v468 = vunpack.c.h.b16 %v327
        %v469 = vunpack.c.l.b16 %v328
        %v470 = vunpack.c.h.b16 %v328
        %v471 = vunpack.c.l.b16 %v329
        %v472 = vunpack.c.h.b16 %v329
        %v473 = vunpack.c.l.b16 %v330
        %v474 = vunpack.c.h.b16 %v330
        %v475 = vunpack.c.l.b16 %v331
        %v476 = vunpack.c.h.b16 %v331
        %v477 = vunpack.c.l.b16 %v332
        %v478 = vunpack.c.h.b16 %v332
        %v479 = vunpack.c.l.b16 %v333
        %v480 = vunpack.c.h.b16 %v333
        %v481 = vunpack.c.l.b16 %v334
        %v482 = vunpack.c.h.b16 %v334
        %v483 = vunpack.c.l.b16 %v335
        %v484 = vunpack.c.h.b16 %v335
        %v485 = vunpack.c.l.b16 %v336
        %v486 = vunpack.c.h.b16 %v336
        %v487 = vunpack.c.l.b16 %v337
        %v488 = vunpack.c.h.b16 %v337
        %v489 = vunpack.c.l.b16 %v338
        %v490 = vunpack.c.h.b16 %v338
        %v491 = vunpack.c.l.b16 %v339
        %v492 = vunpack.c.h.b16 %v339
        %v493 = vunpack.c.l.b16 %v340
        %v494 = vunpack.c.h.b16 %v340
        %v495 = vunpack.c.l.b16 %v341
        %v496 = vunpack.c.h.b16 %v341
        %v497 = vunpack.c.l.b16 %v342
        %v498 = vunpack.c.h.b16 %v342
        %v499 = vunpack.c.l.b16 %v343
        %v500 = vunpack.c.h.b16 %v343
        %v501 = vunpack.c.l.b16 %v344
        %v502 = vunpack.c.h.b16 %v344
        %v503 = vunpack.c.l.b16 %v345
        %v504 = vunpack.c.h.b16 %v345
        %v505 = vunpack.c.l.b16 %v346
        %v506 = vunpack.c.h.b16 %v346
        %v507 = vunpack.c.l.b16 %v347
        %v508 = vunpack.c.h.b16 %v347
        %v509 = vunpack.c.l.b16 %v348
        %v510 = vunpack.c.h.b16 %v348
        %v511 = vunpack.c.l.b16 %v349
        %v512 = vunpack.c.h.b16 %v349
        %v513 = vunpack.c.l.b16 %v350
        %v514 = vunpack.c.h.b16 %v350
        %v515 = vunpack.c.l.b16 %v351
        %v516 = vunpack.c.h.b16 %v351
        %v517 = vunpack.c.l.b16 %v352
        %v518 = vunpack.c.h.b16 %v352
        %v519 = vunpack.c.l.b16 %v353
        %v520 = vunpack.c.h.b16 %v353
        %v521 = vunpack.c.l.b16 %v354
        %v522 = vunpack.c.h.b16 %v354
        %v523 = vunpack.c.l.b16 %v355
        %v524 = vunpack.c.h.b16 %v355
        %v525 = vunpack.c.l.b16 %v356
        %v526 = vunpack.c.h.b16 %v356
        %v527 = vunpack.c.l.b16 %v357
        %v528 = vunpack.c.h.b16 %v357
        %v529 = vunpack.c.l.b16 %v358
        %v530 = vunpack.c.h.b16 %v358
        %v531 = vunpack.c.l.b16 %v359
        %v532 = vunpack.c.h.b16 %v359
        %v533 = vunpack.c.l.b16 %v360
        %v534 = vunpack.c.h.b16 %v360
        %v535 = vunpack.c.l.b16 %v361
        %v536 = vunpack.c.h.b16 %v361
        %v537 = vunpack.c.l.b16 %v362
        %v538 = vunpack.c.h.b16 %v362
        %v539 = vunpack.c.l.b16 %v363
        %v540 = vunpack.c.h.b16 %v363
        %v541 = vunpack.c.l.b16 %v364
        %v542 = vunpack.c.h.b16 %v364
        %v543 = vunpack.c.l.b16 %v365
        %v544 = vunpack.c.h.b16 %v365
        %v545 = vunpack.c.l.b16 %v366
        %v546 = vunpack.c.h.b16 %v366
        %v547 = vunpack.c.l.b16 %v367
        %v548 = vunpack.c.h.b16 %v367
        %v549 = vunpack.c.l.b16 %v368
        %v550 = vunpack.c.h.b16 %v368
        %v551 = vunpack.c.l.b16 %v369
        %v552 = vunpack.c.h.b16 %v369
        %v553 = vunpack.c.l.b16 %v370
        %v554 = vunpack.c.h.b16 %v370
        %v555 = vunpack.c.l.b16 %v371
        %v556 = vunpack.c.h.b16 %v371
        %v557 = vunpack.c.l.b16 %v372
        %v558 = vunpack.c.h.b16 %v372
        %v559 = vunpack.c.l.b16 %v373
        %v560 = vunpack.c.h.b16 %v373
        %v561 = vunpack.c.l.b16 %v374
        %v562 = vunpack.c.h.b16 %v374
        %v563 = vunpack.c.l.b16 %v375
        %v564 = vunpack.c.h.b16 %v375
        %v565 = vunpack.c.l.b16 %v376
        %v566 = vunpack.c.h.b16 %v376
        %v567 = vunpack.c.l.b16 %v377
        %v568 = vunpack.c.h.b16 %v377
        %v569 = vunpack.c.l.b16 %v378
        %v570 = vunpack.c.h.b16 %v378
        %v571 = vunpack.c.l.b16 %v379
        %v572 = vunpack.c.h.b16 %v379
        %v573 = vunpack.c.l.b16 %v380
        %v574 = vunpack.c.h.b16 %v380
        %v575 = vunpack.c.l.b16 %v381
        %v576 = vunpack.c.h.b16 %v381
        %v577 = vunpack.c.l.b16 %v382
        %v578 = vunpack.c.h.b16 %v382
        %v579 = vunpack.c.l.b16 %v383
        %v580 = vunpack.c.h.b16 %v383
        %v581 = vunpack.c.l.b16 %v384
        %v582 = vunpack.c.h.b16 %v384
        %v583 = vpack.c.b16 %v519, %v455
        %v584 = vpack.c.b16 %v520, %v456
        %v585 = vpack.c.b16 %v521, %v457
        %v586 = vpack.c.b16 %v522, %v458
        %v587 = vpack.c.b16 %v523, %v459
        %v588 = vpack.c.b16 %v524, %v460
        %v589 = vpack.c.b16 %v525, %v461
        %v590 = vpack.c.b16 %v526, %v462
        %v591 = vpack.c.b16 %v527, %v463
        %v592 = vpack.c.b16 %v528, %v464
        %v593 = vpack.c.b16 %v529, %v465
        %v594 = vpack.c.b16 %v530, %v466
        %v595 = vpack.c.b16 %v531, %v467
        %v596 = vpack.c.b16 %v532, %v468
        %v597 = vpack.c.b16 %v533, %v469
        %v598 = vpack.c.b16 %v534, %v470
        %v599 = vpack.c.b16 %v535, %v471
        %v600 = vpack.c.b16 %v536, %v472
        %v601 = vpack.c.b16 %v537, %v473
        %v602 = vpack.c.b16 %v538, %v474
        %v603 = vpack.c.b16 %v539, %v475
        %v604 = vpack.c.b16 %v540, %v476
        %v605 = vpack.c.b16 %v541, %v477
        %v606 = vpack.c.b16 %v542, %v478
        %v607 = vpack.c.b16 %v543, %v479
        %v608 = vpack.c.b16 %v544, %v480
        %v609 = vpack.c.b16 %v545, %v481
        %v610 = vpack.c.b16 %v546, %v482
        %v611 = vpack.c.b16 %v547, %v483
        %v612 = vpack.c.b16 %v548, %v484
        %v613 = vpack.c.b16 %v549, %v485
        %v614 = vpack.c.b16 %v550, %v486
        %v615 = vpack.c.b16 %v551, %v487
        %v616 = vpack.c.b16 %v552, %v488
        %v617 = vpack.c.b16 %v553, %v489
        %v618 = vpack.c.b16 %v554, %v490
        %v619 = vpack.c.b16 %v555, %v491
        %v620 = vpack.c.b16 %v556, %v492
        %v621 = vpack.c.b16 %v557, %v493
        %v622 = vpack.c.b16 %v558, %v494
        %v623 = vpack.c.b16 %v559, %v495
        %v624 = vpack.c.b16 %v560, %v496
        %v625 = vpack.c.b16 %v561, %v497
        %v626 = vpack.c.b16 %v562, %v498
        %v627 = vpack.c.b16 %v563, %v499
        %v628 = vpack.c.b16 %v564, %v500
        %v629 = vpack.c.b16 %v565, %v501
        %v630 = vpack.c.b16 %v566, %v502
        %v631 = vpack.c.b16 %v567, %v503
        %v632 = vpack.c.b16 %v568, %v504
        %v633 = vpack.c.b16 %v569, %v505
        %v634 = vpack.c.b16 %v570, %v506
        %v635 = vpack.c.b16 %v571, %v507
        %v636 = vpack.c.b16 %v572, %v508
        %v637 = vpack.c.b16 %v573, %v509
        %v638 = vpack.c.b16 %v574, %v510
        %v639 = vpack.c.b16 %v575, %v511
        %v640 = vpack.c.b16 %v576, %v512
        %v641 = vpack.c.b16 %v577, %v513
        %v642 = vpack.c.b16 %v578, %v514
        %v643 = vpack.c.b16 %v579, %v515
        %v644 = vpack.c.b16 %v580, %v516
        %v645 = vpack.c.b16 %v581, %v517
        %v646 = vpack.c.b16 %v582, %v518
        %vm711 = vcmask 130048
        %v713 = vsel %vm711, %v320, 0
        %715 = vmatpush.bf16.msra.mxu0 0
        %716 = vmatpush.bf16.msra.mxu0 0
        %717 = vmatpush.bf16.msra.mxu0 0
        %718 = vmatpush.bf16.msra.mxu0 0
        %719 = vmatpush.bf16.msra.mxu0 0
        %720 = vmatpush.bf16.msra.mxu0 0
        %721 = vmatpush.bf16.msra.mxu0 0
        %722 = vmatpush.bf16.msra.mxu0 %v583
        %723 = vmatmul.bf16.gmra.mxu0 %v713
        %v724 = vpop.f32.mrf.mxu0
        %v725 = vadd.f32 %v389, %v724
        %v726 = vpop.f32.mrf.mxu0
        %727 = vdwg.mxu0
        %728 = vmatpush.bf16.msra.mxu0 0
        %729 = vmatpush.bf16.msra.mxu0 0
        %730 = vmatpush.bf16.msra.mxu0 0
        %731 = vmatpush.bf16.msra.mxu0 0
        %732 = vmatpush.bf16.msra.mxu0 0
        %733 = vmatpush.bf16.msra.mxu0 0
        %734 = vmatpush.bf16.msra.mxu0 0
        %735 = vmatpush.bf16.msra.mxu0 %v584
        %736 = vmatmul.bf16.gmra.mxu0 %v713
        %v737 = vpop.f32.mrf.mxu0
        %v738 = vadd.f32 %v389, %v737
        %v739 = vpop.f32.mrf.mxu0
        %740 = vdwg.mxu0
        %741 = vmatpush.bf16.msra.mxu0 0
        %742 = vmatpush.bf16.msra.mxu0 0
        %743 = vmatpush.bf16.msra.mxu0 0
        %744 = vmatpush.bf16.msra.mxu0 0
        %745 = vmatpush.bf16.msra.mxu0 0
        %746 = vmatpush.bf16.msra.mxu0 0
        %747 = vmatpush.bf16.msra.mxu0 0
        %748 = vmatpush.bf16.msra.mxu0 %v585
        %749 = vmatmul.bf16.gmra.mxu0 %v713
        %v750 = vpop.f32.mrf.mxu0
        %v751 = vadd.f32 %v389, %v750
        %v752 = vpop.f32.mrf.mxu0
        %753 = vdwg.mxu0
        %754 = vmatpush.bf16.msra.mxu0 0
        %755 = vmatpush.bf16.msra.mxu0 0
        %756 = vmatpush.bf16.msra.mxu0 0
        %757 = vmatpush.bf16.msra.mxu0 0
        %758 = vmatpush.bf16.msra.mxu0 0
        %759 = vmatpush.bf16.msra.mxu0 0
        %760 = vmatpush.bf16.msra.mxu0 0
        %761 = vmatpush.bf16.msra.mxu0 %v586
        %762 = vmatmul.bf16.gmra.mxu0 %v713
        %v763 = vpop.f32.mrf.mxu0
        %v764 = vadd.f32 %v389, %v763
        %v765 = vpop.f32.mrf.mxu0
        %766 = vdwg.mxu0
        %767 = vmatpush.bf16.msra.mxu0 0
        %768 = vmatpush.bf16.msra.mxu0 0
        %769 = vmatpush.bf16.msra.mxu0 0
        %770 = vmatpush.bf16.msra.mxu0 0
        %771 = vmatpush.bf16.msra.mxu0 0
        %772 = vmatpush.bf16.msra.mxu0 0
        %773 = vmatpush.bf16.msra.mxu0 0
        %774 = vmatpush.bf16.msra.mxu0 %v587
        %775 = vmatmul.bf16.gmra.mxu0 %v713
        %v776 = vpop.f32.mrf.mxu0
        %v777 = vadd.f32 %v389, %v776
        %v778 = vpop.f32.mrf.mxu0
        %779 = vdwg.mxu0
        %780 = vmatpush.bf16.msra.mxu0 0
        %781 = vmatpush.bf16.msra.mxu0 0
        %782 = vmatpush.bf16.msra.mxu0 0
        %783 = vmatpush.bf16.msra.mxu0 0
        %784 = vmatpush.bf16.msra.mxu0 0
        %785 = vmatpush.bf16.msra.mxu0 0
        %786 = vmatpush.bf16.msra.mxu0 0
        %787 = vmatpush.bf16.msra.mxu0 %v588
        %788 = vmatmul.bf16.gmra.mxu0 %v713
        %v789 = vpop.f32.mrf.mxu0
        %v790 = vadd.f32 %v389, %v789
        %v791 = vpop.f32.mrf.mxu0
        %792 = vdwg.mxu0
        %793 = vmatpush.bf16.msra.mxu0 0
        %794 = vmatpush.bf16.msra.mxu0 0
        %795 = vmatpush.bf16.msra.mxu0 0
        %796 = vmatpush.bf16.msra.mxu0 0
        %797 = vmatpush.bf16.msra.mxu0 0
        %798 = vmatpush.bf16.msra.mxu0 0
        %799 = vmatpush.bf16.msra.mxu0 0
        %800 = vmatpush.bf16.msra.mxu0 %v589
        %801 = vmatmul.bf16.gmra.mxu0 %v713
        %v802 = vpop.f32.mrf.mxu0
        %v803 = vadd.f32 %v389, %v802
        %v804 = vpop.f32.mrf.mxu0
        %805 = vdwg.mxu0
        %806 = vmatpush.bf16.msra.mxu0 0
        %807 = vmatpush.bf16.msra.mxu0 0
        %808 = vmatpush.bf16.msra.mxu0 0
        %809 = vmatpush.bf16.msra.mxu0 0
        %810 = vmatpush.bf16.msra.mxu0 0
        %811 = vmatpush.bf16.msra.mxu0 0
        %812 = vmatpush.bf16.msra.mxu0 0
        %813 = vmatpush.bf16.msra.mxu0 %v590
        %814 = vmatmul.bf16.gmra.mxu0 %v713
        %v815 = vpop.f32.mrf.mxu0
        %v816 = vadd.f32 %v389, %v815
        %v817 = vpop.f32.mrf.mxu0
        %818 = vdwg.mxu0
        %819 = vmatpush.bf16.msra.mxu0 0
        %820 = vmatpush.bf16.msra.mxu0 0
        %821 = vmatpush.bf16.msra.mxu0 0
        %822 = vmatpush.bf16.msra.mxu0 0
        %823 = vmatpush.bf16.msra.mxu0 0
        %824 = vmatpush.bf16.msra.mxu0 0
        %825 = vmatpush.bf16.msra.mxu0 0
        %826 = vmatpush.bf16.msra.mxu0 %v591
        %827 = vmatmul.bf16.gmra.mxu0 %v713
        %v828 = vpop.f32.mrf.mxu0
        %v829 = vadd.f32 %v389, %v828
        %v830 = vpop.f32.mrf.mxu0
        %831 = vdwg.mxu0
        %832 = vmatpush.bf16.msra.mxu0 0
        %833 = vmatpush.bf16.msra.mxu0 0
        %834 = vmatpush.bf16.msra.mxu0 0
        %835 = vmatpush.bf16.msra.mxu0 0
        %836 = vmatpush.bf16.msra.mxu0 0
        %837 = vmatpush.bf16.msra.mxu0 0
        %838 = vmatpush.bf16.msra.mxu0 0
        %839 = vmatpush.bf16.msra.mxu0 %v592
        %840 = vmatmul.bf16.gmra.mxu0 %v713
        %v841 = vpop.f32.mrf.mxu0
        %v842 = vadd.f32 %v389, %v841
        %v843 = vpop.f32.mrf.mxu0
        %844 = vdwg.mxu0
        %845 = vmatpush.bf16.msra.mxu0 0
        %846 = vmatpush.bf16.msra.mxu0 0
        %847 = vmatpush.bf16.msra.mxu0 0
        %848 = vmatpush.bf16.msra.mxu0 0
        %849 = vmatpush.bf16.msra.mxu0 0
        %850 = vmatpush.bf16.msra.mxu0 0
        %851 = vmatpush.bf16.msra.mxu0 0
        %852 = vmatpush.bf16.msra.mxu0 %v593
        %853 = vmatmul.bf16.gmra.mxu0 %v713
        %v854 = vpop.f32.mrf.mxu0
        %v855 = vadd.f32 %v389, %v854
        %v856 = vpop.f32.mrf.mxu0
        %857 = vdwg.mxu0
        %858 = vmatpush.bf16.msra.mxu0 0
        %859 = vmatpush.bf16.msra.mxu0 0
        %860 = vmatpush.bf16.msra.mxu0 0
        %861 = vmatpush.bf16.msra.mxu0 0
        %862 = vmatpush.bf16.msra.mxu0 0
        %863 = vmatpush.bf16.msra.mxu0 0
        %864 = vmatpush.bf16.msra.mxu0 0
        %865 = vmatpush.bf16.msra.mxu0 %v594
        %866 = vmatmul.bf16.gmra.mxu0 %v713
        %v867 = vpop.f32.mrf.mxu0
        %v868 = vadd.f32 %v389, %v867
        %v869 = vpop.f32.mrf.mxu0
        %870 = vdwg.mxu0
        %871 = vmatpush.bf16.msra.mxu0 0
        %872 = vmatpush.bf16.msra.mxu0 0
        %873 = vmatpush.bf16.msra.mxu0 0
        %874 = vmatpush.bf16.msra.mxu0 0
        %875 = vmatpush.bf16.msra.mxu0 0
        %876 = vmatpush.bf16.msra.mxu0 0
        %877 = vmatpush.bf16.msra.mxu0 0
        %878 = vmatpush.bf16.msra.mxu0 %v595
        %879 = vmatmul.bf16.gmra.mxu0 %v713
        %v880 = vpop.f32.mrf.mxu0
        %v881 = vadd.f32 %v389, %v880
        %v882 = vpop.f32.mrf.mxu0
        %883 = vdwg.mxu0
        %884 = vmatpush.bf16.msra.mxu0 0
        %885 = vmatpush.bf16.msra.mxu0 0
        %886 = vmatpush.bf16.msra.mxu0 0
        %887 = vmatpush.bf16.msra.mxu0 0
        %888 = vmatpush.bf16.msra.mxu0 0
        %889 = vmatpush.bf16.msra.mxu0 0
        %890 = vmatpush.bf16.msra.mxu0 0
        %891 = vmatpush.bf16.msra.mxu0 %v596
        %892 = vmatmul.bf16.gmra.mxu0 %v713
        %v893 = vpop.f32.mrf.mxu0
        %v894 = vadd.f32 %v389, %v893
        %v895 = vpop.f32.mrf.mxu0
        %896 = vdwg.mxu0
        %897 = vmatpush.bf16.msra.mxu0 0
        %898 = vmatpush.bf16.msra.mxu0 0
        %899 = vmatpush.bf16.msra.mxu0 0
        %900 = vmatpush.bf16.msra.mxu0 0
        %901 = vmatpush.bf16.msra.mxu0 0
        %902 = vmatpush.bf16.msra.mxu0 0
        %903 = vmatpush.bf16.msra.mxu0 0
        %904 = vmatpush.bf16.msra.mxu0 %v597
        %905 = vmatmul.bf16.gmra.mxu0 %v713
        %v906 = vpop.f32.mrf.mxu0
        %v907 = vadd.f32 %v389, %v906
        %v908 = vpop.f32.mrf.mxu0
        %909 = vdwg.mxu0
        %910 = vmatpush.bf16.msra.mxu0 0
        %911 = vmatpush.bf16.msra.mxu0 0
        %912 = vmatpush.bf16.msra.mxu0 0
        %913 = vmatpush.bf16.msra.mxu0 0
        %914 = vmatpush.bf16.msra.mxu0 0
        %915 = vmatpush.bf16.msra.mxu0 0
        %916 = vmatpush.bf16.msra.mxu0 0
        %917 = vmatpush.bf16.msra.mxu0 %v598
        %918 = vmatmul.bf16.gmra.mxu0 %v713
        %v919 = vpop.f32.mrf.mxu0
        %v920 = vadd.f32 %v389, %v919
        %v921 = vpop.f32.mrf.mxu0
        %922 = vdwg.mxu0
        %923 = vmatpush.bf16.msra.mxu0 0
        %924 = vmatpush.bf16.msra.mxu0 0
        %925 = vmatpush.bf16.msra.mxu0 0
        %926 = vmatpush.bf16.msra.mxu0 0
        %927 = vmatpush.bf16.msra.mxu0 0
        %928 = vmatpush.bf16.msra.mxu0 0
        %929 = vmatpush.bf16.msra.mxu0 0
        %930 = vmatpush.bf16.msra.mxu0 %v599
        %931 = vmatmul.bf16.gmra.mxu0 %v713
        %v932 = vpop.f32.mrf.mxu0
        %v933 = vadd.f32 %v389, %v932
        %v934 = vpop.f32.mrf.mxu0
        %935 = vdwg.mxu0
        %936 = vmatpush.bf16.msra.mxu0 0
        %937 = vmatpush.bf16.msra.mxu0 0
        %938 = vmatpush.bf16.msra.mxu0 0
        %939 = vmatpush.bf16.msra.mxu0 0
        %940 = vmatpush.bf16.msra.mxu0 0
        %941 = vmatpush.bf16.msra.mxu0 0
        %942 = vmatpush.bf16.msra.mxu0 0
        %943 = vmatpush.bf16.msra.mxu0 %v600
        %944 = vmatmul.bf16.gmra.mxu0 %v713
        %v945 = vpop.f32.mrf.mxu0
        %v946 = vadd.f32 %v389, %v945
        %v947 = vpop.f32.mrf.mxu0
        %948 = vdwg.mxu0
        %949 = vmatpush.bf16.msra.mxu0 0
        %950 = vmatpush.bf16.msra.mxu0 0
        %951 = vmatpush.bf16.msra.mxu0 0
        %952 = vmatpush.bf16.msra.mxu0 0
        %953 = vmatpush.bf16.msra.mxu0 0
        %954 = vmatpush.bf16.msra.mxu0 0
        %955 = vmatpush.bf16.msra.mxu0 0
        %956 = vmatpush.bf16.msra.mxu0 %v601
        %957 = vmatmul.bf16.gmra.mxu0 %v713
        %v958 = vpop.f32.mrf.mxu0
        %v959 = vadd.f32 %v389, %v958
        %v960 = vpop.f32.mrf.mxu0
        %961 = vdwg.mxu0
        %962 = vmatpush.bf16.msra.mxu0 0
        %963 = vmatpush.bf16.msra.mxu0 0
        %964 = vmatpush.bf16.msra.mxu0 0
        %965 = vmatpush.bf16.msra.mxu0 0
        %966 = vmatpush.bf16.msra.mxu0 0
        %967 = vmatpush.bf16.msra.mxu0 0
        %968 = vmatpush.bf16.msra.mxu0 0
        %969 = vmatpush.bf16.msra.mxu0 %v602
        %970 = vmatmul.bf16.gmra.mxu0 %v713
        %v971 = vpop.f32.mrf.mxu0
        %v972 = vadd.f32 %v389, %v971
        %v973 = vpop.f32.mrf.mxu0
        %974 = vdwg.mxu0
        %975 = vmatpush.bf16.msra.mxu0 0
        %976 = vmatpush.bf16.msra.mxu0 0
        %977 = vmatpush.bf16.msra.mxu0 0
        %978 = vmatpush.bf16.msra.mxu0 0
        %979 = vmatpush.bf16.msra.mxu0 0
        %980 = vmatpush.bf16.msra.mxu0 0
        %981 = vmatpush.bf16.msra.mxu0 0
        %982 = vmatpush.bf16.msra.mxu0 %v603
        %983 = vmatmul.bf16.gmra.mxu0 %v713
        %v984 = vpop.f32.mrf.mxu0
        %v985 = vadd.f32 %v389, %v984
        %v986 = vpop.f32.mrf.mxu0
        %987 = vdwg.mxu0
        %988 = vmatpush.bf16.msra.mxu0 0
        %989 = vmatpush.bf16.msra.mxu0 0
        %990 = vmatpush.bf16.msra.mxu0 0
        %991 = vmatpush.bf16.msra.mxu0 0
        %992 = vmatpush.bf16.msra.mxu0 0
        %993 = vmatpush.bf16.msra.mxu0 0
        %994 = vmatpush.bf16.msra.mxu0 0
        %995 = vmatpush.bf16.msra.mxu0 %v604
        %996 = vmatmul.bf16.gmra.mxu0 %v713
        %v997 = vpop.f32.mrf.mxu0
        %v998 = vadd.f32 %v389, %v997
        %v999 = vpop.f32.mrf.mxu0
        %1000 = vdwg.mxu0
        %1001 = vmatpush.bf16.msra.mxu0 0
        %1002 = vmatpush.bf16.msra.mxu0 0
        %1003 = vmatpush.bf16.msra.mxu0 0
        %1004 = vmatpush.bf16.msra.mxu0 0
        %1005 = vmatpush.bf16.msra.mxu0 0
        %1006 = vmatpush.bf16.msra.mxu0 0
        %1007 = vmatpush.bf16.msra.mxu0 0
        %1008 = vmatpush.bf16.msra.mxu0 %v605
        %1009 = vmatmul.bf16.gmra.mxu0 %v713
        %v1010 = vpop.f32.mrf.mxu0
        %v1011 = vadd.f32 %v389, %v1010
        %v1012 = vpop.f32.mrf.mxu0
        %1013 = vdwg.mxu0
        %1014 = vmatpush.bf16.msra.mxu0 0
        %1015 = vmatpush.bf16.msra.mxu0 0
        %1016 = vmatpush.bf16.msra.mxu0 0
        %1017 = vmatpush.bf16.msra.mxu0 0
        %1018 = vmatpush.bf16.msra.mxu0 0
        %1019 = vmatpush.bf16.msra.mxu0 0
        %1020 = vmatpush.bf16.msra.mxu0 0
        %1021 = vmatpush.bf16.msra.mxu0 %v606
        %1022 = vmatmul.bf16.gmra.mxu0 %v713
        %v1023 = vpop.f32.mrf.mxu0
        %v1024 = vadd.f32 %v389, %v1023
        %v1025 = vpop.f32.mrf.mxu0
        %1026 = vdwg.mxu0
        %1027 = vmatpush.bf16.msra.mxu0 0
        %1028 = vmatpush.bf16.msra.mxu0 0
        %1029 = vmatpush.bf16.msra.mxu0 0
        %1030 = vmatpush.bf16.msra.mxu0 0
        %1031 = vmatpush.bf16.msra.mxu0 0
        %1032 = vmatpush.bf16.msra.mxu0 0
        %1033 = vmatpush.bf16.msra.mxu0 0
        %1034 = vmatpush.bf16.msra.mxu0 %v607
        %1035 = vmatmul.bf16.gmra.mxu0 %v713
        %v1036 = vpop.f32.mrf.mxu0
        %v1037 = vadd.f32 %v389, %v1036
        %v1038 = vpop.f32.mrf.mxu0
        %1039 = vdwg.mxu0
        %1040 = vmatpush.bf16.msra.mxu0 0
        %1041 = vmatpush.bf16.msra.mxu0 0
        %1042 = vmatpush.bf16.msra.mxu0 0
        %1043 = vmatpush.bf16.msra.mxu0 0
        %1044 = vmatpush.bf16.msra.mxu0 0
        %1045 = vmatpush.bf16.msra.mxu0 0
        %1046 = vmatpush.bf16.msra.mxu0 0
        %1047 = vmatpush.bf16.msra.mxu0 %v608
        %1048 = vmatmul.bf16.gmra.mxu0 %v713
        %v1049 = vpop.f32.mrf.mxu0
        %v1050 = vadd.f32 %v389, %v1049
        %v1051 = vpop.f32.mrf.mxu0
        %1052 = vdwg.mxu0
        %1053 = vmatpush.bf16.msra.mxu0 0
        %1054 = vmatpush.bf16.msra.mxu0 0
        %1055 = vmatpush.bf16.msra.mxu0 0
        %1056 = vmatpush.bf16.msra.mxu0 0
        %1057 = vmatpush.bf16.msra.mxu0 0
        %1058 = vmatpush.bf16.msra.mxu0 0
        %1059 = vmatpush.bf16.msra.mxu0 0
        %1060 = vmatpush.bf16.msra.mxu0 %v609
        %1061 = vmatmul.bf16.gmra.mxu0 %v713
        %v1062 = vpop.f32.mrf.mxu0
        %v1063 = vadd.f32 %v389, %v1062
        %v1064 = vpop.f32.mrf.mxu0
        %1065 = vdwg.mxu0
        %1066 = vmatpush.bf16.msra.mxu0 0
        %1067 = vmatpush.bf16.msra.mxu0 0
        %1068 = vmatpush.bf16.msra.mxu0 0
        %1069 = vmatpush.bf16.msra.mxu0 0
        %1070 = vmatpush.bf16.msra.mxu0 0
        %1071 = vmatpush.bf16.msra.mxu0 0
        %1072 = vmatpush.bf16.msra.mxu0 0
        %1073 = vmatpush.bf16.msra.mxu0 %v610
        %1074 = vmatmul.bf16.gmra.mxu0 %v713
        %v1075 = vpop.f32.mrf.mxu0
        %v1076 = vadd.f32 %v389, %v1075
        %v1077 = vpop.f32.mrf.mxu0
        %1078 = vdwg.mxu0
        %1079 = vmatpush.bf16.msra.mxu0 0
        %1080 = vmatpush.bf16.msra.mxu0 0
        %1081 = vmatpush.bf16.msra.mxu0 0
        %1082 = vmatpush.bf16.msra.mxu0 0
        %1083 = vmatpush.bf16.msra.mxu0 0
        %1084 = vmatpush.bf16.msra.mxu0 0
        %1085 = vmatpush.bf16.msra.mxu0 0
        %1086 = vmatpush.bf16.msra.mxu0 %v611
        %1087 = vmatmul.bf16.gmra.mxu0 %v713
        %v1088 = vpop.f32.mrf.mxu0
        %v1089 = vadd.f32 %v389, %v1088
        %v1090 = vpop.f32.mrf.mxu0
        %1091 = vdwg.mxu0
        %1092 = vmatpush.bf16.msra.mxu0 0
        %1093 = vmatpush.bf16.msra.mxu0 0
        %1094 = vmatpush.bf16.msra.mxu0 0
        %1095 = vmatpush.bf16.msra.mxu0 0
        %1096 = vmatpush.bf16.msra.mxu0 0
        %1097 = vmatpush.bf16.msra.mxu0 0
        %1098 = vmatpush.bf16.msra.mxu0 0
        %1099 = vmatpush.bf16.msra.mxu0 %v612
        %1100 = vmatmul.bf16.gmra.mxu0 %v713
        %v1101 = vpop.f32.mrf.mxu0
        %v1102 = vadd.f32 %v389, %v1101
        %v1103 = vpop.f32.mrf.mxu0
        %1104 = vdwg.mxu0
        %1105 = vmatpush.bf16.msra.mxu0 0
        %1106 = vmatpush.bf16.msra.mxu0 0
        %1107 = vmatpush.bf16.msra.mxu0 0
        %1108 = vmatpush.bf16.msra.mxu0 0
        %1109 = vmatpush.bf16.msra.mxu0 0
        %1110 = vmatpush.bf16.msra.mxu0 0
        %1111 = vmatpush.bf16.msra.mxu0 0
        %1112 = vmatpush.bf16.msra.mxu0 %v613
        %1113 = vmatmul.bf16.gmra.mxu0 %v713
        %v1114 = vpop.f32.mrf.mxu0
        %v1115 = vadd.f32 %v389, %v1114
        %v1116 = vpop.f32.mrf.mxu0
        %1117 = vdwg.mxu0
        %1118 = vmatpush.bf16.msra.mxu0 0
        %1119 = vmatpush.bf16.msra.mxu0 0
        %1120 = vmatpush.bf16.msra.mxu0 0
        %1121 = vmatpush.bf16.msra.mxu0 0
        %1122 = vmatpush.bf16.msra.mxu0 0
        %1123 = vmatpush.bf16.msra.mxu0 0
        %1124 = vmatpush.bf16.msra.mxu0 0
        %1125 = vmatpush.bf16.msra.mxu0 %v614
        %1126 = vmatmul.bf16.gmra.mxu0 %v713
        %v1127 = vpop.f32.mrf.mxu0
        %v1128 = vadd.f32 %v389, %v1127
        %v1129 = vpop.f32.mrf.mxu0
        %1130 = vdwg.mxu0
        %1131 = vmatpush.bf16.msra.mxu0 0
        %1132 = vmatpush.bf16.msra.mxu0 0
        %1133 = vmatpush.bf16.msra.mxu0 0
        %1134 = vmatpush.bf16.msra.mxu0 0
        %1135 = vmatpush.bf16.msra.mxu0 0
        %1136 = vmatpush.bf16.msra.mxu0 0
        %1137 = vmatpush.bf16.msra.mxu0 0
        %1138 = vmatpush.bf16.msra.mxu0 %v615
        %1139 = vmatmul.bf16.gmra.mxu0 %v713
        %v1140 = vpop.f32.mrf.mxu0
        %v1141 = vadd.f32 %v389, %v1140
        %v1142 = vpop.f32.mrf.mxu0
        %1143 = vdwg.mxu0
        %1144 = vmatpush.bf16.msra.mxu0 0
        %1145 = vmatpush.bf16.msra.mxu0 0
        %1146 = vmatpush.bf16.msra.mxu0 0
        %1147 = vmatpush.bf16.msra.mxu0 0
        %1148 = vmatpush.bf16.msra.mxu0 0
        %1149 = vmatpush.bf16.msra.mxu0 0
        %1150 = vmatpush.bf16.msra.mxu0 0
        %1151 = vmatpush.bf16.msra.mxu0 %v616
        %1152 = vmatmul.bf16.gmra.mxu0 %v713
        %v1153 = vpop.f32.mrf.mxu0
        %v1154 = vadd.f32 %v389, %v1153
        %v1155 = vpop.f32.mrf.mxu0
        %1156 = vdwg.mxu0
        %1157 = vmatpush.bf16.msra.mxu0 0
        %1158 = vmatpush.bf16.msra.mxu0 0
        %1159 = vmatpush.bf16.msra.mxu0 0
        %1160 = vmatpush.bf16.msra.mxu0 0
        %1161 = vmatpush.bf16.msra.mxu0 0
        %1162 = vmatpush.bf16.msra.mxu0 0
        %1163 = vmatpush.bf16.msra.mxu0 0
        %1164 = vmatpush.bf16.msra.mxu0 %v617
        %1165 = vmatmul.bf16.gmra.mxu0 %v713
        %v1166 = vpop.f32.mrf.mxu0
        %v1167 = vadd.f32 %v389, %v1166
        %v1168 = vpop.f32.mrf.mxu0
        %1169 = vdwg.mxu0
        %1170 = vmatpush.bf16.msra.mxu0 0
        %1171 = vmatpush.bf16.msra.mxu0 0
        %1172 = vmatpush.bf16.msra.mxu0 0
        %1173 = vmatpush.bf16.msra.mxu0 0
        %1174 = vmatpush.bf16.msra.mxu0 0
        %1175 = vmatpush.bf16.msra.mxu0 0
        %1176 = vmatpush.bf16.msra.mxu0 0
        %1177 = vmatpush.bf16.msra.mxu0 %v618
        %1178 = vmatmul.bf16.gmra.mxu0 %v713
        %v1179 = vpop.f32.mrf.mxu0
        %v1180 = vadd.f32 %v389, %v1179
        %v1181 = vpop.f32.mrf.mxu0
        %1182 = vdwg.mxu0
        %1183 = vmatpush.bf16.msra.mxu0 0
        %1184 = vmatpush.bf16.msra.mxu0 0
        %1185 = vmatpush.bf16.msra.mxu0 0
        %1186 = vmatpush.bf16.msra.mxu0 0
        %1187 = vmatpush.bf16.msra.mxu0 0
        %1188 = vmatpush.bf16.msra.mxu0 0
        %1189 = vmatpush.bf16.msra.mxu0 0
        %1190 = vmatpush.bf16.msra.mxu0 %v619
        %1191 = vmatmul.bf16.gmra.mxu0 %v713
        %v1192 = vpop.f32.mrf.mxu0
        %v1193 = vadd.f32 %v389, %v1192
        %v1194 = vpop.f32.mrf.mxu0
        %1195 = vdwg.mxu0
        %1196 = vmatpush.bf16.msra.mxu0 0
        %1197 = vmatpush.bf16.msra.mxu0 0
        %1198 = vmatpush.bf16.msra.mxu0 0
        %1199 = vmatpush.bf16.msra.mxu0 0
        %1200 = vmatpush.bf16.msra.mxu0 0
        %1201 = vmatpush.bf16.msra.mxu0 0
        %1202 = vmatpush.bf16.msra.mxu0 0
        %1203 = vmatpush.bf16.msra.mxu0 %v620
        %1204 = vmatmul.bf16.gmra.mxu0 %v713
        %v1205 = vpop.f32.mrf.mxu0
        %v1206 = vadd.f32 %v389, %v1205
        %v1207 = vpop.f32.mrf.mxu0
        %1208 = vdwg.mxu0
        %1209 = vmatpush.bf16.msra.mxu0 0
        %1210 = vmatpush.bf16.msra.mxu0 0
        %1211 = vmatpush.bf16.msra.mxu0 0
        %1212 = vmatpush.bf16.msra.mxu0 0
        %1213 = vmatpush.bf16.msra.mxu0 0
        %1214 = vmatpush.bf16.msra.mxu0 0
        %1215 = vmatpush.bf16.msra.mxu0 0
        %1216 = vmatpush.bf16.msra.mxu0 %v621
        %1217 = vmatmul.bf16.gmra.mxu0 %v713
        %v1218 = vpop.f32.mrf.mxu0
        %v1219 = vadd.f32 %v389, %v1218
        %v1220 = vpop.f32.mrf.mxu0
        %1221 = vdwg.mxu0
        %1222 = vmatpush.bf16.msra.mxu0 0
        %1223 = vmatpush.bf16.msra.mxu0 0
        %1224 = vmatpush.bf16.msra.mxu0 0
        %1225 = vmatpush.bf16.msra.mxu0 0
        %1226 = vmatpush.bf16.msra.mxu0 0
        %1227 = vmatpush.bf16.msra.mxu0 0
        %1228 = vmatpush.bf16.msra.mxu0 0
        %1229 = vmatpush.bf16.msra.mxu0 %v622
        %1230 = vmatmul.bf16.gmra.mxu0 %v713
        %v1231 = vpop.f32.mrf.mxu0
        %v1232 = vadd.f32 %v389, %v1231
        %v1233 = vpop.f32.mrf.mxu0
        %1234 = vdwg.mxu0
        %1235 = vmatpush.bf16.msra.mxu0 0
        %1236 = vmatpush.bf16.msra.mxu0 0
        %1237 = vmatpush.bf16.msra.mxu0 0
        %1238 = vmatpush.bf16.msra.mxu0 0
        %1239 = vmatpush.bf16.msra.mxu0 0
        %1240 = vmatpush.bf16.msra.mxu0 0
        %1241 = vmatpush.bf16.msra.mxu0 0
        %1242 = vmatpush.bf16.msra.mxu0 %v623
        %1243 = vmatmul.bf16.gmra.mxu0 %v713
        %v1244 = vpop.f32.mrf.mxu0
        %v1245 = vadd.f32 %v389, %v1244
        %v1246 = vpop.f32.mrf.mxu0
        %1247 = vdwg.mxu0
        %1248 = vmatpush.bf16.msra.mxu0 0
        %1249 = vmatpush.bf16.msra.mxu0 0
        %1250 = vmatpush.bf16.msra.mxu0 0
        %1251 = vmatpush.bf16.msra.mxu0 0
        %1252 = vmatpush.bf16.msra.mxu0 0
        %1253 = vmatpush.bf16.msra.mxu0 0
        %1254 = vmatpush.bf16.msra.mxu0 0
        %1255 = vmatpush.bf16.msra.mxu0 %v624
        %1256 = vmatmul.bf16.gmra.mxu0 %v713
        %v1257 = vpop.f32.mrf.mxu0
        %v1258 = vadd.f32 %v389, %v1257
        %v1259 = vpop.f32.mrf.mxu0
        %1260 = vdwg.mxu0
        %1261 = vmatpush.bf16.msra.mxu0 0
        %1262 = vmatpush.bf16.msra.mxu0 0
        %1263 = vmatpush.bf16.msra.mxu0 0
        %1264 = vmatpush.bf16.msra.mxu0 0
        %1265 = vmatpush.bf16.msra.mxu0 0
        %1266 = vmatpush.bf16.msra.mxu0 0
        %1267 = vmatpush.bf16.msra.mxu0 0
        %1268 = vmatpush.bf16.msra.mxu0 %v625
        %1269 = vmatmul.bf16.gmra.mxu0 %v713
        %v1270 = vpop.f32.mrf.mxu0
        %v1271 = vadd.f32 %v389, %v1270
        %v1272 = vpop.f32.mrf.mxu0
        %1273 = vdwg.mxu0
        %1274 = vmatpush.bf16.msra.mxu0 0
        %1275 = vmatpush.bf16.msra.mxu0 0
        %1276 = vmatpush.bf16.msra.mxu0 0
        %1277 = vmatpush.bf16.msra.mxu0 0
        %1278 = vmatpush.bf16.msra.mxu0 0
        %1279 = vmatpush.bf16.msra.mxu0 0
        %1280 = vmatpush.bf16.msra.mxu0 0
        %1281 = vmatpush.bf16.msra.mxu0 %v626
        %1282 = vmatmul.bf16.gmra.mxu0 %v713
        %v1283 = vpop.f32.mrf.mxu0
        %v1284 = vadd.f32 %v389, %v1283
        %v1285 = vpop.f32.mrf.mxu0
        %1286 = vdwg.mxu0
        %1287 = vmatpush.bf16.msra.mxu0 0
        %1288 = vmatpush.bf16.msra.mxu0 0
        %1289 = vmatpush.bf16.msra.mxu0 0
        %1290 = vmatpush.bf16.msra.mxu0 0
        %1291 = vmatpush.bf16.msra.mxu0 0
        %1292 = vmatpush.bf16.msra.mxu0 0
        %1293 = vmatpush.bf16.msra.mxu0 0
        %1294 = vmatpush.bf16.msra.mxu0 %v627
        %1295 = vmatmul.bf16.gmra.mxu0 %v713
        %v1296 = vpop.f32.mrf.mxu0
        %v1297 = vadd.f32 %v389, %v1296
        %v1298 = vpop.f32.mrf.mxu0
        %1299 = vdwg.mxu0
        %1300 = vmatpush.bf16.msra.mxu0 0
        %1301 = vmatpush.bf16.msra.mxu0 0
        %1302 = vmatpush.bf16.msra.mxu0 0
        %1303 = vmatpush.bf16.msra.mxu0 0
        %1304 = vmatpush.bf16.msra.mxu0 0
        %1305 = vmatpush.bf16.msra.mxu0 0
        %1306 = vmatpush.bf16.msra.mxu0 0
        %1307 = vmatpush.bf16.msra.mxu0 %v628
        %1308 = vmatmul.bf16.gmra.mxu0 %v713
        %v1309 = vpop.f32.mrf.mxu0
        %v1310 = vadd.f32 %v389, %v1309
        %v1311 = vpop.f32.mrf.mxu0
        %1312 = vdwg.mxu0
        %1313 = vmatpush.bf16.msra.mxu0 0
        %1314 = vmatpush.bf16.msra.mxu0 0
        %1315 = vmatpush.bf16.msra.mxu0 0
        %1316 = vmatpush.bf16.msra.mxu0 0
        %1317 = vmatpush.bf16.msra.mxu0 0
        %1318 = vmatpush.bf16.msra.mxu0 0
        %1319 = vmatpush.bf16.msra.mxu0 0
        %1320 = vmatpush.bf16.msra.mxu0 %v629
        %1321 = vmatmul.bf16.gmra.mxu0 %v713
        %v1322 = vpop.f32.mrf.mxu0
        %v1323 = vadd.f32 %v389, %v1322
        %v1324 = vpop.f32.mrf.mxu0
        %1325 = vdwg.mxu0
        %1326 = vmatpush.bf16.msra.mxu0 0
        %1327 = vmatpush.bf16.msra.mxu0 0
        %1328 = vmatpush.bf16.msra.mxu0 0
        %1329 = vmatpush.bf16.msra.mxu0 0
        %1330 = vmatpush.bf16.msra.mxu0 0
        %1331 = vmatpush.bf16.msra.mxu0 0
        %1332 = vmatpush.bf16.msra.mxu0 0
        %1333 = vmatpush.bf16.msra.mxu0 %v630
        %1334 = vmatmul.bf16.gmra.mxu0 %v713
        %v1335 = vpop.f32.mrf.mxu0
        %v1336 = vadd.f32 %v389, %v1335
        %v1337 = vpop.f32.mrf.mxu0
        %1338 = vdwg.mxu0
        %1339 = vmatpush.bf16.msra.mxu0 0
        %1340 = vmatpush.bf16.msra.mxu0 0
        %1341 = vmatpush.bf16.msra.mxu0 0
        %1342 = vmatpush.bf16.msra.mxu0 0
        %1343 = vmatpush.bf16.msra.mxu0 0
        %1344 = vmatpush.bf16.msra.mxu0 0
        %1345 = vmatpush.bf16.msra.mxu0 0
        %1346 = vmatpush.bf16.msra.mxu0 %v631
        %1347 = vmatmul.bf16.gmra.mxu0 %v713
        %v1348 = vpop.f32.mrf.mxu0
        %v1349 = vadd.f32 %v389, %v1348
        %v1350 = vpop.f32.mrf.mxu0
        %1351 = vdwg.mxu0
        %1352 = vmatpush.bf16.msra.mxu0 0
        %1353 = vmatpush.bf16.msra.mxu0 0
        %1354 = vmatpush.bf16.msra.mxu0 0
        %1355 = vmatpush.bf16.msra.mxu0 0
        %1356 = vmatpush.bf16.msra.mxu0 0
        %1357 = vmatpush.bf16.msra.mxu0 0
        %1358 = vmatpush.bf16.msra.mxu0 0
        %1359 = vmatpush.bf16.msra.mxu0 %v632
        %1360 = vmatmul.bf16.gmra.mxu0 %v713
        %v1361 = vpop.f32.mrf.mxu0
        %v1362 = vadd.f32 %v389, %v1361
        %v1363 = vpop.f32.mrf.mxu0
        %1364 = vdwg.mxu0
        %1365 = vmatpush.bf16.msra.mxu0 0
        %1366 = vmatpush.bf16.msra.mxu0 0
        %1367 = vmatpush.bf16.msra.mxu0 0
        %1368 = vmatpush.bf16.msra.mxu0 0
        %1369 = vmatpush.bf16.msra.mxu0 0
        %1370 = vmatpush.bf16.msra.mxu0 0
        %1371 = vmatpush.bf16.msra.mxu0 0
        %1372 = vmatpush.bf16.msra.mxu0 %v633
        %1373 = vmatmul.bf16.gmra.mxu0 %v713
        %v1374 = vpop.f32.mrf.mxu0
        %v1375 = vadd.f32 %v389, %v1374
        %v1376 = vpop.f32.mrf.mxu0
        %1377 = vdwg.mxu0
        %1378 = vmatpush.bf16.msra.mxu0 0
        %1379 = vmatpush.bf16.msra.mxu0 0
        %1380 = vmatpush.bf16.msra.mxu0 0
        %1381 = vmatpush.bf16.msra.mxu0 0
        %1382 = vmatpush.bf16.msra.mxu0 0
        %1383 = vmatpush.bf16.msra.mxu0 0
        %1384 = vmatpush.bf16.msra.mxu0 0
        %1385 = vmatpush.bf16.msra.mxu0 %v634
        %1386 = vmatmul.bf16.gmra.mxu0 %v713
        %v1387 = vpop.f32.mrf.mxu0
        %v1388 = vadd.f32 %v389, %v1387
        %v1389 = vpop.f32.mrf.mxu0
        %1390 = vdwg.mxu0
        %1391 = vmatpush.bf16.msra.mxu0 0
        %1392 = vmatpush.bf16.msra.mxu0 0
        %1393 = vmatpush.bf16.msra.mxu0 0
        %1394 = vmatpush.bf16.msra.mxu0 0
        %1395 = vmatpush.bf16.msra.mxu0 0
        %1396 = vmatpush.bf16.msra.mxu0 0
        %1397 = vmatpush.bf16.msra.mxu0 0
        %1398 = vmatpush.bf16.msra.mxu0 %v635
        %1399 = vmatmul.bf16.gmra.mxu0 %v713
        %v1400 = vpop.f32.mrf.mxu0
        %v1401 = vadd.f32 %v389, %v1400
        %v1402 = vpop.f32.mrf.mxu0
        %1403 = vdwg.mxu0
        %1404 = vmatpush.bf16.msra.mxu0 0
        %1405 = vmatpush.bf16.msra.mxu0 0
        %1406 = vmatpush.bf16.msra.mxu0 0
        %1407 = vmatpush.bf16.msra.mxu0 0
        %1408 = vmatpush.bf16.msra.mxu0 0
        %1409 = vmatpush.bf16.msra.mxu0 0
        %1410 = vmatpush.bf16.msra.mxu0 0
        %1411 = vmatpush.bf16.msra.mxu0 %v636
        %1412 = vmatmul.bf16.gmra.mxu0 %v713
        %v1413 = vpop.f32.mrf.mxu0
        %v1414 = vadd.f32 %v389, %v1413
        %v1415 = vpop.f32.mrf.mxu0
        %1416 = vdwg.mxu0
        %1417 = vmatpush.bf16.msra.mxu0 0
        %1418 = vmatpush.bf16.msra.mxu0 0
        %1419 = vmatpush.bf16.msra.mxu0 0
        %1420 = vmatpush.bf16.msra.mxu0 0
        %1421 = vmatpush.bf16.msra.mxu0 0
        %1422 = vmatpush.bf16.msra.mxu0 0
        %1423 = vmatpush.bf16.msra.mxu0 0
        %1424 = vmatpush.bf16.msra.mxu0 %v637
        %1425 = vmatmul.bf16.gmra.mxu0 %v713
        %v1426 = vpop.f32.mrf.mxu0
        %v1427 = vadd.f32 %v389, %v1426
        %v1428 = vpop.f32.mrf.mxu0
        %1429 = vdwg.mxu0
        %1430 = vmatpush.bf16.msra.mxu0 0
        %1431 = vmatpush.bf16.msra.mxu0 0
        %1432 = vmatpush.bf16.msra.mxu0 0
        %1433 = vmatpush.bf16.msra.mxu0 0
        %1434 = vmatpush.bf16.msra.mxu0 0
        %1435 = vmatpush.bf16.msra.mxu0 0
        %1436 = vmatpush.bf16.msra.mxu0 0
        %1437 = vmatpush.bf16.msra.mxu0 %v638
        %1438 = vmatmul.bf16.gmra.mxu0 %v713
        %v1439 = vpop.f32.mrf.mxu0
        %v1440 = vadd.f32 %v389, %v1439
        %v1441 = vpop.f32.mrf.mxu0
        %1442 = vdwg.mxu0
        %1443 = vmatpush.bf16.msra.mxu0 0
        %1444 = vmatpush.bf16.msra.mxu0 0
        %1445 = vmatpush.bf16.msra.mxu0 0
        %1446 = vmatpush.bf16.msra.mxu0 0
        %1447 = vmatpush.bf16.msra.mxu0 0
        %1448 = vmatpush.bf16.msra.mxu0 0
        %1449 = vmatpush.bf16.msra.mxu0 0
        %1450 = vmatpush.bf16.msra.mxu0 %v639
        %1451 = vmatmul.bf16.gmra.mxu0 %v713
        %v1452 = vpop.f32.mrf.mxu0
        %v1453 = vadd.f32 %v389, %v1452
        %v1454 = vpop.f32.mrf.mxu0
        %1455 = vdwg.mxu0
        %1456 = vmatpush.bf16.msra.mxu0 0
        %1457 = vmatpush.bf16.msra.mxu0 0
        %1458 = vmatpush.bf16.msra.mxu0 0
        %1459 = vmatpush.bf16.msra.mxu0 0
        %1460 = vmatpush.bf16.msra.mxu0 0
        %1461 = vmatpush.bf16.msra.mxu0 0
        %1462 = vmatpush.bf16.msra.mxu0 0
        %1463 = vmatpush.bf16.msra.mxu0 %v640
        %1464 = vmatmul.bf16.gmra.mxu0 %v713
        %v1465 = vpop.f32.mrf.mxu0
        %v1466 = vadd.f32 %v389, %v1465
        %v1467 = vpop.f32.mrf.mxu0
        %1468 = vdwg.mxu0
        %1469 = vmatpush.bf16.msra.mxu0 0
        %1470 = vmatpush.bf16.msra.mxu0 0
        %1471 = vmatpush.bf16.msra.mxu0 0
        %1472 = vmatpush.bf16.msra.mxu0 0
        %1473 = vmatpush.bf16.msra.mxu0 0
        %1474 = vmatpush.bf16.msra.mxu0 0
        %1475 = vmatpush.bf16.msra.mxu0 0
        %1476 = vmatpush.bf16.msra.mxu0 %v641
        %1477 = vmatmul.bf16.gmra.mxu0 %v713
        %v1478 = vpop.f32.mrf.mxu0
        %v1479 = vadd.f32 %v389, %v1478
        %v1480 = vpop.f32.mrf.mxu0
        %1481 = vdwg.mxu0
        %1482 = vmatpush.bf16.msra.mxu0 0
        %1483 = vmatpush.bf16.msra.mxu0 0
        %1484 = vmatpush.bf16.msra.mxu0 0
        %1485 = vmatpush.bf16.msra.mxu0 0
        %1486 = vmatpush.bf16.msra.mxu0 0
        %1487 = vmatpush.bf16.msra.mxu0 0
        %1488 = vmatpush.bf16.msra.mxu0 0
        %1489 = vmatpush.bf16.msra.mxu0 %v642
        %1490 = vmatmul.bf16.gmra.mxu0 %v713
        %v1491 = vpop.f32.mrf.mxu0
        %v1492 = vadd.f32 %v389, %v1491
        %v1493 = vpop.f32.mrf.mxu0
        %1494 = vdwg.mxu0
        %1495 = vmatpush.bf16.msra.mxu0 0
        %1496 = vmatpush.bf16.msra.mxu0 0
        %1497 = vmatpush.bf16.msra.mxu0 0
        %1498 = vmatpush.bf16.msra.mxu0 0
        %1499 = vmatpush.bf16.msra.mxu0 0
        %1500 = vmatpush.bf16.msra.mxu0 0
        %1501 = vmatpush.bf16.msra.mxu0 0
        %1502 = vmatpush.bf16.msra.mxu0 %v643
        %1503 = vmatmul.bf16.gmra.mxu0 %v713
        %v1504 = vpop.f32.mrf.mxu0
        %v1505 = vadd.f32 %v389, %v1504
        %v1506 = vpop.f32.mrf.mxu0
        %1507 = vdwg.mxu0
        %1508 = vmatpush.bf16.msra.mxu0 0
        %1509 = vmatpush.bf16.msra.mxu0 0
        %1510 = vmatpush.bf16.msra.mxu0 0
        %1511 = vmatpush.bf16.msra.mxu0 0
        %1512 = vmatpush.bf16.msra.mxu0 0
        %1513 = vmatpush.bf16.msra.mxu0 0
        %1514 = vmatpush.bf16.msra.mxu0 0
        %1515 = vmatpush.bf16.msra.mxu0 %v644
        %1516 = vmatmul.bf16.gmra.mxu0 %v713
        %v1517 = vpop.f32.mrf.mxu0
        %v1518 = vadd.f32 %v389, %v1517
        %v1519 = vpop.f32.mrf.mxu0
        %1520 = vdwg.mxu0
        %1521 = vmatpush.bf16.msra.mxu0 0
        %1522 = vmatpush.bf16.msra.mxu0 0
        %1523 = vmatpush.bf16.msra.mxu0 0
        %1524 = vmatpush.bf16.msra.mxu0 0
        %1525 = vmatpush.bf16.msra.mxu0 0
        %1526 = vmatpush.bf16.msra.mxu0 0
        %1527 = vmatpush.bf16.msra.mxu0 0
        %1528 = vmatpush.bf16.msra.mxu0 %v645
        %1529 = vmatmul.bf16.gmra.mxu0 %v713
        %v1530 = vpop.f32.mrf.mxu0
        %v1531 = vadd.f32 %v389, %v1530
        %v1532 = vpop.f32.mrf.mxu0
        %1533 = vdwg.mxu0
        %1534 = vmatpush.bf16.msra.mxu0 0
        %1535 = vmatpush.bf16.msra.mxu0 0
        %1536 = vmatpush.bf16.msra.mxu0 0
        %1537 = vmatpush.bf16.msra.mxu0 0
        %1538 = vmatpush.bf16.msra.mxu0 0
        %1539 = vmatpush.bf16.msra.mxu0 0
        %1540 = vmatpush.bf16.msra.mxu0 0
        %1541 = vmatpush.bf16.msra.mxu0 %v646
        %1542 = vmatmul.bf16.gmra.mxu0 %v713
        %v1543 = vpop.f32.mrf.mxu0
        %v1544 = vadd.f32 %v389, %v1543
        %v1545 = vpop.f32.mrf.mxu0
        %1546 = vdwg.mxu0
        %vm1547 = vcmp.ge.f32.partialorder %v725, 0.0
        %vm1548 = vcmp.ge.f32.partialorder %v738, 0.0
        %vm1549 = vcmp.ge.f32.partialorder %v751, 0.0
        %vm1550 = vcmp.ge.f32.partialorder %v764, 0.0
        %vm1551 = vcmp.ge.f32.partialorder %v777, 0.0
        %vm1552 = vcmp.ge.f32.partialorder %v790, 0.0
        %vm1553 = vcmp.ge.f32.partialorder %v803, 0.0
        %vm1554 = vcmp.ge.f32.partialorder %v816, 0.0
        %vm1555 = vcmp.ge.f32.partialorder %v829, 0.0
        %vm1556 = vcmp.ge.f32.partialorder %v842, 0.0
        %vm1557 = vcmp.ge.f32.partialorder %v855, 0.0
        %vm1558 = vcmp.ge.f32.partialorder %v868, 0.0
        %vm1559 = vcmp.ge.f32.partialorder %v881, 0.0
        %vm1560 = vcmp.ge.f32.partialorder %v894, 0.0
        %vm1561 = vcmp.ge.f32.partialorder %v907, 0.0
        %vm1562 = vcmp.ge.f32.partialorder %v920, 0.0
        %vm1563 = vcmp.ge.f32.partialorder %v933, 0.0
        %vm1564 = vcmp.ge.f32.partialorder %v946, 0.0
        %vm1565 = vcmp.ge.f32.partialorder %v959, 0.0
        %vm1566 = vcmp.ge.f32.partialorder %v972, 0.0
        %vm1567 = vcmp.ge.f32.partialorder %v985, 0.0
        %vm1568 = vcmp.ge.f32.partialorder %v998, 0.0
        %vm1569 = vcmp.ge.f32.partialorder %v1011, 0.0
        %vm1570 = vcmp.ge.f32.partialorder %v1024, 0.0
        %vm1571 = vcmp.ge.f32.partialorder %v1037, 0.0
        %vm1572 = vcmp.ge.f32.partialorder %v1050, 0.0
        %vm1573 = vcmp.ge.f32.partialorder %v1063, 0.0
        %vm1574 = vcmp.ge.f32.partialorder %v1076, 0.0
        %vm1575 = vcmp.ge.f32.partialorder %v1089, 0.0
        %vm1576 = vcmp.ge.f32.partialorder %v1102, 0.0
        %vm1577 = vcmp.ge.f32.partialorder %v1115, 0.0
        %vm1578 = vcmp.ge.f32.partialorder %v1128, 0.0
        %vm1579 = vcmp.ge.f32.partialorder %v1141, 0.0
        %vm1580 = vcmp.ge.f32.partialorder %v1154, 0.0
        %vm1581 = vcmp.ge.f32.partialorder %v1167, 0.0
        %vm1582 = vcmp.ge.f32.partialorder %v1180, 0.0
        %vm1583 = vcmp.ge.f32.partialorder %v1193, 0.0
        %vm1584 = vcmp.ge.f32.partialorder %v1206, 0.0
        %vm1585 = vcmp.ge.f32.partialorder %v1219, 0.0
        %vm1586 = vcmp.ge.f32.partialorder %v1232, 0.0
        %vm1587 = vcmp.ge.f32.partialorder %v1245, 0.0
        %vm1588 = vcmp.ge.f32.partialorder %v1258, 0.0
        %vm1589 = vcmp.ge.f32.partialorder %v1271, 0.0
        %vm1590 = vcmp.ge.f32.partialorder %v1284, 0.0
        %vm1591 = vcmp.ge.f32.partialorder %v1297, 0.0
        %vm1592 = vcmp.ge.f32.partialorder %v1310, 0.0
        %vm1593 = vcmp.ge.f32.partialorder %v1323, 0.0
        %vm1594 = vcmp.ge.f32.partialorder %v1336, 0.0
        %vm1595 = vcmp.ge.f32.partialorder %v1349, 0.0
        %vm1596 = vcmp.ge.f32.partialorder %v1362, 0.0
        %vm1597 = vcmp.ge.f32.partialorder %v1375, 0.0
        %vm1598 = vcmp.ge.f32.partialorder %v1388, 0.0
        %vm1599 = vcmp.ge.f32.partialorder %v1401, 0.0
        %vm1600 = vcmp.ge.f32.partialorder %v1414, 0.0
        %vm1601 = vcmp.ge.f32.partialorder %v1427, 0.0
        %vm1602 = vcmp.ge.f32.partialorder %v1440, 0.0
        %vm1603 = vcmp.ge.f32.partialorder %v1453, 0.0
        %vm1604 = vcmp.ge.f32.partialorder %v1466, 0.0
        %vm1605 = vcmp.ge.f32.partialorder %v1479, 0.0
        %vm1606 = vcmp.ge.f32.partialorder %v1492, 0.0
        %vm1607 = vcmp.ge.f32.partialorder %v1505, 0.0
        %vm1608 = vcmp.ge.f32.partialorder %v1518, 0.0
        %vm1609 = vcmp.ge.f32.partialorder %v1531, 0.0
        %vm1610 = vcmp.ge.f32.partialorder %v1544, 0.0
        %v1611 = vmul.f32 %v725, 0.2
        %v1612 = vmul.f32 %v738, 0.2
        %v1613 = vmul.f32 %v751, 0.2
        %v1614 = vmul.f32 %v764, 0.2
        %v1615 = vmul.f32 %v777, 0.2
        %v1616 = vmul.f32 %v790, 0.2
        %v1617 = vmul.f32 %v803, 0.2
        %v1618 = vmul.f32 %v816, 0.2
        %v1619 = vmul.f32 %v829, 0.2
        %v1620 = vmul.f32 %v842, 0.2
        %v1621 = vmul.f32 %v855, 0.2
        %v1622 = vmul.f32 %v868, 0.2
        %v1623 = vmul.f32 %v881, 0.2
        %v1624 = vmul.f32 %v894, 0.2
        %v1625 = vmul.f32 %v907, 0.2
        %v1626 = vmul.f32 %v920, 0.2
        %v1627 = vmul.f32 %v933, 0.2
        %v1628 = vmul.f32 %v946, 0.2
        %v1629 = vmul.f32 %v959, 0.2
        %v1630 = vmul.f32 %v972, 0.2
        %v1631 = vmul.f32 %v985, 0.2
        %v1632 = vmul.f32 %v998, 0.2
        %v1633 = vmul.f32 %v1011, 0.2
        %v1634 = vmul.f32 %v1024, 0.2
        %v1635 = vmul.f32 %v1037, 0.2
        %v1636 = vmul.f32 %v1050, 0.2
        %v1637 = vmul.f32 %v1063, 0.2
        %v1638 = vmul.f32 %v1076, 0.2
        %v1639 = vmul.f32 %v1089, 0.2
        %v1640 = vmul.f32 %v1102, 0.2
        %v1641 = vmul.f32 %v1115, 0.2
        %v1642 = vmul.f32 %v1128, 0.2
        %v1643 = vmul.f32 %v1141, 0.2
        %v1644 = vmul.f32 %v1154, 0.2
        %v1645 = vmul.f32 %v1167, 0.2
        %v1646 = vmul.f32 %v1180, 0.2
        %v1647 = vmul.f32 %v1193, 0.2
        %v1648 = vmul.f32 %v1206, 0.2
        %v1649 = vmul.f32 %v1219, 0.2
        %v1650 = vmul.f32 %v1232, 0.2
        %v1651 = vmul.f32 %v1245, 0.2
        %v1652 = vmul.f32 %v1258, 0.2
        %v1653 = vmul.f32 %v1271, 0.2
        %v1654 = vmul.f32 %v1284, 0.2
        %v1655 = vmul.f32 %v1297, 0.2
        %v1656 = vmul.f32 %v1310, 0.2
        %v1657 = vmul.f32 %v1323, 0.2
        %v1658 = vmul.f32 %v1336, 0.2
        %v1659 = vmul.f32 %v1349, 0.2
        %v1660 = vmul.f32 %v1362, 0.2
        %v1661 = vmul.f32 %v1375, 0.2
        %v1662 = vmul.f32 %v1388, 0.2
        %v1663 = vmul.f32 %v1401, 0.2
        %v1664 = vmul.f32 %v1414, 0.2
        %v1665 = vmul.f32 %v1427, 0.2
        %v1666 = vmul.f32 %v1440, 0.2
        %v1667 = vmul.f32 %v1453, 0.2
        %v1668 = vmul.f32 %v1466, 0.2
        %v1669 = vmul.f32 %v1479, 0.2
        %v1670 = vmul.f32 %v1492, 0.2
        %v1671 = vmul.f32 %v1505, 0.2
        %v1672 = vmul.f32 %v1518, 0.2
        %v1673 = vmul.f32 %v1531, 0.2
        %v1674 = vmul.f32 %v1544, 0.2
        %v1675 = vsel %vm1547, %v725, %v1611
        %v1676 = vsel %vm1548, %v738, %v1612
        %v1677 = vsel %vm1549, %v751, %v1613
        %v1678 = vsel %vm1550, %v764, %v1614
        %v1679 = vsel %vm1551, %v777, %v1615
        %v1680 = vsel %vm1552, %v790, %v1616
        %v1681 = vsel %vm1553, %v803, %v1617
        %v1682 = vsel %vm1554, %v816, %v1618
        %v1683 = vsel %vm1555, %v829, %v1619
        %v1684 = vsel %vm1556, %v842, %v1620
        %v1685 = vsel %vm1557, %v855, %v1621
        %v1686 = vsel %vm1558, %v868, %v1622
        %v1687 = vsel %vm1559, %v881, %v1623
        %v1688 = vsel %vm1560, %v894, %v1624
        %v1689 = vsel %vm1561, %v907, %v1625
        %v1690 = vsel %vm1562, %v920, %v1626
        %v1691 = vsel %vm1563, %v933, %v1627
        %v1692 = vsel %vm1564, %v946, %v1628
        %v1693 = vsel %vm1565, %v959, %v1629
        %v1694 = vsel %vm1566, %v972, %v1630
        %v1695 = vsel %vm1567, %v985, %v1631
        %v1696 = vsel %vm1568, %v998, %v1632
        %v1697 = vsel %vm1569, %v1011, %v1633
        %v1698 = vsel %vm1570, %v1024, %v1634
        %v1699 = vsel %vm1571, %v1037, %v1635
        %v1700 = vsel %vm1572, %v1050, %v1636
        %v1701 = vsel %vm1573, %v1063, %v1637
        %v1702 = vsel %vm1574, %v1076, %v1638
        %v1703 = vsel %vm1575, %v1089, %v1639
        %v1704 = vsel %vm1576, %v1102, %v1640
        %v1705 = vsel %vm1577, %v1115, %v1641
        %v1706 = vsel %vm1578, %v1128, %v1642
        %v1707 = vsel %vm1579, %v1141, %v1643
        %v1708 = vsel %vm1580, %v1154, %v1644
        %v1709 = vsel %vm1581, %v1167, %v1645
        %v1710 = vsel %vm1582, %v1180, %v1646
        %v1711 = vsel %vm1583, %v1193, %v1647
        %v1712 = vsel %vm1584, %v1206, %v1648
        %v1713 = vsel %vm1585, %v1219, %v1649
        %v1714 = vsel %vm1586, %v1232, %v1650
        %v1715 = vsel %vm1587, %v1245, %v1651
        %v1716 = vsel %vm1588, %v1258, %v1652
        %v1717 = vsel %vm1589, %v1271, %v1653
        %v1718 = vsel %vm1590, %v1284, %v1654
        %v1719 = vsel %vm1591, %v1297, %v1655
        %v1720 = vsel %vm1592, %v1310, %v1656
        %v1721 = vsel %vm1593, %v1323, %v1657
        %v1722 = vsel %vm1594, %v1336, %v1658
        %v1723 = vsel %vm1595, %v1349, %v1659
        %v1724 = vsel %vm1596, %v1362, %v1660
        %v1725 = vsel %vm1597, %v1375, %v1661
        %v1726 = vsel %vm1598, %v1388, %v1662
        %v1727 = vsel %vm1599, %v1401, %v1663
        %v1728 = vsel %vm1600, %v1414, %v1664
        %v1729 = vsel %vm1601, %v1427, %v1665
        %v1730 = vsel %vm1602, %v1440, %v1666
        %v1731 = vsel %vm1603, %v1453, %v1667
        %v1732 = vsel %vm1604, %v1466, %v1668
        %v1733 = vsel %vm1605, %v1479, %v1669
        %v1734 = vsel %vm1606, %v1492, %v1670
        %v1735 = vsel %vm1607, %v1505, %v1671
        %v1736 = vsel %vm1608, %v1518, %v1672
        %v1737 = vsel %vm1609, %v1531, %v1673
        %v1738 = vsel %vm1610, %v1544, %v1674
        %v1739 = vpack.c.bf16 %v1676, %v1675
        %v1740 = vpack.c.bf16 %v1678, %v1677
        %v1741 = vpack.c.bf16 %v1680, %v1679
        %v1742 = vpack.c.bf16 %v1682, %v1681
        %v1743 = vpack.c.bf16 %v1684, %v1683
        %v1744 = vpack.c.bf16 %v1686, %v1685
        %v1745 = vpack.c.bf16 %v1688, %v1687
        %v1746 = vpack.c.bf16 %v1690, %v1689
        %v1747 = vpack.c.bf16 %v1692, %v1691
        %v1748 = vpack.c.bf16 %v1694, %v1693
        %v1749 = vpack.c.bf16 %v1696, %v1695
        %v1750 = vpack.c.bf16 %v1698, %v1697
        %v1751 = vpack.c.bf16 %v1700, %v1699
        %v1752 = vpack.c.bf16 %v1702, %v1701
        %v1753 = vpack.c.bf16 %v1704, %v1703
        %v1754 = vpack.c.bf16 %v1706, %v1705
        %v1755 = vpack.c.bf16 %v1708, %v1707
        %v1756 = vpack.c.bf16 %v1710, %v1709
        %v1757 = vpack.c.bf16 %v1712, %v1711
        %v1758 = vpack.c.bf16 %v1714, %v1713
        %v1759 = vpack.c.bf16 %v1716, %v1715
        %v1760 = vpack.c.bf16 %v1718, %v1717
        %v1761 = vpack.c.bf16 %v1720, %v1719
        %v1762 = vpack.c.bf16 %v1722, %v1721
        %v1763 = vpack.c.bf16 %v1724, %v1723
        %v1764 = vpack.c.bf16 %v1726, %v1725
        %v1765 = vpack.c.bf16 %v1728, %v1727
        %v1766 = vpack.c.bf16 %v1730, %v1729
        %v1767 = vpack.c.bf16 %v1732, %v1731
        %v1768 = vpack.c.bf16 %v1734, %v1733
        %v1769 = vpack.c.bf16 %v1736, %v1735
        %v1770 = vpack.c.bf16 %v1738, %v1737
        %v1803 = vrot.slane %v1739, 2
        %v1804 = vrot.slane %v1740, 4
        %v1805 = vrot.slane %v1740, 6
        %v1806 = vrot.slane %v1741, 2
        %v1807 = vrot.slane %v1742, 4
        %v1808 = vrot.slane %v1742, 6
        %v1809 = vrot.slane %v1743, 2
        %v1810 = vrot.slane %v1744, 4
        %v1811 = vrot.slane %v1744, 6
        %v1812 = vrot.slane %v1745, 2
        %v1813 = vrot.slane %v1746, 4
        %v1814 = vrot.slane %v1746, 6
        %v1815 = vrot.slane %v1747, 2
        %v1816 = vrot.slane %v1748, 4
        %v1817 = vrot.slane %v1748, 6
        %v1818 = vrot.slane %v1749, 2
        %v1819 = vrot.slane %v1750, 4
        %v1820 = vrot.slane %v1750, 6
        %v1821 = vrot.slane %v1751, 2
        %v1822 = vrot.slane %v1752, 4
        %v1823 = vrot.slane %v1752, 6
        %v1824 = vrot.slane %v1753, 2
        %v1825 = vrot.slane %v1754, 4
        %v1826 = vrot.slane %v1754, 6
        %v1827 = vrot.slane %v1755, 2
        %v1828 = vrot.slane %v1756, 4
        %v1829 = vrot.slane %v1756, 6
        %v1830 = vrot.slane %v1757, 2
        %v1831 = vrot.slane %v1758, 4
        %v1832 = vrot.slane %v1758, 6
        %v1833 = vrot.slane %v1759, 2
        %v1834 = vrot.slane %v1760, 4
        %v1835 = vrot.slane %v1760, 6
        %v1836 = vrot.slane %v1761, 2
        %v1837 = vrot.slane %v1762, 4
        %v1838 = vrot.slane %v1762, 6
        %v1839 = vrot.slane %v1763, 2
        %v1840 = vrot.slane %v1764, 4
        %v1841 = vrot.slane %v1764, 6
        %v1842 = vrot.slane %v1765, 2
        %v1843 = vrot.slane %v1766, 4
        %v1844 = vrot.slane %v1766, 6
        %v1845 = vrot.slane %v1767, 2
        %v1846 = vrot.slane %v1768, 4
        %v1847 = vrot.slane %v1768, 6
        %v1848 = vrot.slane %v1769, 2
        %v1849 = vrot.slane %v1770, 4
        %v1850 = vrot.slane %v1770, 6
        %vm1851 = vcmask 1041408
        %v1854 = vsel %vm1851, %v1739, %v1803
        %vm1855 = vcmask 1045508
        %v1858 = vsel %vm1855, %v1804, %v1805
        %vm1859 = vcmask 1043456
        %v1860 = vsel %vm1859, %v1854, %v1858
        %v1863 = vsel %vm1851, %v1741, %v1806
        %v1866 = vsel %vm1855, %v1807, %v1808
        %v1867 = vsel %vm1859, %v1863, %v1866
        %v1870 = vsel %vm1851, %v1743, %v1809
        %v1873 = vsel %vm1855, %v1810, %v1811
        %v1874 = vsel %vm1859, %v1870, %v1873
        %v1877 = vsel %vm1851, %v1745, %v1812
        %v1880 = vsel %vm1855, %v1813, %v1814
        %v1881 = vsel %vm1859, %v1877, %v1880
        %v1884 = vsel %vm1851, %v1747, %v1815
        %v1887 = vsel %vm1855, %v1816, %v1817
        %v1888 = vsel %vm1859, %v1884, %v1887
        %v1891 = vsel %vm1851, %v1749, %v1818
        %v1894 = vsel %vm1855, %v1819, %v1820
        %v1895 = vsel %vm1859, %v1891, %v1894
        %v1898 = vsel %vm1851, %v1751, %v1821
        %v1901 = vsel %vm1855, %v1822, %v1823
        %v1902 = vsel %vm1859, %v1898, %v1901
        %v1905 = vsel %vm1851, %v1753, %v1824
        %v1908 = vsel %vm1855, %v1825, %v1826
        %v1909 = vsel %vm1859, %v1905, %v1908
        %v1912 = vsel %vm1851, %v1755, %v1827
        %v1915 = vsel %vm1855, %v1828, %v1829
        %v1916 = vsel %vm1859, %v1912, %v1915
        %v1919 = vsel %vm1851, %v1757, %v1830
        %v1922 = vsel %vm1855, %v1831, %v1832
        %v1923 = vsel %vm1859, %v1919, %v1922
        %v1926 = vsel %vm1851, %v1759, %v1833
        %v1929 = vsel %vm1855, %v1834, %v1835
        %v1930 = vsel %vm1859, %v1926, %v1929
        %v1933 = vsel %vm1851, %v1761, %v1836
        %v1936 = vsel %vm1855, %v1837, %v1838
        %v1937 = vsel %vm1859, %v1933, %v1936
        %v1940 = vsel %vm1851, %v1763, %v1839
        %v1943 = vsel %vm1855, %v1840, %v1841
        %v1944 = vsel %vm1859, %v1940, %v1943
        %v1947 = vsel %vm1851, %v1765, %v1842
        %v1950 = vsel %vm1855, %v1843, %v1844
        %v1951 = vsel %vm1859, %v1947, %v1950
        %v1954 = vsel %vm1851, %v1767, %v1845
        %v1957 = vsel %vm1855, %v1846, %v1847
        %v1958 = vsel %vm1859, %v1954, %v1957
        %v1961 = vsel %vm1851, %v1769, %v1848
        %v1964 = vsel %vm1855, %v1849, %v1850
        %v1965 = vsel %vm1859, %v1961, %v1964
        %1982 = vst [vmem:[%s317] sm:$0xff] %v1860
        %1983 = vst [vmem:[%s317 + $0x8] sm:$0xff] %v1867
        %1984 = vst [vmem:[%s317 + $0x10] sm:$0xff] %v1874
        %1985 = vst [vmem:[%s317 + $0x18] sm:$0xff] %v1881
        %1986 = vst [vmem:[%s317 + $0x20] sm:$0xff] %v1888
        %1987 = vst [vmem:[%s317 + $0x28] sm:$0xff] %v1895
        %1988 = vst [vmem:[%s317 + $0x30] sm:$0xff] %v1902
        %1989 = vst [vmem:[%s317 + $0x38] sm:$0xff] %v1909
        %1990 = vst [vmem:[%s317 + $0x40] sm:$0xff] %v1916
        %1991 = vst [vmem:[%s317 + $0x48] sm:$0xff] %v1923
        %1992 = vst [vmem:[%s317 + $0x50] sm:$0xff] %v1930
        %1993 = vst [vmem:[%s317 + $0x58] sm:$0xff] %v1937
        %1994 = vst [vmem:[%s317 + $0x60] sm:$0xff] %v1944
        %1995 = vst [vmem:[%s317 + $0x68] sm:$0xff] %v1951
        %1996 = vst [vmem:[%s317 + $0x70] sm:$0xff] %v1958
        %1997 = vst [vmem:[%s317 + $0x78] sm:$0xff] %v1965
        %s1998 = smul.u32 64, %s14
        %p1999 = scmp.lt.s32.totalorder %s1998, 127
        %s2000 = scalar_select %p1999, %s1998, 127
        %s2001 = smul.addr %s2000, 2
        %s2002 = scalar_lea.vmem %s3, %s2001
        // Predicated region
        $region56: #{_lambda_.5} parent=50 // pred_check
          %p2003 = pneg %p100
        $region57: #{_lambda_.5} parent=50 // pred_check_branch
          %2005 = sbr.rel (%p2003) target = $region59
        $region58: #{_lambda_.5} parent=50 // pred_region
          %s2006 = smul.u32 64, %s14
        $region59: #{_lambda_.5} parent=50 // pred_fallthru
          _
      $region51: #{_lambda_.5} parent=5 // pred_fallthru
        _
      %p2007 = scmp.le.s32.totalorder 2, %s9
      // Predicated region
      $region60: #{_lambda_.5} parent=5 // pred_check
        %p2008 = pneg %p2007
      $region61: #{_lambda_.5} parent=5 // pred_check_branch
        %2010 = sbr.rel (%p2008) target = $region63
      $region62: #{_lambda_.5} parent=5 // pred_region
        %s2011 = ssub.s32 %s9, 2
        // Predicated region
        $region64: #{_lambda_.5} parent=62 // pred_check
          %p2012 = pneg %p106
        $region65: #{_lambda_.5} parent=62 // pred_check_branch
          %2014 = sbr.rel (%p2012) target = $region67
        $region66: #{_lambda_.5} parent=62 // pred_region
          %s2015 = smul.u32 64, %s15
          %p2016 = scmp.lt.s32.totalorder %s2015, 127
          %s2017 = scalar_select %p2016, %s2015, 127
          %s2018 = smul.addr %s2017, 2
          %s2019 = scalar_lea.vmem %s3, %s2018
        $region67: #{_lambda_.5} parent=62 // pred_fallthru
          _
      $region63: #{_lambda_.5} parent=5 // pred_fallthru
        _
    $region6: #{_lambda_.5} parent=1 // loop_footer
      %s13 = sadd.s32 1, %s9
    $region7: #{_lambda_.5} parent=1 // loop_footer_branch
      %8 = sbr.rel target = $region3
    $region8: #{_lambda_.5} parent=1 // loop_exit
      _

// kernel: _lambda_.6
$region0: #{_lambda_.6}
  #allocation0 [shape = 'u32[]', space=smem, size = 0x4, offset = 0x4, fixed_abs, tag = 'smem constant byte address 0x4 - core index']
  #allocation1 [shape = 'u32[72,128]{1,0:T(1,128)}', space=vmem, size = 0x9000, scoped, tag = 'internal scratch']
  %s0 = inlined_call_operand.vmem [shape: bf16[64,4096], index: 0, kind: input, shape index: {}]
  %s1 = inlined_call_operand.vmem [shape: bf16[8,64], index: 1, kind: input, shape index: {}]
  %s2 = inlined_call_operand.vmem [shape: bf16[8,4096], index: 2, kind: output, shape index: {}]
  %s3 = sld [smem:[#allocation0]]
  $region64: #{_lambda_.6} parent=0
    _
  %s5 = ssub.s32 1, %s3
  %s6 = scalar_select 0, %s5, %s3
  $region1: #{_lambda_.6} parent=0
    #allocation2 [shape = 'u8[524288]{0}', space=vmem, size = 0x80000, scoped, tag = 'input window, operand 0']
    loop: start=0, step=1, limit=4
    $region2: #{_lambda_.6} parent=1 // loop_pre_header
      _
    $region3: #{_lambda_.6} parent=1 // loop_header
      %s8 = sphi 0, %s12
      %p9 = scmp.ge.s32.totalorder %s8, 4
      %s18 = sphi 0, %s20
      %s21 = sphi 0, %s18
      %s22 = sphi 0, %s21
      %s38 = sphi 0, %s22
      %s42 = sphi 0, %s42
      %s44 = sphi 0, %s42
      %s45 = sphi 0, %s44
      %s59 = sphi 0, %s45
      %s65 = sphi 0, %s67
      %s68 = sphi 0, %s65
      %s69 = sphi 0, %s68
      %s85 = sphi 0, %s69
    $region4: #{_lambda_.6} parent=1 // loop_header_branch
      %11 = sbr.rel (%p9) target = $region8
    $region5: #{_lambda_.6} parent=1 // loop_body
      %s13 = ssub.s32 %s8, 1
      %s14 = ssub.s32 %s8, 2
      %s15 = sadd.s32 %s8, 1
      %s16 = ssub.s32 %s8, %s15
      %p17 = scmp.eq.s32.totalorder %s16, 0
      %s19 = sadd.s32 %s18, 1
      %s20 = scalar_select %p17, %s18, %s19
      %p23 = pneg %p17
      %p24 = scmp.eq.s32.totalorder %s8, 1
      %p25 = por %p23, %p24
      %p26 = scmp.ne.s32.totalorder %s18, %s21
      %p27 = scmp.eq.s32.totalorder %s8, 0
      %p28 = por %p26, %p27
      %p29 = scmp.ne.s32.totalorder %s18, %s21
      %p30 = scmp.eq.s32.totalorder %s13, 1
      %p31 = por %p29, %p30
      %p32 = scmp.ne.s32.totalorder %s21, %s22
      %p33 = scmp.eq.s32.totalorder %s13, 0
      %p34 = por %p32, %p33
      %p35 = scmp.ne.s32.totalorder %s21, %s22
      %p36 = scmp.eq.s32.totalorder %s14, 1
      %p37 = por %p35, %p36
      %p39 = scmp.ne.s32.totalorder %s22, %s38
      %p40 = scmp.eq.s32.totalorder %s14, 0
      %p41 = por %p39, %p40
      %s43 = sadd.s32 %s42, 1
      %p46 = scmp.eq.s32.totalorder %s8, 1
      %p47 = scmp.ne.s32.totalorder %s42, %s44
      %p48 = scmp.eq.s32.totalorder %s8, 0
      %p49 = por %p47, %p48
      %p50 = scmp.ne.s32.totalorder %s42, %s44
      %p51 = scmp.eq.s32.totalorder %s13, 1
      %p52 = por %p50, %p51
      %p53 = scmp.ne.s32.totalorder %s44, %s45
      %p54 = scmp.eq.s32.totalorder %s13, 0
      %p55 = por %p53, %p54
      %p56 = scmp.ne.s32.totalorder %s44, %s45
      %p57 = scmp.eq.s32.totalorder %s14, 1
      %p58 = por %p56, %p57
      %p60 = scmp.ne.s32.totalorder %s45, %s59
      %p61 = scmp.eq.s32.totalorder %s14, 0
      %p62 = por %p60, %p61
      %s63 = ssub.s32 %s8, %s15
      %p64 = scmp.eq.s32.totalorder %s63, 0
      %s66 = sadd.s32 %s65, 1
      %s67 = scalar_select %p64, %s65, %s66
      %p70 = pneg %p64
      %p71 = scmp.eq.s32.totalorder %s8, 1
      %p72 = por %p70, %p71
      %p73 = scmp.ne.s32.totalorder %s65, %s68
      %p74 = scmp.eq.s32.totalorder %s8, 0
      %p75 = por %p73, %p74
      %p76 = scmp.ne.s32.totalorder %s65, %s68
      %p77 = scmp.eq.s32.totalorder %s13, 1
      %p78 = por %p76, %p77
      %p79 = scmp.ne.s32.totalorder %s68, %s69
      %p80 = scmp.eq.s32.totalorder %s13, 0
      %p81 = por %p79, %p80
      %p82 = scmp.ne.s32.totalorder %s68, %s69
      %p83 = scmp.eq.s32.totalorder %s14, 1
      %p84 = por %p82, %p83
      %p86 = scmp.ne.s32.totalorder %s69, %s85
      %p87 = scmp.eq.s32.totalorder %s14, 0
      %p88 = por %p86, %p87
      %p89 = scmp.le.s32.totalorder 1, %s8
      %p90 = scmp.lt.s32.totalorder %s8, 3
      %p91 = pnand %p89, %p90
      %p92 = pneg %p91
      // Predicated region
      $region9: #{_lambda_.6} parent=5 // pred_check
        _
      $region10: #{_lambda_.6} parent=5 // pred_check_branch
        %94 = sbr.rel (%p91) target = $region12
      $region11: #{_lambda_.6} parent=5 // pred_region
        %s95 = ssub.s32 %s8, 1
        // Predicated region
        $region13: #{_lambda_.6} parent=11 // pred_check
          %p96 = pneg %p55
        $region14: #{_lambda_.6} parent=11 // pred_check_branch
          %98 = sbr.rel (%p96) target = $region16
        $region15: #{_lambda_.6} parent=11 // pred_region
          _
        $region16: #{_lambda_.6} parent=11 // pred_fallthru
          _
      $region12: #{_lambda_.6} parent=5 // pred_fallthru
        _
      %p99 = scmp.lt.s32.totalorder %s8, 2
      // Predicated region
      $region17: #{_lambda_.6} parent=5 // pred_check
        %p100 = pneg %p99
      $region18: #{_lambda_.6} parent=5 // pred_check_branch
        %102 = sbr.rel (%p100) target = $region20
      $region19: #{_lambda_.6} parent=5 // pred_region
        // Predicated region
        $region21: #{_lambda_.6} parent=19 // pred_check
          %p103 = pneg %p28
        $region22: #{_lambda_.6} parent=19 // pred_check_branch
          %105 = sbr.rel (%p103) target = $region24
        $region23: #{_lambda_.6} parent=19 // pred_region
          %s106 = sand.u32 %s18, 1
          %s107 = sand.u32 %s18, 1
          %s108 = smul.addr %s107, 512
          %s109 = scalar_lea.vmem [#allocation2], %s108
          %s110 = smul.u32 16, %s8
          %s111 = smul.addr %s110, 4
          %s112 = scalar_lea.vmem %s0, %s111
          // Predicated region
          $region25: #{_lambda_.6} parent=23 // pred_check
            _
          $region26: #{_lambda_.6} parent=23 // pred_check_branch
            %114 = sbr.rel (0) target = $region28
          $region27: #{_lambda_.6} parent=23 // pred_region
            // Predicated region
            $region29: #{_lambda_.6} parent=27 // pred_check
              _
            $region30: #{_lambda_.6} parent=27 // pred_check_branch
              %116 = sbr.rel (0) target = $region32
            $region31: #{_lambda_.6} parent=27 // pred_region
              loop: start=0, step=1, limit=1
              $region33: #{_lambda_.6} parent=31 // loop_pre_header
                _
              $region34: #{_lambda_.6} parent=31 // loop_header
                %s118 = sphi 0, %s122
                %p119 = scmp.ge.s32.totalorder %s118, 1
                %s123 = sphi %s112, %s112
                %s124 = sphi %s109, %s109
              $region35: #{_lambda_.6} parent=31 // loop_header_branch
                %121 = sbr.rel (%p119) target = $region39
              $region36: #{_lambda_.6} parent=31 // loop_body
                %v125 = vld [vmem:[%s123] sm:$0xff]
                %126 = vst [vmem:[%s124] sm:$0xff] %v125
                %v127 = vld [vmem:[%s123 + $0x8] sm:$0xff]
                %128 = vst [vmem:[%s124 + $0x8] sm:$0xff] %v127
                %v129 = vld [vmem:[%s123 + $0x10] sm:$0xff]
                %130 = vst [vmem:[%s124 + $0x10] sm:$0xff] %v129
                %v131 = vld [vmem:[%s123 + $0x18] sm:$0xff]
                %132 = vst [vmem:[%s124 + $0x18] sm:$0xff] %v131
                %v133 = vld [vmem:[%s123 + $0x20] sm:$0xff]
                %134 = vst [vmem:[%s124 + $0x20] sm:$0xff] %v133
                %v135 = vld [vmem:[%s123 + $0x28] sm:$0xff]
                %136 = vst [vmem:[%s124 + $0x28] sm:$0xff] %v135
                %v137 = vld [vmem:[%s123 + $0x30] sm:$0xff]
                %138 = vst [vmem:[%s124 + $0x30] sm:$0xff] %v137
                %v139 = vld [vmem:[%s123 + $0x38] sm:$0xff]
                %140 = vst [vmem:[%s124 + $0x38] sm:$0xff] %v139
                %v141 = vld [vmem:[%s123 + $0x80] sm:$0xff]
                %142 = vst [vmem:[%s124 + $0x40] sm:$0xff] %v141
                %v143 = vld [vmem:[%s123 + $0x88] sm:$0xff]
                %144 = vst [vmem:[%s124 + $0x48] sm:$0xff] %v143
                %v145 = vld [vmem:[%s123 + $0x90] sm:$0xff]
                %146 = vst [vmem:[%s124 + $0x50] sm:$0xff] %v145
                %v147 = vld [vmem:[%s123 + $0x98] sm:$0xff]
                %148 = vst [vmem:[%s124 + $0x58] sm:$0xff] %v147
                %v149 = vld [vmem:[%s123 + $0xa0] sm:$0xff]
                %150 = vst [vmem:[%s124 + $0x60] sm:$0xff] %v149
                %v151 = vld [vmem:[%s123 + $0xa8] sm:$0xff]
                %152 = vst [vmem:[%s124 + $0x68] sm:$0xff] %v151
                %v153 = vld [vmem:[%s123 + $0xb0] sm:$0xff]
                %154 = vst [vmem:[%s124 + $0x70] sm:$0xff] %v153
                %v155 = vld [vmem:[%s123 + $0xb8] sm:$0xff]
                %156 = vst [vmem:[%s124 + $0x78] sm:$0xff] %v155
                %v157 = vld [vmem:[%s123 + $0x100] sm:$0xff]
                %158 = vst [vmem:[%s124 + $0x80] sm:$0xff] %v157
                %v159 = vld [vmem:[%s123 + $0x108] sm:$0xff]
                %160 = vst [vmem:[%s124 + $0x88] sm:$0xff] %v159
                %v161 = vld [vmem:[%s123 + $0x110] sm:$0xff]
                %162 = vst [vmem:[%s124 + $0x90] sm:$0xff] %v161
                %v163 = vld [vmem:[%s123 + $0x118] sm:$0xff]
                %164 = vst [vmem:[%s124 + $0x98] sm:$0xff] %v163
                %v165 = vld [vmem:[%s123 + $0x120] sm:$0xff]
                %166 = vst [vmem:[%s124 + $0xa0] sm:$0xff] %v165
                %v167 = vld [vmem:[%s123 + $0x128] sm:$0xff]
                %168 = vst [vmem:[%s124 + $0xa8] sm:$0xff] %v167
                %v169 = vld [vmem:[%s123 + $0x130] sm:$0xff]
                %170 = vst [vmem:[%s124 + $0xb0] sm:$0xff] %v169
                %v171 = vld [vmem:[%s123 + $0x138] sm:$0xff]
                %172 = vst [vmem:[%s124 + $0xb8] sm:$0xff] %v171
                %v173 = vld [vmem:[%s123 + $0x180] sm:$0xff]
                %174 = vst [vmem:[%s124 + $0xc0] sm:$0xff] %v173
                %v175 = vld [vmem:[%s123 + $0x188] sm:$0xff]
                %176 = vst [vmem:[%s124 + $0xc8] sm:$0xff] %v175
                %v177 = vld [vmem:[%s123 + $0x190] sm:$0xff]
                %178 = vst [vmem:[%s124 + $0xd0] sm:$0xff] %v177
                %v179 = vld [vmem:[%s123 + $0x198] sm:$0xff]
                %180 = vst [vmem:[%s124 + $0xd8] sm:$0xff] %v179
                %v181 = vld [vmem:[%s123 + $0x1a0] sm:$0xff]
                %182 = vst [vmem:[%s124 + $0xe0] sm:$0xff] %v181
                %v183 = vld [vmem:[%s123 + $0x1a8] sm:$0xff]
                %184 = vst [vmem:[%s124 + $0xe8] sm:$0xff] %v183
                %v185 = vld [vmem:[%s123 + $0x1b0] sm:$0xff]
                %186 = vst [vmem:[%s124 + $0xf0] sm:$0xff] %v185
                %v187 = vld [vmem:[%s123 + $0x1b8] sm:$0xff]
                %188 = vst [vmem:[%s124 + $0xf8] sm:$0xff] %v187
                %v189 = vld [vmem:[%s123 + $0x200] sm:$0xff]
                %190 = vst [vmem:[%s124 + $0x100] sm:$0xff] %v189
                %v191 = vld [vmem:[%s123 + $0x208] sm:$0xff]
                %192 = vst [vmem:[%s124 + $0x108] sm:$0xff] %v191
                %v193 = vld [vmem:[%s123 + $0x210] sm:$0xff]
                %194 = vst [vmem:[%s124 + $0x110] sm:$0xff] %v193
                %v195 = vld [vmem:[%s123 + $0x218] sm:$0xff]
                %196 = vst [vmem:[%s124 + $0x118] sm:$0xff] %v195
                %v197 = vld [vmem:[%s123 + $0x220] sm:$0xff]
                %198 = vst [vmem:[%s124 + $0x120] sm:$0xff] %v197
                %v199 = vld [vmem:[%s123 + $0x228] sm:$0xff]
                %200 = vst [vmem:[%s124 + $0x128] sm:$0xff] %v199
                %v201 = vld [vmem:[%s123 + $0x230] sm:$0xff]
                %202 = vst [vmem:[%s124 + $0x130] sm:$0xff] %v201
                %v203 = vld [vmem:[%s123 + $0x238] sm:$0xff]
                %204 = vst [vmem:[%s124 + $0x138] sm:$0xff] %v203
                %v205 = vld [vmem:[%s123 + $0x280] sm:$0xff]
                %206 = vst [vmem:[%s124 + $0x140] sm:$0xff] %v205
                %v207 = vld [vmem:[%s123 + $0x288] sm:$0xff]
                %208 = vst [vmem:[%s124 + $0x148] sm:$0xff] %v207
                %v209 = vld [vmem:[%s123 + $0x290] sm:$0xff]
                %210 = vst [vmem:[%s124 + $0x150] sm:$0xff] %v209
                %v211 = vld [vmem:[%s123 + $0x298] sm:$0xff]
                %212 = vst [vmem:[%s124 + $0x158] sm:$0xff] %v211
                %v213 = vld [vmem:[%s123 + $0x2a0] sm:$0xff]
                %214 = vst [vmem:[%s124 + $0x160] sm:$0xff] %v213
                %v215 = vld [vmem:[%s123 + $0x2a8] sm:$0xff]
                %216 = vst [vmem:[%s124 + $0x168] sm:$0xff] %v215
                %v217 = vld [vmem:[%s123 + $0x2b0] sm:$0xff]
                %218 = vst [vmem:[%s124 + $0x170] sm:$0xff] %v217
                %v219 = vld [vmem:[%s123 + $0x2b8] sm:$0xff]
                %220 = vst [vmem:[%s124 + $0x178] sm:$0xff] %v219
                %v221 = vld [vmem:[%s123 + $0x300] sm:$0xff]
                %222 = vst [vmem:[%s124 + $0x180] sm:$0xff] %v221
                %v223 = vld [vmem:[%s123 + $0x308] sm:$0xff]
                %224 = vst [vmem:[%s124 + $0x188] sm:$0xff] %v223
                %v225 = vld [vmem:[%s123 + $0x310] sm:$0xff]
                %226 = vst [vmem:[%s124 + $0x190] sm:$0xff] %v225
                %v227 = vld [vmem:[%s123 + $0x318] sm:$0xff]
                %228 = vst [vmem:[%s124 + $0x198] sm:$0xff] %v227
                %v229 = vld [vmem:[%s123 + $0x320] sm:$0xff]
                %230 = vst [vmem:[%s124 + $0x1a0] sm:$0xff] %v229
                %v231 = vld [vmem:[%s123 + $0x328] sm:$0xff]
                %232 = vst [vmem:[%s124 + $0x1a8] sm:$0xff] %v231
                %v233 = vld [vmem:[%s123 + $0x330] sm:$0xff]
                %234 = vst [vmem:[%s124 + $0x1b0] sm:$0xff] %v233
                %v235 = vld [vmem:[%s123 + $0x338] sm:$0xff]
                %236 = vst [vmem:[%s124 + $0x1b8] sm:$0xff] %v235
                %v237 = vld [vmem:[%s123 + $0x380] sm:$0xff]
                %238 = vst [vmem:[%s124 + $0x1c0] sm:$0xff] %v237
                %v239 = vld [vmem:[%s123 + $0x388] sm:$0xff]
                %240 = vst [vmem:[%s124 + $0x1c8] sm:$0xff] %v239
                %v241 = vld [vmem:[%s123 + $0x390] sm:$0xff]
                %242 = vst [vmem:[%s124 + $0x1d0] sm:$0xff] %v241
                %v243 = vld [vmem:[%s123 + $0x398] sm:$0xff]
                %244 = vst [vmem:[%s124 + $0x1d8] sm:$0xff] %v243
                %v245 = vld [vmem:[%s123 + $0x3a0] sm:$0xff]
                %246 = vst [vmem:[%s124 + $0x1e0] sm:$0xff] %v245
                %v247 = vld [vmem:[%s123 + $0x3a8] sm:$0xff]
                %248 = vst [vmem:[%s124 + $0x1e8] sm:$0xff] %v247
                %v249 = vld [vmem:[%s123 + $0x3b0] sm:$0xff]
                %250 = vst [vmem:[%s124 + $0x1f0] sm:$0xff] %v249
                %v251 = vld [vmem:[%s123 + $0x3b8] sm:$0xff]
                %252 = vst [vmem:[%s124 + $0x1f8] sm:$0xff] %v251
              $region37: #{_lambda_.6} parent=31 // loop_footer
                %s122 = sadd.s32 1, %s118
              $region38: #{_lambda_.6} parent=31 // loop_footer_branch
                %117 = sbr.rel target = $region34
              $region39: #{_lambda_.6} parent=31 // loop_exit
                _
            $region32: #{_lambda_.6} parent=27 // pred_fallthru
              _
            // Predicated region
            $region40: #{_lambda_.6} parent=27 // pred_check
              _
            $region41: #{_lambda_.6} parent=27 // pred_check_branch
              %254 = sbr.rel target = $region43
            $region42: #{_lambda_.6} parent=27 // pred_region
              _
            $region43: #{_lambda_.6} parent=27 // pred_fallthru
              _
          $region28: #{_lambda_.6} parent=23 // pred_fallthru
            _
          %255 = vnop
        $region24: #{_lambda_.6} parent=19 // pred_fallthru
          _
      $region20: #{_lambda_.6} parent=5 // pred_fallthru
        _
      %p256 = scmp.le.s32.totalorder 1, %s8
      %p257 = scmp.lt.s32.totalorder %s8, 3
      %p258 = pnand %p256, %p257
      %p259 = pneg %p258
      // Predicated region
      $region44: #{_lambda_.6} parent=5 // pred_check
        _
      $region45: #{_lambda_.6} parent=5 // pred_check_branch
        %261 = sbr.rel (%p258) target = $region47
      $region46: #{_lambda_.6} parent=5 // pred_region
        %s262 = ssub.s32 %s8, 1
        %s263 = sand.u32 %s21, 1
        %s264 = sand.u32 %s21, 1
        %s265 = smul.addr %s264, 512
        %s266 = scalar_lea.vmem [#allocation2], %s265
        // Predicated region
        $region48: #{_lambda_.6} parent=46 // pred_check
          %p267 = pneg %p34
        $region49: #{_lambda_.6} parent=46 // pred_check_branch
          %269 = sbr.rel (%p267) target = $region51
        $region50: #{_lambda_.6} parent=46 // pred_region
          _
        $region51: #{_lambda_.6} parent=46 // pred_fallthru
          _
        %s270 = sand.u32 %s21, 1
        %s271 = sand.u32 %s21, 1
        %s272 = smul.addr %s271, 512
        %s273 = scalar_lea.vmem [#allocation2], %s272
        %p274 = pneg %p34
        %p275 = pneg %p31
        %p276 = pneg %p55
        %p277 = pneg %p52
        %p278 = pneg %p81
        %p279 = pneg %p78
        %s280 = smul.u32 16, %s13
        %p281 = scmp.lt.s32.totalorder %s280, 31
        %s282 = scalar_select %p281, %s280, 31
        %s283 = smul.addr %s282, 4
        %s284 = scalar_lea.vmem %s2, %s283
        %s285 = smul.u32 16, %s13
        %s286 = smul.u32 16, %s13
        %p287 = scmp.lt.s32.totalorder %s286, 31
        %s288 = scalar_select %p287, %s286, 31
        %s289 = smul.addr %s288, 4
        %s290 = scalar_lea.vmem %s2, %s289
        %s291 = smul.u32 16, %s13
        %v293 = vld [vmem:[%s1] sm:$0xf]
        %v294 = vld [vmem:[%s266] sm:$0xff]
        %v295 = vld [vmem:[%s266 + $0x8] sm:$0xff]
        %v296 = vld [vmem:[%s266 + $0x10] sm:$0xff]
        %v297 = vld [vmem:[%s266 + $0x18] sm:$0xff]
        %v298 = vld [vmem:[%s266 + $0x20] sm:$0xff]
        %v299 = vld [vmem:[%s266 + $0x28] sm:$0xff]
        %v300 = vld [vmem:[%s266 + $0x30] sm:$0xff]
        %v301 = vld [vmem:[%s266 + $0x38] sm:$0xff]
        %v302 = vld [vmem:[%s266 + $0x40] sm:$0xff]
        %v303 = vld [vmem:[%s266 + $0x48] sm:$0xff]
        %v304 = vld [vmem:[%s266 + $0x50] sm:$0xff]
        %v305 = vld [vmem:[%s266 + $0x58] sm:$0xff]
        %v306 = vld [vmem:[%s266 + $0x60] sm:$0xff]
        %v307 = vld [vmem:[%s266 + $0x68] sm:$0xff]
        %v308 = vld [vmem:[%s266 + $0x70] sm:$0xff]
        %v309 = vld [vmem:[%s266 + $0x78] sm:$0xff]
        %v310 = vld [vmem:[%s266 + $0x80] sm:$0xff]
        %v311 = vld [vmem:[%s266 + $0x88] sm:$0xff]
        %v312 = vld [vmem:[%s266 + $0x90] sm:$0xff]
        %v313 = vld [vmem:[%s266 + $0x98] sm:$0xff]
        %v314 = vld [vmem:[%s266 + $0xa0] sm:$0xff]
        %v315 = vld [vmem:[%s266 + $0xa8] sm:$0xff]
        %v316 = vld [vmem:[%s266 + $0xb0] sm:$0xff]
        %v317 = vld [vmem:[%s266 + $0xb8] sm:$0xff]
        %v318 = vld [vmem:[%s266 + $0xc0] sm:$0xff]
        %v319 = vld [vmem:[%s266 + $0xc8] sm:$0xff]
        %v320 = vld [vmem:[%s266 + $0xd0] sm:$0xff]
        %v321 = vld [vmem:[%s266 + $0xd8] sm:$0xff]
        %v322 = vld [vmem:[%s266 + $0xe0] sm:$0xff]
        %v323 = vld [vmem:[%s266 + $0xe8] sm:$0xff]
        %v324 = vld [vmem:[%s266 + $0xf0] sm:$0xff]
        %v325 = vld [vmem:[%s266 + $0xf8] sm:$0xff]
        %v326 = vld [vmem:[%s266 + $0x100] sm:$0xff]
        %v327 = vld [vmem:[%s266 + $0x108] sm:$0xff]
        %v328 = vld [vmem:[%s266 + $0x110] sm:$0xff]
        %v329 = vld [vmem:[%s266 + $0x118] sm:$0xff]
        %v330 = vld [vmem:[%s266 + $0x120] sm:$0xff]
        %v331 = vld [vmem:[%s266 + $0x128] sm:$0xff]
        %v332 = vld [vmem:[%s266 + $0x130] sm:$0xff]
        %v333 = vld [vmem:[%s266 + $0x138] sm:$0xff]
        %v334 = vld [vmem:[%s266 + $0x140] sm:$0xff]
        %v335 = vld [vmem:[%s266 + $0x148] sm:$0xff]
        %v336 = vld [vmem:[%s266 + $0x150] sm:$0xff]
        %v337 = vld [vmem:[%s266 + $0x158] sm:$0xff]
        %v338 = vld [vmem:[%s266 + $0x160] sm:$0xff]
        %v339 = vld [vmem:[%s266 + $0x168] sm:$0xff]
        %v340 = vld [vmem:[%s266 + $0x170] sm:$0xff]
        %v341 = vld [vmem:[%s266 + $0x178] sm:$0xff]
        %v342 = vld [vmem:[%s266 + $0x180] sm:$0xff]
        %v343 = vld [vmem:[%s266 + $0x188] sm:$0xff]
        %v344 = vld [vmem:[%s266 + $0x190] sm:$0xff]
        %v345 = vld [vmem:[%s266 + $0x198] sm:$0xff]
        %v346 = vld [vmem:[%s266 + $0x1a0] sm:$0xff]
        %v347 = vld [vmem:[%s266 + $0x1a8] sm:$0xff]
        %v348 = vld [vmem:[%s266 + $0x1b0] sm:$0xff]
        %v349 = vld [vmem:[%s266 + $0x1b8] sm:$0xff]
        %v350 = vld [vmem:[%s266 + $0x1c0] sm:$0xff]
        %v351 = vld [vmem:[%s266 + $0x1c8] sm:$0xff]
        %v352 = vld [vmem:[%s266 + $0x1d0] sm:$0xff]
        %v353 = vld [vmem:[%s266 + $0x1d8] sm:$0xff]
        %v354 = vld [vmem:[%s266 + $0x1e0] sm:$0xff]
        %v355 = vld [vmem:[%s266 + $0x1e8] sm:$0xff]
        %v356 = vld [vmem:[%s266 + $0x1f0] sm:$0xff]
        %v357 = vld [vmem:[%s266 + $0x1f8] sm:$0xff]
        %v422 = vunpack.c.l.b16 %v294
        %v423 = vunpack.c.h.b16 %v294
        %v424 = vunpack.c.l.b16 %v295
        %v425 = vunpack.c.h.b16 %v295
        %v426 = vunpack.c.l.b16 %v296
        %v427 = vunpack.c.h.b16 %v296
        %v428 = vunpack.c.l.b16 %v297
        %v429 = vunpack.c.h.b16 %v297
        %v430 = vunpack.c.l.b16 %v298
        %v431 = vunpack.c.h.b16 %v298
        %v432 = vunpack.c.l.b16 %v299
        %v433 = vunpack.c.h.b16 %v299
        %v434 = vunpack.c.l.b16 %v300
        %v435 = vunpack.c.h.b16 %v300
        %v436 = vunpack.c.l.b16 %v301
        %v437 = vunpack.c.h.b16 %v301
        %v438 = vunpack.c.l.b16 %v302
        %v439 = vunpack.c.h.b16 %v302
        %v440 = vunpack.c.l.b16 %v303
        %v441 = vunpack.c.h.b16 %v303
        %v442 = vunpack.c.l.b16 %v304
        %v443 = vunpack.c.h.b16 %v304
        %v444 = vunpack.c.l.b16 %v305
        %v445 = vunpack.c.h.b16 %v305
        %v446 = vunpack.c.l.b16 %v306
        %v447 = vunpack.c.h.b16 %v306
        %v448 = vunpack.c.l.b16 %v307
        %v449 = vunpack.c.h.b16 %v307
        %v450 = vunpack.c.l.b16 %v308
        %v451 = vunpack.c.h.b16 %v308
        %v452 = vunpack.c.l.b16 %v309
        %v453 = vunpack.c.h.b16 %v309
        %v454 = vunpack.c.l.b16 %v310
        %v455 = vunpack.c.h.b16 %v310
        %v456 = vunpack.c.l.b16 %v311
        %v457 = vunpack.c.h.b16 %v311
        %v458 = vunpack.c.l.b16 %v312
        %v459 = vunpack.c.h.b16 %v312
        %v460 = vunpack.c.l.b16 %v313
        %v461 = vunpack.c.h.b16 %v313
        %v462 = vunpack.c.l.b16 %v314
        %v463 = vunpack.c.h.b16 %v314
        %v464 = vunpack.c.l.b16 %v315
        %v465 = vunpack.c.h.b16 %v315
        %v466 = vunpack.c.l.b16 %v316
        %v467 = vunpack.c.h.b16 %v316
        %v468 = vunpack.c.l.b16 %v317
        %v469 = vunpack.c.h.b16 %v317
        %v470 = vunpack.c.l.b16 %v318
        %v471 = vunpack.c.h.b16 %v318
        %v472 = vunpack.c.l.b16 %v319
        %v473 = vunpack.c.h.b16 %v319
        %v474 = vunpack.c.l.b16 %v320
        %v475 = vunpack.c.h.b16 %v320
        %v476 = vunpack.c.l.b16 %v321
        %v477 = vunpack.c.h.b16 %v321
        %v478 = vunpack.c.l.b16 %v322
        %v479 = vunpack.c.h.b16 %v322
        %v480 = vunpack.c.l.b16 %v323
        %v481 = vunpack.c.h.b16 %v323
        %v482 = vunpack.c.l.b16 %v324
        %v483 = vunpack.c.h.b16 %v324
        %v484 = vunpack.c.l.b16 %v325
        %v485 = vunpack.c.h.b16 %v325
        %v486 = vunpack.c.l.b16 %v326
        %v487 = vunpack.c.h.b16 %v326
        %v488 = vunpack.c.l.b16 %v327
        %v489 = vunpack.c.h.b16 %v327
        %v490 = vunpack.c.l.b16 %v328
        %v491 = vunpack.c.h.b16 %v328
        %v492 = vunpack.c.l.b16 %v329
        %v493 = vunpack.c.h.b16 %v329
        %v494 = vunpack.c.l.b16 %v330
        %v495 = vunpack.c.h.b16 %v330
        %v496 = vunpack.c.l.b16 %v331
        %v497 = vunpack.c.h.b16 %v331
        %v498 = vunpack.c.l.b16 %v332
        %v499 = vunpack.c.h.b16 %v332
        %v500 = vunpack.c.l.b16 %v333
        %v501 = vunpack.c.h.b16 %v333
        %v502 = vunpack.c.l.b16 %v334
        %v503 = vunpack.c.h.b16 %v334
        %v504 = vunpack.c.l.b16 %v335
        %v505 = vunpack.c.h.b16 %v335
        %v506 = vunpack.c.l.b16 %v336
        %v507 = vunpack.c.h.b16 %v336
        %v508 = vunpack.c.l.b16 %v337
        %v509 = vunpack.c.h.b16 %v337
        %v510 = vunpack.c.l.b16 %v338
        %v511 = vunpack.c.h.b16 %v338
        %v512 = vunpack.c.l.b16 %v339
        %v513 = vunpack.c.h.b16 %v339
        %v514 = vunpack.c.l.b16 %v340
        %v515 = vunpack.c.h.b16 %v340
        %v516 = vunpack.c.l.b16 %v341
        %v517 = vunpack.c.h.b16 %v341
        %v518 = vunpack.c.l.b16 %v342
        %v519 = vunpack.c.h.b16 %v342
        %v520 = vunpack.c.l.b16 %v343
        %v521 = vunpack.c.h.b16 %v343
        %v522 = vunpack.c.l.b16 %v344
        %v523 = vunpack.c.h.b16 %v344
        %v524 = vunpack.c.l.b16 %v345
        %v525 = vunpack.c.h.b16 %v345
        %v526 = vunpack.c.l.b16 %v346
        %v527 = vunpack.c.h.b16 %v346
        %v528 = vunpack.c.l.b16 %v347
        %v529 = vunpack.c.h.b16 %v347
        %v530 = vunpack.c.l.b16 %v348
        %v531 = vunpack.c.h.b16 %v348
        %v532 = vunpack.c.l.b16 %v349
        %v533 = vunpack.c.h.b16 %v349
        %v534 = vunpack.c.l.b16 %v350
        %v535 = vunpack.c.h.b16 %v350
        %v536 = vunpack.c.l.b16 %v351
        %v537 = vunpack.c.h.b16 %v351
        %v538 = vunpack.c.l.b16 %v352
        %v539 = vunpack.c.h.b16 %v352
        %v540 = vunpack.c.l.b16 %v353
        %v541 = vunpack.c.h.b16 %v353
        %v542 = vunpack.c.l.b16 %v354
        %v543 = vunpack.c.h.b16 %v354
        %v544 = vunpack.c.l.b16 %v355
        %v545 = vunpack.c.h.b16 %v355
        %v546 = vunpack.c.l.b16 %v356
        %v547 = vunpack.c.h.b16 %v356
        %v548 = vunpack.c.l.b16 %v357
        %v549 = vunpack.c.h.b16 %v357
        %v550 = vpack.c.b16 %v438, %v422
        %v551 = vpack.c.b16 %v439, %v423
        %v552 = vpack.c.b16 %v440, %v424
        %v553 = vpack.c.b16 %v441, %v425
        %v554 = vpack.c.b16 %v442, %v426
        %v555 = vpack.c.b16 %v443, %v427
        %v556 = vpack.c.b16 %v444, %v428
        %v557 = vpack.c.b16 %v445, %v429
        %v558 = vpack.c.b16 %v446, %v430
        %v559 = vpack.c.b16 %v447, %v431
        %v560 = vpack.c.b16 %v448, %v432
        %v561 = vpack.c.b16 %v449, %v433
        %v562 = vpack.c.b16 %v450, %v434
        %v563 = vpack.c.b16 %v451, %v435
        %v564 = vpack.c.b16 %v452, %v436
        %v565 = vpack.c.b16 %v453, %v437
        %v566 = vpack.c.b16 %v470, %v454
        %v567 = vpack.c.b16 %v471, %v455
        %v568 = vpack.c.b16 %v472, %v456
        %v569 = vpack.c.b16 %v473, %v457
        %v570 = vpack.c.b16 %v474, %v458
        %v571 = vpack.c.b16 %v475, %v459
        %v572 = vpack.c.b16 %v476, %v460
        %v573 = vpack.c.b16 %v477, %v461
        %v574 = vpack.c.b16 %v478, %v462
        %v575 = vpack.c.b16 %v479, %v463
        %v576 = vpack.c.b16 %v480, %v464
        %v577 = vpack.c.b16 %v481, %v465
        %v578 = vpack.c.b16 %v482, %v466
        %v579 = vpack.c.b16 %v483, %v467
        %v580 = vpack.c.b16 %v484, %v468
        %v581 = vpack.c.b16 %v485, %v469
        %v582 = vpack.c.b16 %v502, %v486
        %v583 = vpack.c.b16 %v503, %v487
        %v584 = vpack.c.b16 %v504, %v488
        %v585 = vpack.c.b16 %v505, %v489
        %v586 = vpack.c.b16 %v506, %v490
        %v587 = vpack.c.b16 %v507, %v491
        %v588 = vpack.c.b16 %v508, %v492
        %v589 = vpack.c.b16 %v509, %v493
        %v590 = vpack.c.b16 %v510, %v494
        %v591 = vpack.c.b16 %v511, %v495
        %v592 = vpack.c.b16 %v512, %v496
        %v593 = vpack.c.b16 %v513, %v497
        %v594 = vpack.c.b16 %v514, %v498
        %v595 = vpack.c.b16 %v515, %v499
        %v596 = vpack.c.b16 %v516, %v500
        %v597 = vpack.c.b16 %v517, %v501
        %v598 = vpack.c.b16 %v534, %v518
        %v599 = vpack.c.b16 %v535, %v519
        %v600 = vpack.c.b16 %v536, %v520
        %v601 = vpack.c.b16 %v537, %v521
        %v602 = vpack.c.b16 %v538, %v522
        %v603 = vpack.c.b16 %v539, %v523
        %v604 = vpack.c.b16 %v540, %v524
        %v605 = vpack.c.b16 %v541, %v525
        %v606 = vpack.c.b16 %v542, %v526
        %v607 = vpack.c.b16 %v543, %v527
        %v608 = vpack.c.b16 %v544, %v528
        %v609 = vpack.c.b16 %v545, %v529
        %v610 = vpack.c.b16 %v546, %v530
        %v611 = vpack.c.b16 %v547, %v531
        %v612 = vpack.c.b16 %v548, %v532
        %v613 = vpack.c.b16 %v549, %v533
        %vm678 = vcmask 523264
        %v680 = vsel %vm678, %v293, 0
        %682 = vmatpush.bf16.msra.mxu0 0
        %683 = vmatpush.bf16.msra.mxu0 0
        %684 = vmatpush.bf16.msra.mxu0 0
        %685 = vmatpush.bf16.msra.mxu0 0
        %686 = vmatpush.bf16.msra.mxu0 %v598
        %687 = vmatpush.bf16.msra.mxu0 %v582
        %688 = vmatpush.bf16.msra.mxu0 %v566
        %689 = vmatpush.bf16.msra.mxu0 %v550
        %690 = vmatmul.bf16.gmra.mxu0 %v680
        %v691 = vpop.f32.mrf.mxu0
        %v692 = vadd.f32 0.0, %v691
        %v693 = vpop.f32.mrf.mxu0
        %694 = vdwg.mxu0
        %695 = vmatpush.bf16.msra.mxu0 0
        %696 = vmatpush.bf16.msra.mxu0 0
        %697 = vmatpush.bf16.msra.mxu0 0
        %698 = vmatpush.bf16.msra.mxu0 0
        %699 = vmatpush.bf16.msra.mxu0 %v599
        %700 = vmatpush.bf16.msra.mxu0 %v583
        %701 = vmatpush.bf16.msra.mxu0 %v567
        %702 = vmatpush.bf16.msra.mxu0 %v551
        %703 = vmatmul.bf16.gmra.mxu0 %v680
        %v704 = vpop.f32.mrf.mxu0
        %v705 = vadd.f32 0.0, %v704
        %v706 = vpop.f32.mrf.mxu0
        %707 = vdwg.mxu0
        %708 = vmatpush.bf16.msra.mxu0 0
        %709 = vmatpush.bf16.msra.mxu0 0
        %710 = vmatpush.bf16.msra.mxu0 0
        %711 = vmatpush.bf16.msra.mxu0 0
        %712 = vmatpush.bf16.msra.mxu0 %v600
        %713 = vmatpush.bf16.msra.mxu0 %v584
        %714 = vmatpush.bf16.msra.mxu0 %v568
        %715 = vmatpush.bf16.msra.mxu0 %v552
        %716 = vmatmul.bf16.gmra.mxu0 %v680
        %v717 = vpop.f32.mrf.mxu0
        %v718 = vadd.f32 0.0, %v717
        %v719 = vpop.f32.mrf.mxu0
        %720 = vdwg.mxu0
        %721 = vmatpush.bf16.msra.mxu0 0
        %722 = vmatpush.bf16.msra.mxu0 0
        %723 = vmatpush.bf16.msra.mxu0 0
        %724 = vmatpush.bf16.msra.mxu0 0
        %725 = vmatpush.bf16.msra.mxu0 %v601
        %726 = vmatpush.bf16.msra.mxu0 %v585
        %727 = vmatpush.bf16.msra.mxu0 %v569
        %728 = vmatpush.bf16.msra.mxu0 %v553
        %729 = vmatmul.bf16.gmra.mxu0 %v680
        %v730 = vpop.f32.mrf.mxu0
        %v731 = vadd.f32 0.0, %v730
        %v732 = vpop.f32.mrf.mxu0
        %733 = vdwg.mxu0
        %734 = vmatpush.bf16.msra.mxu0 0
        %735 = vmatpush.bf16.msra.mxu0 0
        %736 = vmatpush.bf16.msra.mxu0 0
        %737 = vmatpush.bf16.msra.mxu0 0
        %738 = vmatpush.bf16.msra.mxu0 %v602
        %739 = vmatpush.bf16.msra.mxu0 %v586
        %740 = vmatpush.bf16.msra.mxu0 %v570
        %741 = vmatpush.bf16.msra.mxu0 %v554
        %742 = vmatmul.bf16.gmra.mxu0 %v680
        %v743 = vpop.f32.mrf.mxu0
        %v744 = vadd.f32 0.0, %v743
        %v745 = vpop.f32.mrf.mxu0
        %746 = vdwg.mxu0
        %747 = vmatpush.bf16.msra.mxu0 0
        %748 = vmatpush.bf16.msra.mxu0 0
        %749 = vmatpush.bf16.msra.mxu0 0
        %750 = vmatpush.bf16.msra.mxu0 0
        %751 = vmatpush.bf16.msra.mxu0 %v603
        %752 = vmatpush.bf16.msra.mxu0 %v587
        %753 = vmatpush.bf16.msra.mxu0 %v571
        %754 = vmatpush.bf16.msra.mxu0 %v555
        %755 = vmatmul.bf16.gmra.mxu0 %v680
        %v756 = vpop.f32.mrf.mxu0
        %v757 = vadd.f32 0.0, %v756
        %v758 = vpop.f32.mrf.mxu0
        %759 = vdwg.mxu0
        %760 = vmatpush.bf16.msra.mxu0 0
        %761 = vmatpush.bf16.msra.mxu0 0
        %762 = vmatpush.bf16.msra.mxu0 0
        %763 = vmatpush.bf16.msra.mxu0 0
        %764 = vmatpush.bf16.msra.mxu0 %v604
        %765 = vmatpush.bf16.msra.mxu0 %v588
        %766 = vmatpush.bf16.msra.mxu0 %v572
        %767 = vmatpush.bf16.msra.mxu0 %v556
        %768 = vmatmul.bf16.gmra.mxu0 %v680
        %v769 = vpop.f32.mrf.mxu0
        %v770 = vadd.f32 0.0, %v769
        %v771 = vpop.f32.mrf.mxu0
        %772 = vdwg.mxu0
        %773 = vmatpush.bf16.msra.mxu0 0
        %774 = vmatpush.bf16.msra.mxu0 0
        %775 = vmatpush.bf16.msra.mxu0 0
        %776 = vmatpush.bf16.msra.mxu0 0
        %777 = vmatpush.bf16.msra.mxu0 %v605
        %778 = vmatpush.bf16.msra.mxu0 %v589
        %779 = vmatpush.bf16.msra.mxu0 %v573
        %780 = vmatpush.bf16.msra.mxu0 %v557
        %781 = vmatmul.bf16.gmra.mxu0 %v680
        %v782 = vpop.f32.mrf.mxu0
        %v783 = vadd.f32 0.0, %v782
        %v784 = vpop.f32.mrf.mxu0
        %785 = vdwg.mxu0
        %786 = vmatpush.bf16.msra.mxu0 0
        %787 = vmatpush.bf16.msra.mxu0 0
        %788 = vmatpush.bf16.msra.mxu0 0
        %789 = vmatpush.bf16.msra.mxu0 0
        %790 = vmatpush.bf16.msra.mxu0 %v606
        %791 = vmatpush.bf16.msra.mxu0 %v590
        %792 = vmatpush.bf16.msra.mxu0 %v574
        %793 = vmatpush.bf16.msra.mxu0 %v558
        %794 = vmatmul.bf16.gmra.mxu0 %v680
        %v795 = vpop.f32.mrf.mxu0
        %v796 = vadd.f32 0.0, %v795
        %v797 = vpop.f32.mrf.mxu0
        %798 = vdwg.mxu0
        %799 = vmatpush.bf16.msra.mxu0 0
        %800 = vmatpush.bf16.msra.mxu0 0
        %801 = vmatpush.bf16.msra.mxu0 0
        %802 = vmatpush.bf16.msra.mxu0 0
        %803 = vmatpush.bf16.msra.mxu0 %v607
        %804 = vmatpush.bf16.msra.mxu0 %v591
        %805 = vmatpush.bf16.msra.mxu0 %v575
        %806 = vmatpush.bf16.msra.mxu0 %v559
        %807 = vmatmul.bf16.gmra.mxu0 %v680
        %v808 = vpop.f32.mrf.mxu0
        %v809 = vadd.f32 0.0, %v808
        %v810 = vpop.f32.mrf.mxu0
        %811 = vdwg.mxu0
        %812 = vmatpush.bf16.msra.mxu0 0
        %813 = vmatpush.bf16.msra.mxu0 0
        %814 = vmatpush.bf16.msra.mxu0 0
        %815 = vmatpush.bf16.msra.mxu0 0
        %816 = vmatpush.bf16.msra.mxu0 %v608
        %817 = vmatpush.bf16.msra.mxu0 %v592
        %818 = vmatpush.bf16.msra.mxu0 %v576
        %819 = vmatpush.bf16.msra.mxu0 %v560
        %820 = vmatmul.bf16.gmra.mxu0 %v680
        %v821 = vpop.f32.mrf.mxu0
        %v822 = vadd.f32 0.0, %v821
        %v823 = vpop.f32.mrf.mxu0
        %824 = vdwg.mxu0
        %825 = vmatpush.bf16.msra.mxu0 0
        %826 = vmatpush.bf16.msra.mxu0 0
        %827 = vmatpush.bf16.msra.mxu0 0
        %828 = vmatpush.bf16.msra.mxu0 0
        %829 = vmatpush.bf16.msra.mxu0 %v609
        %830 = vmatpush.bf16.msra.mxu0 %v593
        %831 = vmatpush.bf16.msra.mxu0 %v577
        %832 = vmatpush.bf16.msra.mxu0 %v561
        %833 = vmatmul.bf16.gmra.mxu0 %v680
        %v834 = vpop.f32.mrf.mxu0
        %v835 = vadd.f32 0.0, %v834
        %v836 = vpop.f32.mrf.mxu0
        %837 = vdwg.mxu0
        %838 = vmatpush.bf16.msra.mxu0 0
        %839 = vmatpush.bf16.msra.mxu0 0
        %840 = vmatpush.bf16.msra.mxu0 0
        %841 = vmatpush.bf16.msra.mxu0 0
        %842 = vmatpush.bf16.msra.mxu0 %v610
        %843 = vmatpush.bf16.msra.mxu0 %v594
        %844 = vmatpush.bf16.msra.mxu0 %v578
        %845 = vmatpush.bf16.msra.mxu0 %v562
        %846 = vmatmul.bf16.gmra.mxu0 %v680
        %v847 = vpop.f32.mrf.mxu0
        %v848 = vadd.f32 0.0, %v847
        %v849 = vpop.f32.mrf.mxu0
        %850 = vdwg.mxu0
        %851 = vmatpush.bf16.msra.mxu0 0
        %852 = vmatpush.bf16.msra.mxu0 0
        %853 = vmatpush.bf16.msra.mxu0 0
        %854 = vmatpush.bf16.msra.mxu0 0
        %855 = vmatpush.bf16.msra.mxu0 %v611
        %856 = vmatpush.bf16.msra.mxu0 %v595
        %857 = vmatpush.bf16.msra.mxu0 %v579
        %858 = vmatpush.bf16.msra.mxu0 %v563
        %859 = vmatmul.bf16.gmra.mxu0 %v680
        %v860 = vpop.f32.mrf.mxu0
        %v861 = vadd.f32 0.0, %v860
        %v862 = vpop.f32.mrf.mxu0
        %863 = vdwg.mxu0
        %864 = vmatpush.bf16.msra.mxu0 0
        %865 = vmatpush.bf16.msra.mxu0 0
        %866 = vmatpush.bf16.msra.mxu0 0
        %867 = vmatpush.bf16.msra.mxu0 0
        %868 = vmatpush.bf16.msra.mxu0 %v612
        %869 = vmatpush.bf16.msra.mxu0 %v596
        %870 = vmatpush.bf16.msra.mxu0 %v580
        %871 = vmatpush.bf16.msra.mxu0 %v564
        %872 = vmatmul.bf16.gmra.mxu0 %v680
        %v873 = vpop.f32.mrf.mxu0
        %v874 = vadd.f32 0.0, %v873
        %v875 = vpop.f32.mrf.mxu0
        %876 = vdwg.mxu0
        %877 = vmatpush.bf16.msra.mxu0 0
        %878 = vmatpush.bf16.msra.mxu0 0
        %879 = vmatpush.bf16.msra.mxu0 0
        %880 = vmatpush.bf16.msra.mxu0 0
        %881 = vmatpush.bf16.msra.mxu0 %v613
        %882 = vmatpush.bf16.msra.mxu0 %v597
        %883 = vmatpush.bf16.msra.mxu0 %v581
        %884 = vmatpush.bf16.msra.mxu0 %v565
        %885 = vmatmul.bf16.gmra.mxu0 %v680
        %v886 = vpop.f32.mrf.mxu0
        %v887 = vadd.f32 0.0, %v886
        %v888 = vpop.f32.mrf.mxu0
        %889 = vdwg.mxu0
        %v890 = vadd.f32 %v692, %v705
        %v891 = vadd.f32 %v890, %v718
        %v892 = vadd.f32 %v891, %v731
        %v893 = vadd.f32 %v892, %v744
        %v894 = vadd.f32 %v893, %v757
        %v895 = vadd.f32 %v894, %v770
        %v896 = vadd.f32 %v895, %v783
        %897 = vadd.xlane.f32.xlu0 %v896
        %v898 = vpop.xlane.xlu0 %897
        %v899 = vrcp.pop 1024.0
        %v900 = vmul.f32 1024.0, %v899
        %v901 = vsub.f32 1.0, %v900
        %v902 = vmul.f32 %v899, %v901
        %v903 = vadd.f32 %v899, %v902
        %vm904 = vweird.f32 %v899
        %v905 = vsel %vm904, %v899, %v903
        %v906 = vmul.f32 %v898, %v905
        %v907 = vsub.f32 %v692, %v906
        %v908 = vsub.f32 %v705, %v906
        %v909 = vsub.f32 %v718, %v906
        %v910 = vsub.f32 %v731, %v906
        %v911 = vsub.f32 %v744, %v906
        %v912 = vsub.f32 %v757, %v906
        %v913 = vsub.f32 %v770, %v906
        %v914 = vsub.f32 %v783, %v906
        %v915 = vmul.f32 %v907, %v907
        %v916 = vmul.f32 %v908, %v908
        %v917 = vmul.f32 %v909, %v909
        %v918 = vmul.f32 %v910, %v910
        %v919 = vmul.f32 %v911, %v911
        %v920 = vmul.f32 %v912, %v912
        %v921 = vmul.f32 %v913, %v913
        %v922 = vmul.f32 %v914, %v914
        %v923 = vadd.f32 %v915, %v916
        %v924 = vadd.f32 %v923, %v917
        %v925 = vadd.f32 %v924, %v918
        %v926 = vadd.f32 %v925, %v919
        %v927 = vadd.f32 %v926, %v920
        %v928 = vadd.f32 %v927, %v921
        %v929 = vadd.f32 %v928, %v922
        %930 = vadd.xlane.f32.xlu0 %v929
        %v931 = vpop.xlane.xlu0 %930
        %v932 = vmul.f32 %v931, %v905
        %v933 = vadd.f32 %v932, 1e-05
        %v934 = vrsqrt.pop %v933
        %v935 = vmul.f32 %v934, %v933
        %v936 = vmul.f32 %v935, %v934
        %v937 = vmul.f32 0.5, %v936
        %v938 = vsub.f32 1.5, %v937
        %v939 = vmul.f32 %v934, %v938
        %vm940 = vweird.f32 %v933
        %vm941 = vweird.f32 %v934
        %vm942 = vmor %vm940, %vm941
        %v943 = vsel %vm942, %v934, %v939
        %v944 = vmul.f32 %v907, %v943
        %v945 = vmul.f32 %v908, %v943
        %v946 = vmul.f32 %v909, %v943
        %v947 = vmul.f32 %v910, %v943
        %v948 = vmul.f32 %v911, %v943
        %v949 = vmul.f32 %v912, %v943
        %v950 = vmul.f32 %v913, %v943
        %v951 = vmul.f32 %v914, %v943
        %vm952 = vcmp.ge.f32.partialorder %v944, 0.0
        %vm953 = vcmp.ge.f32.partialorder %v945, 0.0
        %vm954 = vcmp.ge.f32.partialorder %v946, 0.0
        %vm955 = vcmp.ge.f32.partialorder %v947, 0.0
        %vm956 = vcmp.ge.f32.partialorder %v948, 0.0
        %vm957 = vcmp.ge.f32.partialorder %v949, 0.0
        %vm958 = vcmp.ge.f32.partialorder %v950, 0.0
        %vm959 = vcmp.ge.f32.partialorder %v951, 0.0
        %v960 = vmul.f32 %v944, 0.2
        %v961 = vmul.f32 %v945, 0.2
        %v962 = vmul.f32 %v946, 0.2
        %v963 = vmul.f32 %v947, 0.2
        %v964 = vmul.f32 %v948, 0.2
        %v965 = vmul.f32 %v949, 0.2
        %v966 = vmul.f32 %v950, 0.2
        %v967 = vmul.f32 %v951, 0.2
        %v968 = vsel %vm952, %v944, %v960
        %v969 = vsel %vm953, %v945, %v961
        %v970 = vsel %vm954, %v946, %v962
        %v971 = vsel %vm955, %v947, %v963
        %v972 = vsel %vm956, %v948, %v964
        %v973 = vsel %vm957, %v949, %v965
        %v974 = vsel %vm958, %v950, %v966
        %v975 = vsel %vm959, %v951, %v967
        %v976 = vpack.c.bf16 %v969, %v968
        %v977 = vpack.c.bf16 %v971, %v970
        %v978 = vpack.c.bf16 %v973, %v972
        %v979 = vpack.c.bf16 %v975, %v974
        %980 = vst [vmem:[%s290] sm:$0xff] %v976
        %981 = vst [vmem:[%s290 + $0x8] sm:$0xff] %v977
        %982 = vst [vmem:[%s290 + $0x10] sm:$0xff] %v978
        %983 = vst [vmem:[%s290 + $0x18] sm:$0xff] %v979
        %v984 = vadd.f32 %v796, %v809
        %v985 = vadd.f32 %v984, %v822
        %v986 = vadd.f32 %v985, %v835
        %v987 = vadd.f32 %v986, %v848
        %v988 = vadd.f32 %v987, %v861
        %v989 = vadd.f32 %v988, %v874
        %v990 = vadd.f32 %v989, %v887
        %991 = vadd.xlane.f32.xlu0 %v990
        %v992 = vpop.xlane.xlu0 %991
        %v993 = vmul.f32 %v992, %v905
        %v994 = vsub.f32 %v796, %v993
        %v995 = vsub.f32 %v809, %v993
        %v996 = vsub.f32 %v822, %v993
        %v997 = vsub.f32 %v835, %v993
        %v998 = vsub.f32 %v848, %v993
        %v999 = vsub.f32 %v861, %v993
        %v1000 = vsub.f32 %v874, %v993
        %v1001 = vsub.f32 %v887, %v993
        %v1002 = vmul.f32 %v994, %v994
        %v1003 = vmul.f32 %v995, %v995
        %v1004 = vmul.f32 %v996, %v996
        %v1005 = vmul.f32 %v997, %v997
        %v1006 = vmul.f32 %v998, %v998
        %v1007 = vmul.f32 %v999, %v999
        %v1008 = vmul.f32 %v1000, %v1000
        %v1009 = vmul.f32 %v1001, %v1001
        %v1010 = vadd.f32 %v1002, %v1003
        %v1011 = vadd.f32 %v1010, %v1004
        %v1012 = vadd.f32 %v1011, %v1005
        %v1013 = vadd.f32 %v1012, %v1006
        %v1014 = vadd.f32 %v1013, %v1007
        %v1015 = vadd.f32 %v1014, %v1008
        %v1016 = vadd.f32 %v1015, %v1009
        %1017 = vadd.xlane.f32.xlu0 %v1016
        %v1018 = vpop.xlane.xlu0 %1017
        %v1019 = vmul.f32 %v1018, %v905
        %v1020 = vadd.f32 %v1019, 1e-05
        %v1021 = vrsqrt.pop %v1020
        %v1022 = vmul.f32 %v1021, %v1020
        %v1023 = vmul.f32 %v1022, %v1021
        %v1024 = vmul.f32 0.5, %v1023
        %v1025 = vsub.f32 1.5, %v1024
        %v1026 = vmul.f32 %v1021, %v1025
        %vm1027 = vweird.f32 %v1020
        %vm1028 = vweird.f32 %v1021
        %vm1029 = vmor %vm1027, %vm1028
        %v1030 = vsel %vm1029, %v1021, %v1026
        %v1031 = vmul.f32 %v994, %v1030
        %v1032 = vmul.f32 %v995, %v1030
        %v1033 = vmul.f32 %v996, %v1030
        %v1034 = vmul.f32 %v997, %v1030
        %v1035 = vmul.f32 %v998, %v1030
        %v1036 = vmul.f32 %v999, %v1030
        %v1037 = vmul.f32 %v1000, %v1030
        %v1038 = vmul.f32 %v1001, %v1030
        %vm1039 = vcmp.ge.f32.partialorder %v1031, 0.0
        %vm1040 = vcmp.ge.f32.partialorder %v1032, 0.0
        %vm1041 = vcmp.ge.f32.partialorder %v1033, 0.0
        %vm1042 = vcmp.ge.f32.partialorder %v1034, 0.0
        %vm1043 = vcmp.ge.f32.partialorder %v1035, 0.0
        %vm1044 = vcmp.ge.f32.partialorder %v1036, 0.0
        %vm1045 = vcmp.ge.f32.partialorder %v1037, 0.0
        %vm1046 = vcmp.ge.f32.partialorder %v1038, 0.0
        %v1047 = vmul.f32 %v1031, 0.2
        %v1048 = vmul.f32 %v1032, 0.2
        %v1049 = vmul.f32 %v1033, 0.2
        %v1050 = vmul.f32 %v1034, 0.2
        %v1051 = vmul.f32 %v1035, 0.2
        %v1052 = vmul.f32 %v1036, 0.2
        %v1053 = vmul.f32 %v1037, 0.2
        %v1054 = vmul.f32 %v1038, 0.2
        %v1055 = vsel %vm1039, %v1031, %v1047
        %v1056 = vsel %vm1040, %v1032, %v1048
        %v1057 = vsel %vm1041, %v1033, %v1049
        %v1058 = vsel %vm1042, %v1034, %v1050
        %v1059 = vsel %vm1043, %v1035, %v1051
        %v1060 = vsel %vm1044, %v1036, %v1052
        %v1061 = vsel %vm1045, %v1037, %v1053
        %v1062 = vsel %vm1046, %v1038, %v1054
        %v1063 = vpack.c.bf16 %v1056, %v1055
        %v1064 = vpack.c.bf16 %v1058, %v1057
        %v1065 = vpack.c.bf16 %v1060, %v1059
        %v1066 = vpack.c.bf16 %v1062, %v1061
        %1067 = vst [vmem:[%s290 + $0x20] sm:$0xff] %v1063
        %1068 = vst [vmem:[%s290 + $0x28] sm:$0xff] %v1064
        %1069 = vst [vmem:[%s290 + $0x30] sm:$0xff] %v1065
        %1070 = vst [vmem:[%s290 + $0x38] sm:$0xff] %v1066
        %s1071 = smul.u32 16, %s13
        %p1072 = scmp.lt.s32.totalorder %s1071, 31
        %s1073 = scalar_select %p1072, %s1071, 31
        %s1074 = smul.addr %s1073, 4
        %s1075 = scalar_lea.vmem %s2, %s1074
        // Predicated region
        $region52: #{_lambda_.6} parent=46 // pred_check
          %p1076 = pneg %p78
        $region53: #{_lambda_.6} parent=46 // pred_check_branch
          %1078 = sbr.rel (%p1076) target = $region55
        $region54: #{_lambda_.6} parent=46 // pred_region
          %s1079 = smul.u32 16, %s13
        $region55: #{_lambda_.6} parent=46 // pred_fallthru
          _
      $region47: #{_lambda_.6} parent=5 // pred_fallthru
        _
      %p1080 = scmp.le.s32.totalorder 2, %s8
      // Predicated region
      $region56: #{_lambda_.6} parent=5 // pred_check
        %p1081 = pneg %p1080
      $region57: #{_lambda_.6} parent=5 // pred_check_branch
        %1083 = sbr.rel (%p1081) target = $region59
      $region58: #{_lambda_.6} parent=5 // pred_region
        %s1084 = ssub.s32 %s8, 2
        // Predicated region
        $region60: #{_lambda_.6} parent=58 // pred_check
          %p1085 = pneg %p84
        $region61: #{_lambda_.6} parent=58 // pred_check_branch
          %1087 = sbr.rel (%p1085) target = $region63
        $region62: #{_lambda_.6} parent=58 // pred_region
          %s1088 = smul.u32 16, %s14
          %p1089 = scmp.lt.s32.totalorder %s1088, 31
          %s1090 = scalar_select %p1089, %s1088, 31
          %s1091 = smul.addr %s1090, 4
          %s1092 = scalar_lea.vmem %s2, %s1091
        $region63: #{_lambda_.6} parent=58 // pred_fallthru
          _
      $region59: #{_lambda_.6} parent=5 // pred_fallthru
        _
    $region6: #{_lambda_.6} parent=1 // loop_footer
      %s12 = sadd.s32 1, %s8
    $region7: #{_lambda_.6} parent=1 // loop_footer_branch
      %7 = sbr.rel target = $region3
    $region8: #{_lambda_.6} parent=1 // loop_exit
      _

// kernel: _lambda_.7
$region0: #{_lambda_.7}
  #allocation0 [shape = 'u32[]', space=smem, size = 0x4, offset = 0x4, fixed_abs, tag = 'smem constant byte address 0x4 - core index']
  #allocation1 [shape = 'u32[72,128]{1,0:T(1,128)}', space=vmem, size = 0x9000, scoped, tag = 'internal scratch']
  %s0 = inlined_call_operand.vmem [shape: bf16[128,1024], index: 0, kind: input, shape index: {}]
  %s1 = inlined_call_operand.vmem [shape: bf16[16,128], index: 1, kind: input, shape index: {}]
  %s2 = inlined_call_operand.vmem [shape: bf16[16,1024], index: 2, kind: output, shape index: {}]
  %s3 = sld [smem:[#allocation0]]
  $region83: #{_lambda_.7} parent=0
    _
  %s5 = ssub.s32 1, %s3
  %s6 = scalar_select 0, %s5, %s3
  $region1: #{_lambda_.7} parent=0
    #allocation2 [shape = 'u8[262144]{0}', space=vmem, size = 0x40000, scoped, tag = 'input window, operand 0']
    #allocation3 [shape = 'u8[32768]{0}', space=vmem, size = 0x8000, scoped, tag = 'output window, operand 0']
    loop: start=0, step=1, limit=4
    $region2: #{_lambda_.7} parent=1 // loop_pre_header
      _
    $region3: #{_lambda_.7} parent=1 // loop_header
      %s8 = sphi 0, %s12
      %p9 = scmp.ge.s32.totalorder %s8, 4
      %s18 = sphi 0, %s20
      %s21 = sphi 0, %s18
      %s22 = sphi 0, %s21
      %s38 = sphi 0, %s22
      %s42 = sphi 0, %s42
      %s44 = sphi 0, %s42
      %s45 = sphi 0, %s44
      %s59 = sphi 0, %s45
      %s65 = sphi 0, %s67
      %s68 = sphi 0, %s65
      %s69 = sphi 0, %s68
      %s85 = sphi 0, %s69
    $region4: #{_lambda_.7} parent=1 // loop_header_branch
      %11 = sbr.rel (%p9) target = $region8
    $region5: #{_lambda_.7} parent=1 // loop_body
      %s13 = ssub.s32 %s8, 1
      %s14 = ssub.s32 %s8, 2
      %s15 = sadd.s32 %s8, 1
      %s16 = ssub.s32 %s8, %s15
      %p17 = scmp.eq.s32.totalorder %s16, 0
      %s19 = sadd.s32 %s18, 1
      %s20 = scalar_select %p17, %s18, %s19
      %p23 = pneg %p17
      %p24 = scmp.eq.s32.totalorder %s8, 1
      %p25 = por %p23, %p24
      %p26 = scmp.ne.s32.totalorder %s18, %s21
      %p27 = scmp.eq.s32.totalorder %s8, 0
      %p28 = por %p26, %p27
      %p29 = scmp.ne.s32.totalorder %s18, %s21
      %p30 = scmp.eq.s32.totalorder %s13, 1
      %p31 = por %p29, %p30
      %p32 = scmp.ne.s32.totalorder %s21, %s22
      %p33 = scmp.eq.s32.totalorder %s13, 0
      %p34 = por %p32, %p33
      %p35 = scmp.ne.s32.totalorder %s21, %s22
      %p36 = scmp.eq.s32.totalorder %s14, 1
      %p37 = por %p35, %p36
      %p39 = scmp.ne.s32.totalorder %s22, %s38
      %p40 = scmp.eq.s32.totalorder %s14, 0
      %p41 = por %p39, %p40
      %s43 = sadd.s32 %s42, 1
      %p46 = scmp.eq.s32.totalorder %s8, 1
      %p47 = scmp.ne.s32.totalorder %s42, %s44
      %p48 = scmp.eq.s32.totalorder %s8, 0
      %p49 = por %p47, %p48
      %p50 = scmp.ne.s32.totalorder %s42, %s44
      %p51 = scmp.eq.s32.totalorder %s13, 1
      %p52 = por %p50, %p51
      %p53 = scmp.ne.s32.totalorder %s44, %s45
      %p54 = scmp.eq.s32.totalorder %s13, 0
      %p55 = por %p53, %p54
      %p56 = scmp.ne.s32.totalorder %s44, %s45
      %p57 = scmp.eq.s32.totalorder %s14, 1
      %p58 = por %p56, %p57
      %p60 = scmp.ne.s32.totalorder %s45, %s59
      %p61 = scmp.eq.s32.totalorder %s14, 0
      %p62 = por %p60, %p61
      %s63 = ssub.s32 %s8, %s15
      %p64 = scmp.eq.s32.totalorder %s63, 0
      %s66 = sadd.s32 %s65, 1
      %s67 = scalar_select %p64, %s65, %s66
      %p70 = pneg %p64
      %p71 = scmp.eq.s32.totalorder %s8, 1
      %p72 = por %p70, %p71
      %p73 = scmp.ne.s32.totalorder %s65, %s68
      %p74 = scmp.eq.s32.totalorder %s8, 0
      %p75 = por %p73, %p74
      %p76 = scmp.ne.s32.totalorder %s65, %s68
      %p77 = scmp.eq.s32.totalorder %s13, 1
      %p78 = por %p76, %p77
      %p79 = scmp.ne.s32.totalorder %s68, %s69
      %p80 = scmp.eq.s32.totalorder %s13, 0
      %p81 = por %p79, %p80
      %p82 = scmp.ne.s32.totalorder %s68, %s69
      %p83 = scmp.eq.s32.totalorder %s14, 1
      %p84 = por %p82, %p83
      %p86 = scmp.ne.s32.totalorder %s69, %s85
      %p87 = scmp.eq.s32.totalorder %s14, 0
      %p88 = por %p86, %p87
      %p89 = scmp.le.s32.totalorder 1, %s8
      %p90 = scmp.lt.s32.totalorder %s8, 3
      %p91 = pnand %p89, %p90
      %p92 = pneg %p91
      // Predicated region
      $region9: #{_lambda_.7} parent=5 // pred_check
        _
      $region10: #{_lambda_.7} parent=5 // pred_check_branch
        %94 = sbr.rel (%p91) target = $region12
      $region11: #{_lambda_.7} parent=5 // pred_region
        %s95 = ssub.s32 %s8, 1
        // Predicated region
        $region13: #{_lambda_.7} parent=11 // pred_check
          %p96 = pneg %p55
        $region14: #{_lambda_.7} parent=11 // pred_check_branch
          %98 = sbr.rel (%p96) target = $region16
        $region15: #{_lambda_.7} parent=11 // pred_region
          _
        $region16: #{_lambda_.7} parent=11 // pred_fallthru
          _
      $region12: #{_lambda_.7} parent=5 // pred_fallthru
        _
      %p99 = scmp.lt.s32.totalorder %s8, 2
      // Predicated region
      $region17: #{_lambda_.7} parent=5 // pred_check
        %p100 = pneg %p99
      $region18: #{_lambda_.7} parent=5 // pred_check_branch
        %102 = sbr.rel (%p100) target = $region20
      $region19: #{_lambda_.7} parent=5 // pred_region
        // Predicated region
        $region21: #{_lambda_.7} parent=19 // pred_check
          %p103 = pneg %p28
        $region22: #{_lambda_.7} parent=19 // pred_check_branch
          %105 = sbr.rel (%p103) target = $region24
        $region23: #{_lambda_.7} parent=19 // pred_region
          %s106 = sand.u32 %s18, 1
          %s107 = sand.u32 %s18, 1
          %s108 = smul.addr %s107, 256
          %s109 = scalar_lea.vmem [#allocation2], %s108
          %s110 = smul.u32 4, %s8
          %s111 = smul.addr %s110, 4
          %s112 = scalar_lea.vmem %s0, %s111
          // Predicated region
          $region25: #{_lambda_.7} parent=23 // pred_check
            _
          $region26: #{_lambda_.7} parent=23 // pred_check_branch
            %114 = sbr.rel (0) target = $region28
          $region27: #{_lambda_.7} parent=23 // pred_region
            // Predicated region
            $region29: #{_lambda_.7} parent=27 // pred_check
              _
            $region30: #{_lambda_.7} parent=27 // pred_check_branch
              %116 = sbr.rel (0) target = $region32
            $region31: #{_lambda_.7} parent=27 // pred_region
              loop: start=0, step=1, limit=1
              $region33: #{_lambda_.7} parent=31 // loop_pre_header
                _
              $region34: #{_lambda_.7} parent=31 // loop_header
                %s118 = sphi 0, %s122
                %p119 = scmp.ge.s32.totalorder %s118, 1
                %s123 = sphi %s112, %s112
                %s124 = sphi %s109, %s109
              $region35: #{_lambda_.7} parent=31 // loop_header_branch
                %121 = sbr.rel (%p119) target = $region39
              $region36: #{_lambda_.7} parent=31 // loop_body
                %v125 = vld [vmem:[%s123] sm:$0xff]
                %126 = vst [vmem:[%s124] sm:$0xff] %v125
                %v127 = vld [vmem:[%s123 + $0x8] sm:$0xff]
                %128 = vst [vmem:[%s124 + $0x8] sm:$0xff] %v127
                %v129 = vld [vmem:[%s123 + $0x20] sm:$0xff]
                %130 = vst [vmem:[%s124 + $0x10] sm:$0xff] %v129
                %v131 = vld [vmem:[%s123 + $0x28] sm:$0xff]
                %132 = vst [vmem:[%s124 + $0x18] sm:$0xff] %v131
                %v133 = vld [vmem:[%s123 + $0x40] sm:$0xff]
                %134 = vst [vmem:[%s124 + $0x20] sm:$0xff] %v133
                %v135 = vld [vmem:[%s123 + $0x48] sm:$0xff]
                %136 = vst [vmem:[%s124 + $0x28] sm:$0xff] %v135
                %v137 = vld [vmem:[%s123 + $0x60] sm:$0xff]
                %138 = vst [vmem:[%s124 + $0x30] sm:$0xff] %v137
                %v139 = vld [vmem:[%s123 + $0x68] sm:$0xff]
                %140 = vst [vmem:[%s124 + $0x38] sm:$0xff] %v139
                %v141 = vld [vmem:[%s123 + $0x80] sm:$0xff]
                %142 = vst [vmem:[%s124 + $0x40] sm:$0xff] %v141
                %v143 = vld [vmem:[%s123 + $0x88] sm:$0xff]
                %144 = vst [vmem:[%s124 + $0x48] sm:$0xff] %v143
                %v145 = vld [vmem:[%s123 + $0xa0] sm:$0xff]
                %146 = vst [vmem:[%s124 + $0x50] sm:$0xff] %v145
                %v147 = vld [vmem:[%s123 + $0xa8] sm:$0xff]
                %148 = vst [vmem:[%s124 + $0x58] sm:$0xff] %v147
                %v149 = vld [vmem:[%s123 + $0xc0] sm:$0xff]
                %150 = vst [vmem:[%s124 + $0x60] sm:$0xff] %v149
                %v151 = vld [vmem:[%s123 + $0xc8] sm:$0xff]
                %152 = vst [vmem:[%s124 + $0x68] sm:$0xff] %v151
                %v153 = vld [vmem:[%s123 + $0xe0] sm:$0xff]
                %154 = vst [vmem:[%s124 + $0x70] sm:$0xff] %v153
                %v155 = vld [vmem:[%s123 + $0xe8] sm:$0xff]
                %156 = vst [vmem:[%s124 + $0x78] sm:$0xff] %v155
                %v157 = vld [vmem:[%s123 + $0x100] sm:$0xff]
                %158 = vst [vmem:[%s124 + $0x80] sm:$0xff] %v157
                %v159 = vld [vmem:[%s123 + $0x108] sm:$0xff]
                %160 = vst [vmem:[%s124 + $0x88] sm:$0xff] %v159
                %v161 = vld [vmem:[%s123 + $0x120] sm:$0xff]
                %162 = vst [vmem:[%s124 + $0x90] sm:$0xff] %v161
                %v163 = vld [vmem:[%s123 + $0x128] sm:$0xff]
                %164 = vst [vmem:[%s124 + $0x98] sm:$0xff] %v163
                %v165 = vld [vmem:[%s123 + $0x140] sm:$0xff]
                %166 = vst [vmem:[%s124 + $0xa0] sm:$0xff] %v165
                %v167 = vld [vmem:[%s123 + $0x148] sm:$0xff]
                %168 = vst [vmem:[%s124 + $0xa8] sm:$0xff] %v167
                %v169 = vld [vmem:[%s123 + $0x160] sm:$0xff]
                %170 = vst [vmem:[%s124 + $0xb0] sm:$0xff] %v169
                %v171 = vld [vmem:[%s123 + $0x168] sm:$0xff]
                %172 = vst [vmem:[%s124 + $0xb8] sm:$0xff] %v171
                %v173 = vld [vmem:[%s123 + $0x180] sm:$0xff]
                %174 = vst [vmem:[%s124 + $0xc0] sm:$0xff] %v173
                %v175 = vld [vmem:[%s123 + $0x188] sm:$0xff]
                %176 = vst [vmem:[%s124 + $0xc8] sm:$0xff] %v175
                %v177 = vld [vmem:[%s123 + $0x1a0] sm:$0xff]
                %178 = vst [vmem:[%s124 + $0xd0] sm:$0xff] %v177
                %v179 = vld [vmem:[%s123 + $0x1a8] sm:$0xff]
                %180 = vst [vmem:[%s124 + $0xd8] sm:$0xff] %v179
                %v181 = vld [vmem:[%s123 + $0x1c0] sm:$0xff]
                %182 = vst [vmem:[%s124 + $0xe0] sm:$0xff] %v181
                %v183 = vld [vmem:[%s123 + $0x1c8] sm:$0xff]
                %184 = vst [vmem:[%s124 + $0xe8] sm:$0xff] %v183
                %v185 = vld [vmem:[%s123 + $0x1e0] sm:$0xff]
                %186 = vst [vmem:[%s124 + $0xf0] sm:$0xff] %v185
                %v187 = vld [vmem:[%s123 + $0x1e8] sm:$0xff]
                %188 = vst [vmem:[%s124 + $0xf8] sm:$0xff] %v187
              $region37: #{_lambda_.7} parent=31 // loop_footer
                %s122 = sadd.s32 1, %s118
              $region38: #{_lambda_.7} parent=31 // loop_footer_branch
                %117 = sbr.rel target = $region34
              $region39: #{_lambda_.7} parent=31 // loop_exit
                _
            $region32: #{_lambda_.7} parent=27 // pred_fallthru
              _
            // Predicated region
            $region40: #{_lambda_.7} parent=27 // pred_check
              _
            $region41: #{_lambda_.7} parent=27 // pred_check_branch
              %190 = sbr.rel target = $region43
            $region42: #{_lambda_.7} parent=27 // pred_region
              _
            $region43: #{_lambda_.7} parent=27 // pred_fallthru
              _
          $region28: #{_lambda_.7} parent=23 // pred_fallthru
            _
          %191 = vnop
        $region24: #{_lambda_.7} parent=19 // pred_fallthru
          _
      $region20: #{_lambda_.7} parent=5 // pred_fallthru
        _
      %p192 = scmp.le.s32.totalorder 1, %s8
      %p193 = scmp.lt.s32.totalorder %s8, 3
      %p194 = pnand %p192, %p193
      %p195 = pneg %p194
      // Predicated region
      $region44: #{_lambda_.7} parent=5 // pred_check
        _
      $region45: #{_lambda_.7} parent=5 // pred_check_branch
        %197 = sbr.rel (%p194) target = $region47
      $region46: #{_lambda_.7} parent=5 // pred_region
        %s198 = ssub.s32 %s8, 1
        %s199 = sand.u32 %s21, 1
        %s200 = sand.u32 %s21, 1
        %s201 = smul.addr %s200, 256
        %s202 = scalar_lea.vmem [#allocation2], %s201
        // Predicated region
        $region48: #{_lambda_.7} parent=46 // pred_check
          %p203 = pneg %p34
        $region49: #{_lambda_.7} parent=46 // pred_check_branch
          %205 = sbr.rel (%p203) target = $region51
        $region50: #{_lambda_.7} parent=46 // pred_region
          _
        $region51: #{_lambda_.7} parent=46 // pred_fallthru
          _
        %s206 = sand.u32 %s21, 1
        %s207 = sand.u32 %s21, 1
        %s208 = smul.addr %s207, 256
        %s209 = scalar_lea.vmem [#allocation2], %s208
        %p210 = pneg %p34
        %p211 = pneg %p31
        %p212 = pneg %p55
        %p213 = pneg %p52
        %p214 = pneg %p81
        %p215 = pneg %p78
        %s216 = sand.u32 %s68, 1
        %s217 = sand.u32 %s68, 1
        %s218 = smul.addr %s217, 32
        %s219 = scalar_lea.vmem [#allocation3], %s218
        %s220 = smul.u32 4, %s13
        %s221 = smul.u32 4, %s13
        %v222 = vld [vmem:[%s1] sm:$0xf]
        %v223 = vld [vmem:[%s1 + $0x4] sm:$0xf]
        %v224 = vld [vmem:[%s202] sm:$0xff]
        %v225 = vld [vmem:[%s202 + $0x8] sm:$0xff]
        %v226 = vld [vmem:[%s202 + $0x10] sm:$0xff]
        %v227 = vld [vmem:[%s202 + $0x18] sm:$0xff]
        %v228 = vld [vmem:[%s202 + $0x20] sm:$0xff]
        %v229 = vld [vmem:[%s202 + $0x28] sm:$0xff]
        %v230 = vld [vmem:[%s202 + $0x30] sm:$0xff]
        %v231 = vld [vmem:[%s202 + $0x38] sm:$0xff]
        %v232 = vld [vmem:[%s202 + $0x40] sm:$0xff]
        %v233 = vld [vmem:[%s202 + $0x48] sm:$0xff]
        %v234 = vld [vmem:[%s202 + $0x50] sm:$0xff]
        %v235 = vld [vmem:[%s202 + $0x58] sm:$0xff]
        %v236 = vld [vmem:[%s202 + $0x60] sm:$0xff]
        %v237 = vld [vmem:[%s202 + $0x68] sm:$0xff]
        %v238 = vld [vmem:[%s202 + $0x70] sm:$0xff]
        %v239 = vld [vmem:[%s202 + $0x78] sm:$0xff]
        %v240 = vld [vmem:[%s202 + $0x80] sm:$0xff]
        %v241 = vld [vmem:[%s202 + $0x88] sm:$0xff]
        %v242 = vld [vmem:[%s202 + $0x90] sm:$0xff]
        %v243 = vld [vmem:[%s202 + $0x98] sm:$0xff]
        %v244 = vld [vmem:[%s202 + $0xa0] sm:$0xff]
        %v245 = vld [vmem:[%s202 + $0xa8] sm:$0xff]
        %v246 = vld [vmem:[%s202 + $0xb0] sm:$0xff]
        %v247 = vld [vmem:[%s202 + $0xb8] sm:$0xff]
        %v248 = vld [vmem:[%s202 + $0xc0] sm:$0xff]
        %v249 = vld [vmem:[%s202 + $0xc8] sm:$0xff]
        %v250 = vld [vmem:[%s202 + $0xd0] sm:$0xff]
        %v251 = vld [vmem:[%s202 + $0xd8] sm:$0xff]
        %v252 = vld [vmem:[%s202 + $0xe0] sm:$0xff]
        %v253 = vld [vmem:[%s202 + $0xe8] sm:$0xff]
        %v254 = vld [vmem:[%s202 + $0xf0] sm:$0xff]
        %v255 = vld [vmem:[%s202 + $0xf8] sm:$0xff]
        %v258 = vunpack.c.l.b16 %v222
        %v259 = vunpack.c.l.b16 %v223
        %v260 = vpack.c.b16 %v259, %v258
        %v294 = vunpack.c.l.b16 %v224
        %v295 = vunpack.c.h.b16 %v224
        %v296 = vunpack.c.l.b16 %v225
        %v297 = vunpack.c.h.b16 %v225
        %v298 = vunpack.c.l.b16 %v226
        %v299 = vunpack.c.h.b16 %v226
        %v300 = vunpack.c.l.b16 %v227
        %v301 = vunpack.c.h.b16 %v227
        %v302 = vunpack.c.l.b16 %v228
        %v303 = vunpack.c.h.b16 %v228
        %v304 = vunpack.c.l.b16 %v229
        %v305 = vunpack.c.h.b16 %v229
        %v306 = vunpack.c.l.b16 %v230
        %v307 = vunpack.c.h.b16 %v230
        %v308 = vunpack.c.l.b16 %v231
        %v309 = vunpack.c.h.b16 %v231
        %v310 = vunpack.c.l.b16 %v232
        %v311 = vunpack.c.h.b16 %v232
        %v312 = vunpack.c.l.b16 %v233
        %v313 = vunpack.c.h.b16 %v233
        %v314 = vunpack.c.l.b16 %v234
        %v315 = vunpack.c.h.b16 %v234
        %v316 = vunpack.c.l.b16 %v235
        %v317 = vunpack.c.h.b16 %v235
        %v318 = vunpack.c.l.b16 %v236
        %v319 = vunpack.c.h.b16 %v236
        %v320 = vunpack.c.l.b16 %v237
        %v321 = vunpack.c.h.b16 %v237
        %v322 = vunpack.c.l.b16 %v238
        %v323 = vunpack.c.h.b16 %v238
        %v324 = vunpack.c.l.b16 %v239
        %v325 = vunpack.c.h.b16 %v239
        %v326 = vunpack.c.l.b16 %v240
        %v327 = vunpack.c.h.b16 %v240
        %v328 = vunpack.c.l.b16 %v241
        %v329 = vunpack.c.h.b16 %v241
        %v330 = vunpack.c.l.b16 %v242
        %v331 = vunpack.c.h.b16 %v242
        %v332 = vunpack.c.l.b16 %v243
        %v333 = vunpack.c.h.b16 %v243
        %v334 = vunpack.c.l.b16 %v244
        %v335 = vunpack.c.h.b16 %v244
        %v336 = vunpack.c.l.b16 %v245
        %v337 = vunpack.c.h.b16 %v245
        %v338 = vunpack.c.l.b16 %v246
        %v339 = vunpack.c.h.b16 %v246
        %v340 = vunpack.c.l.b16 %v247
        %v341 = vunpack.c.h.b16 %v247
        %v342 = vunpack.c.l.b16 %v248
        %v343 = vunpack.c.h.b16 %v248
        %v344 = vunpack.c.l.b16 %v249
        %v345 = vunpack.c.h.b16 %v249
        %v346 = vunpack.c.l.b16 %v250
        %v347 = vunpack.c.h.b16 %v250
        %v348 = vunpack.c.l.b16 %v251
        %v349 = vunpack.c.h.b16 %v251
        %v350 = vunpack.c.l.b16 %v252
        %v351 = vunpack.c.h.b16 %v252
        %v352 = vunpack.c.l.b16 %v253
        %v353 = vunpack.c.h.b16 %v253
        %v354 = vunpack.c.l.b16 %v254
        %v355 = vunpack.c.h.b16 %v254
        %v356 = vunpack.c.l.b16 %v255
        %v357 = vunpack.c.h.b16 %v255
        %v358 = vpack.c.b16 %v298, %v294
        %v359 = vpack.c.b16 %v299, %v295
        %v360 = vpack.c.b16 %v300, %v296
        %v361 = vpack.c.b16 %v301, %v297
        %v362 = vpack.c.b16 %v306, %v302
        %v363 = vpack.c.b16 %v307, %v303
        %v364 = vpack.c.b16 %v308, %v304
        %v365 = vpack.c.b16 %v309, %v305
        %v366 = vpack.c.b16 %v314, %v310
        %v367 = vpack.c.b16 %v315, %v311
        %v368 = vpack.c.b16 %v316, %v312
        %v369 = vpack.c.b16 %v317, %v313
        %v370 = vpack.c.b16 %v322, %v318
        %v371 = vpack.c.b16 %v323, %v319
        %v372 = vpack.c.b16 %v324, %v320
        %v373 = vpack.c.b16 %v325, %v321
        %v374 = vpack.c.b16 %v330, %v326
        %v375 = vpack.c.b16 %v331, %v327
        %v376 = vpack.c.b16 %v332, %v328
        %v377 = vpack.c.b16 %v333, %v329
        %v378 = vpack.c.b16 %v338, %v334
        %v379 = vpack.c.b16 %v339, %v335
        %v380 = vpack.c.b16 %v340, %v336
        %v381 = vpack.c.b16 %v341, %v337
        %v382 = vpack.c.b16 %v346, %v342
        %v383 = vpack.c.b16 %v347, %v343
        %v384 = vpack.c.b16 %v348, %v344
        %v385 = vpack.c.b16 %v349, %v345
        %v386 = vpack.c.b16 %v354, %v350
        %v387 = vpack.c.b16 %v355, %v351
        %v388 = vpack.c.b16 %v356, %v352
        %v389 = vpack.c.b16 %v357, %v353
        %422 = vmatpush.bf16.msra.mxu0 %v386
        %423 = vmatpush.bf16.msra.mxu0 %v382
        %424 = vmatpush.bf16.msra.mxu0 %v378
        %425 = vmatpush.bf16.msra.mxu0 %v374
        %426 = vmatpush.bf16.msra.mxu0 %v370
        %427 = vmatpush.bf16.msra.mxu0 %v366
        %428 = vmatpush.bf16.msra.mxu0 %v362
        %429 = vmatpush.bf16.msra.mxu0 %v358
        %430 = vmatmul.bf16.gmra.mxu0 %v260
        %v431 = vpop.f32.mrf.mxu0
        %v432 = vadd.f32 0.0, %v431
        %v433 = vpop.f32.mrf.mxu0
        %v434 = vadd.f32 0.0, %v433
        %435 = vdwg.mxu0
        %436 = vmatpush.bf16.msra.mxu0 %v387
        %437 = vmatpush.bf16.msra.mxu0 %v383
        %438 = vmatpush.bf16.msra.mxu0 %v379
        %439 = vmatpush.bf16.msra.mxu0 %v375
        %440 = vmatpush.bf16.msra.mxu0 %v371
        %441 = vmatpush.bf16.msra.mxu0 %v367
        %442 = vmatpush.bf16.msra.mxu0 %v363
        %443 = vmatpush.bf16.msra.mxu0 %v359
        %444 = vmatmul.bf16.gmra.mxu0 %v260
        %v445 = vpop.f32.mrf.mxu0
        %v446 = vadd.f32 0.0, %v445
        %v447 = vpop.f32.mrf.mxu0
        %v448 = vadd.f32 0.0, %v447
        %449 = vdwg.mxu0
        %450 = vmatpush.bf16.msra.mxu0 %v388
        %451 = vmatpush.bf16.msra.mxu0 %v384
        %452 = vmatpush.bf16.msra.mxu0 %v380
        %453 = vmatpush.bf16.msra.mxu0 %v376
        %454 = vmatpush.bf16.msra.mxu0 %v372
        %455 = vmatpush.bf16.msra.mxu0 %v368
        %456 = vmatpush.bf16.msra.mxu0 %v364
        %457 = vmatpush.bf16.msra.mxu0 %v360
        %458 = vmatmul.bf16.gmra.mxu0 %v260
        %v459 = vpop.f32.mrf.mxu0
        %v460 = vadd.f32 0.0, %v459
        %v461 = vpop.f32.mrf.mxu0
        %v462 = vadd.f32 0.0, %v461
        %463 = vdwg.mxu0
        %464 = vmatpush.bf16.msra.mxu0 %v389
        %465 = vmatpush.bf16.msra.mxu0 %v385
        %466 = vmatpush.bf16.msra.mxu0 %v381
        %467 = vmatpush.bf16.msra.mxu0 %v377
        %468 = vmatpush.bf16.msra.mxu0 %v373
        %469 = vmatpush.bf16.msra.mxu0 %v369
        %470 = vmatpush.bf16.msra.mxu0 %v365
        %471 = vmatpush.bf16.msra.mxu0 %v361
        %472 = vmatmul.bf16.gmra.mxu0 %v260
        %v473 = vpop.f32.mrf.mxu0
        %v474 = vadd.f32 0.0, %v473
        %v475 = vpop.f32.mrf.mxu0
        %v476 = vadd.f32 0.0, %v475
        %477 = vdwg.mxu0
        %v478 = vadd.f32 %v432, %v446
        %479 = vadd.xlane.f32.xlu0 %v478
        %v480 = vpop.xlane.xlu0 %479
        %v481 = vadd.f32 %v434, %v448
        %482 = vadd.xlane.f32.xlu0 %v481
        %v483 = vpop.xlane.xlu0 %482
        %v484 = vrcp.pop 256.0
        %v485 = vmul.f32 256.0, %v484
        %v486 = vsub.f32 1.0, %v485
        %v487 = vmul.f32 %v484, %v486
        %v488 = vadd.f32 %v484, %v487
        %vm489 = vweird.f32 %v484
        %v490 = vsel %vm489, %v484, %v488
        %v491 = vmul.f32 %v480, %v490
        %v492 = vmul.f32 %v483, %v490
        %v493 = vsub.f32 %v432, %v491
        %v494 = vsub.f32 %v446, %v491
        %v495 = vsub.f32 %v434, %v492
        %v496 = vsub.f32 %v448, %v492
        %v497 = vmul.f32 %v493, %v493
        %v498 = vmul.f32 %v494, %v494
        %v499 = vmul.f32 %v495, %v495
        %v500 = vmul.f32 %v496, %v496
        %v501 = vadd.f32 %v497, %v498
        %502 = vadd.xlane.f32.xlu0 %v501
        %v503 = vpop.xlane.xlu0 %502
        %v504 = vadd.f32 %v499, %v500
        %505 = vadd.xlane.f32.xlu0 %v504
        %v506 = vpop.xlane.xlu0 %505
        %v507 = vmul.f32 %v503, %v490
        %v508 = vmul.f32 %v506, %v490
        %v509 = vadd.f32 %v507, 1e-05
        %v510 = vadd.f32 %v508, 1e-05
        %v511 = vrsqrt.pop %v509
        %v512 = vmul.f32 %v511, %v509
        %v513 = vmul.f32 %v512, %v511
        %v514 = vmul.f32 0.5, %v513
        %v515 = vsub.f32 1.5, %v514
        %v516 = vmul.f32 %v511, %v515
        %vm517 = vweird.f32 %v509
        %vm518 = vweird.f32 %v511
        %vm519 = vmor %vm517, %vm518
        %v520 = vsel %vm519, %v511, %v516
        %v521 = vrsqrt.pop %v510
        %v522 = vmul.f32 %v521, %v510
        %v523 = vmul.f32 %v522, %v521
        %v524 = vmul.f32 0.5, %v523
        %v525 = vsub.f32 1.5, %v524
        %v526 = vmul.f32 %v521, %v525
        %vm527 = vweird.f32 %v510
        %vm528 = vweird.f32 %v521
        %vm529 = vmor %vm527, %vm528
        %v530 = vsel %vm529, %v521, %v526
        %v531 = vmul.f32 %v493, %v520
        %v532 = vmul.f32 %v494, %v520
        %v533 = vmul.f32 %v495, %v530
        %v534 = vmul.f32 %v496, %v530
        %vm535 = vcmp.ge.f32.partialorder %v531, 0.0
        %vm536 = vcmp.ge.f32.partialorder %v532, 0.0
        %vm537 = vcmp.ge.f32.partialorder %v533, 0.0
        %vm538 = vcmp.ge.f32.partialorder %v534, 0.0
        %v539 = vmul.f32 %v531, 0.2
        %v540 = vmul.f32 %v532, 0.2
        %v541 = vmul.f32 %v533, 0.2
        %v542 = vmul.f32 %v534, 0.2
        %v543 = vsel %vm535, %v531, %v539
        %v544 = vsel %vm536, %v532, %v540
        %v545 = vsel %vm537, %v533, %v541
        %v546 = vsel %vm538, %v534, %v542
        %v547 = vpack.c.bf16 %v544, %v543
        %v548 = vpack.c.bf16 %v546, %v545
        %549 = vst [vmem:[%s219] sm:$0xff] %v547
        %550 = vst [vmem:[%s219 + $0x10] sm:$0xff] %v548
        %v551 = vadd.f32 %v460, %v474
        %552 = vadd.xlane.f32.xlu0 %v551
        %v553 = vpop.xlane.xlu0 %552
        %v554 = vadd.f32 %v462, %v476
        %555 = vadd.xlane.f32.xlu0 %v554
        %v556 = vpop.xlane.xlu0 %555
        %v557 = vmul.f32 %v553, %v490
        %v558 = vmul.f32 %v556, %v490
        %v559 = vsub.f32 %v460, %v557
        %v560 = vsub.f32 %v474, %v557
        %v561 = vsub.f32 %v462, %v558
        %v562 = vsub.f32 %v476, %v558
        %v563 = vmul.f32 %v559, %v559
        %v564 = vmul.f32 %v560, %v560
        %v565 = vmul.f32 %v561, %v561
        %v566 = vmul.f32 %v562, %v562
        %v567 = vadd.f32 %v563, %v564
        %568 = vadd.xlane.f32.xlu0 %v567
        %v569 = vpop.xlane.xlu0 %568
        %v570 = vadd.f32 %v565, %v566
        %571 = vadd.xlane.f32.xlu0 %v570
        %v572 = vpop.xlane.xlu0 %571
        %v573 = vmul.f32 %v569, %v490
        %v574 = vmul.f32 %v572, %v490
        %v575 = vadd.f32 %v573, 1e-05
        %v576 = vadd.f32 %v574, 1e-05
        %v577 = vrsqrt.pop %v575
        %v578 = vmul.f32 %v577, %v575
        %v579 = vmul.f32 %v578, %v577
        %v580 = vmul.f32 0.5, %v579
        %v581 = vsub.f32 1.5, %v580
        %v582 = vmul.f32 %v577, %v581
        %vm583 = vweird.f32 %v575
        %vm584 = vweird.f32 %v577
        %vm585 = vmor %vm583, %vm584
        %v586 = vsel %vm585, %v577, %v582
        %v587 = vrsqrt.pop %v576
        %v588 = vmul.f32 %v587, %v576
        %v589 = vmul.f32 %v588, %v587
        %v590 = vmul.f32 0.5, %v589
        %v591 = vsub.f32 1.5, %v590
        %v592 = vmul.f32 %v587, %v591
        %vm593 = vweird.f32 %v576
        %vm594 = vweird.f32 %v587
        %vm595 = vmor %vm593, %vm594
        %v596 = vsel %vm595, %v587, %v592
        %v597 = vmul.f32 %v559, %v586
        %v598 = vmul.f32 %v560, %v586
        %v599 = vmul.f32 %v561, %v596
        %v600 = vmul.f32 %v562, %v596
        %vm601 = vcmp.ge.f32.partialorder %v597, 0.0
        %vm602 = vcmp.ge.f32.partialorder %v598, 0.0
        %vm603 = vcmp.ge.f32.partialorder %v599, 0.0
        %vm604 = vcmp.ge.f32.partialorder %v600, 0.0
        %v605 = vmul.f32 %v597, 0.2
        %v606 = vmul.f32 %v598, 0.2
        %v607 = vmul.f32 %v599, 0.2
        %v608 = vmul.f32 %v600, 0.2
        %v609 = vsel %vm601, %v597, %v605
        %v610 = vsel %vm602, %v598, %v606
        %v611 = vsel %vm603, %v599, %v607
        %v612 = vsel %vm604, %v600, %v608
        %v613 = vpack.c.bf16 %v610, %v609
        %v614 = vpack.c.bf16 %v612, %v611
        %615 = vst [vmem:[%s219 + $0x8] sm:$0xff] %v613
        %616 = vst [vmem:[%s219 + $0x18] sm:$0xff] %v614
        %s617 = sand.u32 %s68, 1
        %s618 = sand.u32 %s68, 1
        %s619 = smul.addr %s618, 32
        %s620 = scalar_lea.vmem [#allocation3], %s619
        // Predicated region
        $region52: #{_lambda_.7} parent=46 // pred_check
          %p621 = pneg %p78
        $region53: #{_lambda_.7} parent=46 // pred_check_branch
          %623 = sbr.rel (%p621) target = $region55
        $region54: #{_lambda_.7} parent=46 // pred_region
          %s624 = smul.u32 4, %s13
          %s625 = smul.addr %s624, 4
          %s626 = scalar_lea.vmem %s2, %s625
          // Predicated region
          $region56: #{_lambda_.7} parent=54 // pred_check
            _
          $region57: #{_lambda_.7} parent=54 // pred_check_branch
            %628 = sbr.rel (0) target = $region59
          $region58: #{_lambda_.7} parent=54 // pred_region
            // Predicated region
            $region60: #{_lambda_.7} parent=58 // pred_check
              _
            $region61: #{_lambda_.7} parent=58 // pred_check_branch
              %630 = sbr.rel (0) target = $region63
            $region62: #{_lambda_.7} parent=58 // pred_region
              loop: start=0, step=1, limit=1
              $region64: #{_lambda_.7} parent=62 // loop_pre_header
                _
              $region65: #{_lambda_.7} parent=62 // loop_header
                %s632 = sphi 0, %s636
                %p633 = scmp.ge.s32.totalorder %s632, 1
                %s637 = sphi %s620, %s620
                %s638 = sphi %s626, %s626
              $region66: #{_lambda_.7} parent=62 // loop_header_branch
                %635 = sbr.rel (%p633) target = $region70
              $region67: #{_lambda_.7} parent=62 // loop_body
                %v639 = vld [vmem:[%s637] sm:$0xff]
                %640 = vst [vmem:[%s638] sm:$0xff] %v639
                %v641 = vld [vmem:[%s637 + $0x8] sm:$0xff]
                %642 = vst [vmem:[%s638 + $0x8] sm:$0xff] %v641
                %v643 = vld [vmem:[%s637 + $0x10] sm:$0xff]
                %644 = vst [vmem:[%s638 + $0x20] sm:$0xff] %v643
                %v645 = vld [vmem:[%s637 + $0x18] sm:$0xff]
                %646 = vst [vmem:[%s638 + $0x28] sm:$0xff] %v645
              $region68: #{_lambda_.7} parent=62 // loop_footer
                %s636 = sadd.s32 1, %s632
              $region69: #{_lambda_.7} parent=62 // loop_footer_branch
                %631 = sbr.rel target = $region65
              $region70: #{_lambda_.7} parent=62 // loop_exit
                _
            $region63: #{_lambda_.7} parent=58 // pred_fallthru
              _
            // Predicated region
            $region71: #{_lambda_.7} parent=58 // pred_check
              _
            $region72: #{_lambda_.7} parent=58 // pred_check_branch
              %648 = sbr.rel target = $region74
            $region73: #{_lambda_.7} parent=58 // pred_region
              _
            $region74: #{_lambda_.7} parent=58 // pred_fallthru
              _
          $region59: #{_lambda_.7} parent=54 // pred_fallthru
            _
          %649 = vnop
        $region55: #{_lambda_.7} parent=46 // pred_fallthru
          _
      $region47: #{_lambda_.7} parent=5 // pred_fallthru
        _
      %p650 = scmp.le.s32.totalorder 2, %s8
      // Predicated region
      $region75: #{_lambda_.7} parent=5 // pred_check
        %p651 = pneg %p650
      $region76: #{_lambda_.7} parent=5 // pred_check_branch
        %653 = sbr.rel (%p651) target = $region78
      $region77: #{_lambda_.7} parent=5 // pred_region
        %s654 = ssub.s32 %s8, 2
        // Predicated region
        $region79: #{_lambda_.7} parent=77 // pred_check
          %p655 = pneg %p84
        $region80: #{_lambda_.7} parent=77 // pred_check_branch
          %657 = sbr.rel (%p655) target = $region82
        $region81: #{_lambda_.7} parent=77 // pred_region
          %s658 = sand.u32 %s69, 1
          %s659 = sand.u32 %s69, 1
          %s660 = smul.addr %s659, 32
          %s661 = scalar_lea.vmem [#allocation3], %s660
        $region82: #{_lambda_.7} parent=77 // pred_fallthru
          _
      $region78: #{_lambda_.7} parent=5 // pred_fallthru
        _
    $region6: #{_lambda_.7} parent=1 // loop_footer
      %s12 = sadd.s32 1, %s8
    $region7: #{_lambda_.7} parent=1 // loop_footer_branch
      %7 = sbr.rel target = $region3
    $region8: #{_lambda_.7} parent=1 // loop_exit
      _

// kernel: _lambda_.8
$region0: #{_lambda_.8}
  #allocation0 [shape = 'u32[]', space=smem, size = 0x4, offset = 0x4, fixed_abs, tag = 'smem constant byte address 0x4 - core index']
  #allocation1 [shape = 'u32[72,128]{1,0:T(1,128)}', space=vmem, size = 0x9000, scoped, tag = 'internal scratch']
  %s0 = inlined_call_operand.vmem [shape: bf16[256,256], index: 0, kind: input, shape index: {}]
  %s1 = inlined_call_operand.vmem [shape: bf16[32,256], index: 1, kind: input, shape index: {}]
  %s2 = inlined_call_operand.vmem [shape: bf16[32,256], index: 2, kind: output, shape index: {}]
  %s3 = sld [smem:[#allocation0]]
  $region119: #{_lambda_.8} parent=0
    _
  %s5 = ssub.s32 1, %s3
  %s6 = scalar_select 0, %s5, %s3
  $region1: #{_lambda_.8} parent=0
    #allocation2 [shape = 'u8[131072]{0}', space=vmem, size = 0x20000, scoped, tag = 'input window, operand 0']
    #allocation3 [shape = 'u8[16384]{0}', space=vmem, size = 0x4000, scoped, tag = 'output window, operand 0']
    loop: start=0, step=1, limit=4
    $region2: #{_lambda_.8} parent=1 // loop_pre_header
      _
    $region3: #{_lambda_.8} parent=1 // loop_header
      %s8 = sphi 0, %s12
      %p9 = scmp.ge.s32.totalorder %s8, 4
      %s18 = sphi 0, %s20
      %s21 = sphi 0, %s18
      %s22 = sphi 0, %s21
      %s38 = sphi 0, %s22
      %s42 = sphi 0, %s42
      %s44 = sphi 0, %s42
      %s45 = sphi 0, %s44
      %s59 = sphi 0, %s45
      %s65 = sphi 0, %s67
      %s68 = sphi 0, %s65
      %s69 = sphi 0, %s68
      %s85 = sphi 0, %s69
    $region4: #{_lambda_.8} parent=1 // loop_header_branch
      %11 = sbr.rel (%p9) target = $region8
    $region5: #{_lambda_.8} parent=1 // loop_body
      %s13 = ssub.s32 %s8, 1
      %s14 = ssub.s32 %s8, 2
      %s15 = sadd.s32 %s8, 1
      %s16 = ssub.s32 %s8, %s15
      %p17 = scmp.eq.s32.totalorder %s16, 0
      %s19 = sadd.s32 %s18, 1
      %s20 = scalar_select %p17, %s18, %s19
      %p23 = pneg %p17
      %p24 = scmp.eq.s32.totalorder %s8, 1
      %p25 = por %p23, %p24
      %p26 = scmp.ne.s32.totalorder %s18, %s21
      %p27 = scmp.eq.s32.totalorder %s8, 0
      %p28 = por %p26, %p27
      %p29 = scmp.ne.s32.totalorder %s18, %s21
      %p30 = scmp.eq.s32.totalorder %s13, 1
      %p31 = por %p29, %p30
      %p32 = scmp.ne.s32.totalorder %s21, %s22
      %p33 = scmp.eq.s32.totalorder %s13, 0
      %p34 = por %p32, %p33
      %p35 = scmp.ne.s32.totalorder %s21, %s22
      %p36 = scmp.eq.s32.totalorder %s14, 1
      %p37 = por %p35, %p36
      %p39 = scmp.ne.s32.totalorder %s22, %s38
      %p40 = scmp.eq.s32.totalorder %s14, 0
      %p41 = por %p39, %p40
      %s43 = sadd.s32 %s42, 1
      %p46 = scmp.eq.s32.totalorder %s8, 1
      %p47 = scmp.ne.s32.totalorder %s42, %s44
      %p48 = scmp.eq.s32.totalorder %s8, 0
      %p49 = por %p47, %p48
      %p50 = scmp.ne.s32.totalorder %s42, %s44
      %p51 = scmp.eq.s32.totalorder %s13, 1
      %p52 = por %p50, %p51
      %p53 = scmp.ne.s32.totalorder %s44, %s45
      %p54 = scmp.eq.s32.totalorder %s13, 0
      %p55 = por %p53, %p54
      %p56 = scmp.ne.s32.totalorder %s44, %s45
      %p57 = scmp.eq.s32.totalorder %s14, 1
      %p58 = por %p56, %p57
      %p60 = scmp.ne.s32.totalorder %s45, %s59
      %p61 = scmp.eq.s32.totalorder %s14, 0
      %p62 = por %p60, %p61
      %s63 = ssub.s32 %s8, %s15
      %p64 = scmp.eq.s32.totalorder %s63, 0
      %s66 = sadd.s32 %s65, 1
      %s67 = scalar_select %p64, %s65, %s66
      %p70 = pneg %p64
      %p71 = scmp.eq.s32.totalorder %s8, 1
      %p72 = por %p70, %p71
      %p73 = scmp.ne.s32.totalorder %s65, %s68
      %p74 = scmp.eq.s32.totalorder %s8, 0
      %p75 = por %p73, %p74
      %p76 = scmp.ne.s32.totalorder %s65, %s68
      %p77 = scmp.eq.s32.totalorder %s13, 1
      %p78 = por %p76, %p77
      %p79 = scmp.ne.s32.totalorder %s68, %s69
      %p80 = scmp.eq.s32.totalorder %s13, 0
      %p81 = por %p79, %p80
      %p82 = scmp.ne.s32.totalorder %s68, %s69
      %p83 = scmp.eq.s32.totalorder %s14, 1
      %p84 = por %p82, %p83
      %p86 = scmp.ne.s32.totalorder %s69, %s85
      %p87 = scmp.eq.s32.totalorder %s14, 0
      %p88 = por %p86, %p87
      %p89 = scmp.le.s32.totalorder 1, %s8
      %p90 = scmp.lt.s32.totalorder %s8, 3
      %p91 = pnand %p89, %p90
      %p92 = pneg %p91
      // Predicated region
      $region9: #{_lambda_.8} parent=5 // pred_check
        _
      $region10: #{_lambda_.8} parent=5 // pred_check_branch
        %94 = sbr.rel (%p91) target = $region12
      $region11: #{_lambda_.8} parent=5 // pred_region
        %s95 = ssub.s32 %s8, 1
        // Predicated region
        $region13: #{_lambda_.8} parent=11 // pred_check
          %p96 = pneg %p55
        $region14: #{_lambda_.8} parent=11 // pred_check_branch
          %98 = sbr.rel (%p96) target = $region16
        $region15: #{_lambda_.8} parent=11 // pred_region
          _
        $region16: #{_lambda_.8} parent=11 // pred_fallthru
          _
      $region12: #{_lambda_.8} parent=5 // pred_fallthru
        _
      %p99 = scmp.lt.s32.totalorder %s8, 2
      // Predicated region
      $region17: #{_lambda_.8} parent=5 // pred_check
        %p100 = pneg %p99
      $region18: #{_lambda_.8} parent=5 // pred_check_branch
        %102 = sbr.rel (%p100) target = $region20
      $region19: #{_lambda_.8} parent=5 // pred_region
        // Predicated region
        $region21: #{_lambda_.8} parent=19 // pred_check
          %p103 = pneg %p28
        $region22: #{_lambda_.8} parent=19 // pred_check_branch
          %105 = sbr.rel (%p103) target = $region24
        $region23: #{_lambda_.8} parent=19 // pred_region
          %s106 = sand.u32 %s18, 1
          %s107 = sand.u32 %s18, 1
          %s108 = smul.addr %s107, 128
          %s109 = scalar_lea.vmem [#allocation2], %s108
          %s110 = smul.addr %s8, 4
          %s111 = scalar_lea.vmem %s0, %s110
          // Predicated region
          $region25: #{_lambda_.8} parent=23 // pred_check
            _
          $region26: #{_lambda_.8} parent=23 // pred_check_branch
            %113 = sbr.rel (0) target = $region28
          $region27: #{_lambda_.8} parent=23 // pred_region
            // Predicated region
            $region29: #{_lambda_.8} parent=27 // pred_check
              _
            $region30: #{_lambda_.8} parent=27 // pred_check_branch
              %115 = sbr.rel target = $region32
            $region31: #{_lambda_.8} parent=27 // pred_region
              // Predicated region
              $region44: #{_lambda_.8} parent=31 // pred_check
                _
              $region45: #{_lambda_.8} parent=31 // pred_check_branch
                %193 = sbr.rel (0) target = $region47
              $region46: #{_lambda_.8} parent=31 // pred_region
                loop: start=0, step=1, limit=1
                $region48: #{_lambda_.8} parent=46 // loop_pre_header
                  _
                $region49: #{_lambda_.8} parent=46 // loop_header
                  %s195 = sphi 0, %s199
                  %p196 = scmp.ge.s32.totalorder %s195, 1
                  %s200 = sphi %s111, %s111
                  %s201 = sphi %s109, %s109
                $region50: #{_lambda_.8} parent=46 // loop_header_branch
                  %198 = sbr.rel (%p196) target = $region54
                $region51: #{_lambda_.8} parent=46 // loop_body
                  _
                $region52: #{_lambda_.8} parent=46 // loop_footer
                  %s199 = sadd.s32 1, %s195
                $region53: #{_lambda_.8} parent=46 // loop_footer_branch
                  %194 = sbr.rel target = $region49
                $region54: #{_lambda_.8} parent=46 // loop_exit
                  _
                %s203 = ssub.s32 16, 1
                loop: start=0, step=1, limit=1
                $region55: #{_lambda_.8} parent=46 // loop_pre_header
                  _
                $region56: #{_lambda_.8} parent=46 // loop_header
                  %s205 = sphi 0, %s209
                  %p206 = scmp.ge.s32.totalorder %s205, 1
                  %s210 = sphi %s111, %s111
                  %s211 = sphi %s109, %s109
                $region57: #{_lambda_.8} parent=46 // loop_header_branch
                  %208 = sbr.rel (%p206) target = $region61
                $region58: #{_lambda_.8} parent=46 // loop_body
                  %v212 = vld [vmem:[%s210] sm:%s203]
                  %213 = vst [vmem:[%s211] sm:%s203] %v212
                  %v214 = vld [vmem:[%s210 + $0x8] sm:%s203]
                  %215 = vst [vmem:[%s211 + $0x4] sm:%s203] %v214
                  %v216 = vld [vmem:[%s210 + $0x10] sm:%s203]
                  %217 = vst [vmem:[%s211 + $0x8] sm:%s203] %v216
                  %v218 = vld [vmem:[%s210 + $0x18] sm:%s203]
                  %219 = vst [vmem:[%s211 + $0xc] sm:%s203] %v218
                  %v220 = vld [vmem:[%s210 + $0x20] sm:%s203]
                  %221 = vst [vmem:[%s211 + $0x10] sm:%s203] %v220
                  %v222 = vld [vmem:[%s210 + $0x28] sm:%s203]
                  %223 = vst [vmem:[%s211 + $0x14] sm:%s203] %v222
                  %v224 = vld [vmem:[%s210 + $0x30] sm:%s203]
                  %225 = vst [vmem:[%s211 + $0x18] sm:%s203] %v224
                  %v226 = vld [vmem:[%s210 + $0x38] sm:%s203]
                  %227 = vst [vmem:[%s211 + $0x1c] sm:%s203] %v226
                  %v228 = vld [vmem:[%s210 + $0x40] sm:%s203]
                  %229 = vst [vmem:[%s211 + $0x20] sm:%s203] %v228
                  %v230 = vld [vmem:[%s210 + $0x48] sm:%s203]
                  %231 = vst [vmem:[%s211 + $0x24] sm:%s203] %v230
                  %v232 = vld [vmem:[%s210 + $0x50] sm:%s203]
                  %233 = vst [vmem:[%s211 + $0x28] sm:%s203] %v232
                  %v234 = vld [vmem:[%s210 + $0x58] sm:%s203]
                  %235 = vst [vmem:[%s211 + $0x2c] sm:%s203] %v234
                  %v236 = vld [vmem:[%s210 + $0x60] sm:%s203]
                  %237 = vst [vmem:[%s211 + $0x30] sm:%s203] %v236
                  %v238 = vld [vmem:[%s210 + $0x68] sm:%s203]
                  %239 = vst [vmem:[%s211 + $0x34] sm:%s203] %v238
                  %v240 = vld [vmem:[%s210 + $0x70] sm:%s203]
                  %241 = vst [vmem:[%s211 + $0x38] sm:%s203] %v240
                  %v242 = vld [vmem:[%s210 + $0x78] sm:%s203]
                  %243 = vst [vmem:[%s211 + $0x3c] sm:%s203] %v242
                  %v244 = vld [vmem:[%s210 + $0x80] sm:%s203]
                  %245 = vst [vmem:[%s211 + $0x40] sm:%s203] %v244
                  %v246 = vld [vmem:[%s210 + $0x88] sm:%s203]
                  %247 = vst [vmem:[%s211 + $0x44] sm:%s203] %v246
                  %v248 = vld [vmem:[%s210 + $0x90] sm:%s203]
                  %249 = vst [vmem:[%s211 + $0x48] sm:%s203] %v248
                  %v250 = vld [vmem:[%s210 + $0x98] sm:%s203]
                  %251 = vst [vmem:[%s211 + $0x4c] sm:%s203] %v250
                  %v252 = vld [vmem:[%s210 + $0xa0] sm:%s203]
                  %253 = vst [vmem:[%s211 + $0x50] sm:%s203] %v252
                  %v254 = vld [vmem:[%s210 + $0xa8] sm:%s203]
                  %255 = vst [vmem:[%s211 + $0x54] sm:%s203] %v254
                  %v256 = vld [vmem:[%s210 + $0xb0] sm:%s203]
                  %257 = vst [vmem:[%s211 + $0x58] sm:%s203] %v256
                  %v258 = vld [vmem:[%s210 + $0xb8] sm:%s203]
                  %259 = vst [vmem:[%s211 + $0x5c] sm:%s203] %v258
                  %v260 = vld [vmem:[%s210 + $0xc0] sm:%s203]
                  %261 = vst [vmem:[%s211 + $0x60] sm:%s203] %v260
                  %v262 = vld [vmem:[%s210 + $0xc8] sm:%s203]
                  %263 = vst [vmem:[%s211 + $0x64] sm:%s203] %v262
                  %v264 = vld [vmem:[%s210 + $0xd0] sm:%s203]
                  %265 = vst [vmem:[%s211 + $0x68] sm:%s203] %v264
                  %v266 = vld [vmem:[%s210 + $0xd8] sm:%s203]
                  %267 = vst [vmem:[%s211 + $0x6c] sm:%s203] %v266
                  %v268 = vld [vmem:[%s210 + $0xe0] sm:%s203]
                  %269 = vst [vmem:[%s211 + $0x70] sm:%s203] %v268
                  %v270 = vld [vmem:[%s210 + $0xe8] sm:%s203]
                  %271 = vst [vmem:[%s211 + $0x74] sm:%s203] %v270
                  %v272 = vld [vmem:[%s210 + $0xf0] sm:%s203]
                  %273 = vst [vmem:[%s211 + $0x78] sm:%s203] %v272
                  %v274 = vld [vmem:[%s210 + $0xf8] sm:%s203]
                  %275 = vst [vmem:[%s211 + $0x7c] sm:%s203] %v274
                $region59: #{_lambda_.8} parent=46 // loop_footer
                  %s209 = sadd.s32 1, %s205
                $region60: #{_lambda_.8} parent=46 // loop_footer_branch
                  %204 = sbr.rel target = $region56
                $region61: #{_lambda_.8} parent=46 // loop_exit
                  _
              $region47: #{_lambda_.8} parent=31 // pred_fallthru
                _
            $region32: #{_lambda_.8} parent=27 // pred_fallthru
              _
            // Predicated region
            $region33: #{_lambda_.8} parent=27 // pred_check
              _
            $region34: #{_lambda_.8} parent=27 // pred_check_branch
              %117 = sbr.rel (0) target = $region36
            $region35: #{_lambda_.8} parent=27 // pred_region
              %s119 = ssub.s32 16, 1
              loop: start=0, step=1, limit=1
              $region37: #{_lambda_.8} parent=35 // loop_pre_header
                _
              $region38: #{_lambda_.8} parent=35 // loop_header
                %s121 = sphi 0, %s125
                %p122 = scmp.ge.s32.totalorder %s121, 1
                %s126 = sphi %s111, %s111
                %s127 = sphi %s109, %s109
              $region39: #{_lambda_.8} parent=35 // loop_header_branch
                %124 = sbr.rel (%p122) target = $region43
              $region40: #{_lambda_.8} parent=35 // loop_body
                %v128 = vld [vmem:[%s126] sm:%s119]
                %129 = vst [vmem:[%s127] sm:%s119] %v128
                %v130 = vld [vmem:[%s126 + $0x8] sm:%s119]
                %131 = vst [vmem:[%s127 + $0x4] sm:%s119] %v130
                %v132 = vld [vmem:[%s126 + $0x10] sm:%s119]
                %133 = vst [vmem:[%s127 + $0x8] sm:%s119] %v132
                %v134 = vld [vmem:[%s126 + $0x18] sm:%s119]
                %135 = vst [vmem:[%s127 + $0xc] sm:%s119] %v134
                %v136 = vld [vmem:[%s126 + $0x20] sm:%s119]
                %137 = vst [vmem:[%s127 + $0x10] sm:%s119] %v136
                %v138 = vld [vmem:[%s126 + $0x28] sm:%s119]
                %139 = vst [vmem:[%s127 + $0x14] sm:%s119] %v138
                %v140 = vld [vmem:[%s126 + $0x30] sm:%s119]
                %141 = vst [vmem:[%s127 + $0x18] sm:%s119] %v140
                %v142 = vld [vmem:[%s126 + $0x38] sm:%s119]
                %143 = vst [vmem:[%s127 + $0x1c] sm:%s119] %v142
                %v144 = vld [vmem:[%s126 + $0x40] sm:%s119]
                %145 = vst [vmem:[%s127 + $0x20] sm:%s119] %v144
                %v146 = vld [vmem:[%s126 + $0x48] sm:%s119]
                %147 = vst [vmem:[%s127 + $0x24] sm:%s119] %v146
                %v148 = vld [vmem:[%s126 + $0x50] sm:%s119]
                %149 = vst [vmem:[%s127 + $0x28] sm:%s119] %v148
                %v150 = vld [vmem:[%s126 + $0x58] sm:%s119]
                %151 = vst [vmem:[%s127 + $0x2c] sm:%s119] %v150
                %v152 = vld [vmem:[%s126 + $0x60] sm:%s119]
                %153 = vst [vmem:[%s127 + $0x30] sm:%s119] %v152
                %v154 = vld [vmem:[%s126 + $0x68] sm:%s119]
                %155 = vst [vmem:[%s127 + $0x34] sm:%s119] %v154
                %v156 = vld [vmem:[%s126 + $0x70] sm:%s119]
                %157 = vst [vmem:[%s127 + $0x38] sm:%s119] %v156
                %v158 = vld [vmem:[%s126 + $0x78] sm:%s119]
                %159 = vst [vmem:[%s127 + $0x3c] sm:%s119] %v158
                %v160 = vld [vmem:[%s126 + $0x80] sm:%s119]
                %161 = vst [vmem:[%s127 + $0x40] sm:%s119] %v160
                %v162 = vld [vmem:[%s126 + $0x88] sm:%s119]
                %163 = vst [vmem:[%s127 + $0x44] sm:%s119] %v162
                %v164 = vld [vmem:[%s126 + $0x90] sm:%s119]
                %165 = vst [vmem:[%s127 + $0x48] sm:%s119] %v164
                %v166 = vld [vmem:[%s126 + $0x98] sm:%s119]
                %167 = vst [vmem:[%s127 + $0x4c] sm:%s119] %v166
                %v168 = vld [vmem:[%s126 + $0xa0] sm:%s119]
                %169 = vst [vmem:[%s127 + $0x50] sm:%s119] %v168
                %v170 = vld [vmem:[%s126 + $0xa8] sm:%s119]
                %171 = vst [vmem:[%s127 + $0x54] sm:%s119] %v170
                %v172 = vld [vmem:[%s126 + $0xb0] sm:%s119]
                %173 = vst [vmem:[%s127 + $0x58] sm:%s119] %v172
                %v174 = vld [vmem:[%s126 + $0xb8] sm:%s119]
                %175 = vst [vmem:[%s127 + $0x5c] sm:%s119] %v174
                %v176 = vld [vmem:[%s126 + $0xc0] sm:%s119]
                %177 = vst [vmem:[%s127 + $0x60] sm:%s119] %v176
                %v178 = vld [vmem:[%s126 + $0xc8] sm:%s119]
                %179 = vst [vmem:[%s127 + $0x64] sm:%s119] %v178
                %v180 = vld [vmem:[%s126 + $0xd0] sm:%s119]
                %181 = vst [vmem:[%s127 + $0x68] sm:%s119] %v180
                %v182 = vld [vmem:[%s126 + $0xd8] sm:%s119]
                %183 = vst [vmem:[%s127 + $0x6c] sm:%s119] %v182
                %v184 = vld [vmem:[%s126 + $0xe0] sm:%s119]
                %185 = vst [vmem:[%s127 + $0x70] sm:%s119] %v184
                %v186 = vld [vmem:[%s126 + $0xe8] sm:%s119]
                %187 = vst [vmem:[%s127 + $0x74] sm:%s119] %v186
                %v188 = vld [vmem:[%s126 + $0xf0] sm:%s119]
                %189 = vst [vmem:[%s127 + $0x78] sm:%s119] %v188
                %v190 = vld [vmem:[%s126 + $0xf8] sm:%s119]
                %191 = vst [vmem:[%s127 + $0x7c] sm:%s119] %v190
              $region41: #{_lambda_.8} parent=35 // loop_footer
                %s125 = sadd.s32 1, %s121
              $region42: #{_lambda_.8} parent=35 // loop_footer_branch
                %120 = sbr.rel target = $region38
              $region43: #{_lambda_.8} parent=35 // loop_exit
                _
            $region36: #{_lambda_.8} parent=27 // pred_fallthru
              _
          $region28: #{_lambda_.8} parent=23 // pred_fallthru
            _
          %276 = vnop
        $region24: #{_lambda_.8} parent=19 // pred_fallthru
          _
      $region20: #{_lambda_.8} parent=5 // pred_fallthru
        _
      %p277 = scmp.le.s32.totalorder 1, %s8
      %p278 = scmp.lt.s32.totalorder %s8, 3
      %p279 = pnand %p277, %p278
      %p280 = pneg %p279
      // Predicated region
      $region62: #{_lambda_.8} parent=5 // pred_check
        _
      $region63: #{_lambda_.8} parent=5 // pred_check_branch
        %282 = sbr.rel (%p279) target = $region65
      $region64: #{_lambda_.8} parent=5 // pred_region
        %s283 = ssub.s32 %s8, 1
        %s284 = sand.u32 %s21, 1
        %s285 = sand.u32 %s21, 1
        %s286 = smul.addr %s285, 128
        %s287 = scalar_lea.vmem [#allocation2], %s286
        // Predicated region
        $region66: #{_lambda_.8} parent=64 // pred_check
          %p288 = pneg %p34
        $region67: #{_lambda_.8} parent=64 // pred_check_branch
          %290 = sbr.rel (%p288) target = $region69
        $region68: #{_lambda_.8} parent=64 // pred_region
          _
        $region69: #{_lambda_.8} parent=64 // pred_fallthru
          _
        %s291 = sand.u32 %s21, 1
        %s292 = sand.u32 %s21, 1
        %s293 = smul.addr %s292, 128
        %s294 = scalar_lea.vmem [#allocation2], %s293
        %p295 = pneg %p34
        %p296 = pneg %p31
        %p297 = pneg %p55
        %p298 = pneg %p52
        %p299 = pneg %p81
        %p300 = pneg %p78
        %s301 = sand.u32 %s68, 1
        %s302 = sand.u32 %s68, 1
        %s303 = smul.addr %s302, 16
        %s304 = scalar_lea.vmem [#allocation3], %s303
        %v305 = vld [vmem:[%s1] sm:$0xff]
        %v306 = vld [vmem:[%s1 + $0x8] sm:$0xff]
        %v307 = vld [vmem:[%s1 + $0x10] sm:$0xff]
        %v308 = vld [vmem:[%s1 + $0x18] sm:$0xff]
        %v309 = vld [vmem:[%s287] sm:$0xf]
        %v310 = vld [vmem:[%s287 + $0x4] sm:$0xf]
        %v311 = vld [vmem:[%s287 + $0x8] sm:$0xf]
        %v312 = vld [vmem:[%s287 + $0xc] sm:$0xf]
        %v313 = vld [vmem:[%s287 + $0x10] sm:$0xf]
        %v314 = vld [vmem:[%s287 + $0x14] sm:$0xf]
        %v315 = vld [vmem:[%s287 + $0x18] sm:$0xf]
        %v316 = vld [vmem:[%s287 + $0x1c] sm:$0xf]
        %v317 = vld [vmem:[%s287 + $0x20] sm:$0xf]
        %v318 = vld [vmem:[%s287 + $0x24] sm:$0xf]
        %v319 = vld [vmem:[%s287 + $0x28] sm:$0xf]
        %v320 = vld [vmem:[%s287 + $0x2c] sm:$0xf]
        %v321 = vld [vmem:[%s287 + $0x30] sm:$0xf]
        %v322 = vld [vmem:[%s287 + $0x34] sm:$0xf]
        %v323 = vld [vmem:[%s287 + $0x38] sm:$0xf]
        %v324 = vld [vmem:[%s287 + $0x3c] sm:$0xf]
        %v325 = vld [vmem:[%s287 + $0x40] sm:$0xf]
        %v326 = vld [vmem:[%s287 + $0x44] sm:$0xf]
        %v327 = vld [vmem:[%s287 + $0x48] sm:$0xf]
        %v328 = vld [vmem:[%s287 + $0x4c] sm:$0xf]
        %v329 = vld [vmem:[%s287 + $0x50] sm:$0xf]
        %v330 = vld [vmem:[%s287 + $0x54] sm:$0xf]
        %v331 = vld [vmem:[%s287 + $0x58] sm:$0xf]
        %v332 = vld [vmem:[%s287 + $0x5c] sm:$0xf]
        %v333 = vld [vmem:[%s287 + $0x60] sm:$0xf]
        %v334 = vld [vmem:[%s287 + $0x64] sm:$0xf]
        %v335 = vld [vmem:[%s287 + $0x68] sm:$0xf]
        %v336 = vld [vmem:[%s287 + $0x6c] sm:$0xf]
        %v337 = vld [vmem:[%s287 + $0x70] sm:$0xf]
        %v338 = vld [vmem:[%s287 + $0x74] sm:$0xf]
        %v339 = vld [vmem:[%s287 + $0x78] sm:$0xf]
        %v340 = vld [vmem:[%s287 + $0x7c] sm:$0xf]
        %v345 = vunpack.c.l.b16 %v305
        %v346 = vunpack.c.h.b16 %v305
        %v347 = vunpack.c.l.b16 %v306
        %v348 = vunpack.c.h.b16 %v306
        %v349 = vunpack.c.l.b16 %v307
        %v350 = vunpack.c.h.b16 %v307
        %v351 = vunpack.c.l.b16 %v308
        %v352 = vunpack.c.h.b16 %v308
        %v353 = vpack.c.b16 %v347, %v345
        %v354 = vpack.c.b16 %v348, %v346
        %v355 = vpack.c.b16 %v351, %v349
        %v356 = vpack.c.b16 %v352, %v350
        %v393 = vunpack.c.l.b16 %v309
        %v394 = vunpack.c.l.b16 %v310
        %v395 = vunpack.c.l.b16 %v311
        %v396 = vunpack.c.l.b16 %v312
        %v397 = vunpack.c.l.b16 %v313
        %v398 = vunpack.c.l.b16 %v314
        %v399 = vunpack.c.l.b16 %v315
        %v400 = vunpack.c.l.b16 %v316
        %v401 = vunpack.c.l.b16 %v317
        %v402 = vunpack.c.l.b16 %v318
        %v403 = vunpack.c.l.b16 %v319
        %v404 = vunpack.c.l.b16 %v320
        %v405 = vunpack.c.l.b16 %v321
        %v406 = vunpack.c.l.b16 %v322
        %v407 = vunpack.c.l.b16 %v323
        %v408 = vunpack.c.l.b16 %v324
        %v409 = vunpack.c.l.b16 %v325
        %v410 = vunpack.c.l.b16 %v326
        %v411 = vunpack.c.l.b16 %v327
        %v412 = vunpack.c.l.b16 %v328
        %v413 = vunpack.c.l.b16 %v329
        %v414 = vunpack.c.l.b16 %v330
        %v415 = vunpack.c.l.b16 %v331
        %v416 = vunpack.c.l.b16 %v332
        %v417 = vunpack.c.l.b16 %v333
        %v418 = vunpack.c.l.b16 %v334
        %v419 = vunpack.c.l.b16 %v335
        %v420 = vunpack.c.l.b16 %v336
        %v421 = vunpack.c.l.b16 %v337
        %v422 = vunpack.c.l.b16 %v338
        %v423 = vunpack.c.l.b16 %v339
        %v424 = vunpack.c.l.b16 %v340
        %v425 = vpack.c.b16 %v394, %v393
        %v426 = vpack.c.b16 %v396, %v395
        %v427 = vpack.c.b16 %v398, %v397
        %v428 = vpack.c.b16 %v400, %v399
        %v429 = vpack.c.b16 %v402, %v401
        %v430 = vpack.c.b16 %v404, %v403
        %v431 = vpack.c.b16 %v406, %v405
        %v432 = vpack.c.b16 %v408, %v407
        %v433 = vpack.c.b16 %v410, %v409
        %v434 = vpack.c.b16 %v412, %v411
        %v435 = vpack.c.b16 %v414, %v413
        %v436 = vpack.c.b16 %v416, %v415
        %v437 = vpack.c.b16 %v418, %v417
        %v438 = vpack.c.b16 %v420, %v419
        %v439 = vpack.c.b16 %v422, %v421
        %v440 = vpack.c.b16 %v424, %v423
        %457 = vmatpush.bf16.msra.mxu0 %v432
        %458 = vmatpush.bf16.msra.mxu0 %v431
        %459 = vmatpush.bf16.msra.mxu0 %v430
        %460 = vmatpush.bf16.msra.mxu0 %v429
        %461 = vmatpush.bf16.msra.mxu0 %v428
        %462 = vmatpush.bf16.msra.mxu0 %v427
        %463 = vmatpush.bf16.msra.mxu0 %v426
        %464 = vmatpush.bf16.msra.mxu0 %v425
        %465 = vmatmul.bf16.gmra.mxu0 %v353
        %v466 = vpop.f32.mrf.mxu0
        %v467 = vadd.f32 0.0, %v466
        %v468 = vpop.f32.mrf.mxu0
        %v469 = vadd.f32 0.0, %v468
        %470 = vmatmul.bf16.gmra.mxu0 %v355
        %v471 = vpop.f32.mrf.mxu0
        %v472 = vadd.f32 0.0, %v471
        %v473 = vpop.f32.mrf.mxu0
        %v474 = vadd.f32 0.0, %v473
        %475 = vdwg.mxu0
        %476 = vmatpush.bf16.msra.mxu0 %v440
        %477 = vmatpush.bf16.msra.mxu0 %v439
        %478 = vmatpush.bf16.msra.mxu0 %v438
        %479 = vmatpush.bf16.msra.mxu0 %v437
        %480 = vmatpush.bf16.msra.mxu0 %v436
        %481 = vmatpush.bf16.msra.mxu0 %v435
        %482 = vmatpush.bf16.msra.mxu0 %v434
        %483 = vmatpush.bf16.msra.mxu0 %v433
        %484 = vmatmul.bf16.gmra.mxu0 %v354
        %v485 = vpop.f32.mrf.mxu0
        %v486 = vadd.f32 %v467, %v485
        %v487 = vpop.f32.mrf.mxu0
        %v488 = vadd.f32 %v469, %v487
        %489 = vmatmul.bf16.gmra.mxu0 %v356
        %v490 = vpop.f32.mrf.mxu0
        %v491 = vadd.f32 %v472, %v490
        %v492 = vpop.f32.mrf.mxu0
        %v493 = vadd.f32 %v474, %v492
        %494 = vdwg.mxu0
        %vm495 = vcmask 523264
        %v496 = vsel %vm495, %v486, 0.0
        %497 = vadd.xlane.f32.xlu0 %v496
        %v498 = vpop.xlane.xlu0 %497
        %v499 = vsel %vm495, %v488, 0.0
        %500 = vadd.xlane.f32.xlu0 %v499
        %v501 = vpop.xlane.xlu0 %500
        %v502 = vsel %vm495, %v491, 0.0
        %503 = vadd.xlane.f32.xlu0 %v502
        %v504 = vpop.xlane.xlu0 %503
        %v505 = vsel %vm495, %v493, 0.0
        %506 = vadd.xlane.f32.xlu0 %v505
        %v507 = vpop.xlane.xlu0 %506
        %v508 = vrcp.pop 64.0
        %v509 = vmul.f32 64.0, %v508
        %v510 = vsub.f32 1.0, %v509
        %v511 = vmul.f32 %v508, %v510
        %v512 = vadd.f32 %v508, %v511
        %vm513 = vweird.f32 %v508
        %v514 = vsel %vm513, %v508, %v512
        %v515 = vmul.f32 %v498, %v514
        %v516 = vmul.f32 %v501, %v514
        %v517 = vmul.f32 %v504, %v514
        %v518 = vmul.f32 %v507, %v514
        %v519 = vsub.f32 %v486, %v515
        %v520 = vsub.f32 %v488, %v516
        %v521 = vsub.f32 %v491, %v517
        %v522 = vsub.f32 %v493, %v518
        %v523 = vmul.f32 %v519, %v519
        %v524 = vmul.f32 %v520, %v520
        %v525 = vmul.f32 %v521, %v521
        %v526 = vmul.f32 %v522, %v522
        %v527 = vsel %vm495, %v523, 0.0
        %528 = vadd.xlane.f32.xlu0 %v527
        %v529 = vpop.xlane.xlu0 %528
        %v530 = vsel %vm495, %v524, 0.0
        %531 = vadd.xlane.f32.xlu0 %v530
        %v532 = vpop.xlane.xlu0 %531
        %v533 = vsel %vm495, %v525, 0.0
        %534 = vadd.xlane.f32.xlu0 %v533
        %v535 = vpop.xlane.xlu0 %534
        %v536 = vsel %vm495, %v526, 0.0
        %537 = vadd.xlane.f32.xlu0 %v536
        %v538 = vpop.xlane.xlu0 %537
        %v539 = vmul.f32 %v529, %v514
        %v540 = vmul.f32 %v532, %v514
        %v541 = vmul.f32 %v535, %v514
        %v542 = vmul.f32 %v538, %v514
        %v543 = vadd.f32 %v539, 1e-05
        %v544 = vadd.f32 %v540, 1e-05
        %v545 = vadd.f32 %v541, 1e-05
        %v546 = vadd.f32 %v542, 1e-05
        %v547 = vrsqrt.pop %v543
        %v548 = vmul.f32 %v547, %v543
        %v549 = vmul.f32 %v548, %v547
        %v550 = vmul.f32 0.5, %v549
        %v551 = vsub.f32 1.5, %v550
        %v552 = vmul.f32 %v547, %v551
        %vm553 = vweird.f32 %v543
        %vm554 = vweird.f32 %v547
        %vm555 = vmor %vm553, %vm554
        %v556 = vsel %vm555, %v547, %v552
        %v557 = vrsqrt.pop %v544
        %v558 = vmul.f32 %v557, %v544
        %v559 = vmul.f32 %v558, %v557
        %v560 = vmul.f32 0.5, %v559
        %v561 = vsub.f32 1.5, %v560
        %v562 = vmul.f32 %v557, %v561
        %vm563 = vweird.f32 %v544
        %vm564 = vweird.f32 %v557
        %vm565 = vmor %vm563, %vm564
        %v566 = vsel %vm565, %v557, %v562
        %v567 = vrsqrt.pop %v545
        %v568 = vmul.f32 %v567, %v545
        %v569 = vmul.f32 %v568, %v567
        %v570 = vmul.f32 0.5, %v569
        %v571 = vsub.f32 1.5, %v570
        %v572 = vmul.f32 %v567, %v571
        %vm573 = vweird.f32 %v545
        %vm574 = vweird.f32 %v567
        %vm575 = vmor %vm573, %vm574
        %v576 = vsel %vm575, %v567, %v572
        %v577 = vrsqrt.pop %v546
        %v578 = vmul.f32 %v577, %v546
        %v579 = vmul.f32 %v578, %v577
        %v580 = vmul.f32 0.5, %v579
        %v581 = vsub.f32 1.5, %v580
        %v582 = vmul.f32 %v577, %v581
        %vm583 = vweird.f32 %v546
        %vm584 = vweird.f32 %v577
        %vm585 = vmor %vm583, %vm584
        %v586 = vsel %vm585, %v577, %v582
        %v587 = vmul.f32 %v519, %v556
        %v588 = vmul.f32 %v520, %v566
        %v589 = vmul.f32 %v521, %v576
        %v590 = vmul.f32 %v522, %v586
        %vm591 = vcmp.ge.f32.partialorder %v587, 0.0
        %vm592 = vcmp.ge.f32.partialorder %v588, 0.0
        %vm593 = vcmp.ge.f32.partialorder %v589, 0.0
        %vm594 = vcmp.ge.f32.partialorder %v590, 0.0
        %v595 = vmul.f32 %v587, 0.2
        %v596 = vmul.f32 %v588, 0.2
        %v597 = vmul.f32 %v589, 0.2
        %v598 = vmul.f32 %v590, 0.2
        %v599 = vsel %vm591, %v587, %v595
        %v600 = vsel %vm592, %v588, %v596
        %v601 = vsel %vm593, %v589, %v597
        %v602 = vsel %vm594, %v590, %v598
        %607 = vrot.lane.b32.xlu0 %v486, 64
        %v608 = vpop.permute.xlu0 %607
        %609 = vrot.lane.b32.xlu0 %v488, 64
        %v610 = vpop.permute.xlu0 %609
        %611 = vrot.lane.b32.xlu0 %v491, 64
        %v612 = vpop.permute.xlu0 %611
        %613 = vrot.lane.b32.xlu0 %v493, 64
        %v614 = vpop.permute.xlu0 %613
        %v619 = vsel %vm495, %v608, 0.0
        %620 = vadd.xlane.f32.xlu0 %v619
        %v621 = vpop.xlane.xlu0 %620
        %v622 = vsel %vm495, %v610, 0.0
        %623 = vadd.xlane.f32.xlu0 %v622
        %v624 = vpop.xlane.xlu0 %623
        %v625 = vsel %vm495, %v612, 0.0
        %626 = vadd.xlane.f32.xlu0 %v625
        %v627 = vpop.xlane.xlu0 %626
        %v628 = vsel %vm495, %v614, 0.0
        %629 = vadd.xlane.f32.xlu0 %v628
        %v630 = vpop.xlane.xlu0 %629
        %v631 = vmul.f32 %v621, %v514
        %v632 = vmul.f32 %v624, %v514
        %v633 = vmul.f32 %v627, %v514
        %v634 = vmul.f32 %v630, %v514
        %v635 = vsub.f32 %v486, %v631
        %v636 = vsub.f32 %v488, %v632
        %v637 = vsub.f32 %v491, %v633
        %v638 = vsub.f32 %v493, %v634
        %v639 = vmul.f32 %v635, %v635
        %v640 = vmul.f32 %v636, %v636
        %v641 = vmul.f32 %v637, %v637
        %v642 = vmul.f32 %v638, %v638
        %647 = vrot.lane.b32.xlu0 %v639, 64
        %v648 = vpop.permute.xlu0 %647
        %649 = vrot.lane.b32.xlu0 %v640, 64
        %v650 = vpop.permute.xlu0 %649
        %651 = vrot.lane.b32.xlu0 %v641, 64
        %v652 = vpop.permute.xlu0 %651
        %653 = vrot.lane.b32.xlu0 %v642, 64
        %v654 = vpop.permute.xlu0 %653
        %v659 = vsel %vm495, %v648, 0.0
        %660 = vadd.xlane.f32.xlu0 %v659
        %v661 = vpop.xlane.xlu0 %660
        %v662 = vsel %vm495, %v650, 0.0
        %663 = vadd.xlane.f32.xlu0 %v662
        %v664 = vpop.xlane.xlu0 %663
        %v665 = vsel %vm495, %v652, 0.0
        %666 = vadd.xlane.f32.xlu0 %v665
        %v667 = vpop.xlane.xlu0 %666
        %v668 = vsel %vm495, %v654, 0.0
        %669 = vadd.xlane.f32.xlu0 %v668
        %v670 = vpop.xlane.xlu0 %669
        %v671 = vmul.f32 %v661, %v514
        %v672 = vmul.f32 %v664, %v514
        %v673 = vmul.f32 %v667, %v514
        %v674 = vmul.f32 %v670, %v514
        %v675 = vadd.f32 %v671, 1e-05
        %v676 = vadd.f32 %v672, 1e-05
        %v677 = vadd.f32 %v673, 1e-05
        %v678 = vadd.f32 %v674, 1e-05
        %v679 = vrsqrt.pop %v675
        %v680 = vmul.f32 %v679, %v675
        %v681 = vmul.f32 %v680, %v679
        %v682 = vmul.f32 0.5, %v681
        %v683 = vsub.f32 1.5, %v682
        %v684 = vmul.f32 %v679, %v683
        %vm685 = vweird.f32 %v675
        %vm686 = vweird.f32 %v679
        %vm687 = vmor %vm685, %vm686
        %v688 = vsel %vm687, %v679, %v684
        %v689 = vrsqrt.pop %v676
        %v690 = vmul.f32 %v689, %v676
        %v691 = vmul.f32 %v690, %v689
        %v692 = vmul.f32 0.5, %v691
        %v693 = vsub.f32 1.5, %v692
        %v694 = vmul.f32 %v689, %v693
        %vm695 = vweird.f32 %v676
        %vm696 = vweird.f32 %v689
        %vm697 = vmor %vm695, %vm696
        %v698 = vsel %vm697, %v689, %v694
        %v699 = vrsqrt.pop %v677
        %v700 = vmul.f32 %v699, %v677
        %v701 = vmul.f32 %v700, %v699
        %v702 = vmul.f32 0.5, %v701
        %v703 = vsub.f32 1.5, %v702
        %v704 = vmul.f32 %v699, %v703
        %vm705 = vweird.f32 %v677
        %vm706 = vweird.f32 %v699
        %vm707 = vmor %vm705, %vm706
        %v708 = vsel %vm707, %v699, %v704
        %v709 = vrsqrt.pop %v678
        %v710 = vmul.f32 %v709, %v678
        %v711 = vmul.f32 %v710, %v709
        %v712 = vmul.f32 0.5, %v711
        %v713 = vsub.f32 1.5, %v712
        %v714 = vmul.f32 %v709, %v713
        %vm715 = vweird.f32 %v678
        %vm716 = vweird.f32 %v709
        %vm717 = vmor %vm715, %vm716
        %v718 = vsel %vm717, %v709, %v714
        %v719 = vmul.f32 %v635, %v688
        %v720 = vmul.f32 %v636, %v698
        %v721 = vmul.f32 %v637, %v708
        %v722 = vmul.f32 %v638, %v718
        %vm723 = vcmp.ge.f32.partialorder %v719, 0.0
        %vm724 = vcmp.ge.f32.partialorder %v720, 0.0
        %vm725 = vcmp.ge.f32.partialorder %v721, 0.0
        %vm726 = vcmp.ge.f32.partialorder %v722, 0.0
        %v727 = vmul.f32 %v719, 0.2
        %v728 = vmul.f32 %v720, 0.2
        %v729 = vmul.f32 %v721, 0.2
        %v730 = vmul.f32 %v722, 0.2
        %v731 = vsel %vm723, %v719, %v727
        %v732 = vsel %vm724, %v720, %v728
        %v733 = vsel %vm725, %v721, %v729
        %v734 = vsel %vm726, %v722, %v730
        %v735 = vsel %vm495, %v599, %v731
        %v736 = vsel %vm495, %v600, %v732
        %v737 = vsel %vm495, %v601, %v733
        %v738 = vsel %vm495, %v602, %v734
        %v739 = vpack.c.bf16 %v735, %v735
        %v740 = vpack.c.bf16 %v736, %v736
        %v741 = vpack.c.bf16 %v737, %v737
        %v742 = vpack.c.bf16 %v738, %v738
        %743 = vst [vmem:[%s304] sm:$0xf] %v739
        %744 = vst [vmem:[%s304 + $0x4] sm:$0xf] %v740
        %745 = vst [vmem:[%s304 + $0x8] sm:$0xf] %v741
        %746 = vst [vmem:[%s304 + $0xc] sm:$0xf] %v742
        %s747 = sand.u32 %s68, 1
        %s748 = sand.u32 %s68, 1
        %s749 = smul.addr %s748, 16
        %s750 = scalar_lea.vmem [#allocation3], %s749
        // Predicated region
        $region70: #{_lambda_.8} parent=64 // pred_check
          %p751 = pneg %p78
        $region71: #{_lambda_.8} parent=64 // pred_check_branch
          %753 = sbr.rel (%p751) target = $region73
        $region72: #{_lambda_.8} parent=64 // pred_region
          %s754 = smul.addr %s13, 4
          %s755 = scalar_lea.vmem %s2, %s754
          // Predicated region
          $region74: #{_lambda_.8} parent=72 // pred_check
            _
          $region75: #{_lambda_.8} parent=72 // pred_check_branch
            %757 = sbr.rel (0) target = $region77
          $region76: #{_lambda_.8} parent=72 // pred_region
            // Predicated region
            $region78: #{_lambda_.8} parent=76 // pred_check
              _
            $region79: #{_lambda_.8} parent=76 // pred_check_branch
              %759 = sbr.rel target = $region81
            $region80: #{_lambda_.8} parent=76 // pred_region
              // Predicated region
              $region93: #{_lambda_.8} parent=80 // pred_check
                _
              $region94: #{_lambda_.8} parent=80 // pred_check_branch
                %781 = sbr.rel (0) target = $region96
              $region95: #{_lambda_.8} parent=80 // pred_region
                loop: start=0, step=1, limit=1
                $region97: #{_lambda_.8} parent=95 // loop_pre_header
                  _
                $region98: #{_lambda_.8} parent=95 // loop_header
                  %s783 = sphi 0, %s787
                  %p784 = scmp.ge.s32.totalorder %s783, 1
                  %s788 = sphi %s750, %s750
                  %s789 = sphi %s755, %s755
                $region99: #{_lambda_.8} parent=95 // loop_header_branch
                  %786 = sbr.rel (%p784) target = $region103
                $region100: #{_lambda_.8} parent=95 // loop_body
                  _
                $region101: #{_lambda_.8} parent=95 // loop_footer
                  %s787 = sadd.s32 1, %s783
                $region102: #{_lambda_.8} parent=95 // loop_footer_branch
                  %782 = sbr.rel target = $region98
                $region103: #{_lambda_.8} parent=95 // loop_exit
                  _
                %s791 = ssub.s32 16, 1
                loop: start=0, step=1, limit=1
                $region104: #{_lambda_.8} parent=95 // loop_pre_header
                  _
                $region105: #{_lambda_.8} parent=95 // loop_header
                  %s793 = sphi 0, %s797
                  %p794 = scmp.ge.s32.totalorder %s793, 1
                  %s798 = sphi %s750, %s750
                  %s799 = sphi %s755, %s755
                $region106: #{_lambda_.8} parent=95 // loop_header_branch
                  %796 = sbr.rel (%p794) target = $region110
                $region107: #{_lambda_.8} parent=95 // loop_body
                  %v800 = vld [vmem:[%s798] sm:%s791]
                  %801 = vst [vmem:[%s799] sm:%s791] %v800
                  %v802 = vld [vmem:[%s798 + $0x4] sm:%s791]
                  %803 = vst [vmem:[%s799 + $0x8] sm:%s791] %v802
                  %v804 = vld [vmem:[%s798 + $0x8] sm:%s791]
                  %805 = vst [vmem:[%s799 + $0x10] sm:%s791] %v804
                  %v806 = vld [vmem:[%s798 + $0xc] sm:%s791]
                  %807 = vst [vmem:[%s799 + $0x18] sm:%s791] %v806
                $region108: #{_lambda_.8} parent=95 // loop_footer
                  %s797 = sadd.s32 1, %s793
                $region109: #{_lambda_.8} parent=95 // loop_footer_branch
                  %792 = sbr.rel target = $region105
                $region110: #{_lambda_.8} parent=95 // loop_exit
                  _
              $region96: #{_lambda_.8} parent=80 // pred_fallthru
                _
            $region81: #{_lambda_.8} parent=76 // pred_fallthru
              _
            // Predicated region
            $region82: #{_lambda_.8} parent=76 // pred_check
              _
            $region83: #{_lambda_.8} parent=76 // pred_check_branch
              %761 = sbr.rel (0) target = $region85
            $region84: #{_lambda_.8} parent=76 // pred_region
              %s763 = ssub.s32 16, 1
              loop: start=0, step=1, limit=1
              $region86: #{_lambda_.8} parent=84 // loop_pre_header
                _
              $region87: #{_lambda_.8} parent=84 // loop_header
                %s765 = sphi 0, %s769
                %p766 = scmp.ge.s32.totalorder %s765, 1
                %s770 = sphi %s750, %s750
                %s771 = sphi %s755, %s755
              $region88: #{_lambda_.8} parent=84 // loop_header_branch
                %768 = sbr.rel (%p766) target = $region92
              $region89: #{_lambda_.8} parent=84 // loop_body
                %v772 = vld [vmem:[%s770] sm:%s763]
                %773 = vst [vmem:[%s771] sm:%s763] %v772
                %v774 = vld [vmem:[%s770 + $0x4] sm:%s763]
                %775 = vst [vmem:[%s771 + $0x8] sm:%s763] %v774
                %v776 = vld [vmem:[%s770 + $0x8] sm:%s763]
                %777 = vst [vmem:[%s771 + $0x10] sm:%s763] %v776
                %v778 = vld [vmem:[%s770 + $0xc] sm:%s763]
                %779 = vst [vmem:[%s771 + $0x18] sm:%s763] %v778
              $region90: #{_lambda_.8} parent=84 // loop_footer
                %s769 = sadd.s32 1, %s765
              $region91: #{_lambda_.8} parent=84 // loop_footer_branch
                %764 = sbr.rel target = $region87
              $region92: #{_lambda_.8} parent=84 // loop_exit
                _
            $region85: #{_lambda_.8} parent=76 // pred_fallthru
              _
          $region77: #{_lambda_.8} parent=72 // pred_fallthru
            _
          %808 = vnop
        $region73: #{_lambda_.8} parent=64 // pred_fallthru
          _
      $region65: #{_lambda_.8} parent=5 // pred_fallthru
        _
      %p809 = scmp.le.s32.totalorder 2, %s8
      // Predicated region
      $region111: #{_lambda_.8} parent=5 // pred_check
        %p810 = pneg %p809
      $region112: #{_lambda_.8} parent=5 // pred_check_branch
        %812 = sbr.rel (%p810) target = $region114
      $region113: #{_lambda_.8} parent=5 // pred_region
        %s813 = ssub.s32 %s8, 2
        // Predicated region
        $region115: #{_lambda_.8} parent=113 // pred_check
          %p814 = pneg %p84
        $region116: #{_lambda_.8} parent=113 // pred_check_branch
          %816 = sbr.rel (%p814) target = $region118
        $region117: #{_lambda_.8} parent=113 // pred_region
          %s817 = sand.u32 %s69, 1
          %s818 = sand.u32 %s69, 1
          %s819 = smul.addr %s818, 16
          %s820 = scalar_lea.vmem [#allocation3], %s819
        $region118: #{_lambda_.8} parent=113 // pred_fallthru
          _
      $region114: #{_lambda_.8} parent=5 // pred_fallthru
        _
    $region6: #{_lambda_.8} parent=1 // loop_footer
      %s12 = sadd.s32 1, %s8
    $region7: #{_lambda_.8} parent=1 // loop_footer_branch
      %7 = sbr.rel target = $region3
    $region8: #{_lambda_.8} parent=1 // loop_exit
      _

// kernel: _lambda_.9
$region0: #{_lambda_.9}
  #allocation0 [shape = 'u32[]', space=smem, size = 0x4, offset = 0x4, fixed_abs, tag = 'smem constant byte address 0x4 - core index']
  #allocation1 [shape = 'u32[72,128]{1,0:T(1,128)}', space=vmem, size = 0x9000, scoped, tag = 'internal scratch']
  %s0 = inlined_call_operand.vmem [shape: bf16[512,64], index: 0, kind: input, shape index: {}]
  %s1 = inlined_call_operand.vmem [shape: bf16[32,512], index: 1, kind: input, shape index: {}]
  %s2 = inlined_call_operand.vmem [shape: bf16[16,32,16], index: 2, kind: input, shape index: {}]
  %s3 = inlined_call_operand.vmem [shape: f32[16,1], index: 3, kind: input, shape index: {}]
  %s4 = inlined_call_operand.vmem [shape: f32[16,4], index: 4, kind: output, shape index: {}]
  %s5 = sld [smem:[#allocation0]]
  $region26: #{_lambda_.9} parent=0
    _
  %s7 = ssub.s32 1, %s5
  %s8 = scalar_select 0, %s7, %s5
  // Predicated region
  $region2: #{_lambda_.9} parent=0 // pred_check
    _
  $region3: #{_lambda_.9} parent=0 // pred_check_branch
    %10 = sbr.rel (0) target = $region5
  $region4: #{_lambda_.9} parent=0 // pred_region
    _
  $region5: #{_lambda_.9} parent=0 // pred_fallthru
    _
  // Predicated region
  $region6: #{_lambda_.9} parent=0 // pred_check
    _
  $region7: #{_lambda_.9} parent=0 // pred_check_branch
    %12 = sbr.rel (0) target = $region9
  $region8: #{_lambda_.9} parent=0 // pred_region
    _
  $region9: #{_lambda_.9} parent=0 // pred_fallthru
    _
  // Predicated region
  $region10: #{_lambda_.9} parent=0 // pred_check
    _
  $region11: #{_lambda_.9} parent=0 // pred_check_branch
    %14 = sbr.rel (0) target = $region13
  $region12: #{_lambda_.9} parent=0 // pred_region
    _
  $region13: #{_lambda_.9} parent=0 // pred_fallthru
    _
  // Predicated region
  $region14: #{_lambda_.9} parent=0 // pred_check
    _
  $region15: #{_lambda_.9} parent=0 // pred_check_branch
    %16 = sbr.rel (0) target = $region17
  $region16: #{_lambda_.9} parent=0 // pred_region
    _
  $region17: #{_lambda_.9} parent=0 // pred_fallthru
    _
  %v17 = vld [vmem:[%s1] sm:$0xff]
  %v18 = vld [vmem:[%s1 + $0x8] sm:$0xff]
  %v19 = vld [vmem:[%s1 + $0x10] sm:$0xff]
  %v20 = vld [vmem:[%s1 + $0x18] sm:$0xff]
  %v21 = vld [vmem:[%s1 + $0x20] sm:$0xff]
  %v22 = vld [vmem:[%s1 + $0x28] sm:$0xff]
  %v23 = vld [vmem:[%s1 + $0x30] sm:$0xff]
  %v24 = vld [vmem:[%s1 + $0x38] sm:$0xff]
  %v25 = vld [vmem:[%s0] sm:$0xf]
  %v26 = vld [vmem:[%s0 + $0x4] sm:$0xf]
  %v27 = vld [vmem:[%s0 + $0x8] sm:$0xf]
  %v28 = vld [vmem:[%s0 + $0xc] sm:$0xf]
  %v29 = vld [vmem:[%s0 + $0x10] sm:$0xf]
  %v30 = vld [vmem:[%s0 + $0x14] sm:$0xf]
  %v31 = vld [vmem:[%s0 + $0x18] sm:$0xf]
  %v32 = vld [vmem:[%s0 + $0x1c] sm:$0xf]
  %v33 = vld [vmem:[%s0 + $0x20] sm:$0xf]
  %v34 = vld [vmem:[%s0 + $0x24] sm:$0xf]
  %v35 = vld [vmem:[%s0 + $0x28] sm:$0xf]
  %v36 = vld [vmem:[%s0 + $0x2c] sm:$0xf]
  %v37 = vld [vmem:[%s0 + $0x30] sm:$0xf]
  %v38 = vld [vmem:[%s0 + $0x34] sm:$0xf]
  %v39 = vld [vmem:[%s0 + $0x38] sm:$0xf]
  %v40 = vld [vmem:[%s0 + $0x3c] sm:$0xf]
  %v41 = vld [vmem:[%s0 + $0x40] sm:$0xf]
  %v42 = vld [vmem:[%s0 + $0x44] sm:$0xf]
  %v43 = vld [vmem:[%s0 + $0x48] sm:$0xf]
  %v44 = vld [vmem:[%s0 + $0x4c] sm:$0xf]
  %v45 = vld [vmem:[%s0 + $0x50] sm:$0xf]
  %v46 = vld [vmem:[%s0 + $0x54] sm:$0xf]
  %v47 = vld [vmem:[%s0 + $0x58] sm:$0xf]
  %v48 = vld [vmem:[%s0 + $0x5c] sm:$0xf]
  %v49 = vld [vmem:[%s0 + $0x60] sm:$0xf]
  %v50 = vld [vmem:[%s0 + $0x64] sm:$0xf]
  %v51 = vld [vmem:[%s0 + $0x68] sm:$0xf]
  %v52 = vld [vmem:[%s0 + $0x6c] sm:$0xf]
  %v53 = vld [vmem:[%s0 + $0x70] sm:$0xf]
  %v54 = vld [vmem:[%s0 + $0x74] sm:$0xf]
  %v55 = vld [vmem:[%s0 + $0x78] sm:$0xf]
  %v56 = vld [vmem:[%s0 + $0x7c] sm:$0xf]
  %v57 = vld [vmem:[%s0 + $0x80] sm:$0xf]
  %v58 = vld [vmem:[%s0 + $0x84] sm:$0xf]
  %v59 = vld [vmem:[%s0 + $0x88] sm:$0xf]
  %v60 = vld [vmem:[%s0 + $0x8c] sm:$0xf]
  %v61 = vld [vmem:[%s0 + $0x90] sm:$0xf]
  %v62 = vld [vmem:[%s0 + $0x94] sm:$0xf]
  %v63 = vld [vmem:[%s0 + $0x98] sm:$0xf]
  %v64 = vld [vmem:[%s0 + $0x9c] sm:$0xf]
  %v65 = vld [vmem:[%s0 + $0xa0] sm:$0xf]
  %v66 = vld [vmem:[%s0 + $0xa4] sm:$0xf]
  %v67 = vld [vmem:[%s0 + $0xa8] sm:$0xf]
  %v68 = vld [vmem:[%s0 + $0xac] sm:$0xf]
  %v69 = vld [vmem:[%s0 + $0xb0] sm:$0xf]
  %v70 = vld [vmem:[%s0 + $0xb4] sm:$0xf]
  %v71 = vld [vmem:[%s0 + $0xb8] sm:$0xf]
  %v72 = vld [vmem:[%s0 + $0xbc] sm:$0xf]
  %v73 = vld [vmem:[%s0 + $0xc0] sm:$0xf]
  %v74 = vld [vmem:[%s0 + $0xc4] sm:$0xf]
  %v75 = vld [vmem:[%s0 + $0xc8] sm:$0xf]
  %v76 = vld [vmem:[%s0 + $0xcc] sm:$0xf]
  %v77 = vld [vmem:[%s0 + $0xd0] sm:$0xf]
  %v78 = vld [vmem:[%s0 + $0xd4] sm:$0xf]
  %v79 = vld [vmem:[%s0 + $0xd8] sm:$0xf]
  %v80 = vld [vmem:[%s0 + $0xdc] sm:$0xf]
  %v81 = vld [vmem:[%s0 + $0xe0] sm:$0xf]
  %v82 = vld [vmem:[%s0 + $0xe4] sm:$0xf]
  %v83 = vld [vmem:[%s0 + $0xe8] sm:$0xf]
  %v84 = vld [vmem:[%s0 + $0xec] sm:$0xf]
  %v85 = vld [vmem:[%s0 + $0xf0] sm:$0xf]
  %v86 = vld [vmem:[%s0 + $0xf4] sm:$0xf]
  %v87 = vld [vmem:[%s0 + $0xf8] sm:$0xf]
  %v88 = vld [vmem:[%s0 + $0xfc] sm:$0xf]
  %v97 = vunpack.c.l.b16 %v17
  %v98 = vunpack.c.h.b16 %v17
  %v99 = vunpack.c.l.b16 %v18
  %v100 = vunpack.c.h.b16 %v18
  %v101 = vunpack.c.l.b16 %v19
  %v102 = vunpack.c.h.b16 %v19
  %v103 = vunpack.c.l.b16 %v20
  %v104 = vunpack.c.h.b16 %v20
  %v105 = vunpack.c.l.b16 %v21
  %v106 = vunpack.c.h.b16 %v21
  %v107 = vunpack.c.l.b16 %v22
  %v108 = vunpack.c.h.b16 %v22
  %v109 = vunpack.c.l.b16 %v23
  %v110 = vunpack.c.h.b16 %v23
  %v111 = vunpack.c.l.b16 %v24
  %v112 = vunpack.c.h.b16 %v24
  %v113 = vpack.c.b16 %v101, %v97
  %v114 = vpack.c.b16 %v102, %v98
  %v115 = vpack.c.b16 %v103, %v99
  %v116 = vpack.c.b16 %v104, %v100
  %v117 = vpack.c.b16 %v109, %v105
  %v118 = vpack.c.b16 %v110, %v106
  %v119 = vpack.c.b16 %v111, %v107
  %v120 = vpack.c.b16 %v112, %v108
  %v193 = vunpack.c.l.b16 %v25
  %v194 = vunpack.c.l.b16 %v26
  %v195 = vunpack.c.l.b16 %v27
  %v196 = vunpack.c.l.b16 %v28
  %v197 = vunpack.c.l.b16 %v29
  %v198 = vunpack.c.l.b16 %v30
  %v199 = vunpack.c.l.b16 %v31
  %v200 = vunpack.c.l.b16 %v32
  %v201 = vunpack.c.l.b16 %v33
  %v202 = vunpack.c.l.b16 %v34
  %v203 = vunpack.c.l.b16 %v35
  %v204 = vunpack.c.l.b16 %v36
  %v205 = vunpack.c.l.b16 %v37
  %v206 = vunpack.c.l.b16 %v38
  %v207 = vunpack.c.l.b16 %v39
  %v208 = vunpack.c.l.b16 %v40
  %v209 = vunpack.c.l.b16 %v41
  %v210 = vunpack.c.l.b16 %v42
  %v211 = vunpack.c.l.b16 %v43
  %v212 = vunpack.c.l.b16 %v44
  %v213 = vunpack.c.l.b16 %v45
  %v214 = vunpack.c.l.b16 %v46
  %v215 = vunpack.c.l.b16 %v47
  %v216 = vunpack.c.l.b16 %v48
  %v217 = vunpack.c.l.b16 %v49
  %v218 = vunpack.c.l.b16 %v50
  %v219 = vunpack.c.l.b16 %v51
  %v220 = vunpack.c.l.b16 %v52
  %v221 = vunpack.c.l.b16 %v53
  %v222 = vunpack.c.l.b16 %v54
  %v223 = vunpack.c.l.b16 %v55
  %v224 = vunpack.c.l.b16 %v56
  %v225 = vunpack.c.l.b16 %v57
  %v226 = vunpack.c.l.b16 %v58
  %v227 = vunpack.c.l.b16 %v59
  %v228 = vunpack.c.l.b16 %v60
  %v229 = vunpack.c.l.b16 %v61
  %v230 = vunpack.c.l.b16 %v62
  %v231 = vunpack.c.l.b16 %v63
  %v232 = vunpack.c.l.b16 %v64
  %v233 = vunpack.c.l.b16 %v65
  %v234 = vunpack.c.l.b16 %v66
  %v235 = vunpack.c.l.b16 %v67
  %v236 = vunpack.c.l.b16 %v68
  %v237 = vunpack.c.l.b16 %v69
  %v238 = vunpack.c.l.b16 %v70
  %v239 = vunpack.c.l.b16 %v71
  %v240 = vunpack.c.l.b16 %v72
  %v241 = vunpack.c.l.b16 %v73
  %v242 = vunpack.c.l.b16 %v74
  %v243 = vunpack.c.l.b16 %v75
  %v244 = vunpack.c.l.b16 %v76
  %v245 = vunpack.c.l.b16 %v77
  %v246 = vunpack.c.l.b16 %v78
  %v247 = vunpack.c.l.b16 %v79
  %v248 = vunpack.c.l.b16 %v80
  %v249 = vunpack.c.l.b16 %v81
  %v250 = vunpack.c.l.b16 %v82
  %v251 = vunpack.c.l.b16 %v83
  %v252 = vunpack.c.l.b16 %v84
  %v253 = vunpack.c.l.b16 %v85
  %v254 = vunpack.c.l.b16 %v86
  %v255 = vunpack.c.l.b16 %v87
  %v256 = vunpack.c.l.b16 %v88
  %v257 = vpack.c.b16 %v194, %v193
  %v258 = vpack.c.b16 %v196, %v195
  %v259 = vpack.c.b16 %v198, %v197
  %v260 = vpack.c.b16 %v200, %v199
  %v261 = vpack.c.b16 %v202, %v201
  %v262 = vpack.c.b16 %v204, %v203
  %v263 = vpack.c.b16 %v206, %v205
  %v264 = vpack.c.b16 %v208, %v207
  %v265 = vpack.c.b16 %v210, %v209
  %v266 = vpack.c.b16 %v212, %v211
  %v267 = vpack.c.b16 %v214, %v213
  %v268 = vpack.c.b16 %v216, %v215
  %v269 = vpack.c.b16 %v218, %v217
  %v270 = vpack.c.b16 %v220, %v219
  %v271 = vpack.c.b16 %v222, %v221
  %v272 = vpack.c.b16 %v224, %v223
  %v273 = vpack.c.b16 %v226, %v225
  %v274 = vpack.c.b16 %v228, %v227
  %v275 = vpack.c.b16 %v230, %v229
  %v276 = vpack.c.b16 %v232, %v231
  %v277 = vpack.c.b16 %v234, %v233
  %v278 = vpack.c.b16 %v236, %v235
  %v279 = vpack.c.b16 %v238, %v237
  %v280 = vpack.c.b16 %v240, %v239
  %v281 = vpack.c.b16 %v242, %v241
  %v282 = vpack.c.b16 %v244, %v243
  %v283 = vpack.c.b16 %v246, %v245
  %v284 = vpack.c.b16 %v248, %v247
  %v285 = vpack.c.b16 %v250, %v249
  %v286 = vpack.c.b16 %v252, %v251
  %v287 = vpack.c.b16 %v254, %v253
  %v288 = vpack.c.b16 %v256, %v255
  %321 = vmatpush.bf16.msra.mxu0 %v264
  %322 = vmatpush.bf16.msra.mxu0 %v263
  %323 = vmatpush.bf16.msra.mxu0 %v262
  %324 = vmatpush.bf16.msra.mxu0 %v261
  %325 = vmatpush.bf16.msra.mxu0 %v260
  %326 = vmatpush.bf16.msra.mxu0 %v259
  %327 = vmatpush.bf16.msra.mxu0 %v258
  %328 = vmatpush.bf16.msra.mxu0 %v257
  %329 = vmatmul.bf16.gmra.mxu0 %v113
  %v330 = vpop.f32.mrf.mxu0
  %v331 = vadd.f32 0.0, %v330
  %v332 = vpop.f32.mrf.mxu0
  %v333 = vadd.f32 0.0, %v332
  %334 = vmatmul.bf16.gmra.mxu0 %v117
  %v335 = vpop.f32.mrf.mxu0
  %v336 = vadd.f32 0.0, %v335
  %v337 = vpop.f32.mrf.mxu0
  %v338 = vadd.f32 0.0, %v337
  %339 = vdwg.mxu0
  %340 = vmatpush.bf16.msra.mxu0 %v272
  %341 = vmatpush.bf16.msra.mxu0 %v271
  %342 = vmatpush.bf16.msra.mxu0 %v270
  %343 = vmatpush.bf16.msra.mxu0 %v269
  %344 = vmatpush.bf16.msra.mxu0 %v268
  %345 = vmatpush.bf16.msra.mxu0 %v267
  %346 = vmatpush.bf16.msra.mxu0 %v266
  %347 = vmatpush.bf16.msra.mxu0 %v265
  %348 = vmatmul.bf16.gmra.mxu0 %v114
  %v349 = vpop.f32.mrf.mxu0
  %v350 = vadd.f32 %v331, %v349
  %v351 = vpop.f32.mrf.mxu0
  %v352 = vadd.f32 %v333, %v351
  %353 = vmatmul.bf16.gmra.mxu0 %v118
  %v354 = vpop.f32.mrf.mxu0
  %v355 = vadd.f32 %v336, %v354
  %v356 = vpop.f32.mrf.mxu0
  %v357 = vadd.f32 %v338, %v356
  %358 = vdwg.mxu0
  %359 = vmatpush.bf16.msra.mxu0 %v280
  %360 = vmatpush.bf16.msra.mxu0 %v279
  %361 = vmatpush.bf16.msra.mxu0 %v278
  %362 = vmatpush.bf16.msra.mxu0 %v277
  %363 = vmatpush.bf16.msra.mxu0 %v276
  %364 = vmatpush.bf16.msra.mxu0 %v275
  %365 = vmatpush.bf16.msra.mxu0 %v274
  %366 = vmatpush.bf16.msra.mxu0 %v273
  %367 = vmatmul.bf16.gmra.mxu0 %v115
  %v368 = vpop.f32.mrf.mxu0
  %v369 = vadd.f32 %v350, %v368
  %v370 = vpop.f32.mrf.mxu0
  %v371 = vadd.f32 %v352, %v370
  %372 = vmatmul.bf16.gmra.mxu0 %v119
  %v373 = vpop.f32.mrf.mxu0
  %v374 = vadd.f32 %v355, %v373
  %v375 = vpop.f32.mrf.mxu0
  %v376 = vadd.f32 %v357, %v375
  %377 = vdwg.mxu0
  %378 = vmatpush.bf16.msra.mxu0 %v288
  %379 = vmatpush.bf16.msra.mxu0 %v287
  %380 = vmatpush.bf16.msra.mxu0 %v286
  %381 = vmatpush.bf16.msra.mxu0 %v285
  %382 = vmatpush.bf16.msra.mxu0 %v284
  %383 = vmatpush.bf16.msra.mxu0 %v283
  %384 = vmatpush.bf16.msra.mxu0 %v282
  %385 = vmatpush.bf16.msra.mxu0 %v281
  %386 = vmatmul.bf16.gmra.mxu0 %v116
  %v387 = vpop.f32.mrf.mxu0
  %v388 = vadd.f32 %v369, %v387
  %v389 = vpop.f32.mrf.mxu0
  %v390 = vadd.f32 %v371, %v389
  %391 = vmatmul.bf16.gmra.mxu0 %v120
  %v392 = vpop.f32.mrf.mxu0
  %v393 = vadd.f32 %v374, %v392
  %v394 = vpop.f32.mrf.mxu0
  %v395 = vadd.f32 %v376, %v394
  %396 = vdwg.mxu0
  %v397 = vld [vmem:[%s2] sm:$0xf]
  %v398 = vld [vmem:[%s2 + $0x4] sm:$0xf]
  %v399 = vld [vmem:[%s2 + $0x8] sm:$0xf]
  %v400 = vld [vmem:[%s2 + $0xc] sm:$0xf]
  %v401 = vld [vmem:[%s2 + $0x10] sm:$0xf]
  %v402 = vld [vmem:[%s2 + $0x14] sm:$0xf]
  %v403 = vld [vmem:[%s2 + $0x18] sm:$0xf]
  %v404 = vld [vmem:[%s2 + $0x1c] sm:$0xf]
  %v405 = vld [vmem:[%s2 + $0x20] sm:$0xf]
  %v406 = vld [vmem:[%s2 + $0x24] sm:$0xf]
  %v407 = vld [vmem:[%s2 + $0x28] sm:$0xf]
  %v408 = vld [vmem:[%s2 + $0x2c] sm:$0xf]
  %v409 = vld [vmem:[%s2 + $0x30] sm:$0xf]
  %v410 = vld [vmem:[%s2 + $0x34] sm:$0xf]
  %v411 = vld [vmem:[%s2 + $0x38] sm:$0xf]
  %v412 = vld [vmem:[%s2 + $0x3c] sm:$0xf]
  %v413 = vld [vmem:[%s2 + $0x40] sm:$0xf]
  %v414 = vld [vmem:[%s2 + $0x44] sm:$0xf]
  %v415 = vld [vmem:[%s2 + $0x48] sm:$0xf]
  %v416 = vld [vmem:[%s2 + $0x4c] sm:$0xf]
  %v417 = vld [vmem:[%s2 + $0x50] sm:$0xf]
  %v418 = vld [vmem:[%s2 + $0x54] sm:$0xf]
  %v419 = vld [vmem:[%s2 + $0x58] sm:$0xf]
  %v420 = vld [vmem:[%s2 + $0x5c] sm:$0xf]
  %v421 = vld [vmem:[%s2 + $0x60] sm:$0xf]
  %v422 = vld [vmem:[%s2 + $0x64] sm:$0xf]
  %v423 = vld [vmem:[%s2 + $0x68] sm:$0xf]
  %v424 = vld [vmem:[%s2 + $0x6c] sm:$0xf]
  %v425 = vld [vmem:[%s2 + $0x70] sm:$0xf]
  %v426 = vld [vmem:[%s2 + $0x74] sm:$0xf]
  %v427 = vld [vmem:[%s2 + $0x78] sm:$0xf]
  %v428 = vld [vmem:[%s2 + $0x7c] sm:$0xf]
  %v429 = vld [vmem:[%s2 + $0x80] sm:$0xf]
  %v430 = vld [vmem:[%s2 + $0x84] sm:$0xf]
  %v431 = vld [vmem:[%s2 + $0x88] sm:$0xf]
  %v432 = vld [vmem:[%s2 + $0x8c] sm:$0xf]
  %v433 = vld [vmem:[%s2 + $0x90] sm:$0xf]
  %v434 = vld [vmem:[%s2 + $0x94] sm:$0xf]
  %v435 = vld [vmem:[%s2 + $0x98] sm:$0xf]
  %v436 = vld [vmem:[%s2 + $0x9c] sm:$0xf]
  %v437 = vld [vmem:[%s2 + $0xa0] sm:$0xf]
  %v438 = vld [vmem:[%s2 + $0xa4] sm:$0xf]
  %v439 = vld [vmem:[%s2 + $0xa8] sm:$0xf]
  %v440 = vld [vmem:[%s2 + $0xac] sm:$0xf]
  %v441 = vld [vmem:[%s2 + $0xb0] sm:$0xf]
  %v442 = vld [vmem:[%s2 + $0xb4] sm:$0xf]
  %v443 = vld [vmem:[%s2 + $0xb8] sm:$0xf]
  %v444 = vld [vmem:[%s2 + $0xbc] sm:$0xf]
  %v445 = vld [vmem:[%s2 + $0xc0] sm:$0xf]
  %v446 = vld [vmem:[%s2 + $0xc4] sm:$0xf]
  %v447 = vld [vmem:[%s2 + $0xc8] sm:$0xf]
  %v448 = vld [vmem:[%s2 + $0xcc] sm:$0xf]
  %v449 = vld [vmem:[%s2 + $0xd0] sm:$0xf]
  %v450 = vld [vmem:[%s2 + $0xd4] sm:$0xf]
  %v451 = vld [vmem:[%s2 + $0xd8] sm:$0xf]
  %v452 = vld [vmem:[%s2 + $0xdc] sm:$0xf]
  %v453 = vld [vmem:[%s2 + $0xe0] sm:$0xf]
  %v454 = vld [vmem:[%s2 + $0xe4] sm:$0xf]
  %v455 = vld [vmem:[%s2 + $0xe8] sm:$0xf]
  %v456 = vld [vmem:[%s2 + $0xec] sm:$0xf]
  %v457 = vld [vmem:[%s2 + $0xf0] sm:$0xf]
  %v458 = vld [vmem:[%s2 + $0xf4] sm:$0xf]
  %v459 = vld [vmem:[%s2 + $0xf8] sm:$0xf]
  %v460 = vld [vmem:[%s2 + $0xfc] sm:$0xf]
  %v461 = vunpack.c.l.bf16 %v397
  %v462 = vunpack.c.l.bf16 %v398
  %v463 = vunpack.c.l.bf16 %v399
  %v464 = vunpack.c.l.bf16 %v400
  %v465 = vunpack.c.l.bf16 %v401
  %v466 = vunpack.c.l.bf16 %v402
  %v467 = vunpack.c.l.bf16 %v403
  %v468 = vunpack.c.l.bf16 %v404
  %v469 = vunpack.c.l.bf16 %v405
  %v470 = vunpack.c.l.bf16 %v406
  %v471 = vunpack.c.l.bf16 %v407
  %v472 = vunpack.c.l.bf16 %v408
  %v473 = vunpack.c.l.bf16 %v409
  %v474 = vunpack.c.l.bf16 %v410
  %v475 = vunpack.c.l.bf16 %v411
  %v476 = vunpack.c.l.bf16 %v412
  %v477 = vunpack.c.l.bf16 %v413
  %v478 = vunpack.c.l.bf16 %v414
  %v479 = vunpack.c.l.bf16 %v415
  %v480 = vunpack.c.l.bf16 %v416
  %v481 = vunpack.c.l.bf16 %v417
  %v482 = vunpack.c.l.bf16 %v418
  %v483 = vunpack.c.l.bf16 %v419
  %v484 = vunpack.c.l.bf16 %v420
  %v485 = vunpack.c.l.bf16 %v421
  %v486 = vunpack.c.l.bf16 %v422
  %v487 = vunpack.c.l.bf16 %v423
  %v488 = vunpack.c.l.bf16 %v424
  %v489 = vunpack.c.l.bf16 %v425
  %v490 = vunpack.c.l.bf16 %v426
  %v491 = vunpack.c.l.bf16 %v427
  %v492 = vunpack.c.l.bf16 %v428
  %v493 = vunpack.c.l.bf16 %v429
  %v494 = vunpack.c.l.bf16 %v430
  %v495 = vunpack.c.l.bf16 %v431
  %v496 = vunpack.c.l.bf16 %v432
  %v497 = vunpack.c.l.bf16 %v433
  %v498 = vunpack.c.l.bf16 %v434
  %v499 = vunpack.c.l.bf16 %v435
  %v500 = vunpack.c.l.bf16 %v436
  %v501 = vunpack.c.l.bf16 %v437
  %v502 = vunpack.c.l.bf16 %v438
  %v503 = vunpack.c.l.bf16 %v439
  %v504 = vunpack.c.l.bf16 %v440
  %v505 = vunpack.c.l.bf16 %v441
  %v506 = vunpack.c.l.bf16 %v442
  %v507 = vunpack.c.l.bf16 %v443
  %v508 = vunpack.c.l.bf16 %v444
  %v509 = vunpack.c.l.bf16 %v445
  %v510 = vunpack.c.l.bf16 %v446
  %v511 = vunpack.c.l.bf16 %v447
  %v512 = vunpack.c.l.bf16 %v448
  %v513 = vunpack.c.l.bf16 %v449
  %v514 = vunpack.c.l.bf16 %v450
  %v515 = vunpack.c.l.bf16 %v451
  %v516 = vunpack.c.l.bf16 %v452
  %v517 = vunpack.c.l.bf16 %v453
  %v518 = vunpack.c.l.bf16 %v454
  %v519 = vunpack.c.l.bf16 %v455
  %v520 = vunpack.c.l.bf16 %v456
  %v521 = vunpack.c.l.bf16 %v457
  %v522 = vunpack.c.l.bf16 %v458
  %v523 = vunpack.c.l.bf16 %v459
  %v524 = vunpack.c.l.bf16 %v460
  %vm525 = vcmask 130048
  %v526 = vsel %vm525, %v388, 0.0
  %527 = vadd.xlane.f32.xlu0 %v526
  %v528 = vpop.xlane.xlu0 %527
  %v529 = vsel %vm525, %v390, 0.0
  %530 = vadd.xlane.f32.xlu0 %v529
  %v531 = vpop.xlane.xlu0 %530
  %v532 = vsel %vm525, %v393, 0.0
  %533 = vadd.xlane.f32.xlu0 %v532
  %v534 = vpop.xlane.xlu0 %533
  %v535 = vsel %vm525, %v395, 0.0
  %536 = vadd.xlane.f32.xlu0 %v535
  %v537 = vpop.xlane.xlu0 %536
  %v538 = vrcp.pop 16.0
  %v539 = vmul.f32 16.0, %v538
  %v540 = vsub.f32 1.0, %v539
  %v541 = vmul.f32 %v538, %v540
  %v542 = vadd.f32 %v538, %v541
  %vm543 = vweird.f32 %v538
  %v544 = vsel %vm543, %v538, %v542
  %v545 = vmul.f32 %v528, %v544
  %v546 = vmul.f32 %v531, %v544
  %v547 = vmul.f32 %v534, %v544
  %v548 = vmul.f32 %v537, %v544
  %v549 = vsub.f32 %v388, %v545
  %v550 = vsub.f32 %v390, %v546
  %v551 = vsub.f32 %v393, %v547
  %v552 = vsub.f32 %v395, %v548
  %v553 = vmul.f32 %v549, %v549
  %v554 = vmul.f32 %v550, %v550
  %v555 = vmul.f32 %v551, %v551
  %v556 = vmul.f32 %v552, %v552
  %v557 = vsel %vm525, %v553, 0.0
  %558 = vadd.xlane.f32.xlu0 %v557
  %v559 = vpop.xlane.xlu0 %558
  %v560 = vsel %vm525, %v554, 0.0
  %561 = vadd.xlane.f32.xlu0 %v560
  %v562 = vpop.xlane.xlu0 %561
  %v563 = vsel %vm525, %v555, 0.0
  %564 = vadd.xlane.f32.xlu0 %v563
  %v565 = vpop.xlane.xlu0 %564
  %v566 = vsel %vm525, %v556, 0.0
  %567 = vadd.xlane.f32.xlu0 %v566
  %v568 = vpop.xlane.xlu0 %567
  %v569 = vmul.f32 %v559, %v544
  %v570 = vmul.f32 %v562, %v544
  %v571 = vmul.f32 %v565, %v544
  %v572 = vmul.f32 %v568, %v544
  %v573 = vadd.f32 %v569, 1e-05
  %v574 = vadd.f32 %v570, 1e-05
  %v575 = vadd.f32 %v571, 1e-05
  %v576 = vadd.f32 %v572, 1e-05
  %v577 = vrsqrt.pop %v573
  %v578 = vmul.f32 %v577, %v573
  %v579 = vmul.f32 %v578, %v577
  %v580 = vmul.f32 0.5, %v579
  %v581 = vsub.f32 1.5, %v580
  %v582 = vmul.f32 %v577, %v581
  %vm583 = vweird.f32 %v573
  %vm584 = vweird.f32 %v577
  %vm585 = vmor %vm583, %vm584
  %v586 = vsel %vm585, %v577, %v582
  %v587 = vrsqrt.pop %v574
  %v588 = vmul.f32 %v587, %v574
  %v589 = vmul.f32 %v588, %v587
  %v590 = vmul.f32 0.5, %v589
  %v591 = vsub.f32 1.5, %v590
  %v592 = vmul.f32 %v587, %v591
  %vm593 = vweird.f32 %v574
  %vm594 = vweird.f32 %v587
  %vm595 = vmor %vm593, %vm594
  %v596 = vsel %vm595, %v587, %v592
  %v597 = vrsqrt.pop %v575
  %v598 = vmul.f32 %v597, %v575
  %v599 = vmul.f32 %v598, %v597
  %v600 = vmul.f32 0.5, %v599
  %v601 = vsub.f32 1.5, %v600
  %v602 = vmul.f32 %v597, %v601
  %vm603 = vweird.f32 %v575
  %vm604 = vweird.f32 %v597
  %vm605 = vmor %vm603, %vm604
  %v606 = vsel %vm605, %v597, %v602
  %v607 = vrsqrt.pop %v576
  %v608 = vmul.f32 %v607, %v576
  %v609 = vmul.f32 %v608, %v607
  %v610 = vmul.f32 0.5, %v609
  %v611 = vsub.f32 1.5, %v610
  %v612 = vmul.f32 %v607, %v611
  %vm613 = vweird.f32 %v576
  %vm614 = vweird.f32 %v607
  %vm615 = vmor %vm613, %vm614
  %v616 = vsel %vm615, %v607, %v612
  %v617 = vmul.f32 %v549, %v586
  %v618 = vmul.f32 %v550, %v596
  %v619 = vmul.f32 %v551, %v606
  %v620 = vmul.f32 %v552, %v616
  %vm621 = vcmp.ge.f32.partialorder %v617, 0.0
  %vm622 = vcmp.ge.f32.partialorder %v618, 0.0
  %vm623 = vcmp.ge.f32.partialorder %v619, 0.0
  %vm624 = vcmp.ge.f32.partialorder %v620, 0.0
  %v625 = vmul.f32 %v617, 0.2
  %v626 = vmul.f32 %v618, 0.2
  %v627 = vmul.f32 %v619, 0.2
  %v628 = vmul.f32 %v620, 0.2
  %v629 = vsel %vm621, %v617, %v625
  %v630 = vsel %vm622, %v618, %v626
  %v631 = vsel %vm623, %v619, %v627
  %v632 = vsel %vm624, %v620, %v628
  %v633 = vmul.f32 %v461, %v629
  %v634 = vmul.f32 %v462, %v630
  %v635 = vmul.f32 %v463, %v631
  %v636 = vmul.f32 %v464, %v632
  %v637 = vmul.f32 %v465, %v629
  %v638 = vmul.f32 %v466, %v630
  %v639 = vmul.f32 %v467, %v631
  %v640 = vmul.f32 %v468, %v632
  %v641 = vmul.f32 %v469, %v629
  %v642 = vmul.f32 %v470, %v630
  %v643 = vmul.f32 %v471, %v631
  %v644 = vmul.f32 %v472, %v632
  %v645 = vmul.f32 %v473, %v629
  %v646 = vmul.f32 %v474, %v630
  %v647 = vmul.f32 %v475, %v631
  %v648 = vmul.f32 %v476, %v632
  %v649 = vmul.f32 %v477, %v629
  %v650 = vmul.f32 %v478, %v630
  %v651 = vmul.f32 %v479, %v631
  %v652 = vmul.f32 %v480, %v632
  %v653 = vmul.f32 %v481, %v629
  %v654 = vmul.f32 %v482, %v630
  %v655 = vmul.f32 %v483, %v631
  %v656 = vmul.f32 %v484, %v632
  %v657 = vmul.f32 %v485, %v629
  %v658 = vmul.f32 %v486, %v630
  %v659 = vmul.f32 %v487, %v631
  %v660 = vmul.f32 %v488, %v632
  %v661 = vmul.f32 %v489, %v629
  %v662 = vmul.f32 %v490, %v630
  %v663 = vmul.f32 %v491, %v631
  %v664 = vmul.f32 %v492, %v632
  %v665 = vmul.f32 %v493, %v629
  %v666 = vmul.f32 %v494, %v630
  %v667 = vmul.f32 %v495, %v631
  %v668 = vmul.f32 %v496, %v632
  %v669 = vmul.f32 %v497, %v629
  %v670 = vmul.f32 %v498, %v630
  %v671 = vmul.f32 %v499, %v631
  %v672 = vmul.f32 %v500, %v632
  %v673 = vmul.f32 %v501, %v629
  %v674 = vmul.f32 %v502, %v630
  %v675 = vmul.f32 %v503, %v631
  %v676 = vmul.f32 %v504, %v632
  %v677 = vmul.f32 %v505, %v629
  %v678 = vmul.f32 %v506, %v630
  %v679 = vmul.f32 %v507, %v631
  %v680 = vmul.f32 %v508, %v632
  %v681 = vmul.f32 %v509, %v629
  %v682 = vmul.f32 %v510, %v630
  %v683 = vmul.f32 %v511, %v631
  %v684 = vmul.f32 %v512, %v632
  %v685 = vmul.f32 %v513, %v629
  %v686 = vmul.f32 %v514, %v630
  %v687 = vmul.f32 %v515, %v631
  %v688 = vmul.f32 %v516, %v632
  %v689 = vmul.f32 %v517, %v629
  %v690 = vmul.f32 %v518, %v630
  %v691 = vmul.f32 %v519, %v631
  %v692 = vmul.f32 %v520, %v632
  %v693 = vmul.f32 %v521, %v629
  %v694 = vmul.f32 %v522, %v630
  %v695 = vmul.f32 %v523, %v631
  %v696 = vmul.f32 %v524, %v632
  %v697 = vsel %vm525, %v633, 0.0
  %698 = vadd.xlane.f32.xlu0 %v697
  %v699 = vpop.xlane.xlu0 %698
  %v700 = vsel %vm525, %v634, 0.0
  %701 = vadd.xlane.f32.xlu0 %v700
  %v702 = vpop.xlane.xlu0 %701
  %v703 = vsel %vm525, %v635, 0.0
  %704 = vadd.xlane.f32.xlu0 %v703
  %v705 = vpop.xlane.xlu0 %704
  %v706 = vsel %vm525, %v636, 0.0
  %707 = vadd.xlane.f32.xlu0 %v706
  %v708 = vpop.xlane.xlu0 %707
  %v709 = vsel %vm525, %v637, 0.0
  %710 = vadd.xlane.f32.xlu0 %v709
  %v711 = vpop.xlane.xlu0 %710
  %v712 = vsel %vm525, %v638, 0.0
  %713 = vadd.xlane.f32.xlu0 %v712
  %v714 = vpop.xlane.xlu0 %713
  %v715 = vsel %vm525, %v639, 0.0
  %716 = vadd.xlane.f32.xlu0 %v715
  %v717 = vpop.xlane.xlu0 %716
  %v718 = vsel %vm525, %v640, 0.0
  %719 = vadd.xlane.f32.xlu0 %v718
  %v720 = vpop.xlane.xlu0 %719
  %v721 = vsel %vm525, %v641, 0.0
  %722 = vadd.xlane.f32.xlu0 %v721
  %v723 = vpop.xlane.xlu0 %722
  %v724 = vsel %vm525, %v642, 0.0
  %725 = vadd.xlane.f32.xlu0 %v724
  %v726 = vpop.xlane.xlu0 %725
  %v727 = vsel %vm525, %v643, 0.0
  %728 = vadd.xlane.f32.xlu0 %v727
  %v729 = vpop.xlane.xlu0 %728
  %v730 = vsel %vm525, %v644, 0.0
  %731 = vadd.xlane.f32.xlu0 %v730
  %v732 = vpop.xlane.xlu0 %731
  %v733 = vsel %vm525, %v645, 0.0
  %734 = vadd.xlane.f32.xlu0 %v733
  %v735 = vpop.xlane.xlu0 %734
  %v736 = vsel %vm525, %v646, 0.0
  %737 = vadd.xlane.f32.xlu0 %v736
  %v738 = vpop.xlane.xlu0 %737
  %v739 = vsel %vm525, %v647, 0.0
  %740 = vadd.xlane.f32.xlu0 %v739
  %v741 = vpop.xlane.xlu0 %740
  %v742 = vsel %vm525, %v648, 0.0
  %743 = vadd.xlane.f32.xlu0 %v742
  %v744 = vpop.xlane.xlu0 %743
  %v745 = vsel %vm525, %v649, 0.0
  %746 = vadd.xlane.f32.xlu0 %v745
  %v747 = vpop.xlane.xlu0 %746
  %v748 = vsel %vm525, %v650, 0.0
  %749 = vadd.xlane.f32.xlu0 %v748
  %v750 = vpop.xlane.xlu0 %749
  %v751 = vsel %vm525, %v651, 0.0
  %752 = vadd.xlane.f32.xlu0 %v751
  %v753 = vpop.xlane.xlu0 %752
  %v754 = vsel %vm525, %v652, 0.0
  %755 = vadd.xlane.f32.xlu0 %v754
  %v756 = vpop.xlane.xlu0 %755
  %v757 = vsel %vm525, %v653, 0.0
  %758 = vadd.xlane.f32.xlu0 %v757
  %v759 = vpop.xlane.xlu0 %758
  %v760 = vsel %vm525, %v654, 0.0
  %761 = vadd.xlane.f32.xlu0 %v760
  %v762 = vpop.xlane.xlu0 %761
  %v763 = vsel %vm525, %v655, 0.0
  %764 = vadd.xlane.f32.xlu0 %v763
  %v765 = vpop.xlane.xlu0 %764
  %v766 = vsel %vm525, %v656, 0.0
  %767 = vadd.xlane.f32.xlu0 %v766
  %v768 = vpop.xlane.xlu0 %767
  %v769 = vsel %vm525, %v657, 0.0
  %770 = vadd.xlane.f32.xlu0 %v769
  %v771 = vpop.xlane.xlu0 %770
  %v772 = vsel %vm525, %v658, 0.0
  %773 = vadd.xlane.f32.xlu0 %v772
  %v774 = vpop.xlane.xlu0 %773
  %v775 = vsel %vm525, %v659, 0.0
  %776 = vadd.xlane.f32.xlu0 %v775
  %v777 = vpop.xlane.xlu0 %776
  %v778 = vsel %vm525, %v660, 0.0
  %779 = vadd.xlane.f32.xlu0 %v778
  %v780 = vpop.xlane.xlu0 %779
  %v781 = vsel %vm525, %v661, 0.0
  %782 = vadd.xlane.f32.xlu0 %v781
  %v783 = vpop.xlane.xlu0 %782
  %v784 = vsel %vm525, %v662, 0.0
  %785 = vadd.xlane.f32.xlu0 %v784
  %v786 = vpop.xlane.xlu0 %785
  %v787 = vsel %vm525, %v663, 0.0
  %788 = vadd.xlane.f32.xlu0 %v787
  %v789 = vpop.xlane.xlu0 %788
  %v790 = vsel %vm525, %v664, 0.0
  %791 = vadd.xlane.f32.xlu0 %v790
  %v792 = vpop.xlane.xlu0 %791
  %v793 = vsel %vm525, %v665, 0.0
  %794 = vadd.xlane.f32.xlu0 %v793
  %v795 = vpop.xlane.xlu0 %794
  %v796 = vsel %vm525, %v666, 0.0
  %797 = vadd.xlane.f32.xlu0 %v796
  %v798 = vpop.xlane.xlu0 %797
  %v799 = vsel %vm525, %v667, 0.0
  %800 = vadd.xlane.f32.xlu0 %v799
  %v801 = vpop.xlane.xlu0 %800
  %v802 = vsel %vm525, %v668, 0.0
  %803 = vadd.xlane.f32.xlu0 %v802
  %v804 = vpop.xlane.xlu0 %803
  %v805 = vsel %vm525, %v669, 0.0
  %806 = vadd.xlane.f32.xlu0 %v805
  %v807 = vpop.xlane.xlu0 %806
  %v808 = vsel %vm525, %v670, 0.0
  %809 = vadd.xlane.f32.xlu0 %v808
  %v810 = vpop.xlane.xlu0 %809
  %v811 = vsel %vm525, %v671, 0.0
  %812 = vadd.xlane.f32.xlu0 %v811
  %v813 = vpop.xlane.xlu0 %812
  %v814 = vsel %vm525, %v672, 0.0
  %815 = vadd.xlane.f32.xlu0 %v814
  %v816 = vpop.xlane.xlu0 %815
  %v817 = vsel %vm525, %v673, 0.0
  %818 = vadd.xlane.f32.xlu0 %v817
  %v819 = vpop.xlane.xlu0 %818
  %v820 = vsel %vm525, %v674, 0.0
  %821 = vadd.xlane.f32.xlu0 %v820
  %v822 = vpop.xlane.xlu0 %821
  %v823 = vsel %vm525, %v675, 0.0
  %824 = vadd.xlane.f32.xlu0 %v823
  %v825 = vpop.xlane.xlu0 %824
  %v826 = vsel %vm525, %v676, 0.0
  %827 = vadd.xlane.f32.xlu0 %v826
  %v828 = vpop.xlane.xlu0 %827
  %v829 = vsel %vm525, %v677, 0.0
  %830 = vadd.xlane.f32.xlu0 %v829
  %v831 = vpop.xlane.xlu0 %830
  %v832 = vsel %vm525, %v678, 0.0
  %833 = vadd.xlane.f32.xlu0 %v832
  %v834 = vpop.xlane.xlu0 %833
  %v835 = vsel %vm525, %v679, 0.0
  %836 = vadd.xlane.f32.xlu0 %v835
  %v837 = vpop.xlane.xlu0 %836
  %v838 = vsel %vm525, %v680, 0.0
  %839 = vadd.xlane.f32.xlu0 %v838
  %v840 = vpop.xlane.xlu0 %839
  %v841 = vsel %vm525, %v681, 0.0
  %842 = vadd.xlane.f32.xlu0 %v841
  %v843 = vpop.xlane.xlu0 %842
  %v844 = vsel %vm525, %v682, 0.0
  %845 = vadd.xlane.f32.xlu0 %v844
  %v846 = vpop.xlane.xlu0 %845
  %v847 = vsel %vm525, %v683, 0.0
  %848 = vadd.xlane.f32.xlu0 %v847
  %v849 = vpop.xlane.xlu0 %848
  %v850 = vsel %vm525, %v684, 0.0
  %851 = vadd.xlane.f32.xlu0 %v850
  %v852 = vpop.xlane.xlu0 %851
  %v853 = vsel %vm525, %v685, 0.0
  %854 = vadd.xlane.f32.xlu0 %v853
  %v855 = vpop.xlane.xlu0 %854
  %v856 = vsel %vm525, %v686, 0.0
  %857 = vadd.xlane.f32.xlu0 %v856
  %v858 = vpop.xlane.xlu0 %857
  %v859 = vsel %vm525, %v687, 0.0
  %860 = vadd.xlane.f32.xlu0 %v859
  %v861 = vpop.xlane.xlu0 %860
  %v862 = vsel %vm525, %v688, 0.0
  %863 = vadd.xlane.f32.xlu0 %v862
  %v864 = vpop.xlane.xlu0 %863
  %v865 = vsel %vm525, %v689, 0.0
  %866 = vadd.xlane.f32.xlu0 %v865
  %v867 = vpop.xlane.xlu0 %866
  %v868 = vsel %vm525, %v690, 0.0
  %869 = vadd.xlane.f32.xlu0 %v868
  %v870 = vpop.xlane.xlu0 %869
  %v871 = vsel %vm525, %v691, 0.0
  %872 = vadd.xlane.f32.xlu0 %v871
  %v873 = vpop.xlane.xlu0 %872
  %v874 = vsel %vm525, %v692, 0.0
  %875 = vadd.xlane.f32.xlu0 %v874
  %v876 = vpop.xlane.xlu0 %875
  %v877 = vsel %vm525, %v693, 0.0
  %878 = vadd.xlane.f32.xlu0 %v877
  %v879 = vpop.xlane.xlu0 %878
  %v880 = vsel %vm525, %v694, 0.0
  %881 = vadd.xlane.f32.xlu0 %v880
  %v882 = vpop.xlane.xlu0 %881
  %v883 = vsel %vm525, %v695, 0.0
  %884 = vadd.xlane.f32.xlu0 %v883
  %v885 = vpop.xlane.xlu0 %884
  %v886 = vsel %vm525, %v696, 0.0
  %887 = vadd.xlane.f32.xlu0 %v886
  %v888 = vpop.xlane.xlu0 %887
  %v953 = vlaneseq
  %v954 = vand.u32 %v953, 127
  %v955 = vperm.slane %v699, %v954
  %v956 = vadd.s32 %v954, 4294967288
  %v957 = vperm.slane %v702, %v956
  %vm958 = vcmask 130112
  %v959 = vsel %vm958, %v957, %v955
  %v960 = vadd.s32 %v954, 4294967280
  %v961 = vperm.slane %v705, %v960
  %vm962 = vcmask 195712
  %v963 = vsel %vm962, %v961, %v959
  %v964 = vadd.s32 %v954, 4294967272
  %v965 = vperm.slane %v708, %v964
  %vm966 = vcmask 261312
  %v967 = vsel %vm966, %v965, %v963
  %v968 = vperm.slane %v711, %v954
  %v969 = vperm.slane %v714, %v956
  %v970 = vsel %vm958, %v969, %v968
  %v971 = vperm.slane %v717, %v960
  %v972 = vsel %vm962, %v971, %v970
  %v973 = vperm.slane %v720, %v964
  %v974 = vsel %vm966, %v973, %v972
  %v975 = vperm.slane %v723, %v954
  %v976 = vperm.slane %v726, %v956
  %v977 = vsel %vm958, %v976, %v975
  %v978 = vperm.slane %v729, %v960
  %v979 = vsel %vm962, %v978, %v977
  %v980 = vperm.slane %v732, %v964
  %v981 = vsel %vm966, %v980, %v979
  %v982 = vperm.slane %v735, %v954
  %v983 = vperm.slane %v738, %v956
  %v984 = vsel %vm958, %v983, %v982
  %v985 = vperm.slane %v741, %v960
  %v986 = vsel %vm962, %v985, %v984
  %v987 = vperm.slane %v744, %v964
  %v988 = vsel %vm966, %v987, %v986
  %v989 = vperm.slane %v747, %v954
  %v990 = vperm.slane %v750, %v956
  %v991 = vsel %vm958, %v990, %v989
  %v992 = vperm.slane %v753, %v960
  %v993 = vsel %vm962, %v992, %v991
  %v994 = vperm.slane %v756, %v964
  %v995 = vsel %vm966, %v994, %v993
  %v996 = vperm.slane %v759, %v954
  %v997 = vperm.slane %v762, %v956
  %v998 = vsel %vm958, %v997, %v996
  %v999 = vperm.slane %v765, %v960
  %v1000 = vsel %vm962, %v999, %v998
  %v1001 = vperm.slane %v768, %v964
  %v1002 = vsel %vm966, %v1001, %v1000
  %v1003 = vperm.slane %v771, %v954
  %v1004 = vperm.slane %v774, %v956
  %v1005 = vsel %vm958, %v1004, %v1003
  %v1006 = vperm.slane %v777, %v960
  %v1007 = vsel %vm962, %v1006, %v1005
  %v1008 = vperm.slane %v780, %v964
  %v1009 = vsel %vm966, %v1008, %v1007
  %v1010 = vperm.slane %v783, %v954
  %v1011 = vperm.slane %v786, %v956
  %v1012 = vsel %vm958, %v1011, %v1010
  %v1013 = vperm.slane %v789, %v960
  %v1014 = vsel %vm962, %v1013, %v1012
  %v1015 = vperm.slane %v792, %v964
  %v1016 = vsel %vm966, %v1015, %v1014
  %v1017 = vperm.slane %v795, %v954
  %v1018 = vperm.slane %v798, %v956
  %v1019 = vsel %vm958, %v1018, %v1017
  %v1020 = vperm.slane %v801, %v960
  %v1021 = vsel %vm962, %v1020, %v1019
  %v1022 = vperm.slane %v804, %v964
  %v1023 = vsel %vm966, %v1022, %v1021
  %v1024 = vperm.slane %v807, %v954
  %v1025 = vperm.slane %v810, %v956
  %v1026 = vsel %vm958, %v1025, %v1024
  %v1027 = vperm.slane %v813, %v960
  %v1028 = vsel %vm962, %v1027, %v1026
  %v1029 = vperm.slane %v816, %v964
  %v1030 = vsel %vm966, %v1029, %v1028
  %v1031 = vperm.slane %v819, %v954
  %v1032 = vperm.slane %v822, %v956
  %v1033 = vsel %vm958, %v1032, %v1031
  %v1034 = vperm.slane %v825, %v960
  %v1035 = vsel %vm962, %v1034, %v1033
  %v1036 = vperm.slane %v828, %v964
  %v1037 = vsel %vm966, %v1036, %v1035
  %v1038 = vperm.slane %v831, %v954
  %v1039 = vperm.slane %v834, %v956
  %v1040 = vsel %vm958, %v1039, %v1038
  %v1041 = vperm.slane %v837, %v960
  %v1042 = vsel %vm962, %v1041, %v1040
  %v1043 = vperm.slane %v840, %v964
  %v1044 = vsel %vm966, %v1043, %v1042
  %v1045 = vperm.slane %v843, %v954
  %v1046 = vperm.slane %v846, %v956
  %v1047 = vsel %vm958, %v1046, %v1045
  %v1048 = vperm.slane %v849, %v960
  %v1049 = vsel %vm962, %v1048, %v1047
  %v1050 = vperm.slane %v852, %v964
  %v1051 = vsel %vm966, %v1050, %v1049
  %v1052 = vperm.slane %v855, %v954
  %v1053 = vperm.slane %v858, %v956
  %v1054 = vsel %vm958, %v1053, %v1052
  %v1055 = vperm.slane %v861, %v960
  %v1056 = vsel %vm962, %v1055, %v1054
  %v1057 = vperm.slane %v864, %v964
  %v1058 = vsel %vm966, %v1057, %v1056
  %v1059 = vperm.slane %v867, %v954
  %v1060 = vperm.slane %v870, %v956
  %v1061 = vsel %vm958, %v1060, %v1059
  %v1062 = vperm.slane %v873, %v960
  %v1063 = vsel %vm962, %v1062, %v1061
  %v1064 = vperm.slane %v876, %v964
  %v1065 = vsel %vm966, %v1064, %v1063
  %v1066 = vperm.slane %v879, %v954
  %v1067 = vperm.slane %v882, %v956
  %v1068 = vsel %vm958, %v1067, %v1066
  %v1069 = vperm.slane %v885, %v960
  %v1070 = vsel %vm962, %v1069, %v1068
  %v1071 = vperm.slane %v888, %v964
  %v1072 = vsel %vm966, %v1071, %v1070
  %vm1073 = vcmask 1041409
  %v1074 = vsel %vm1073, %v974, %v967
  %vm1075 = vcmask 1042434
  %v1076 = vsel %vm1075, %v981, %v1074
  %vm1077 = vcmask 1043459
  %v1078 = vsel %vm1077, %v988, %v1076
  %vm1079 = vcmask 1044484
  %v1080 = vsel %vm1079, %v995, %v1078
  %vm1081 = vcmask 1045509
  %v1082 = vsel %vm1081, %v1002, %v1080
  %vm1083 = vcmask 1046534
  %v1084 = vsel %vm1083, %v1009, %v1082
  %vm1085 = vcmask 1047559
  %v1086 = vsel %vm1085, %v1016, %v1084
  %v1087 = vsel %vm1073, %v1030, %v1023
  %v1088 = vsel %vm1075, %v1037, %v1087
  %v1089 = vsel %vm1077, %v1044, %v1088
  %v1090 = vsel %vm1079, %v1051, %v1089
  %v1091 = vsel %vm1081, %v1058, %v1090
  %v1092 = vsel %vm1083, %v1065, %v1091
  %v1093 = vsel %vm1085, %v1072, %v1092
  %vm1096 = vcmask 261120
  %v1097 = vsel %vm1096, %v1086, 0.0
  %1098 = vadd.xlane.f32.xlu0 %v1097
  %v1099 = vpop.xlane.xlu0 %1098
  %v1100 = vsel %vm1096, %v1093, 0.0
  %1101 = vadd.xlane.f32.xlu0 %v1100
  %v1102 = vpop.xlane.xlu0 %1101
  %1107 = vrot.lane.b32.xlu0 %v388, 112
  %v1108 = vpop.permute.xlu0 %1107
  %1109 = vrot.lane.b32.xlu0 %v390, 112
  %v1110 = vpop.permute.xlu0 %1109
  %1111 = vrot.lane.b32.xlu0 %v393, 112
  %v1112 = vpop.permute.xlu0 %1111
  %1113 = vrot.lane.b32.xlu0 %v395, 112
  %v1114 = vpop.permute.xlu0 %1113
  %v1119 = vsel %vm525, %v1108, 0.0
  %1120 = vadd.xlane.f32.xlu0 %v1119
  %v1121 = vpop.xlane.xlu0 %1120
  %v1122 = vsel %vm525, %v1110, 0.0
  %1123 = vadd.xlane.f32.xlu0 %v1122
  %v1124 = vpop.xlane.xlu0 %1123
  %v1125 = vsel %vm525, %v1112, 0.0
  %1126 = vadd.xlane.f32.xlu0 %v1125
  %v1127 = vpop.xlane.xlu0 %1126
  %v1128 = vsel %vm525, %v1114, 0.0
  %1129 = vadd.xlane.f32.xlu0 %v1128
  %v1130 = vpop.xlane.xlu0 %1129
  %v1131 = vmul.f32 %v1121, %v544
  %v1132 = vmul.f32 %v1124, %v544
  %v1133 = vmul.f32 %v1127, %v544
  %v1134 = vmul.f32 %v1130, %v544
  %v1135 = vsub.f32 %v388, %v1131
  %v1136 = vsub.f32 %v390, %v1132
  %v1137 = vsub.f32 %v393, %v1133
  %v1138 = vsub.f32 %v395, %v1134
  %v1139 = vmul.f32 %v1135, %v1135
  %v1140 = vmul.f32 %v1136, %v1136
  %v1141 = vmul.f32 %v1137, %v1137
  %v1142 = vmul.f32 %v1138, %v1138
  %1147 = vrot.lane.b32.xlu0 %v1139, 112
  %v1148 = vpop.permute.xlu0 %1147
  %1149 = vrot.lane.b32.xlu0 %v1140, 112
  %v1150 = vpop.permute.xlu0 %1149
  %1151 = vrot.lane.b32.xlu0 %v1141, 112
  %v1152 = vpop.permute.xlu0 %1151
  %1153 = vrot.lane.b32.xlu0 %v1142, 112
  %v1154 = vpop.permute.xlu0 %1153
  %v1159 = vsel %vm525, %v1148, 0.0
  %1160 = vadd.xlane.f32.xlu0 %v1159
  %v1161 = vpop.xlane.xlu0 %1160
  %v1162 = vsel %vm525, %v1150, 0.0
  %1163 = vadd.xlane.f32.xlu0 %v1162
  %v1164 = vpop.xlane.xlu0 %1163
  %v1165 = vsel %vm525, %v1152, 0.0
  %1166 = vadd.xlane.f32.xlu0 %v1165
  %v1167 = vpop.xlane.xlu0 %1166
  %v1168 = vsel %vm525, %v1154, 0.0
  %1169 = vadd.xlane.f32.xlu0 %v1168
  %v1170 = vpop.xlane.xlu0 %1169
  %v1171 = vmul.f32 %v1161, %v544
  %v1172 = vmul.f32 %v1164, %v544
  %v1173 = vmul.f32 %v1167, %v544
  %v1174 = vmul.f32 %v1170, %v544
  %v1175 = vadd.f32 %v1171, 1e-05
  %v1176 = vadd.f32 %v1172, 1e-05
  %v1177 = vadd.f32 %v1173, 1e-05
  %v1178 = vadd.f32 %v1174, 1e-05
  %v1179 = vrsqrt.pop %v1175
  %v1180 = vmul.f32 %v1179, %v1175
  %v1181 = vmul.f32 %v1180, %v1179
  %v1182 = vmul.f32 0.5, %v1181
  %v1183 = vsub.f32 1.5, %v1182
  %v1184 = vmul.f32 %v1179, %v1183
  %vm1185 = vweird.f32 %v1175
  %vm1186 = vweird.f32 %v1179
  %vm1187 = vmor %vm1185, %vm1186
  %v1188 = vsel %vm1187, %v1179, %v1184
  %v1189 = vrsqrt.pop %v1176
  %v1190 = vmul.f32 %v1189, %v1176
  %v1191 = vmul.f32 %v1190, %v1189
  %v1192 = vmul.f32 0.5, %v1191
  %v1193 = vsub.f32 1.5, %v1192
  %v1194 = vmul.f32 %v1189, %v1193
  %vm1195 = vweird.f32 %v1176
  %vm1196 = vweird.f32 %v1189
  %vm1197 = vmor %vm1195, %vm1196
  %v1198 = vsel %vm1197, %v1189, %v1194
  %v1199 = vrsqrt.pop %v1177
  %v1200 = vmul.f32 %v1199, %v1177
  %v1201 = vmul.f32 %v1200, %v1199
  %v1202 = vmul.f32 0.5, %v1201
  %v1203 = vsub.f32 1.5, %v1202
  %v1204 = vmul.f32 %v1199, %v1203
  %vm1205 = vweird.f32 %v1177
  %vm1206 = vweird.f32 %v1199
  %vm1207 = vmor %vm1205, %vm1206
  %v1208 = vsel %vm1207, %v1199, %v1204
  %v1209 = vrsqrt.pop %v1178
  %v1210 = vmul.f32 %v1209, %v1178
  %v1211 = vmul.f32 %v1210, %v1209
  %v1212 = vmul.f32 0.5, %v1211
  %v1213 = vsub.f32 1.5, %v1212
  %v1214 = vmul.f32 %v1209, %v1213
  %vm1215 = vweird.f32 %v1178
  %vm1216 = vweird.f32 %v1209
  %vm1217 = vmor %vm1215, %vm1216
  %v1218 = vsel %vm1217, %v1209, %v1214
  %v1219 = vmul.f32 %v1135, %v1188
  %v1220 = vmul.f32 %v1136, %v1198
  %v1221 = vmul.f32 %v1137, %v1208
  %v1222 = vmul.f32 %v1138, %v1218
  %vm1223 = vcmp.ge.f32.partialorder %v1219, 0.0
  %vm1224 = vcmp.ge.f32.partialorder %v1220, 0.0
  %vm1225 = vcmp.ge.f32.partialorder %v1221, 0.0
  %vm1226 = vcmp.ge.f32.partialorder %v1222, 0.0
  %v1227 = vmul.f32 %v1219, 0.2
  %v1228 = vmul.f32 %v1220, 0.2
  %v1229 = vmul.f32 %v1221, 0.2
  %v1230 = vmul.f32 %v1222, 0.2
  %v1231 = vsel %vm1223, %v1219, %v1227
  %v1232 = vsel %vm1224, %v1220, %v1228
  %v1233 = vsel %vm1225, %v1221, %v1229
  %v1234 = vsel %vm1226, %v1222, %v1230
  %1239 = vrot.lane.b32.xlu0 %v1231, 112
  %v1240 = vpop.permute.xlu0 %1239
  %1241 = vrot.lane.b32.xlu0 %v1232, 112
  %v1242 = vpop.permute.xlu0 %1241
  %1243 = vrot.lane.b32.xlu0 %v1233, 112
  %v1244 = vpop.permute.xlu0 %1243
  %1245 = vrot.lane.b32.xlu0 %v1234, 112
  %v1246 = vpop.permute.xlu0 %1245
  %v1251 = vmul.f32 %v461, %v1240
  %v1252 = vmul.f32 %v462, %v1242
  %v1253 = vmul.f32 %v463, %v1244
  %v1254 = vmul.f32 %v464, %v1246
  %v1255 = vmul.f32 %v465, %v1240
  %v1256 = vmul.f32 %v466, %v1242
  %v1257 = vmul.f32 %v467, %v1244
  %v1258 = vmul.f32 %v468, %v1246
  %v1259 = vmul.f32 %v469, %v1240
  %v1260 = vmul.f32 %v470, %v1242
  %v1261 = vmul.f32 %v471, %v1244
  %v1262 = vmul.f32 %v472, %v1246
  %v1263 = vmul.f32 %v473, %v1240
  %v1264 = vmul.f32 %v474, %v1242
  %v1265 = vmul.f32 %v475, %v1244
  %v1266 = vmul.f32 %v476, %v1246
  %v1267 = vmul.f32 %v477, %v1240
  %v1268 = vmul.f32 %v478, %v1242
  %v1269 = vmul.f32 %v479, %v1244
  %v1270 = vmul.f32 %v480, %v1246
  %v1271 = vmul.f32 %v481, %v1240
  %v1272 = vmul.f32 %v482, %v1242
  %v1273 = vmul.f32 %v483, %v1244
  %v1274 = vmul.f32 %v484, %v1246
  %v1275 = vmul.f32 %v485, %v1240
  %v1276 = vmul.f32 %v486, %v1242
  %v1277 = vmul.f32 %v487, %v1244
  %v1278 = vmul.f32 %v488, %v1246
  %v1279 = vmul.f32 %v489, %v1240
  %v1280 = vmul.f32 %v490, %v1242
  %v1281 = vmul.f32 %v491, %v1244
  %v1282 = vmul.f32 %v492, %v1246
  %v1283 = vmul.f32 %v493, %v1240
  %v1284 = vmul.f32 %v494, %v1242
  %v1285 = vmul.f32 %v495, %v1244
  %v1286 = vmul.f32 %v496, %v1246
  %v1287 = vmul.f32 %v497, %v1240
  %v1288 = vmul.f32 %v498, %v1242
  %v1289 = vmul.f32 %v499, %v1244
  %v1290 = vmul.f32 %v500, %v1246
  %v1291 = vmul.f32 %v501, %v1240
  %v1292 = vmul.f32 %v502, %v1242
  %v1293 = vmul.f32 %v503, %v1244
  %v1294 = vmul.f32 %v504, %v1246
  %v1295 = vmul.f32 %v505, %v1240
  %v1296 = vmul.f32 %v506, %v1242
  %v1297 = vmul.f32 %v507, %v1244
  %v1298 = vmul.f32 %v508, %v1246
  %v1299 = vmul.f32 %v509, %v1240
  %v1300 = vmul.f32 %v510, %v1242
  %v1301 = vmul.f32 %v511, %v1244
  %v1302 = vmul.f32 %v512, %v1246
  %v1303 = vmul.f32 %v513, %v1240
  %v1304 = vmul.f32 %v514, %v1242
  %v1305 = vmul.f32 %v515, %v1244
  %v1306 = vmul.f32 %v516, %v1246
  %v1307 = vmul.f32 %v517, %v1240
  %v1308 = vmul.f32 %v518, %v1242
  %v1309 = vmul.f32 %v519, %v1244
  %v1310 = vmul.f32 %v520, %v1246
  %v1311 = vmul.f32 %v521, %v1240
  %v1312 = vmul.f32 %v522, %v1242
  %v1313 = vmul.f32 %v523, %v1244
  %v1314 = vmul.f32 %v524, %v1246
  %v1315 = vsel %vm525, %v1251, 0.0
  %1316 = vadd.xlane.f32.xlu0 %v1315
  %v1317 = vpop.xlane.xlu0 %1316
  %v1318 = vsel %vm525, %v1252, 0.0
  %1319 = vadd.xlane.f32.xlu0 %v1318
  %v1320 = vpop.xlane.xlu0 %1319
  %v1321 = vsel %vm525, %v1253, 0.0
  %1322 = vadd.xlane.f32.xlu0 %v1321
  %v1323 = vpop.xlane.xlu0 %1322
  %v1324 = vsel %vm525, %v1254, 0.0
  %1325 = vadd.xlane.f32.xlu0 %v1324
  %v1326 = vpop.xlane.xlu0 %1325
  %v1327 = vsel %vm525, %v1255, 0.0
  %1328 = vadd.xlane.f32.xlu0 %v1327
  %v1329 = vpop.xlane.xlu0 %1328
  %v1330 = vsel %vm525, %v1256, 0.0
  %1331 = vadd.xlane.f32.xlu0 %v1330
  %v1332 = vpop.xlane.xlu0 %1331
  %v1333 = vsel %vm525, %v1257, 0.0
  %1334 = vadd.xlane.f32.xlu0 %v1333
  %v1335 = vpop.xlane.xlu0 %1334
  %v1336 = vsel %vm525, %v1258, 0.0
  %1337 = vadd.xlane.f32.xlu0 %v1336
  %v1338 = vpop.xlane.xlu0 %1337
  %v1339 = vsel %vm525, %v1259, 0.0
  %1340 = vadd.xlane.f32.xlu0 %v1339
  %v1341 = vpop.xlane.xlu0 %1340
  %v1342 = vsel %vm525, %v1260, 0.0
  %1343 = vadd.xlane.f32.xlu0 %v1342
  %v1344 = vpop.xlane.xlu0 %1343
  %v1345 = vsel %vm525, %v1261, 0.0
  %1346 = vadd.xlane.f32.xlu0 %v1345
  %v1347 = vpop.xlane.xlu0 %1346
  %v1348 = vsel %vm525, %v1262, 0.0
  %1349 = vadd.xlane.f32.xlu0 %v1348
  %v1350 = vpop.xlane.xlu0 %1349
  %v1351 = vsel %vm525, %v1263, 0.0
  %1352 = vadd.xlane.f32.xlu0 %v1351
  %v1353 = vpop.xlane.xlu0 %1352
  %v1354 = vsel %vm525, %v1264, 0.0
  %1355 = vadd.xlane.f32.xlu0 %v1354
  %v1356 = vpop.xlane.xlu0 %1355
  %v1357 = vsel %vm525, %v1265, 0.0
  %1358 = vadd.xlane.f32.xlu0 %v1357
  %v1359 = vpop.xlane.xlu0 %1358
  %v1360 = vsel %vm525, %v1266, 0.0
  %1361 = vadd.xlane.f32.xlu0 %v1360
  %v1362 = vpop.xlane.xlu0 %1361
  %v1363 = vsel %vm525, %v1267, 0.0
  %1364 = vadd.xlane.f32.xlu0 %v1363
  %v1365 = vpop.xlane.xlu0 %1364
  %v1366 = vsel %vm525, %v1268, 0.0
  %1367 = vadd.xlane.f32.xlu0 %v1366
  %v1368 = vpop.xlane.xlu0 %1367
  %v1369 = vsel %vm525, %v1269, 0.0
  %1370 = vadd.xlane.f32.xlu0 %v1369
  %v1371 = vpop.xlane.xlu0 %1370
  %v1372 = vsel %vm525, %v1270, 0.0
  %1373 = vadd.xlane.f32.xlu0 %v1372
  %v1374 = vpop.xlane.xlu0 %1373
  %v1375 = vsel %vm525, %v1271, 0.0
  %1376 = vadd.xlane.f32.xlu0 %v1375
  %v1377 = vpop.xlane.xlu0 %1376
  %v1378 = vsel %vm525, %v1272, 0.0
  %1379 = vadd.xlane.f32.xlu0 %v1378
  %v1380 = vpop.xlane.xlu0 %1379
  %v1381 = vsel %vm525, %v1273, 0.0
  %1382 = vadd.xlane.f32.xlu0 %v1381
  %v1383 = vpop.xlane.xlu0 %1382
  %v1384 = vsel %vm525, %v1274, 0.0
  %1385 = vadd.xlane.f32.xlu0 %v1384
  %v1386 = vpop.xlane.xlu0 %1385
  %v1387 = vsel %vm525, %v1275, 0.0
  %1388 = vadd.xlane.f32.xlu0 %v1387
  %v1389 = vpop.xlane.xlu0 %1388
  %v1390 = vsel %vm525, %v1276, 0.0
  %1391 = vadd.xlane.f32.xlu0 %v1390
  %v1392 = vpop.xlane.xlu0 %1391
  %v1393 = vsel %vm525, %v1277, 0.0
  %1394 = vadd.xlane.f32.xlu0 %v1393
  %v1395 = vpop.xlane.xlu0 %1394
  %v1396 = vsel %vm525, %v1278, 0.0
  %1397 = vadd.xlane.f32.xlu0 %v1396
  %v1398 = vpop.xlane.xlu0 %1397
  %v1399 = vsel %vm525, %v1279, 0.0
  %1400 = vadd.xlane.f32.xlu0 %v1399
  %v1401 = vpop.xlane.xlu0 %1400
  %v1402 = vsel %vm525, %v1280, 0.0
  %1403 = vadd.xlane.f32.xlu0 %v1402
  %v1404 = vpop.xlane.xlu0 %1403
  %v1405 = vsel %vm525, %v1281, 0.0
  %1406 = vadd.xlane.f32.xlu0 %v1405
  %v1407 = vpop.xlane.xlu0 %1406
  %v1408 = vsel %vm525, %v1282, 0.0
  %1409 = vadd.xlane.f32.xlu0 %v1408
  %v1410 = vpop.xlane.xlu0 %1409
  %v1411 = vsel %vm525, %v1283, 0.0
  %1412 = vadd.xlane.f32.xlu0 %v1411
  %v1413 = vpop.xlane.xlu0 %1412
  %v1414 = vsel %vm525, %v1284, 0.0
  %1415 = vadd.xlane.f32.xlu0 %v1414
  %v1416 = vpop.xlane.xlu0 %1415
  %v1417 = vsel %vm525, %v1285, 0.0
  %1418 = vadd.xlane.f32.xlu0 %v1417
  %v1419 = vpop.xlane.xlu0 %1418
  %v1420 = vsel %vm525, %v1286, 0.0
  %1421 = vadd.xlane.f32.xlu0 %v1420
  %v1422 = vpop.xlane.xlu0 %1421
  %v1423 = vsel %vm525, %v1287, 0.0
  %1424 = vadd.xlane.f32.xlu0 %v1423
  %v1425 = vpop.xlane.xlu0 %1424
  %v1426 = vsel %vm525, %v1288, 0.0
  %1427 = vadd.xlane.f32.xlu0 %v1426
  %v1428 = vpop.xlane.xlu0 %1427
  %v1429 = vsel %vm525, %v1289, 0.0
  %1430 = vadd.xlane.f32.xlu0 %v1429
  %v1431 = vpop.xlane.xlu0 %1430
  %v1432 = vsel %vm525, %v1290, 0.0
  %1433 = vadd.xlane.f32.xlu0 %v1432
  %v1434 = vpop.xlane.xlu0 %1433
  %v1435 = vsel %vm525, %v1291, 0.0
  %1436 = vadd.xlane.f32.xlu0 %v1435
  %v1437 = vpop.xlane.xlu0 %1436
  %v1438 = vsel %vm525, %v1292, 0.0
  %1439 = vadd.xlane.f32.xlu0 %v1438
  %v1440 = vpop.xlane.xlu0 %1439
  %v1441 = vsel %vm525, %v1293, 0.0
  %1442 = vadd.xlane.f32.xlu0 %v1441
  %v1443 = vpop.xlane.xlu0 %1442
  %v1444 = vsel %vm525, %v1294, 0.0
  %1445 = vadd.xlane.f32.xlu0 %v1444
  %v1446 = vpop.xlane.xlu0 %1445
  %v1447 = vsel %vm525, %v1295, 0.0
  %1448 = vadd.xlane.f32.xlu0 %v1447
  %v1449 = vpop.xlane.xlu0 %1448
  %v1450 = vsel %vm525, %v1296, 0.0
  %1451 = vadd.xlane.f32.xlu0 %v1450
  %v1452 = vpop.xlane.xlu0 %1451
  %v1453 = vsel %vm525, %v1297, 0.0
  %1454 = vadd.xlane.f32.xlu0 %v1453
  %v1455 = vpop.xlane.xlu0 %1454
  %v1456 = vsel %vm525, %v1298, 0.0
  %1457 = vadd.xlane.f32.xlu0 %v1456
  %v1458 = vpop.xlane.xlu0 %1457
  %v1459 = vsel %vm525, %v1299, 0.0
  %1460 = vadd.xlane.f32.xlu0 %v1459
  %v1461 = vpop.xlane.xlu0 %1460
  %v1462 = vsel %vm525, %v1300, 0.0
  %1463 = vadd.xlane.f32.xlu0 %v1462
  %v1464 = vpop.xlane.xlu0 %1463
  %v1465 = vsel %vm525, %v1301, 0.0
  %1466 = vadd.xlane.f32.xlu0 %v1465
  %v1467 = vpop.xlane.xlu0 %1466
  %v1468 = vsel %vm525, %v1302, 0.0
  %1469 = vadd.xlane.f32.xlu0 %v1468
  %v1470 = vpop.xlane.xlu0 %1469
  %v1471 = vsel %vm525, %v1303, 0.0
  %1472 = vadd.xlane.f32.xlu0 %v1471
  %v1473 = vpop.xlane.xlu0 %1472
  %v1474 = vsel %vm525, %v1304, 0.0
  %1475 = vadd.xlane.f32.xlu0 %v1474
  %v1476 = vpop.xlane.xlu0 %1475
  %v1477 = vsel %vm525, %v1305, 0.0
  %1478 = vadd.xlane.f32.xlu0 %v1477
  %v1479 = vpop.xlane.xlu0 %1478
  %v1480 = vsel %vm525, %v1306, 0.0
  %1481 = vadd.xlane.f32.xlu0 %v1480
  %v1482 = vpop.xlane.xlu0 %1481
  %v1483 = vsel %vm525, %v1307, 0.0
  %1484 = vadd.xlane.f32.xlu0 %v1483
  %v1485 = vpop.xlane.xlu0 %1484
  %v1486 = vsel %vm525, %v1308, 0.0
  %1487 = vadd.xlane.f32.xlu0 %v1486
  %v1488 = vpop.xlane.xlu0 %1487
  %v1489 = vsel %vm525, %v1309, 0.0
  %1490 = vadd.xlane.f32.xlu0 %v1489
  %v1491 = vpop.xlane.xlu0 %1490
  %v1492 = vsel %vm525, %v1310, 0.0
  %1493 = vadd.xlane.f32.xlu0 %v1492
  %v1494 = vpop.xlane.xlu0 %1493
  %v1495 = vsel %vm525, %v1311, 0.0
  %1496 = vadd.xlane.f32.xlu0 %v1495
  %v1497 = vpop.xlane.xlu0 %1496
  %v1498 = vsel %vm525, %v1312, 0.0
  %1499 = vadd.xlane.f32.xlu0 %v1498
  %v1500 = vpop.xlane.xlu0 %1499
  %v1501 = vsel %vm525, %v1313, 0.0
  %1502 = vadd.xlane.f32.xlu0 %v1501
  %v1503 = vpop.xlane.xlu0 %1502
  %v1504 = vsel %vm525, %v1314, 0.0
  %1505 = vadd.xlane.f32.xlu0 %v1504
  %v1506 = vpop.xlane.xlu0 %1505
  %v1571 = vperm.slane %v1317, %v954
  %v1572 = vperm.slane %v1320, %v956
  %v1573 = vsel %vm958, %v1572, %v1571
  %v1574 = vperm.slane %v1323, %v960
  %v1575 = vsel %vm962, %v1574, %v1573
  %v1576 = vperm.slane %v1326, %v964
  %v1577 = vsel %vm966, %v1576, %v1575
  %v1578 = vperm.slane %v1329, %v954
  %v1579 = vperm.slane %v1332, %v956
  %v1580 = vsel %vm958, %v1579, %v1578
  %v1581 = vperm.slane %v1335, %v960
  %v1582 = vsel %vm962, %v1581, %v1580
  %v1583 = vperm.slane %v1338, %v964
  %v1584 = vsel %vm966, %v1583, %v1582
  %v1585 = vperm.slane %v1341, %v954
  %v1586 = vperm.slane %v1344, %v956
  %v1587 = vsel %vm958, %v1586, %v1585
  %v1588 = vperm.slane %v1347, %v960
  %v1589 = vsel %vm962, %v1588, %v1587
  %v1590 = vperm.slane %v1350, %v964
  %v1591 = vsel %vm966, %v1590, %v1589
  %v1592 = vperm.slane %v1353, %v954
  %v1593 = vperm.slane %v1356, %v956
  %v1594 = vsel %vm958, %v1593, %v1592
  %v1595 = vperm.slane %v1359, %v960
  %v1596 = vsel %vm962, %v1595, %v1594
  %v1597 = vperm.slane %v1362, %v964
  %v1598 = vsel %vm966, %v1597, %v1596
  %v1599 = vperm.slane %v1365, %v954
  %v1600 = vperm.slane %v1368, %v956
  %v1601 = vsel %vm958, %v1600, %v1599
  %v1602 = vperm.slane %v1371, %v960
  %v1603 = vsel %vm962, %v1602, %v1601
  %v1604 = vperm.slane %v1374, %v964
  %v1605 = vsel %vm966, %v1604, %v1603
  %v1606 = vperm.slane %v1377, %v954
  %v1607 = vperm.slane %v1380, %v956
  %v1608 = vsel %vm958, %v1607, %v1606
  %v1609 = vperm.slane %v1383, %v960
  %v1610 = vsel %vm962, %v1609, %v1608
  %v1611 = vperm.slane %v1386, %v964
  %v1612 = vsel %vm966, %v1611, %v1610
  %v1613 = vperm.slane %v1389, %v954
  %v1614 = vperm.slane %v1392, %v956
  %v1615 = vsel %vm958, %v1614, %v1613
  %v1616 = vperm.slane %v1395, %v960
  %v1617 = vsel %vm962, %v1616, %v1615
  %v1618 = vperm.slane %v1398, %v964
  %v1619 = vsel %vm966, %v1618, %v1617
  %v1620 = vperm.slane %v1401, %v954
  %v1621 = vperm.slane %v1404, %v956
  %v1622 = vsel %vm958, %v1621, %v1620
  %v1623 = vperm.slane %v1407, %v960
  %v1624 = vsel %vm962, %v1623, %v1622
  %v1625 = vperm.slane %v1410, %v964
  %v1626 = vsel %vm966, %v1625, %v1624
  %v1627 = vperm.slane %v1413, %v954
  %v1628 = vperm.slane %v1416, %v956
  %v1629 = vsel %vm958, %v1628, %v1627
  %v1630 = vperm.slane %v1419, %v960
  %v1631 = vsel %vm962, %v1630, %v1629
  %v1632 = vperm.slane %v1422, %v964
  %v1633 = vsel %vm966, %v1632, %v1631
  %v1634 = vperm.slane %v1425, %v954
  %v1635 = vperm.slane %v1428, %v956
  %v1636 = vsel %vm958, %v1635, %v1634
  %v1637 = vperm.slane %v1431, %v960
  %v1638 = vsel %vm962, %v1637, %v1636
  %v1639 = vperm.slane %v1434, %v964
  %v1640 = vsel %vm966, %v1639, %v1638
  %v1641 = vperm.slane %v1437, %v954
  %v1642 = vperm.slane %v1440, %v956
  %v1643 = vsel %vm958, %v1642, %v1641
  %v1644 = vperm.slane %v1443, %v960
  %v1645 = vsel %vm962, %v1644, %v1643
  %v1646 = vperm.slane %v1446, %v964
  %v1647 = vsel %vm966, %v1646, %v1645
  %v1648 = vperm.slane %v1449, %v954
  %v1649 = vperm.slane %v1452, %v956
  %v1650 = vsel %vm958, %v1649, %v1648
  %v1651 = vperm.slane %v1455, %v960
  %v1652 = vsel %vm962, %v1651, %v1650
  %v1653 = vperm.slane %v1458, %v964
  %v1654 = vsel %vm966, %v1653, %v1652
  %v1655 = vperm.slane %v1461, %v954
  %v1656 = vperm.slane %v1464, %v956
  %v1657 = vsel %vm958, %v1656, %v1655
  %v1658 = vperm.slane %v1467, %v960
  %v1659 = vsel %vm962, %v1658, %v1657
  %v1660 = vperm.slane %v1470, %v964
  %v1661 = vsel %vm966, %v1660, %v1659
  %v1662 = vperm.slane %v1473, %v954
  %v1663 = vperm.slane %v1476, %v956
  %v1664 = vsel %vm958, %v1663, %v1662
  %v1665 = vperm.slane %v1479, %v960
  %v1666 = vsel %vm962, %v1665, %v1664
  %v1667 = vperm.slane %v1482, %v964
  %v1668 = vsel %vm966, %v1667, %v1666
  %v1669 = vperm.slane %v1485, %v954
  %v1670 = vperm.slane %v1488, %v956
  %v1671 = vsel %vm958, %v1670, %v1669
  %v1672 = vperm.slane %v1491, %v960
  %v1673 = vsel %vm962, %v1672, %v1671
  %v1674 = vperm.slane %v1494, %v964
  %v1675 = vsel %vm966, %v1674, %v1673
  %v1676 = vperm.slane %v1497, %v954
  %v1677 = vperm.slane %v1500, %v956
  %v1678 = vsel %vm958, %v1677, %v1676
  %v1679 = vperm.slane %v1503, %v960
  %v1680 = vsel %vm962, %v1679, %v1678
  %v1681 = vperm.slane %v1506, %v964
  %v1682 = vsel %vm966, %v1681, %v1680
  %v1683 = vsel %vm1073, %v1584, %v1577
  %v1684 = vsel %vm1075, %v1591, %v1683
  %v1685 = vsel %vm1077, %v1598, %v1684
  %v1686 = vsel %vm1079, %v1605, %v1685
  %v1687 = vsel %vm1081, %v1612, %v1686
  %v1688 = vsel %vm1083, %v1619, %v1687
  %v1689 = vsel %vm1085, %v1626, %v1688
  %v1690 = vsel %vm1073, %v1640, %v1633
  %v1691 = vsel %vm1075, %v1647, %v1690
  %v1692 = vsel %vm1077, %v1654, %v1691
  %v1693 = vsel %vm1079, %v1661, %v1692
  %v1694 = vsel %vm1081, %v1668, %v1693
  %v1695 = vsel %vm1083, %v1675, %v1694
  %v1696 = vsel %vm1085, %v1682, %v1695
  %v1699 = vsel %vm1096, %v1689, 0.0
  %1700 = vadd.xlane.f32.xlu0 %v1699
  %v1701 = vpop.xlane.xlu0 %1700
  %v1702 = vsel %vm1096, %v1696, 0.0
  %1703 = vadd.xlane.f32.xlu0 %v1702
  %v1704 = vpop.xlane.xlu0 %1703
  %1705 = vrot.lane.b32.xlu0 %v388, 96
  %v1706 = vpop.permute.xlu0 %1705
  %1707 = vrot.lane.b32.xlu0 %v390, 96
  %v1708 = vpop.permute.xlu0 %1707
  %1709 = vrot.lane.b32.xlu0 %v393, 96
  %v1710 = vpop.permute.xlu0 %1709
  %1711 = vrot.lane.b32.xlu0 %v395, 96
  %v1712 = vpop.permute.xlu0 %1711
  %v1717 = vsel %vm525, %v1706, 0.0
  %1718 = vadd.xlane.f32.xlu0 %v1717
  %v1719 = vpop.xlane.xlu0 %1718
  %v1720 = vsel %vm525, %v1708, 0.0
  %1721 = vadd.xlane.f32.xlu0 %v1720
  %v1722 = vpop.xlane.xlu0 %1721
  %v1723 = vsel %vm525, %v1710, 0.0
  %1724 = vadd.xlane.f32.xlu0 %v1723
  %v1725 = vpop.xlane.xlu0 %1724
  %v1726 = vsel %vm525, %v1712, 0.0
  %1727 = vadd.xlane.f32.xlu0 %v1726
  %v1728 = vpop.xlane.xlu0 %1727
  %v1729 = vmul.f32 %v1719, %v544
  %v1730 = vmul.f32 %v1722, %v544
  %v1731 = vmul.f32 %v1725, %v544
  %v1732 = vmul.f32 %v1728, %v544
  %v1733 = vsub.f32 %v388, %v1729
  %v1734 = vsub.f32 %v390, %v1730
  %v1735 = vsub.f32 %v393, %v1731
  %v1736 = vsub.f32 %v395, %v1732
  %v1737 = vmul.f32 %v1733, %v1733
  %v1738 = vmul.f32 %v1734, %v1734
  %v1739 = vmul.f32 %v1735, %v1735
  %v1740 = vmul.f32 %v1736, %v1736
  %1745 = vrot.lane.b32.xlu0 %v1737, 96
  %v1746 = vpop.permute.xlu0 %1745
  %1747 = vrot.lane.b32.xlu0 %v1738, 96
  %v1748 = vpop.permute.xlu0 %1747
  %1749 = vrot.lane.b32.xlu0 %v1739, 96
  %v1750 = vpop.permute.xlu0 %1749
  %1751 = vrot.lane.b32.xlu0 %v1740, 96
  %v1752 = vpop.permute.xlu0 %1751
  %v1757 = vsel %vm525, %v1746, 0.0
  %1758 = vadd.xlane.f32.xlu0 %v1757
  %v1759 = vpop.xlane.xlu0 %1758
  %v1760 = vsel %vm525, %v1748, 0.0
  %1761 = vadd.xlane.f32.xlu0 %v1760
  %v1762 = vpop.xlane.xlu0 %1761
  %v1763 = vsel %vm525, %v1750, 0.0
  %1764 = vadd.xlane.f32.xlu0 %v1763
  %v1765 = vpop.xlane.xlu0 %1764
  %v1766 = vsel %vm525, %v1752, 0.0
  %1767 = vadd.xlane.f32.xlu0 %v1766
  %v1768 = vpop.xlane.xlu0 %1767
  %v1769 = vmul.f32 %v1759, %v544
  %v1770 = vmul.f32 %v1762, %v544
  %v1771 = vmul.f32 %v1765, %v544
  %v1772 = vmul.f32 %v1768, %v544
  %v1773 = vadd.f32 %v1769, 1e-05
  %v1774 = vadd.f32 %v1770, 1e-05
  %v1775 = vadd.f32 %v1771, 1e-05
  %v1776 = vadd.f32 %v1772, 1e-05
  %v1777 = vrsqrt.pop %v1773
  %v1778 = vmul.f32 %v1777, %v1773
  %v1779 = vmul.f32 %v1778, %v1777
  %v1780 = vmul.f32 0.5, %v1779
  %v1781 = vsub.f32 1.5, %v1780
  %v1782 = vmul.f32 %v1777, %v1781
  %vm1783 = vweird.f32 %v1773
  %vm1784 = vweird.f32 %v1777
  %vm1785 = vmor %vm1783, %vm1784
  %v1786 = vsel %vm1785, %v1777, %v1782
  %v1787 = vrsqrt.pop %v1774
  %v1788 = vmul.f32 %v1787, %v1774
  %v1789 = vmul.f32 %v1788, %v1787
  %v1790 = vmul.f32 0.5, %v1789
  %v1791 = vsub.f32 1.5, %v1790
  %v1792 = vmul.f32 %v1787, %v1791
  %vm1793 = vweird.f32 %v1774
  %vm1794 = vweird.f32 %v1787
  %vm1795 = vmor %vm1793, %vm1794
  %v1796 = vsel %vm1795, %v1787, %v1792
  %v1797 = vrsqrt.pop %v1775
  %v1798 = vmul.f32 %v1797, %v1775
  %v1799 = vmul.f32 %v1798, %v1797
  %v1800 = vmul.f32 0.5, %v1799
  %v1801 = vsub.f32 1.5, %v1800
  %v1802 = vmul.f32 %v1797, %v1801
  %vm1803 = vweird.f32 %v1775
  %vm1804 = vweird.f32 %v1797
  %vm1805 = vmor %vm1803, %vm1804
  %v1806 = vsel %vm1805, %v1797, %v1802
  %v1807 = vrsqrt.pop %v1776
  %v1808 = vmul.f32 %v1807, %v1776
  %v1809 = vmul.f32 %v1808, %v1807
  %v1810 = vmul.f32 0.5, %v1809
  %v1811 = vsub.f32 1.5, %v1810
  %v1812 = vmul.f32 %v1807, %v1811
  %vm1813 = vweird.f32 %v1776
  %vm1814 = vweird.f32 %v1807
  %vm1815 = vmor %vm1813, %vm1814
  %v1816 = vsel %vm1815, %v1807, %v1812
  %v1817 = vmul.f32 %v1733, %v1786
  %v1818 = vmul.f32 %v1734, %v1796
  %v1819 = vmul.f32 %v1735, %v1806
  %v1820 = vmul.f32 %v1736, %v1816
  %vm1821 = vcmp.ge.f32.partialorder %v1817, 0.0
  %vm1822 = vcmp.ge.f32.partialorder %v1818, 0.0
  %vm1823 = vcmp.ge.f32.partialorder %v1819, 0.0
  %vm1824 = vcmp.ge.f32.partialorder %v1820, 0.0
  %v1825 = vmul.f32 %v1817, 0.2
  %v1826 = vmul.f32 %v1818, 0.2
  %v1827 = vmul.f32 %v1819, 0.2
  %v1828 = vmul.f32 %v1820, 0.2
  %v1829 = vsel %vm1821, %v1817, %v1825
  %v1830 = vsel %vm1822, %v1818, %v1826
  %v1831 = vsel %vm1823, %v1819, %v1827
  %v1832 = vsel %vm1824, %v1820, %v1828
  %1837 = vrot.lane.b32.xlu0 %v1829, 96
  %v1838 = vpop.permute.xlu0 %1837
  %1839 = vrot.lane.b32.xlu0 %v1830, 96
  %v1840 = vpop.permute.xlu0 %1839
  %1841 = vrot.lane.b32.xlu0 %v1831, 96
  %v1842 = vpop.permute.xlu0 %1841
  %1843 = vrot.lane.b32.xlu0 %v1832, 96
  %v1844 = vpop.permute.xlu0 %1843
  %v1849 = vmul.f32 %v461, %v1838
  %v1850 = vmul.f32 %v462, %v1840
  %v1851 = vmul.f32 %v463, %v1842
  %v1852 = vmul.f32 %v464, %v1844
  %v1853 = vmul.f32 %v465, %v1838
  %v1854 = vmul.f32 %v466, %v1840
  %v1855 = vmul.f32 %v467, %v1842
  %v1856 = vmul.f32 %v468, %v1844
  %v1857 = vmul.f32 %v469, %v1838
  %v1858 = vmul.f32 %v470, %v1840
  %v1859 = vmul.f32 %v471, %v1842
  %v1860 = vmul.f32 %v472, %v1844
  %v1861 = vmul.f32 %v473, %v1838
  %v1862 = vmul.f32 %v474, %v1840
  %v1863 = vmul.f32 %v475, %v1842
  %v1864 = vmul.f32 %v476, %v1844
  %v1865 = vmul.f32 %v477, %v1838
  %v1866 = vmul.f32 %v478, %v1840
  %v1867 = vmul.f32 %v479, %v1842
  %v1868 = vmul.f32 %v480, %v1844
  %v1869 = vmul.f32 %v481, %v1838
  %v1870 = vmul.f32 %v482, %v1840
  %v1871 = vmul.f32 %v483, %v1842
  %v1872 = vmul.f32 %v484, %v1844
  %v1873 = vmul.f32 %v485, %v1838
  %v1874 = vmul.f32 %v486, %v1840
  %v1875 = vmul.f32 %v487, %v1842
  %v1876 = vmul.f32 %v488, %v1844
  %v1877 = vmul.f32 %v489, %v1838
  %v1878 = vmul.f32 %v490, %v1840
  %v1879 = vmul.f32 %v491, %v1842
  %v1880 = vmul.f32 %v492, %v1844
  %v1881 = vmul.f32 %v493, %v1838
  %v1882 = vmul.f32 %v494, %v1840
  %v1883 = vmul.f32 %v495, %v1842
  %v1884 = vmul.f32 %v496, %v1844
  %v1885 = vmul.f32 %v497, %v1838
  %v1886 = vmul.f32 %v498, %v1840
  %v1887 = vmul.f32 %v499, %v1842
  %v1888 = vmul.f32 %v500, %v1844
  %v1889 = vmul.f32 %v501, %v1838
  %v1890 = vmul.f32 %v502, %v1840
  %v1891 = vmul.f32 %v503, %v1842
  %v1892 = vmul.f32 %v504, %v1844
  %v1893 = vmul.f32 %v505, %v1838
  %v1894 = vmul.f32 %v506, %v1840
  %v1895 = vmul.f32 %v507, %v1842
  %v1896 = vmul.f32 %v508, %v1844
  %v1897 = vmul.f32 %v509, %v1838
  %v1898 = vmul.f32 %v510, %v1840
  %v1899 = vmul.f32 %v511, %v1842
  %v1900 = vmul.f32 %v512, %v1844
  %v1901 = vmul.f32 %v513, %v1838
  %v1902 = vmul.f32 %v514, %v1840
  %v1903 = vmul.f32 %v515, %v1842
  %v1904 = vmul.f32 %v516, %v1844
  %v1905 = vmul.f32 %v517, %v1838
  %v1906 = vmul.f32 %v518, %v1840
  %v1907 = vmul.f32 %v519, %v1842
  %v1908 = vmul.f32 %v520, %v1844
  %v1909 = vmul.f32 %v521, %v1838
  %v1910 = vmul.f32 %v522, %v1840
  %v1911 = vmul.f32 %v523, %v1842
  %v1912 = vmul.f32 %v524, %v1844
  %v1913 = vsel %vm525, %v1849, 0.0
  %1914 = vadd.xlane.f32.xlu0 %v1913
  %v1915 = vpop.xlane.xlu0 %1914
  %v1916 = vsel %vm525, %v1850, 0.0
  %1917 = vadd.xlane.f32.xlu0 %v1916
  %v1918 = vpop.xlane.xlu0 %1917
  %v1919 = vsel %vm525, %v1851, 0.0
  %1920 = vadd.xlane.f32.xlu0 %v1919
  %v1921 = vpop.xlane.xlu0 %1920
  %v1922 = vsel %vm525, %v1852, 0.0
  %1923 = vadd.xlane.f32.xlu0 %v1922
  %v1924 = vpop.xlane.xlu0 %1923
  %v1925 = vsel %vm525, %v1853, 0.0
  %1926 = vadd.xlane.f32.xlu0 %v1925
  %v1927 = vpop.xlane.xlu0 %1926
  %v1928 = vsel %vm525, %v1854, 0.0
  %1929 = vadd.xlane.f32.xlu0 %v1928
  %v1930 = vpop.xlane.xlu0 %1929
  %v1931 = vsel %vm525, %v1855, 0.0
  %1932 = vadd.xlane.f32.xlu0 %v1931
  %v1933 = vpop.xlane.xlu0 %1932
  %v1934 = vsel %vm525, %v1856, 0.0
  %1935 = vadd.xlane.f32.xlu0 %v1934
  %v1936 = vpop.xlane.xlu0 %1935
  %v1937 = vsel %vm525, %v1857, 0.0
  %1938 = vadd.xlane.f32.xlu0 %v1937
  %v1939 = vpop.xlane.xlu0 %1938
  %v1940 = vsel %vm525, %v1858, 0.0
  %1941 = vadd.xlane.f32.xlu0 %v1940
  %v1942 = vpop.xlane.xlu0 %1941
  %v1943 = vsel %vm525, %v1859, 0.0
  %1944 = vadd.xlane.f32.xlu0 %v1943
  %v1945 = vpop.xlane.xlu0 %1944
  %v1946 = vsel %vm525, %v1860, 0.0
  %1947 = vadd.xlane.f32.xlu0 %v1946
  %v1948 = vpop.xlane.xlu0 %1947
  %v1949 = vsel %vm525, %v1861, 0.0
  %1950 = vadd.xlane.f32.xlu0 %v1949
  %v1951 = vpop.xlane.xlu0 %1950
  %v1952 = vsel %vm525, %v1862, 0.0
  %1953 = vadd.xlane.f32.xlu0 %v1952
  %v1954 = vpop.xlane.xlu0 %1953
  %v1955 = vsel %vm525, %v1863, 0.0
  %1956 = vadd.xlane.f32.xlu0 %v1955
  %v1957 = vpop.xlane.xlu0 %1956
  %v1958 = vsel %vm525, %v1864, 0.0
  %1959 = vadd.xlane.f32.xlu0 %v1958
  %v1960 = vpop.xlane.xlu0 %1959
  %v1961 = vsel %vm525, %v1865, 0.0
  %1962 = vadd.xlane.f32.xlu0 %v1961
  %v1963 = vpop.xlane.xlu0 %1962
  %v1964 = vsel %vm525, %v1866, 0.0
  %1965 = vadd.xlane.f32.xlu0 %v1964
  %v1966 = vpop.xlane.xlu0 %1965
  %v1967 = vsel %vm525, %v1867, 0.0
  %1968 = vadd.xlane.f32.xlu0 %v1967
  %v1969 = vpop.xlane.xlu0 %1968
  %v1970 = vsel %vm525, %v1868, 0.0
  %1971 = vadd.xlane.f32.xlu0 %v1970
  %v1972 = vpop.xlane.xlu0 %1971
  %v1973 = vsel %vm525, %v1869, 0.0
  %1974 = vadd.xlane.f32.xlu0 %v1973
  %v1975 = vpop.xlane.xlu0 %1974
  %v1976 = vsel %vm525, %v1870, 0.0
  %1977 = vadd.xlane.f32.xlu0 %v1976
  %v1978 = vpop.xlane.xlu0 %1977
  %v1979 = vsel %vm525, %v1871, 0.0
  %1980 = vadd.xlane.f32.xlu0 %v1979
  %v1981 = vpop.xlane.xlu0 %1980
  %v1982 = vsel %vm525, %v1872, 0.0
  %1983 = vadd.xlane.f32.xlu0 %v1982
  %v1984 = vpop.xlane.xlu0 %1983
  %v1985 = vsel %vm525, %v1873, 0.0
  %1986 = vadd.xlane.f32.xlu0 %v1985
  %v1987 = vpop.xlane.xlu0 %1986
  %v1988 = vsel %vm525, %v1874, 0.0
  %1989 = vadd.xlane.f32.xlu0 %v1988
  %v1990 = vpop.xlane.xlu0 %1989
  %v1991 = vsel %vm525, %v1875, 0.0
  %1992 = vadd.xlane.f32.xlu0 %v1991
  %v1993 = vpop.xlane.xlu0 %1992
  %v1994 = vsel %vm525, %v1876, 0.0
  %1995 = vadd.xlane.f32.xlu0 %v1994
  %v1996 = vpop.xlane.xlu0 %1995
  %v1997 = vsel %vm525, %v1877, 0.0
  %1998 = vadd.xlane.f32.xlu0 %v1997
  %v1999 = vpop.xlane.xlu0 %1998
  %v2000 = vsel %vm525, %v1878, 0.0
  %2001 = vadd.xlane.f32.xlu0 %v2000
  %v2002 = vpop.xlane.xlu0 %2001
  %v2003 = vsel %vm525, %v1879, 0.0
  %2004 = vadd.xlane.f32.xlu0 %v2003
  %v2005 = vpop.xlane.xlu0 %2004
  %v2006 = vsel %vm525, %v1880, 0.0
  %2007 = vadd.xlane.f32.xlu0 %v2006
  %v2008 = vpop.xlane.xlu0 %2007
  %v2009 = vsel %vm525, %v1881, 0.0
  %2010 = vadd.xlane.f32.xlu0 %v2009
  %v2011 = vpop.xlane.xlu0 %2010
  %v2012 = vsel %vm525, %v1882, 0.0
  %2013 = vadd.xlane.f32.xlu0 %v2012
  %v2014 = vpop.xlane.xlu0 %2013
  %v2015 = vsel %vm525, %v1883, 0.0
  %2016 = vadd.xlane.f32.xlu0 %v2015
  %v2017 = vpop.xlane.xlu0 %2016
  %v2018 = vsel %vm525, %v1884, 0.0
  %2019 = vadd.xlane.f32.xlu0 %v2018
  %v2020 = vpop.xlane.xlu0 %2019
  %v2021 = vsel %vm525, %v1885, 0.0
  %2022 = vadd.xlane.f32.xlu0 %v2021
  %v2023 = vpop.xlane.xlu0 %2022
  %v2024 = vsel %vm525, %v1886, 0.0
  %2025 = vadd.xlane.f32.xlu0 %v2024
  %v2026 = vpop.xlane.xlu0 %2025
  %v2027 = vsel %vm525, %v1887, 0.0
  %2028 = vadd.xlane.f32.xlu0 %v2027
  %v2029 = vpop.xlane.xlu0 %2028
  %v2030 = vsel %vm525, %v1888, 0.0
  %2031 = vadd.xlane.f32.xlu0 %v2030
  %v2032 = vpop.xlane.xlu0 %2031
  %v2033 = vsel %vm525, %v1889, 0.0
  %2034 = vadd.xlane.f32.xlu0 %v2033
  %v2035 = vpop.xlane.xlu0 %2034
  %v2036 = vsel %vm525, %v1890, 0.0
  %2037 = vadd.xlane.f32.xlu0 %v2036
  %v2038 = vpop.xlane.xlu0 %2037
  %v2039 = vsel %vm525, %v1891, 0.0
  %2040 = vadd.xlane.f32.xlu0 %v2039
  %v2041 = vpop.xlane.xlu0 %2040
  %v2042 = vsel %vm525, %v1892, 0.0
  %2043 = vadd.xlane.f32.xlu0 %v2042
  %v2044 = vpop.xlane.xlu0 %2043
  %v2045 = vsel %vm525, %v1893, 0.0
  %2046 = vadd.xlane.f32.xlu0 %v2045
  %v2047 = vpop.xlane.xlu0 %2046
  %v2048 = vsel %vm525, %v1894, 0.0
  %2049 = vadd.xlane.f32.xlu0 %v2048
  %v2050 = vpop.xlane.xlu0 %2049
  %v2051 = vsel %vm525, %v1895, 0.0
  %2052 = vadd.xlane.f32.xlu0 %v2051
  %v2053 = vpop.xlane.xlu0 %2052
  %v2054 = vsel %vm525, %v1896, 0.0
  %2055 = vadd.xlane.f32.xlu0 %v2054
  %v2056 = vpop.xlane.xlu0 %2055
  %v2057 = vsel %vm525, %v1897, 0.0
  %2058 = vadd.xlane.f32.xlu0 %v2057
  %v2059 = vpop.xlane.xlu0 %2058
  %v2060 = vsel %vm525, %v1898, 0.0
  %2061 = vadd.xlane.f32.xlu0 %v2060
  %v2062 = vpop.xlane.xlu0 %2061
  %v2063 = vsel %vm525, %v1899, 0.0
  %2064 = vadd.xlane.f32.xlu0 %v2063
  %v2065 = vpop.xlane.xlu0 %2064
  %v2066 = vsel %vm525, %v1900, 0.0
  %2067 = vadd.xlane.f32.xlu0 %v2066
  %v2068 = vpop.xlane.xlu0 %2067
  %v2069 = vsel %vm525, %v1901, 0.0
  %2070 = vadd.xlane.f32.xlu0 %v2069
  %v2071 = vpop.xlane.xlu0 %2070
  %v2072 = vsel %vm525, %v1902, 0.0
  %2073 = vadd.xlane.f32.xlu0 %v2072
  %v2074 = vpop.xlane.xlu0 %2073
  %v2075 = vsel %vm525, %v1903, 0.0
  %2076 = vadd.xlane.f32.xlu0 %v2075
  %v2077 = vpop.xlane.xlu0 %2076
  %v2078 = vsel %vm525, %v1904, 0.0
  %2079 = vadd.xlane.f32.xlu0 %v2078
  %v2080 = vpop.xlane.xlu0 %2079
  %v2081 = vsel %vm525, %v1905, 0.0
  %2082 = vadd.xlane.f32.xlu0 %v2081
  %v2083 = vpop.xlane.xlu0 %2082
  %v2084 = vsel %vm525, %v1906, 0.0
  %2085 = vadd.xlane.f32.xlu0 %v2084
  %v2086 = vpop.xlane.xlu0 %2085
  %v2087 = vsel %vm525, %v1907, 0.0
  %2088 = vadd.xlane.f32.xlu0 %v2087
  %v2089 = vpop.xlane.xlu0 %2088
  %v2090 = vsel %vm525, %v1908, 0.0
  %2091 = vadd.xlane.f32.xlu0 %v2090
  %v2092 = vpop.xlane.xlu0 %2091
  %v2093 = vsel %vm525, %v1909, 0.0
  %2094 = vadd.xlane.f32.xlu0 %v2093
  %v2095 = vpop.xlane.xlu0 %2094
  %v2096 = vsel %vm525, %v1910, 0.0
  %2097 = vadd.xlane.f32.xlu0 %v2096
  %v2098 = vpop.xlane.xlu0 %2097
  %v2099 = vsel %vm525, %v1911, 0.0
  %2100 = vadd.xlane.f32.xlu0 %v2099
  %v2101 = vpop.xlane.xlu0 %2100
  %v2102 = vsel %vm525, %v1912, 0.0
  %2103 = vadd.xlane.f32.xlu0 %v2102
  %v2104 = vpop.xlane.xlu0 %2103
  %v2169 = vperm.slane %v1915, %v954
  %v2170 = vperm.slane %v1918, %v956
  %v2171 = vsel %vm958, %v2170, %v2169
  %v2172 = vperm.slane %v1921, %v960
  %v2173 = vsel %vm962, %v2172, %v2171
  %v2174 = vperm.slane %v1924, %v964
  %v2175 = vsel %vm966, %v2174, %v2173
  %v2176 = vperm.slane %v1927, %v954
  %v2177 = vperm.slane %v1930, %v956
  %v2178 = vsel %vm958, %v2177, %v2176
  %v2179 = vperm.slane %v1933, %v960
  %v2180 = vsel %vm962, %v2179, %v2178
  %v2181 = vperm.slane %v1936, %v964
  %v2182 = vsel %vm966, %v2181, %v2180
  %v2183 = vperm.slane %v1939, %v954
  %v2184 = vperm.slane %v1942, %v956
  %v2185 = vsel %vm958, %v2184, %v2183
  %v2186 = vperm.slane %v1945, %v960
  %v2187 = vsel %vm962, %v2186, %v2185
  %v2188 = vperm.slane %v1948, %v964
  %v2189 = vsel %vm966, %v2188, %v2187
  %v2190 = vperm.slane %v1951, %v954
  %v2191 = vperm.slane %v1954, %v956
  %v2192 = vsel %vm958, %v2191, %v2190
  %v2193 = vperm.slane %v1957, %v960
  %v2194 = vsel %vm962, %v2193, %v2192
  %v2195 = vperm.slane %v1960, %v964
  %v2196 = vsel %vm966, %v2195, %v2194
  %v2197 = vperm.slane %v1963, %v954
  %v2198 = vperm.slane %v1966, %v956
  %v2199 = vsel %vm958, %v2198, %v2197
  %v2200 = vperm.slane %v1969, %v960
  %v2201 = vsel %vm962, %v2200, %v2199
  %v2202 = vperm.slane %v1972, %v964
  %v2203 = vsel %vm966, %v2202, %v2201
  %v2204 = vperm.slane %v1975, %v954
  %v2205 = vperm.slane %v1978, %v956
  %v2206 = vsel %vm958, %v2205, %v2204
  %v2207 = vperm.slane %v1981, %v960
  %v2208 = vsel %vm962, %v2207, %v2206
  %v2209 = vperm.slane %v1984, %v964
  %v2210 = vsel %vm966, %v2209, %v2208
  %v2211 = vperm.slane %v1987, %v954
  %v2212 = vperm.slane %v1990, %v956
  %v2213 = vsel %vm958, %v2212, %v2211
  %v2214 = vperm.slane %v1993, %v960
  %v2215 = vsel %vm962, %v2214, %v2213
  %v2216 = vperm.slane %v1996, %v964
  %v2217 = vsel %vm966, %v2216, %v2215
  %v2218 = vperm.slane %v1999, %v954
  %v2219 = vperm.slane %v2002, %v956
  %v2220 = vsel %vm958, %v2219, %v2218
  %v2221 = vperm.slane %v2005, %v960
  %v2222 = vsel %vm962, %v2221, %v2220
  %v2223 = vperm.slane %v2008, %v964
  %v2224 = vsel %vm966, %v2223, %v2222
  %v2225 = vperm.slane %v2011, %v954
  %v2226 = vperm.slane %v2014, %v956
  %v2227 = vsel %vm958, %v2226, %v2225
  %v2228 = vperm.slane %v2017, %v960
  %v2229 = vsel %vm962, %v2228, %v2227
  %v2230 = vperm.slane %v2020, %v964
  %v2231 = vsel %vm966, %v2230, %v2229
  %v2232 = vperm.slane %v2023, %v954
  %v2233 = vperm.slane %v2026, %v956
  %v2234 = vsel %vm958, %v2233, %v2232
  %v2235 = vperm.slane %v2029, %v960
  %v2236 = vsel %vm962, %v2235, %v2234
  %v2237 = vperm.slane %v2032, %v964
  %v2238 = vsel %vm966, %v2237, %v2236
  %v2239 = vperm.slane %v2035, %v954
  %v2240 = vperm.slane %v2038, %v956
  %v2241 = vsel %vm958, %v2240, %v2239
  %v2242 = vperm.slane %v2041, %v960
  %v2243 = vsel %vm962, %v2242, %v2241
  %v2244 = vperm.slane %v2044, %v964
  %v2245 = vsel %vm966, %v2244, %v2243
  %v2246 = vperm.slane %v2047, %v954
  %v2247 = vperm.slane %v2050, %v956
  %v2248 = vsel %vm958, %v2247, %v2246
  %v2249 = vperm.slane %v2053, %v960
  %v2250 = vsel %vm962, %v2249, %v2248
  %v2251 = vperm.slane %v2056, %v964
  %v2252 = vsel %vm966, %v2251, %v2250
  %v2253 = vperm.slane %v2059, %v954
  %v2254 = vperm.slane %v2062, %v956
  %v2255 = vsel %vm958, %v2254, %v2253
  %v2256 = vperm.slane %v2065, %v960
  %v2257 = vsel %vm962, %v2256, %v2255
  %v2258 = vperm.slane %v2068, %v964
  %v2259 = vsel %vm966, %v2258, %v2257
  %v2260 = vperm.slane %v2071, %v954
  %v2261 = vperm.slane %v2074, %v956
  %v2262 = vsel %vm958, %v2261, %v2260
  %v2263 = vperm.slane %v2077, %v960
  %v2264 = vsel %vm962, %v2263, %v2262
  %v2265 = vperm.slane %v2080, %v964
  %v2266 = vsel %vm966, %v2265, %v2264
  %v2267 = vperm.slane %v2083, %v954
  %v2268 = vperm.slane %v2086, %v956
  %v2269 = vsel %vm958, %v2268, %v2267
  %v2270 = vperm.slane %v2089, %v960
  %v2271 = vsel %vm962, %v2270, %v2269
  %v2272 = vperm.slane %v2092, %v964
  %v2273 = vsel %vm966, %v2272, %v2271
  %v2274 = vperm.slane %v2095, %v954
  %v2275 = vperm.slane %v2098, %v956
  %v2276 = vsel %vm958, %v2275, %v2274
  %v2277 = vperm.slane %v2101, %v960
  %v2278 = vsel %vm962, %v2277, %v2276
  %v2279 = vperm.slane %v2104, %v964
  %v2280 = vsel %vm966, %v2279, %v2278
  %v2281 = vsel %vm1073, %v2182, %v2175
  %v2282 = vsel %vm1075, %v2189, %v2281
  %v2283 = vsel %vm1077, %v2196, %v2282
  %v2284 = vsel %vm1079, %v2203, %v2283
  %v2285 = vsel %vm1081, %v2210, %v2284
  %v2286 = vsel %vm1083, %v2217, %v2285
  %v2287 = vsel %vm1085, %v2224, %v2286
  %v2288 = vsel %vm1073, %v2238, %v2231
  %v2289 = vsel %vm1075, %v2245, %v2288
  %v2290 = vsel %vm1077, %v2252, %v2289
  %v2291 = vsel %vm1079, %v2259, %v2290
  %v2292 = vsel %vm1081, %v2266, %v2291
  %v2293 = vsel %vm1083, %v2273, %v2292
  %v2294 = vsel %vm1085, %v2280, %v2293
  %v2297 = vsel %vm1096, %v2287, 0.0
  %2298 = vadd.xlane.f32.xlu0 %v2297
  %v2299 = vpop.xlane.xlu0 %2298
  %v2300 = vsel %vm1096, %v2294, 0.0
  %2301 = vadd.xlane.f32.xlu0 %v2300
  %v2302 = vpop.xlane.xlu0 %2301
  %2303 = vrot.lane.b32.xlu0 %v388, 80
  %v2304 = vpop.permute.xlu0 %2303
  %2305 = vrot.lane.b32.xlu0 %v390, 80
  %v2306 = vpop.permute.xlu0 %2305
  %2307 = vrot.lane.b32.xlu0 %v393, 80
  %v2308 = vpop.permute.xlu0 %2307
  %2309 = vrot.lane.b32.xlu0 %v395, 80
  %v2310 = vpop.permute.xlu0 %2309
  %v2315 = vsel %vm525, %v2304, 0.0
  %2316 = vadd.xlane.f32.xlu0 %v2315
  %v2317 = vpop.xlane.xlu0 %2316
  %v2318 = vsel %vm525, %v2306, 0.0
  %2319 = vadd.xlane.f32.xlu0 %v2318
  %v2320 = vpop.xlane.xlu0 %2319
  %v2321 = vsel %vm525, %v2308, 0.0
  %2322 = vadd.xlane.f32.xlu0 %v2321
  %v2323 = vpop.xlane.xlu0 %2322
  %v2324 = vsel %vm525, %v2310, 0.0
  %2325 = vadd.xlane.f32.xlu0 %v2324
  %v2326 = vpop.xlane.xlu0 %2325
  %v2327 = vmul.f32 %v2317, %v544
  %v2328 = vmul.f32 %v2320, %v544
  %v2329 = vmul.f32 %v2323, %v544
  %v2330 = vmul.f32 %v2326, %v544
  %v2331 = vsub.f32 %v388, %v2327
  %v2332 = vsub.f32 %v390, %v2328
  %v2333 = vsub.f32 %v393, %v2329
  %v2334 = vsub.f32 %v395, %v2330
  %v2335 = vmul.f32 %v2331, %v2331
  %v2336 = vmul.f32 %v2332, %v2332
  %v2337 = vmul.f32 %v2333, %v2333
  %v2338 = vmul.f32 %v2334, %v2334
  %2343 = vrot.lane.b32.xlu0 %v2335, 80
  %v2344 = vpop.permute.xlu0 %2343
  %2345 = vrot.lane.b32.xlu0 %v2336, 80
  %v2346 = vpop.permute.xlu0 %2345
  %2347 = vrot.lane.b32.xlu0 %v2337, 80
  %v2348 = vpop.permute.xlu0 %2347
  %2349 = vrot.lane.b32.xlu0 %v2338, 80
  %v2350 = vpop.permute.xlu0 %2349
  %v2355 = vsel %vm525, %v2344, 0.0
  %2356 = vadd.xlane.f32.xlu0 %v2355
  %v2357 = vpop.xlane.xlu0 %2356
  %v2358 = vsel %vm525, %v2346, 0.0
  %2359 = vadd.xlane.f32.xlu0 %v2358
  %v2360 = vpop.xlane.xlu0 %2359
  %v2361 = vsel %vm525, %v2348, 0.0
  %2362 = vadd.xlane.f32.xlu0 %v2361
  %v2363 = vpop.xlane.xlu0 %2362
  %v2364 = vsel %vm525, %v2350, 0.0
  %2365 = vadd.xlane.f32.xlu0 %v2364
  %v2366 = vpop.xlane.xlu0 %2365
  %v2367 = vmul.f32 %v2357, %v544
  %v2368 = vmul.f32 %v2360, %v544
  %v2369 = vmul.f32 %v2363, %v544
  %v2370 = vmul.f32 %v2366, %v544
  %v2371 = vadd.f32 %v2367, 1e-05
  %v2372 = vadd.f32 %v2368, 1e-05
  %v2373 = vadd.f32 %v2369, 1e-05
  %v2374 = vadd.f32 %v2370, 1e-05
  %v2375 = vrsqrt.pop %v2371
  %v2376 = vmul.f32 %v2375, %v2371
  %v2377 = vmul.f32 %v2376, %v2375
  %v2378 = vmul.f32 0.5, %v2377
  %v2379 = vsub.f32 1.5, %v2378
  %v2380 = vmul.f32 %v2375, %v2379
  %vm2381 = vweird.f32 %v2371
  %vm2382 = vweird.f32 %v2375
  %vm2383 = vmor %vm2381, %vm2382
  %v2384 = vsel %vm2383, %v2375, %v2380
  %v2385 = vrsqrt.pop %v2372
  %v2386 = vmul.f32 %v2385, %v2372
  %v2387 = vmul.f32 %v2386, %v2385
  %v2388 = vmul.f32 0.5, %v2387
  %v2389 = vsub.f32 1.5, %v2388
  %v2390 = vmul.f32 %v2385, %v2389
  %vm2391 = vweird.f32 %v2372
  %vm2392 = vweird.f32 %v2385
  %vm2393 = vmor %vm2391, %vm2392
  %v2394 = vsel %vm2393, %v2385, %v2390
  %v2395 = vrsqrt.pop %v2373
  %v2396 = vmul.f32 %v2395, %v2373
  %v2397 = vmul.f32 %v2396, %v2395
  %v2398 = vmul.f32 0.5, %v2397
  %v2399 = vsub.f32 1.5, %v2398
  %v2400 = vmul.f32 %v2395, %v2399
  %vm2401 = vweird.f32 %v2373
  %vm2402 = vweird.f32 %v2395
  %vm2403 = vmor %vm2401, %vm2402
  %v2404 = vsel %vm2403, %v2395, %v2400
  %v2405 = vrsqrt.pop %v2374
  %v2406 = vmul.f32 %v2405, %v2374
  %v2407 = vmul.f32 %v2406, %v2405
  %v2408 = vmul.f32 0.5, %v2407
  %v2409 = vsub.f32 1.5, %v2408
  %v2410 = vmul.f32 %v2405, %v2409
  %vm2411 = vweird.f32 %v2374
  %vm2412 = vweird.f32 %v2405
  %vm2413 = vmor %vm2411, %vm2412
  %v2414 = vsel %vm2413, %v2405, %v2410
  %v2415 = vmul.f32 %v2331, %v2384
  %v2416 = vmul.f32 %v2332, %v2394
  %v2417 = vmul.f32 %v2333, %v2404
  %v2418 = vmul.f32 %v2334, %v2414
  %vm2419 = vcmp.ge.f32.partialorder %v2415, 0.0
  %vm2420 = vcmp.ge.f32.partialorder %v2416, 0.0
  %vm2421 = vcmp.ge.f32.partialorder %v2417, 0.0
  %vm2422 = vcmp.ge.f32.partialorder %v2418, 0.0
  %v2423 = vmul.f32 %v2415, 0.2
  %v2424 = vmul.f32 %v2416, 0.2
  %v2425 = vmul.f32 %v2417, 0.2
  %v2426 = vmul.f32 %v2418, 0.2
  %v2427 = vsel %vm2419, %v2415, %v2423
  %v2428 = vsel %vm2420, %v2416, %v2424
  %v2429 = vsel %vm2421, %v2417, %v2425
  %v2430 = vsel %vm2422, %v2418, %v2426
  %2435 = vrot.lane.b32.xlu0 %v2427, 80
  %v2436 = vpop.permute.xlu0 %2435
  %2437 = vrot.lane.b32.xlu0 %v2428, 80
  %v2438 = vpop.permute.xlu0 %2437
  %2439 = vrot.lane.b32.xlu0 %v2429, 80
  %v2440 = vpop.permute.xlu0 %2439
  %2441 = vrot.lane.b32.xlu0 %v2430, 80
  %v2442 = vpop.permute.xlu0 %2441
  %v2447 = vmul.f32 %v461, %v2436
  %v2448 = vmul.f32 %v462, %v2438
  %v2449 = vmul.f32 %v463, %v2440
  %v2450 = vmul.f32 %v464, %v2442
  %v2451 = vmul.f32 %v465, %v2436
  %v2452 = vmul.f32 %v466, %v2438
  %v2453 = vmul.f32 %v467, %v2440
  %v2454 = vmul.f32 %v468, %v2442
  %v2455 = vmul.f32 %v469, %v2436
  %v2456 = vmul.f32 %v470, %v2438
  %v2457 = vmul.f32 %v471, %v2440
  %v2458 = vmul.f32 %v472, %v2442
  %v2459 = vmul.f32 %v473, %v2436
  %v2460 = vmul.f32 %v474, %v2438
  %v2461 = vmul.f32 %v475, %v2440
  %v2462 = vmul.f32 %v476, %v2442
  %v2463 = vmul.f32 %v477, %v2436
  %v2464 = vmul.f32 %v478, %v2438
  %v2465 = vmul.f32 %v479, %v2440
  %v2466 = vmul.f32 %v480, %v2442
  %v2467 = vmul.f32 %v481, %v2436
  %v2468 = vmul.f32 %v482, %v2438
  %v2469 = vmul.f32 %v483, %v2440
  %v2470 = vmul.f32 %v484, %v2442
  %v2471 = vmul.f32 %v485, %v2436
  %v2472 = vmul.f32 %v486, %v2438
  %v2473 = vmul.f32 %v487, %v2440
  %v2474 = vmul.f32 %v488, %v2442
  %v2475 = vmul.f32 %v489, %v2436
  %v2476 = vmul.f32 %v490, %v2438
  %v2477 = vmul.f32 %v491, %v2440
  %v2478 = vmul.f32 %v492, %v2442
  %v2479 = vmul.f32 %v493, %v2436
  %v2480 = vmul.f32 %v494, %v2438
  %v2481 = vmul.f32 %v495, %v2440
  %v2482 = vmul.f32 %v496, %v2442
  %v2483 = vmul.f32 %v497, %v2436
  %v2484 = vmul.f32 %v498, %v2438
  %v2485 = vmul.f32 %v499, %v2440
  %v2486 = vmul.f32 %v500, %v2442
  %v2487 = vmul.f32 %v501, %v2436
  %v2488 = vmul.f32 %v502, %v2438
  %v2489 = vmul.f32 %v503, %v2440
  %v2490 = vmul.f32 %v504, %v2442
  %v2491 = vmul.f32 %v505, %v2436
  %v2492 = vmul.f32 %v506, %v2438
  %v2493 = vmul.f32 %v507, %v2440
  %v2494 = vmul.f32 %v508, %v2442
  %v2495 = vmul.f32 %v509, %v2436
  %v2496 = vmul.f32 %v510, %v2438
  %v2497 = vmul.f32 %v511, %v2440
  %v2498 = vmul.f32 %v512, %v2442
  %v2499 = vmul.f32 %v513, %v2436
  %v2500 = vmul.f32 %v514, %v2438
  %v2501 = vmul.f32 %v515, %v2440
  %v2502 = vmul.f32 %v516, %v2442
  %v2503 = vmul.f32 %v517, %v2436
  %v2504 = vmul.f32 %v518, %v2438
  %v2505 = vmul.f32 %v519, %v2440
  %v2506 = vmul.f32 %v520, %v2442
  %v2507 = vmul.f32 %v521, %v2436
  %v2508 = vmul.f32 %v522, %v2438
  %v2509 = vmul.f32 %v523, %v2440
  %v2510 = vmul.f32 %v524, %v2442
  %v2511 = vsel %vm525, %v2447, 0.0
  %2512 = vadd.xlane.f32.xlu0 %v2511
  %v2513 = vpop.xlane.xlu0 %2512
  %v2514 = vsel %vm525, %v2448, 0.0
  %2515 = vadd.xlane.f32.xlu0 %v2514
  %v2516 = vpop.xlane.xlu0 %2515
  %v2517 = vsel %vm525, %v2449, 0.0
  %2518 = vadd.xlane.f32.xlu0 %v2517
  %v2519 = vpop.xlane.xlu0 %2518
  %v2520 = vsel %vm525, %v2450, 0.0
  %2521 = vadd.xlane.f32.xlu0 %v2520
  %v2522 = vpop.xlane.xlu0 %2521
  %v2523 = vsel %vm525, %v2451, 0.0
  %2524 = vadd.xlane.f32.xlu0 %v2523
  %v2525 = vpop.xlane.xlu0 %2524
  %v2526 = vsel %vm525, %v2452, 0.0
  %2527 = vadd.xlane.f32.xlu0 %v2526
  %v2528 = vpop.xlane.xlu0 %2527
  %v2529 = vsel %vm525, %v2453, 0.0
  %2530 = vadd.xlane.f32.xlu0 %v2529
  %v2531 = vpop.xlane.xlu0 %2530
  %v2532 = vsel %vm525, %v2454, 0.0
  %2533 = vadd.xlane.f32.xlu0 %v2532
  %v2534 = vpop.xlane.xlu0 %2533
  %v2535 = vsel %vm525, %v2455, 0.0
  %2536 = vadd.xlane.f32.xlu0 %v2535
  %v2537 = vpop.xlane.xlu0 %2536
  %v2538 = vsel %vm525, %v2456, 0.0
  %2539 = vadd.xlane.f32.xlu0 %v2538
  %v2540 = vpop.xlane.xlu0 %2539
  %v2541 = vsel %vm525, %v2457, 0.0
  %2542 = vadd.xlane.f32.xlu0 %v2541
  %v2543 = vpop.xlane.xlu0 %2542
  %v2544 = vsel %vm525, %v2458, 0.0
  %2545 = vadd.xlane.f32.xlu0 %v2544
  %v2546 = vpop.xlane.xlu0 %2545
  %v2547 = vsel %vm525, %v2459, 0.0
  %2548 = vadd.xlane.f32.xlu0 %v2547
  %v2549 = vpop.xlane.xlu0 %2548
  %v2550 = vsel %vm525, %v2460, 0.0
  %2551 = vadd.xlane.f32.xlu0 %v2550
  %v2552 = vpop.xlane.xlu0 %2551
  %v2553 = vsel %vm525, %v2461, 0.0
  %2554 = vadd.xlane.f32.xlu0 %v2553
  %v2555 = vpop.xlane.xlu0 %2554
  %v2556 = vsel %vm525, %v2462, 0.0
  %2557 = vadd.xlane.f32.xlu0 %v2556
  %v2558 = vpop.xlane.xlu0 %2557
  %v2559 = vsel %vm525, %v2463, 0.0
  %2560 = vadd.xlane.f32.xlu0 %v2559
  %v2561 = vpop.xlane.xlu0 %2560
  %v2562 = vsel %vm525, %v2464, 0.0
  %2563 = vadd.xlane.f32.xlu0 %v2562
  %v2564 = vpop.xlane.xlu0 %2563
  %v2565 = vsel %vm525, %v2465, 0.0
  %2566 = vadd.xlane.f32.xlu0 %v2565
  %v2567 = vpop.xlane.xlu0 %2566
  %v2568 = vsel %vm525, %v2466, 0.0
  %2569 = vadd.xlane.f32.xlu0 %v2568
  %v2570 = vpop.xlane.xlu0 %2569
  %v2571 = vsel %vm525, %v2467, 0.0
  %2572 = vadd.xlane.f32.xlu0 %v2571
  %v2573 = vpop.xlane.xlu0 %2572
  %v2574 = vsel %vm525, %v2468, 0.0
  %2575 = vadd.xlane.f32.xlu0 %v2574
  %v2576 = vpop.xlane.xlu0 %2575
  %v2577 = vsel %vm525, %v2469, 0.0
  %2578 = vadd.xlane.f32.xlu0 %v2577
  %v2579 = vpop.xlane.xlu0 %2578
  %v2580 = vsel %vm525, %v2470, 0.0
  %2581 = vadd.xlane.f32.xlu0 %v2580
  %v2582 = vpop.xlane.xlu0 %2581
  %v2583 = vsel %vm525, %v2471, 0.0
  %2584 = vadd.xlane.f32.xlu0 %v2583
  %v2585 = vpop.xlane.xlu0 %2584
  %v2586 = vsel %vm525, %v2472, 0.0
  %2587 = vadd.xlane.f32.xlu0 %v2586
  %v2588 = vpop.xlane.xlu0 %2587
  %v2589 = vsel %vm525, %v2473, 0.0
  %2590 = vadd.xlane.f32.xlu0 %v2589
  %v2591 = vpop.xlane.xlu0 %2590
  %v2592 = vsel %vm525, %v2474, 0.0
  %2593 = vadd.xlane.f32.xlu0 %v2592
  %v2594 = vpop.xlane.xlu0 %2593
  %v2595 = vsel %vm525, %v2475, 0.0
  %2596 = vadd.xlane.f32.xlu0 %v2595
  %v2597 = vpop.xlane.xlu0 %2596
  %v2598 = vsel %vm525, %v2476, 0.0
  %2599 = vadd.xlane.f32.xlu0 %v2598
  %v2600 = vpop.xlane.xlu0 %2599
  %v2601 = vsel %vm525, %v2477, 0.0
  %2602 = vadd.xlane.f32.xlu0 %v2601
  %v2603 = vpop.xlane.xlu0 %2602
  %v2604 = vsel %vm525, %v2478, 0.0
  %2605 = vadd.xlane.f32.xlu0 %v2604
  %v2606 = vpop.xlane.xlu0 %2605
  %v2607 = vsel %vm525, %v2479, 0.0
  %2608 = vadd.xlane.f32.xlu0 %v2607
  %v2609 = vpop.xlane.xlu0 %2608
  %v2610 = vsel %vm525, %v2480, 0.0
  %2611 = vadd.xlane.f32.xlu0 %v2610
  %v2612 = vpop.xlane.xlu0 %2611
  %v2613 = vsel %vm525, %v2481, 0.0
  %2614 = vadd.xlane.f32.xlu0 %v2613
  %v2615 = vpop.xlane.xlu0 %2614
  %v2616 = vsel %vm525, %v2482, 0.0
  %2617 = vadd.xlane.f32.xlu0 %v2616
  %v2618 = vpop.xlane.xlu0 %2617
  %v2619 = vsel %vm525, %v2483, 0.0
  %2620 = vadd.xlane.f32.xlu0 %v2619
  %v2621 = vpop.xlane.xlu0 %2620
  %v2622 = vsel %vm525, %v2484, 0.0
  %2623 = vadd.xlane.f32.xlu0 %v2622
  %v2624 = vpop.xlane.xlu0 %2623
  %v2625 = vsel %vm525, %v2485, 0.0
  %2626 = vadd.xlane.f32.xlu0 %v2625
  %v2627 = vpop.xlane.xlu0 %2626
  %v2628 = vsel %vm525, %v2486, 0.0
  %2629 = vadd.xlane.f32.xlu0 %v2628
  %v2630 = vpop.xlane.xlu0 %2629
  %v2631 = vsel %vm525, %v2487, 0.0
  %2632 = vadd.xlane.f32.xlu0 %v2631
  %v2633 = vpop.xlane.xlu0 %2632
  %v2634 = vsel %vm525, %v2488, 0.0
  %2635 = vadd.xlane.f32.xlu0 %v2634
  %v2636 = vpop.xlane.xlu0 %2635
  %v2637 = vsel %vm525, %v2489, 0.0
  %2638 = vadd.xlane.f32.xlu0 %v2637
  %v2639 = vpop.xlane.xlu0 %2638
  %v2640 = vsel %vm525, %v2490, 0.0
  %2641 = vadd.xlane.f32.xlu0 %v2640
  %v2642 = vpop.xlane.xlu0 %2641
  %v2643 = vsel %vm525, %v2491, 0.0
  %2644 = vadd.xlane.f32.xlu0 %v2643
  %v2645 = vpop.xlane.xlu0 %2644
  %v2646 = vsel %vm525, %v2492, 0.0
  %2647 = vadd.xlane.f32.xlu0 %v2646
  %v2648 = vpop.xlane.xlu0 %2647
  %v2649 = vsel %vm525, %v2493, 0.0
  %2650 = vadd.xlane.f32.xlu0 %v2649
  %v2651 = vpop.xlane.xlu0 %2650
  %v2652 = vsel %vm525, %v2494, 0.0
  %2653 = vadd.xlane.f32.xlu0 %v2652
  %v2654 = vpop.xlane.xlu0 %2653
  %v2655 = vsel %vm525, %v2495, 0.0
  %2656 = vadd.xlane.f32.xlu0 %v2655
  %v2657 = vpop.xlane.xlu0 %2656
  %v2658 = vsel %vm525, %v2496, 0.0
  %2659 = vadd.xlane.f32.xlu0 %v2658
  %v2660 = vpop.xlane.xlu0 %2659
  %v2661 = vsel %vm525, %v2497, 0.0
  %2662 = vadd.xlane.f32.xlu0 %v2661
  %v2663 = vpop.xlane.xlu0 %2662
  %v2664 = vsel %vm525, %v2498, 0.0
  %2665 = vadd.xlane.f32.xlu0 %v2664
  %v2666 = vpop.xlane.xlu0 %2665
  %v2667 = vsel %vm525, %v2499, 0.0
  %2668 = vadd.xlane.f32.xlu0 %v2667
  %v2669 = vpop.xlane.xlu0 %2668
  %v2670 = vsel %vm525, %v2500, 0.0
  %2671 = vadd.xlane.f32.xlu0 %v2670
  %v2672 = vpop.xlane.xlu0 %2671
  %v2673 = vsel %vm525, %v2501, 0.0
  %2674 = vadd.xlane.f32.xlu0 %v2673
  %v2675 = vpop.xlane.xlu0 %2674
  %v2676 = vsel %vm525, %v2502, 0.0
  %2677 = vadd.xlane.f32.xlu0 %v2676
  %v2678 = vpop.xlane.xlu0 %2677
  %v2679 = vsel %vm525, %v2503, 0.0
  %2680 = vadd.xlane.f32.xlu0 %v2679
  %v2681 = vpop.xlane.xlu0 %2680
  %v2682 = vsel %vm525, %v2504, 0.0
  %2683 = vadd.xlane.f32.xlu0 %v2682
  %v2684 = vpop.xlane.xlu0 %2683
  %v2685 = vsel %vm525, %v2505, 0.0
  %2686 = vadd.xlane.f32.xlu0 %v2685
  %v2687 = vpop.xlane.xlu0 %2686
  %v2688 = vsel %vm525, %v2506, 0.0
  %2689 = vadd.xlane.f32.xlu0 %v2688
  %v2690 = vpop.xlane.xlu0 %2689
  %v2691 = vsel %vm525, %v2507, 0.0
  %2692 = vadd.xlane.f32.xlu0 %v2691
  %v2693 = vpop.xlane.xlu0 %2692
  %v2694 = vsel %vm525, %v2508, 0.0
  %2695 = vadd.xlane.f32.xlu0 %v2694
  %v2696 = vpop.xlane.xlu0 %2695
  %v2697 = vsel %vm525, %v2509, 0.0
  %2698 = vadd.xlane.f32.xlu0 %v2697
  %v2699 = vpop.xlane.xlu0 %2698
  %v2700 = vsel %vm525, %v2510, 0.0
  %2701 = vadd.xlane.f32.xlu0 %v2700
  %v2702 = vpop.xlane.xlu0 %2701
  %v2767 = vperm.slane %v2513, %v954
  %v2768 = vperm.slane %v2516, %v956
  %v2769 = vsel %vm958, %v2768, %v2767
  %v2770 = vperm.slane %v2519, %v960
  %v2771 = vsel %vm962, %v2770, %v2769
  %v2772 = vperm.slane %v2522, %v964
  %v2773 = vsel %vm966, %v2772, %v2771
  %v2774 = vperm.slane %v2525, %v954
  %v2775 = vperm.slane %v2528, %v956
  %v2776 = vsel %vm958, %v2775, %v2774
  %v2777 = vperm.slane %v2531, %v960
  %v2778 = vsel %vm962, %v2777, %v2776
  %v2779 = vperm.slane %v2534, %v964
  %v2780 = vsel %vm966, %v2779, %v2778
  %v2781 = vperm.slane %v2537, %v954
  %v2782 = vperm.slane %v2540, %v956
  %v2783 = vsel %vm958, %v2782, %v2781
  %v2784 = vperm.slane %v2543, %v960
  %v2785 = vsel %vm962, %v2784, %v2783
  %v2786 = vperm.slane %v2546, %v964
  %v2787 = vsel %vm966, %v2786, %v2785
  %v2788 = vperm.slane %v2549, %v954
  %v2789 = vperm.slane %v2552, %v956
  %v2790 = vsel %vm958, %v2789, %v2788
  %v2791 = vperm.slane %v2555, %v960
  %v2792 = vsel %vm962, %v2791, %v2790
  %v2793 = vperm.slane %v2558, %v964
  %v2794 = vsel %vm966, %v2793, %v2792
  %v2795 = vperm.slane %v2561, %v954
  %v2796 = vperm.slane %v2564, %v956
  %v2797 = vsel %vm958, %v2796, %v2795
  %v2798 = vperm.slane %v2567, %v960
  %v2799 = vsel %vm962, %v2798, %v2797
  %v2800 = vperm.slane %v2570, %v964
  %v2801 = vsel %vm966, %v2800, %v2799
  %v2802 = vperm.slane %v2573, %v954
  %v2803 = vperm.slane %v2576, %v956
  %v2804 = vsel %vm958, %v2803, %v2802
  %v2805 = vperm.slane %v2579, %v960
  %v2806 = vsel %vm962, %v2805, %v2804
  %v2807 = vperm.slane %v2582, %v964
  %v2808 = vsel %vm966, %v2807, %v2806
  %v2809 = vperm.slane %v2585, %v954
  %v2810 = vperm.slane %v2588, %v956
  %v2811 = vsel %vm958, %v2810, %v2809
  %v2812 = vperm.slane %v2591, %v960
  %v2813 = vsel %vm962, %v2812, %v2811
  %v2814 = vperm.slane %v2594, %v964
  %v2815 = vsel %vm966, %v2814, %v2813
  %v2816 = vperm.slane %v2597, %v954
  %v2817 = vperm.slane %v2600, %v956
  %v2818 = vsel %vm958, %v2817, %v2816
  %v2819 = vperm.slane %v2603, %v960
  %v2820 = vsel %vm962, %v2819, %v2818
  %v2821 = vperm.slane %v2606, %v964
  %v2822 = vsel %vm966, %v2821, %v2820
  %v2823 = vperm.slane %v2609, %v954
  %v2824 = vperm.slane %v2612, %v956
  %v2825 = vsel %vm958, %v2824, %v2823
  %v2826 = vperm.slane %v2615, %v960
  %v2827 = vsel %vm962, %v2826, %v2825
  %v2828 = vperm.slane %v2618, %v964
  %v2829 = vsel %vm966, %v2828, %v2827
  %v2830 = vperm.slane %v2621, %v954
  %v2831 = vperm.slane %v2624, %v956
  %v2832 = vsel %vm958, %v2831, %v2830
  %v2833 = vperm.slane %v2627, %v960
  %v2834 = vsel %vm962, %v2833, %v2832
  %v2835 = vperm.slane %v2630, %v964
  %v2836 = vsel %vm966, %v2835, %v2834
  %v2837 = vperm.slane %v2633, %v954
  %v2838 = vperm.slane %v2636, %v956
  %v2839 = vsel %vm958, %v2838, %v2837
  %v2840 = vperm.slane %v2639, %v960
  %v2841 = vsel %vm962, %v2840, %v2839
  %v2842 = vperm.slane %v2642, %v964
  %v2843 = vsel %vm966, %v2842, %v2841
  %v2844 = vperm.slane %v2645, %v954
  %v2845 = vperm.slane %v2648, %v956
  %v2846 = vsel %vm958, %v2845, %v2844
  %v2847 = vperm.slane %v2651, %v960
  %v2848 = vsel %vm962, %v2847, %v2846
  %v2849 = vperm.slane %v2654, %v964
  %v2850 = vsel %vm966, %v2849, %v2848
  %v2851 = vperm.slane %v2657, %v954
  %v2852 = vperm.slane %v2660, %v956
  %v2853 = vsel %vm958, %v2852, %v2851
  %v2854 = vperm.slane %v2663, %v960
  %v2855 = vsel %vm962, %v2854, %v2853
  %v2856 = vperm.slane %v2666, %v964
  %v2857 = vsel %vm966, %v2856, %v2855
  %v2858 = vperm.slane %v2669, %v954
  %v2859 = vperm.slane %v2672, %v956
  %v2860 = vsel %vm958, %v2859, %v2858
  %v2861 = vperm.slane %v2675, %v960
  %v2862 = vsel %vm962, %v2861, %v2860
  %v2863 = vperm.slane %v2678, %v964
  %v2864 = vsel %vm966, %v2863, %v2862
  %v2865 = vperm.slane %v2681, %v954
  %v2866 = vperm.slane %v2684, %v956
  %v2867 = vsel %vm958, %v2866, %v2865
  %v2868 = vperm.slane %v2687, %v960
  %v2869 = vsel %vm962, %v2868, %v2867
  %v2870 = vperm.slane %v2690, %v964
  %v2871 = vsel %vm966, %v2870, %v2869
  %v2872 = vperm.slane %v2693, %v954
  %v2873 = vperm.slane %v2696, %v956
  %v2874 = vsel %vm958, %v2873, %v2872
  %v2875 = vperm.slane %v2699, %v960
  %v2876 = vsel %vm962, %v2875, %v2874
  %v2877 = vperm.slane %v2702, %v964
  %v2878 = vsel %vm966, %v2877, %v2876
  %v2879 = vsel %vm1073, %v2780, %v2773
  %v2880 = vsel %vm1075, %v2787, %v2879
  %v2881 = vsel %vm1077, %v2794, %v2880
  %v2882 = vsel %vm1079, %v2801, %v2881
  %v2883 = vsel %vm1081, %v2808, %v2882
  %v2884 = vsel %vm1083, %v2815, %v2883
  %v2885 = vsel %vm1085, %v2822, %v2884
  %v2886 = vsel %vm1073, %v2836, %v2829
  %v2887 = vsel %vm1075, %v2843, %v2886
  %v2888 = vsel %vm1077, %v2850, %v2887
  %v2889 = vsel %vm1079, %v2857, %v2888
  %v2890 = vsel %vm1081, %v2864, %v2889
  %v2891 = vsel %vm1083, %v2871, %v2890
  %v2892 = vsel %vm1085, %v2878, %v2891
  %v2895 = vsel %vm1096, %v2885, 0.0
  %2896 = vadd.xlane.f32.xlu0 %v2895
  %v2897 = vpop.xlane.xlu0 %2896
  %v2898 = vsel %vm1096, %v2892, 0.0
  %2899 = vadd.xlane.f32.xlu0 %v2898
  %v2900 = vpop.xlane.xlu0 %2899
  %vm2901 = vcmask 7168
  %v2902 = vsel %vm2901, %v1099, %v1701
  %v2903 = vsel %vm2901, %v1102, %v1704
  %vm2904 = vcmask 15360
  %v2905 = vsel %vm2904, %v2902, %v2299
  %v2906 = vsel %vm2904, %v2903, %v2302
  %vm2907 = vcmask 23552
  %v2908 = vsel %vm2907, %v2905, %v2897
  %v2909 = vsel %vm2907, %v2906, %v2900
  %v2910 = vld [vmem:[%s3] sm:$0xff]
  %v2911 = vld [vmem:[%s3 + $0x8] sm:$0xff]
  %2913 = vset.pattern.permute.xlu0 0
  %2914 = vperm.xlu0 %2913, %v2910
  %v2915 = vpop.permute.xlu0 %2914
  %2918 = vset.pattern.permute.xlu0 0
  %2919 = vperm.xlu0 %2918, %v2911
  %v2920 = vpop.permute.xlu0 %2919
  %v2922 = vadd.f32 %v2908, %v2915
  %v2923 = vadd.f32 %v2909, %v2920
  %vm2924 = vcmask 31744
  %2925 = vst.msk [vmem:[%s4] sm:$0xff] %vm2924, %v2922
  %2926 = vst.msk [vmem:[%s4 + $0x8] sm:$0xff] %vm2924, %v2923
  // Predicated region
  $region18: #{_lambda_.9} parent=0 // pred_check
    _
  $region19: #{_lambda_.9} parent=0 // pred_check_branch
    %2928 = sbr.rel (0) target = $region21
  $region20: #{_lambda_.9} parent=0 // pred_region
    _
  $region21: #{_lambda_.9} parent=0 // pred_fallthru
    _
  // Predicated region
  $region22: #{_lambda_.9} parent=0 // pred_check
    _
  $region23: #{_lambda_.9} parent=0 // pred_check_branch
    %2930 = sbr.rel (0) target = $region25
  $region24: #{_lambda_.9} parent=0 // pred_region
    _
  $region25: #{_lambda_.9} parent=0 // pred_fallthru
    _

</llo_original>
